<compile_context>
chip_gen: v5e
topology: v5e:2x2
jax: 0.10.0
libtpu: 0.0.40
codegen_flags: <defaults>
</compile_context>

<pallas_src>
import functools

import jax
import jax.numpy as jnp
from jax.experimental import pallas as pl
from jax.experimental.pallas import tpu as pltpu

C_OUT = 64            # SpecialBlockA out_channels
NUM_CLASSES = 8
OUT_H = 4             # AdaptiveAvgPool2d((4, 1)) target height
KW = 8                # conv kernel width (fixed in the module)
BATCH_TILE = 128      # batch elements per grid step = lane width of every tile
EPS = 1e-5

# (kh, stride_h, pad_h, maxpool_h) for block_low / block_middle / block_high
BRANCHES = (
    dict(kh=3,  sh=1, ph=1, mp=6),   # round(3/4+0.5)=1,  int(3/2)=1
    dict(kh=6,  sh=3, ph=2, mp=2),   # round(6/4+0.5)=2,  int(6/2)=3
    dict(kh=12, sh=6, ph=4, mp=1),   # round(12/4+0.5)=4, int(12/2)=6
)
PH_MAX = max(c["ph"] for c in BRANCHES)


# ---------------------------------------------------------------------------
# Fused kernel: 3 x (conv + BN + ReLU + MaxPool + AdaptiveAvgPool) + Linear
# ---------------------------------------------------------------------------
def _blanknet_kernel(x_ref, w_lo, w_mi, w_hi, bias_ref, fcw_ref, fcb_ref, o_ref,
                     *, w_pad, wc, geoms):
    """One batch tile.  x_ref: (H_tot*W_pad, NT) bf16, rows ordered (h, w), batch in lanes.

    geoms[b] = (kh, sh, row_off, mp, hc) for branch b.  Conv output row `hc` of branch b
    needs input rows [row_off + hc*sh, row_off + hc*sh + kh), i.e. a contiguous
    (kh*W_pad)-row slab of x_ref.
    """
    nt = o_ref.shape[-1]
    wcc = wc * C_OUT
    logits = jnp.zeros((NUM_CLASSES, nt), jnp.float32)

    for b, w_ref in enumerate((w_lo, w_mi, w_hi)):
        kh, sh, off, mp, hc = geoms[b]
        hp = hc // mp                                        # MaxPool2d floor mode
        wmat = w_ref[...]                                    # (Wc*64, kh*W_pad) bf16, BN-scaled
        bias = jnp.broadcast_to(bias_ref[b * wcc:(b + 1) * wcc, :], (wcc, nt))  # hoisted

        # conv (one matmul per output row) + BN bias + ReLU + MaxPool((mp, 1)).
        pooled = []                                          # hp x (Wc*64, NT) f32
        for pw in range(hp):
            gmax = None
            for r in range(mp):
                hrow = pw * mp + r                           # conv output row
                start = (off + hrow * sh) * w_pad            # 8-aligned (w_pad % 8 == 0)
                rhs = x_ref[start:start + kh * w_pad, :]     # (kh*W_pad, NT) bf16
                y = jnp.dot(wmat, rhs, preferred_element_type=jnp.float32)
                y = jnp.maximum(y + bias, 0.0)               # folded-BN bias + ReLU (f32)
                gmax = y if r == 0 else jnp.maximum(gmax, y)
            pooled.append(gmax)

        # AdaptiveAvgPool2d((4, 1)) over (hp rows x Wc cols), then FC contribution.
        for t in range(OUT_H):
            s_w = (t * hp) // OUT_H
            e_w = -(-((t + 1) * hp) // OUT_H)                # ceil
            win = pooled[s_w]
            for pw in range(s_w + 1, e_w):
                win = win + pooled[pw]
            feat = win[0:C_OUT, :]                           # sum over conv-width positions
            for wdx in range(1, wc):
                feat = feat + win[wdx * C_OUT:(wdx + 1) * C_OUT, :]
            feat = (feat * (1.0 / ((e_w - s_w) * wc))).astype(jnp.bfloat16)
            blk = (b * OUT_H + t) * NUM_CLASSES
            logits = logits + jnp.dot(fcw_ref[blk:blk + NUM_CLASSES, :], feat,
                                      preferred_element_type=jnp.float32)

    o_ref[...] = logits + jnp.broadcast_to(fcb_ref[...], (NUM_CLASSES, nt))


# ---------------------------------------------------------------------------
# Host-side glue: weight folding / layout, input re-layout, pallas_call
# ---------------------------------------------------------------------------
def init_params(key):
    params = {}
    for bi, cfg in enumerate(BRANCHES):
        key, k1, k2, k3, k4, k5 = jax.random.split(key, 6)
        kh = cfg["kh"]
        params[f"branch{bi}"] = dict(
            w=0.1 * jax.random.normal(k1, (C_OUT, 1, kh, KW), jnp.float32),  # Conv2d, bias=False
            gamma=1.0 + 0.1 * jax.random.normal(k2, (C_OUT,), jnp.float32),  # BN weight
            beta=0.1 * jax.random.normal(k3, (C_OUT,), jnp.float32),         # BN bias
            rmean=0.1 * jax.random.normal(k4, (C_OUT,), jnp.float32),        # BN running_mean
            rvar=jnp.abs(1.0 + 0.1 * jax.random.normal(k5, (C_OUT,), jnp.float32)),
        )
    key, kw_, kb_ = jax.random.split(key, 3)
    params["fc_w"] = 0.05 * jax.random.normal(kw_, (NUM_CLASSES, C_OUT * OUT_H * 3), jnp.float32)
    params["fc_b"] = 0.1 * jax.random.normal(kb_, (NUM_CLASSES,), jnp.float32)
    return params


@jax.jit
def blanknet_forward(params, x):
    N, _, H, W = x.shape
    assert W >= KW, "input width must be >= conv kernel width (8)"
    wc = W - KW + 1                         # conv output width (shared by all branches)
    wcc = wc * C_OUT
    w_padded = -(-W // 8) * 8               # 8-aligned row pitch inside the kernel block

    geoms, hp_all = [], []
    for cfg in BRANCHES:
        kh, sh, ph, mp = cfg["kh"], cfg["sh"], cfg["ph"], cfg["mp"]
        hc = (H + 2 * ph - kh) // sh + 1
        geoms.append((kh, sh, PH_MAX - ph, mp, hc))
        hp_all.append(hc // mp)
    # torch.cat along channels requires matching post-maxpool spatial dims across branches
    assert len(set(hp_all)) == 1, "post-maxpool heights must match across branches"

    # Fold BN (eval mode) scale into the conv weights; keep only the bias for the kernel.
    w_mats, bias_cols = [], []
    for bi, cfg in enumerate(BRANCHES):
        kh = cfg["kh"]
        p = params[f"branch{bi}"]
        inv_std = p["gamma"] / jnp.sqrt(p["rvar"] + EPS)                 # (64,)
        wt = p["w"][:, 0] * inv_std[:, None, None]                       # (64, kh, 8)
        wmat = jnp.zeros((wc, C_OUT, kh, w_padded), jnp.float32)
        for wdx in range(wc):                                            # both width positions
            wmat = wmat.at[wdx, :, :, wdx:wdx + KW].set(wt)              # go into output lanes
        w_mats.append(wmat.reshape(wcc, kh * w_padded).astype(jnp.bfloat16))
        bias_cols.append(jnp.tile(p["beta"] - p["rmean"] * inv_std, wc)) # (Wc*64,)
    bias_all = jnp.concatenate(bias_cols).reshape(3 * wcc, 1).astype(jnp.float32)

    # FC weight: torch flatten order is (channel = b*64 + c, t); kernel consumes one
    # (8, 64) block per (branch, t) feature, so permute to (b, t, out, c) and cast bf16.
    fcw = params["fc_w"].reshape(NUM_CLASSES, 3, C_OUT, OUT_H)
    fcw = jnp.transpose(fcw, (1, 3, 0, 2)).reshape(3 * OUT_H * NUM_CLASSES, C_OUT)
    fcw = fcw.astype(jnp.bfloat16)
    fcb = params["fc_b"].reshape(NUM_CLASSES, 1).astype(jnp.float32)

    # One dense bf16 copy of the input: shared zero-padding of PH_MAX rows top/bottom,
    # width padded to w_padded, rows flattened (h, w), batch moved to the lane dim.
    nt = BATCH_TILE
    n_pad = -(-N // nt) * nt
    h_tot = H + 2 * PH_MAX
    xk = jnp.pad(x[:, 0], ((0, n_pad - N), (PH_MAX, PH_MAX), (0, w_padded - W)))
    xk = jnp.transpose(xk, (1, 2, 0)).reshape(h_tot * w_padded, n_pad).astype(jnp.bfloat16)

    kern = functools.partial(_blanknet_kernel, w_pad=w_padded, wc=wc, geoms=tuple(geoms))
    in_specs = [pl.BlockSpec((h_tot * w_padded, nt), lambda g: (0, g))]
    for (kh, _, _, _, _) in geoms:
        in_specs.append(pl.BlockSpec((wcc, kh * w_padded), lambda g: (0, 0)))
    in_specs += [
        pl.BlockSpec((3 * wcc, 1), lambda g: (0, 0)),
        pl.BlockSpec((3 * OUT_H * NUM_CLASSES, C_OUT), lambda g: (0, 0)),
        pl.BlockSpec((NUM_CLASSES, 1), lambda g: (0, 0)),
    ]

    out = pl.pallas_call(
        kern,
        out_shape=jax.ShapeDtypeStruct((NUM_CLASSES, n_pad), jnp.float32),
        grid=(n_pad // nt,),
        in_specs=in_specs,
        out_specs=pl.BlockSpec((NUM_CLASSES, nt), lambda g: (0, g)),
        compiler_params=pltpu.CompilerParams(dimension_semantics=("parallel",)),
    )(xk, *w_mats, bias_all, fcw, fcb)

    return out[:, :N].T                                      # (N, 8) f32


# ---------------------------------------------------------------------------
# Pure-JAX f32 reference (mirrors the PyTorch forward, eval-mode BN) for validation
# ---------------------------------------------------------------------------
@jax.jit
def blanknet_reference(params, x):
    feats = []
    for bi, cfg in enumerate(BRANCHES):
        p = params[f"branch{bi}"]
        kh, sh, ph, mp = cfg["kh"], cfg["sh"], cfg["ph"], cfg["mp"]
        y = jax.lax.conv_general_dilated(
            x, p["w"], window_strides=(sh, 1), padding=((ph, ph), (0, 0)),
            dimension_numbers=("NCHW", "OIHW", "NCHW"))
        inv_std = p["gamma"] / jnp.sqrt(p["rvar"] + EPS)
        y = y * inv_std[None, :, None, None] \
            + (p["beta"] - p["rmean"] * inv_std)[None, :, None, None]
        y = jnp.maximum(y, 0.0)
        n, c, hc, wcd = y.shape
        hp = hc // mp
        y = y[:, :, :hp * mp, :].reshape(n, c, hp, mp, wcd).max(axis=3)   # MaxPool2d((mp,1))
        feats.append(y)
    cat = jnp.concatenate(feats, axis=1)                                  # (N, 192, hp, Wc)
    n, c, hp, _ = cat.shape
    rows = [cat[:, :, (t * hp) // OUT_H: -(-((t + 1) * hp) // OUT_H), :].mean(axis=(2, 3))
            for t in range(OUT_H)]                                        # AdaptiveAvgPool2d((4,1))
    flat = jnp.stack(rows, axis=2).reshape(n, c * OUT_H)                  # torch .view order (c, t)
    return flat @ params["fc_w"].T + params["fc_b"]


if __name__ == "__main__":
    key = jax.random.PRNGKey(0)
    pkey, xkey = jax.random.split(key)
    params = init_params(pkey)
    # NCHW, C=1; H=48 -> all branches pool to height 8 before the adaptive pool
    # (required for torch.cat in the reference module); W=9 -> conv width-out 2.
    x = jax.random.normal(xkey, (2, 1, 48, 9), jnp.float32)
    out = blanknet_forward(params, x)
    jax.block_until_ready(out)
    assert out.shape == (2, NUM_CLASSES) and out.dtype == jnp.float32
    assert bool(jnp.all(jnp.isfinite(out)))
    ref = blanknet_reference(params, x)
    err = float(jnp.max(jnp.abs(out - ref)))
    assert err < 0.1, f"kernel deviates from f32 reference: max|err|={err}"   # bf16 tolerance
    print("KERNEL_OK")
</pallas_src>

<mosaic_0001>
module attributes {stable_mosaic.version = 11 : i64} {
  func.func @_blanknet_kernel(%arg0: i32, %arg1: memref<896x128xbf16, #tpu.memory_space<vmem>>, %arg2: memref<128x48xbf16, #tpu.memory_space<vmem>>, %arg3: memref<128x96xbf16, #tpu.memory_space<vmem>>, %arg4: memref<128x192xbf16, #tpu.memory_space<vmem>>, %arg5: memref<384x1xf32, #tpu.memory_space<vmem>>, %arg6: memref<96x64xbf16, #tpu.memory_space<vmem>>, %arg7: memref<8x1xf32, #tpu.memory_space<vmem>>, %arg8: memref<8x128xf32, #tpu.memory_space<vmem>>) attributes {dimension_semantics = [#tpu.dimension_semantics<parallel>], iteration_bounds = array<i64: 1>, scalar_prefetch = 0 : i64, scratch_operands = 0 : i64, tpu.core_type = #tpu.core_type<tc>, window_params = [{transform_indices = @transform_0, window_bounds = array<i64: 896, 128>}, {pipeline_mode = #tpu.pipeline_mode<synchronous>, transform_indices = @transform_1, window_bounds = array<i64: 128, 48>}, {pipeline_mode = #tpu.pipeline_mode<synchronous>, transform_indices = @transform_2, window_bounds = array<i64: 128, 96>}, {pipeline_mode = #tpu.pipeline_mode<synchronous>, transform_indices = @transform_3, window_bounds = array<i64: 128, 192>}, {pipeline_mode = #tpu.pipeline_mode<synchronous>, transform_indices = @transform_4, window_bounds = array<i64: 384, 1>}, {pipeline_mode = #tpu.pipeline_mode<synchronous>, transform_indices = @transform_5, window_bounds = array<i64: 96, 64>}, {pipeline_mode = #tpu.pipeline_mode<synchronous>, transform_indices = @transform_6, window_bounds = array<i64: 8, 1>}, {transform_indices = @transform_7, window_bounds = array<i64: 8, 128>}]} {
    %cst = arith.constant 0.000000e+00 : f32
    %0 = vector.broadcast %cst : f32 to vector<8x128xf32>
    %c0 = arith.constant 0 : index
    %c0_0 = arith.constant 0 : index
    %1 = vector.load %arg2[%c0, %c0_0] : memref<128x48xbf16, #tpu.memory_space<vmem>>, vector<128x48xbf16>
    %c0_1 = arith.constant 0 : index
    %c0_2 = arith.constant 0 : index
    %2 = vector.load %arg5[%c0_1, %c0_2] : memref<384x1xf32, #tpu.memory_space<vmem>>, vector<128x1xf32>
    %3 = vector.shape_cast %2 : vector<128x1xf32> to vector<128x1xf32>
    %4 = vector.broadcast %3 : vector<128x1xf32> to vector<128x128xf32>
    %c48 = arith.constant 48 : index
    %c0_3 = arith.constant 0 : index
    %5 = vector.load %arg1[%c48, %c0_3] : memref<896x128xbf16, #tpu.memory_space<vmem>>, vector<48x128xbf16>
    %cst_4 = arith.constant dense<0.000000e+00> : vector<128x128xf32>
    %6 = tpu.matmul %1, %5, %cst_4 {dimension_numbers = #tpu.dot_dimension_numbers<[1], [0], [0], [1], [0, 0, 1, 1], [], []>} : vector<128x48xbf16>, vector<48x128xbf16>, vector<128x128xf32> -> vector<128x128xf32>
    %7 = arith.addf %6, %4 : vector<128x128xf32>
    %cst_5 = arith.constant 0.000000e+00 : f32
    %8 = vector.broadcast %cst_5 : f32 to vector<128x128xf32>
    %9 = arith.maximumf %7, %8 : vector<128x128xf32>
    %c64 = arith.constant 64 : index
    %c0_6 = arith.constant 0 : index
    %10 = vector.load %arg1[%c64, %c0_6] : memref<896x128xbf16, #tpu.memory_space<vmem>>, vector<48x128xbf16>
    %cst_7 = arith.constant dense<0.000000e+00> : vector<128x128xf32>
    %11 = tpu.matmul %1, %10, %cst_7 {dimension_numbers = #tpu.dot_dimension_numbers<[1], [0], [0], [1], [0, 0, 1, 1], [], []>} : vector<128x48xbf16>, vector<48x128xbf16>, vector<128x128xf32> -> vector<128x128xf32>
    %12 = arith.addf %11, %4 : vector<128x128xf32>
    %cst_8 = arith.constant 0.000000e+00 : f32
    %13 = vector.broadcast %cst_8 : f32 to vector<128x128xf32>
    %14 = arith.maximumf %12, %13 : vector<128x128xf32>
    %15 = arith.maximumf %9, %14 : vector<128x128xf32>
    %c80 = arith.constant 80 : index
    %c0_9 = arith.constant 0 : index
    %16 = vector.load %arg1[%c80, %c0_9] : memref<896x128xbf16, #tpu.memory_space<vmem>>, vector<48x128xbf16>
    %cst_10 = arith.constant dense<0.000000e+00> : vector<128x128xf32>
    %17 = tpu.matmul %1, %16, %cst_10 {dimension_numbers = #tpu.dot_dimension_numbers<[1], [0], [0], [1], [0, 0, 1, 1], [], []>} : vector<128x48xbf16>, vector<48x128xbf16>, vector<128x128xf32> -> vector<128x128xf32>
    %18 = arith.addf %17, %4 : vector<128x128xf32>
    %cst_11 = arith.constant 0.000000e+00 : f32
    %19 = vector.broadcast %cst_11 : f32 to vector<128x128xf32>
    %20 = arith.maximumf %18, %19 : vector<128x128xf32>
    %21 = arith.maximumf %15, %20 : vector<128x128xf32>
    %c96 = arith.constant 96 : index
    %c0_12 = arith.constant 0 : index
    %22 = vector.load %arg1[%c96, %c0_12] : memref<896x128xbf16, #tpu.memory_space<vmem>>, vector<48x128xbf16>
    %cst_13 = arith.constant dense<0.000000e+00> : vector<128x128xf32>
    %23 = tpu.matmul %1, %22, %cst_13 {dimension_numbers = #tpu.dot_dimension_numbers<[1], [0], [0], [1], [0, 0, 1, 1], [], []>} : vector<128x48xbf16>, vector<48x128xbf16>, vector<128x128xf32> -> vector<128x128xf32>
    %24 = arith.addf %23, %4 : vector<128x128xf32>
    %cst_14 = arith.constant 0.000000e+00 : f32
    %25 = vector.broadcast %cst_14 : f32 to vector<128x128xf32>
    %26 = arith.maximumf %24, %25 : vector<128x128xf32>
    %27 = arith.maximumf %21, %26 : vector<128x128xf32>
    %c112 = arith.constant 112 : index
    %c0_15 = arith.constant 0 : index
    %28 = vector.load %arg1[%c112, %c0_15] : memref<896x128xbf16, #tpu.memory_space<vmem>>, vector<48x128xbf16>
    %cst_16 = arith.constant dense<0.000000e+00> : vector<128x128xf32>
    %29 = tpu.matmul %1, %28, %cst_16 {dimension_numbers = #tpu.dot_dimension_numbers<[1], [0], [0], [1], [0, 0, 1, 1], [], []>} : vector<128x48xbf16>, vector<48x128xbf16>, vector<128x128xf32> -> vector<128x128xf32>
    %30 = arith.addf %29, %4 : vector<128x128xf32>
    %cst_17 = arith.constant 0.000000e+00 : f32
    %31 = vector.broadcast %cst_17 : f32 to vector<128x128xf32>
    %32 = arith.maximumf %30, %31 : vector<128x128xf32>
    %33 = arith.maximumf %27, %32 : vector<128x128xf32>
    %c128 = arith.constant 128 : index
    %c0_18 = arith.constant 0 : index
    %34 = vector.load %arg1[%c128, %c0_18] : memref<896x128xbf16, #tpu.memory_space<vmem>>, vector<48x128xbf16>
    %cst_19 = arith.constant dense<0.000000e+00> : vector<128x128xf32>
    %35 = tpu.matmul %1, %34, %cst_19 {dimension_numbers = #tpu.dot_dimension_numbers<[1], [0], [0], [1], [0, 0, 1, 1], [], []>} : vector<128x48xbf16>, vector<48x128xbf16>, vector<128x128xf32> -> vector<128x128xf32>
    %36 = arith.addf %35, %4 : vector<128x128xf32>
    %cst_20 = arith.constant 0.000000e+00 : f32
    %37 = vector.broadcast %cst_20 : f32 to vector<128x128xf32>
    %38 = arith.maximumf %36, %37 : vector<128x128xf32>
    %39 = arith.maximumf %33, %38 : vector<128x128xf32>
    %c144 = arith.constant 144 : index
    %c0_21 = arith.constant 0 : index
    %40 = vector.load %arg1[%c144, %c0_21] : memref<896x128xbf16, #tpu.memory_space<vmem>>, vector<48x128xbf16>
    %cst_22 = arith.constant dense<0.000000e+00> : vector<128x128xf32>
    %41 = tpu.matmul %1, %40, %cst_22 {dimension_numbers = #tpu.dot_dimension_numbers<[1], [0], [0], [1], [0, 0, 1, 1], [], []>} : vector<128x48xbf16>, vector<48x128xbf16>, vector<128x128xf32> -> vector<128x128xf32>
    %42 = arith.addf %41, %4 : vector<128x128xf32>
    %cst_23 = arith.constant 0.000000e+00 : f32
    %43 = vector.broadcast %cst_23 : f32 to vector<128x128xf32>
    %44 = arith.maximumf %42, %43 : vector<128x128xf32>
    %c160 = arith.constant 160 : index
    %c0_24 = arith.constant 0 : index
    %45 = vector.load %arg1[%c160, %c0_24] : memref<896x128xbf16, #tpu.memory_space<vmem>>, vector<48x128xbf16>
    %cst_25 = arith.constant dense<0.000000e+00> : vector<128x128xf32>
    %46 = tpu.matmul %1, %45, %cst_25 {dimension_numbers = #tpu.dot_dimension_numbers<[1], [0], [0], [1], [0, 0, 1, 1], [], []>} : vector<128x48xbf16>, vector<48x128xbf16>, vector<128x128xf32> -> vector<128x128xf32>
    %47 = arith.addf %46, %4 : vector<128x128xf32>
    %cst_26 = arith.constant 0.000000e+00 : f32
    %48 = vector.broadcast %cst_26 : f32 to vector<128x128xf32>
    %49 = arith.maximumf %47, %48 : vector<128x128xf32>
    %50 = arith.maximumf %44, %49 : vector<128x128xf32>
    %c176 = arith.constant 176 : index
    %c0_27 = arith.constant 0 : index
    %51 = vector.load %arg1[%c176, %c0_27] : memref<896x128xbf16, #tpu.memory_space<vmem>>, vector<48x128xbf16>
    %cst_28 = arith.constant dense<0.000000e+00> : vector<128x128xf32>
    %52 = tpu.matmul %1, %51, %cst_28 {dimension_numbers = #tpu.dot_dimension_numbers<[1], [0], [0], [1], [0, 0, 1, 1], [], []>} : vector<128x48xbf16>, vector<48x128xbf16>, vector<128x128xf32> -> vector<128x128xf32>
    %53 = arith.addf %52, %4 : vector<128x128xf32>
    %cst_29 = arith.constant 0.000000e+00 : f32
    %54 = vector.broadcast %cst_29 : f32 to vector<128x128xf32>
    %55 = arith.maximumf %53, %54 : vector<128x128xf32>
    %56 = arith.maximumf %50, %55 : vector<128x128xf32>
    %c192 = arith.constant 192 : index
    %c0_30 = arith.constant 0 : index
    %57 = vector.load %arg1[%c192, %c0_30] : memref<896x128xbf16, #tpu.memory_space<vmem>>, vector<48x128xbf16>
    %cst_31 = arith.constant dense<0.000000e+00> : vector<128x128xf32>
    %58 = tpu.matmul %1, %57, %cst_31 {dimension_numbers = #tpu.dot_dimension_numbers<[1], [0], [0], [1], [0, 0, 1, 1], [], []>} : vector<128x48xbf16>, vector<48x128xbf16>, vector<128x128xf32> -> vector<128x128xf32>
    %59 = arith.addf %58, %4 : vector<128x128xf32>
    %cst_32 = arith.constant 0.000000e+00 : f32
    %60 = vector.broadcast %cst_32 : f32 to vector<128x128xf32>
    %61 = arith.maximumf %59, %60 : vector<128x128xf32>
    %62 = arith.maximumf %56, %61 : vector<128x128xf32>
    %c208 = arith.constant 208 : index
    %c0_33 = arith.constant 0 : index
    %63 = vector.load %arg1[%c208, %c0_33] : memref<896x128xbf16, #tpu.memory_space<vmem>>, vector<48x128xbf16>
    %cst_34 = arith.constant dense<0.000000e+00> : vector<128x128xf32>
    %64 = tpu.matmul %1, %63, %cst_34 {dimension_numbers = #tpu.dot_dimension_numbers<[1], [0], [0], [1], [0, 0, 1, 1], [], []>} : vector<128x48xbf16>, vector<48x128xbf16>, vector<128x128xf32> -> vector<128x128xf32>
    %65 = arith.addf %64, %4 : vector<128x128xf32>
    %cst_35 = arith.constant 0.000000e+00 : f32
    %66 = vector.broadcast %cst_35 : f32 to vector<128x128xf32>
    %67 = arith.maximumf %65, %66 : vector<128x128xf32>
    %68 = arith.maximumf %62, %67 : vector<128x128xf32>
    %c224 = arith.constant 224 : index
    %c0_36 = arith.constant 0 : index
    %69 = vector.load %arg1[%c224, %c0_36] : memref<896x128xbf16, #tpu.memory_space<vmem>>, vector<48x128xbf16>
    %cst_37 = arith.constant dense<0.000000e+00> : vector<128x128xf32>
    %70 = tpu.matmul %1, %69, %cst_37 {dimension_numbers = #tpu.dot_dimension_numbers<[1], [0], [0], [1], [0, 0, 1, 1], [], []>} : vector<128x48xbf16>, vector<48x128xbf16>, vector<128x128xf32> -> vector<128x128xf32>
    %71 = arith.addf %70, %4 : vector<128x128xf32>
    %cst_38 = arith.constant 0.000000e+00 : f32
    %72 = vector.broadcast %cst_38 : f32 to vector<128x128xf32>
    %73 = arith.maximumf %71, %72 : vector<128x128xf32>
    %74 = arith.maximumf %68, %73 : vector<128x128xf32>
    %c240 = arith.constant 240 : index
    %c0_39 = arith.constant 0 : index
    %75 = vector.load %arg1[%c240, %c0_39] : memref<896x128xbf16, #tpu.memory_space<vmem>>, vector<48x128xbf16>
    %cst_40 = arith.constant dense<0.000000e+00> : vector<128x128xf32>
    %76 = tpu.matmul %1, %75, %cst_40 {dimension_numbers = #tpu.dot_dimension_numbers<[1], [0], [0], [1], [0, 0, 1, 1], [], []>} : vector<128x48xbf16>, vector<48x128xbf16>, vector<128x128xf32> -> vector<128x128xf32>
    %77 = arith.addf %76, %4 : vector<128x128xf32>
    %cst_41 = arith.constant 0.000000e+00 : f32
    %78 = vector.broadcast %cst_41 : f32 to vector<128x128xf32>
    %79 = arith.maximumf %77, %78 : vector<128x128xf32>
    %c256 = arith.constant 256 : index
    %c0_42 = arith.constant 0 : index
    %80 = vector.load %arg1[%c256, %c0_42] : memref<896x128xbf16, #tpu.memory_space<vmem>>, vector<48x128xbf16>
    %cst_43 = arith.constant dense<0.000000e+00> : vector<128x128xf32>
    %81 = tpu.matmul %1, %80, %cst_43 {dimension_numbers = #tpu.dot_dimension_numbers<[1], [0], [0], [1], [0, 0, 1, 1], [], []>} : vector<128x48xbf16>, vector<48x128xbf16>, vector<128x128xf32> -> vector<128x128xf32>
    %82 = arith.addf %81, %4 : vector<128x128xf32>
    %cst_44 = arith.constant 0.000000e+00 : f32
    %83 = vector.broadcast %cst_44 : f32 to vector<128x128xf32>
    %84 = arith.maximumf %82, %83 : vector<128x128xf32>
    %85 = arith.maximumf %79, %84 : vector<128x128xf32>
    %c272 = arith.constant 272 : index
    %c0_45 = arith.constant 0 : index
    %86 = vector.load %arg1[%c272, %c0_45] : memref<896x128xbf16, #tpu.memory_space<vmem>>, vector<48x128xbf16>
    %cst_46 = arith.constant dense<0.000000e+00> : vector<128x128xf32>
    %87 = tpu.matmul %1, %86, %cst_46 {dimension_numbers = #tpu.dot_dimension_numbers<[1], [0], [0], [1], [0, 0, 1, 1], [], []>} : vector<128x48xbf16>, vector<48x128xbf16>, vector<128x128xf32> -> vector<128x128xf32>
    %88 = arith.addf %87, %4 : vector<128x128xf32>
    %cst_47 = arith.constant 0.000000e+00 : f32
    %89 = vector.broadcast %cst_47 : f32 to vector<128x128xf32>
    %90 = arith.maximumf %88, %89 : vector<128x128xf32>
    %91 = arith.maximumf %85, %90 : vector<128x128xf32>
    %c288 = arith.constant 288 : index
    %c0_48 = arith.constant 0 : index
    %92 = vector.load %arg1[%c288, %c0_48] : memref<896x128xbf16, #tpu.memory_space<vmem>>, vector<48x128xbf16>
    %cst_49 = arith.constant dense<0.000000e+00> : vector<128x128xf32>
    %93 = tpu.matmul %1, %92, %cst_49 {dimension_numbers = #tpu.dot_dimension_numbers<[1], [0], [0], [1], [0, 0, 1, 1], [], []>} : vector<128x48xbf16>, vector<48x128xbf16>, vector<128x128xf32> -> vector<128x128xf32>
    %94 = arith.addf %93, %4 : vector<128x128xf32>
    %cst_50 = arith.constant 0.000000e+00 : f32
    %95 = vector.broadcast %cst_50 : f32 to vector<128x128xf32>
    %96 = arith.maximumf %94, %95 : vector<128x128xf32>
    %97 = arith.maximumf %91, %96 : vector<128x128xf32>
    %c304 = arith.constant 304 : index
    %c0_51 = arith.constant 0 : index
    %98 = vector.load %arg1[%c304, %c0_51] : memref<896x128xbf16, #tpu.memory_space<vmem>>, vector<48x128xbf16>
    %cst_52 = arith.constant dense<0.000000e+00> : vector<128x128xf32>
    %99 = tpu.matmul %1, %98, %cst_52 {dimension_numbers = #tpu.dot_dimension_numbers<[1], [0], [0], [1], [0, 0, 1, 1], [], []>} : vector<128x48xbf16>, vector<48x128xbf16>, vector<128x128xf32> -> vector<128x128xf32>
    %100 = arith.addf %99, %4 : vector<128x128xf32>
    %cst_53 = arith.constant 0.000000e+00 : f32
    %101 = vector.broadcast %cst_53 : f32 to vector<128x128xf32>
    %102 = arith.maximumf %100, %101 : vector<128x128xf32>
    %103 = arith.maximumf %97, %102 : vector<128x128xf32>
    %c320 = arith.constant 320 : index
    %c0_54 = arith.constant 0 : index
    %104 = vector.load %arg1[%c320, %c0_54] : memref<896x128xbf16, #tpu.memory_space<vmem>>, vector<48x128xbf16>
    %cst_55 = arith.constant dense<0.000000e+00> : vector<128x128xf32>
    %105 = tpu.matmul %1, %104, %cst_55 {dimension_numbers = #tpu.dot_dimension_numbers<[1], [0], [0], [1], [0, 0, 1, 1], [], []>} : vector<128x48xbf16>, vector<48x128xbf16>, vector<128x128xf32> -> vector<128x128xf32>
    %106 = arith.addf %105, %4 : vector<128x128xf32>
    %cst_56 = arith.constant 0.000000e+00 : f32
    %107 = vector.broadcast %cst_56 : f32 to vector<128x128xf32>
    %108 = arith.maximumf %106, %107 : vector<128x128xf32>
    %109 = arith.maximumf %103, %108 : vector<128x128xf32>
    %c336 = arith.constant 336 : index
    %c0_57 = arith.constant 0 : index
    %110 = vector.load %arg1[%c336, %c0_57] : memref<896x128xbf16, #tpu.memory_space<vmem>>, vector<48x128xbf16>
    %cst_58 = arith.constant dense<0.000000e+00> : vector<128x128xf32>
    %111 = tpu.matmul %1, %110, %cst_58 {dimension_numbers = #tpu.dot_dimension_numbers<[1], [0], [0], [1], [0, 0, 1, 1], [], []>} : vector<128x48xbf16>, vector<48x128xbf16>, vector<128x128xf32> -> vector<128x128xf32>
    %112 = arith.addf %111, %4 : vector<128x128xf32>
    %cst_59 = arith.constant 0.000000e+00 : f32
    %113 = vector.broadcast %cst_59 : f32 to vector<128x128xf32>
    %114 = arith.maximumf %112, %113 : vector<128x128xf32>
    %c352 = arith.constant 352 : index
    %c0_60 = arith.constant 0 : index
    %115 = vector.load %arg1[%c352, %c0_60] : memref<896x128xbf16, #tpu.memory_space<vmem>>, vector<48x128xbf16>
    %cst_61 = arith.constant dense<0.000000e+00> : vector<128x128xf32>
    %116 = tpu.matmul %1, %115, %cst_61 {dimension_numbers = #tpu.dot_dimension_numbers<[1], [0], [0], [1], [0, 0, 1, 1], [], []>} : vector<128x48xbf16>, vector<48x128xbf16>, vector<128x128xf32> -> vector<128x128xf32>
    %117 = arith.addf %116, %4 : vector<128x128xf32>
    %cst_62 = arith.constant 0.000000e+00 : f32
    %118 = vector.broadcast %cst_62 : f32 to vector<128x128xf32>
    %119 = arith.maximumf %117, %118 : vector<128x128xf32>
    %120 = arith.maximumf %114, %119 : vector<128x128xf32>
    %c368 = arith.constant 368 : index
    %c0_63 = arith.constant 0 : index
    %121 = vector.load %arg1[%c368, %c0_63] : memref<896x128xbf16, #tpu.memory_space<vmem>>, vector<48x128xbf16>
    %cst_64 = arith.constant dense<0.000000e+00> : vector<128x128xf32>
    %122 = tpu.matmul %1, %121, %cst_64 {dimension_numbers = #tpu.dot_dimension_numbers<[1], [0], [0], [1], [0, 0, 1, 1], [], []>} : vector<128x48xbf16>, vector<48x128xbf16>, vector<128x128xf32> -> vector<128x128xf32>
    %123 = arith.addf %122, %4 : vector<128x128xf32>
    %cst_65 = arith.constant 0.000000e+00 : f32
    %124 = vector.broadcast %cst_65 : f32 to vector<128x128xf32>
    %125 = arith.maximumf %123, %124 : vector<128x128xf32>
    %126 = arith.maximumf %120, %125 : vector<128x128xf32>
    %c384 = arith.constant 384 : index
    %c0_66 = arith.constant 0 : index
    %127 = vector.load %arg1[%c384, %c0_66] : memref<896x128xbf16, #tpu.memory_space<vmem>>, vector<48x128xbf16>
    %cst_67 = arith.constant dense<0.000000e+00> : vector<128x128xf32>
    %128 = tpu.matmul %1, %127, %cst_67 {dimension_numbers = #tpu.dot_dimension_numbers<[1], [0], [0], [1], [0, 0, 1, 1], [], []>} : vector<128x48xbf16>, vector<48x128xbf16>, vector<128x128xf32> -> vector<128x128xf32>
    %129 = arith.addf %128, %4 : vector<128x128xf32>
    %cst_68 = arith.constant 0.000000e+00 : f32
    %130 = vector.broadcast %cst_68 : f32 to vector<128x128xf32>
    %131 = arith.maximumf %129, %130 : vector<128x128xf32>
    %132 = arith.maximumf %126, %131 : vector<128x128xf32>
    %c400 = arith.constant 400 : index
    %c0_69 = arith.constant 0 : index
    %133 = vector.load %arg1[%c400, %c0_69] : memref<896x128xbf16, #tpu.memory_space<vmem>>, vector<48x128xbf16>
    %cst_70 = arith.constant dense<0.000000e+00> : vector<128x128xf32>
    %134 = tpu.matmul %1, %133, %cst_70 {dimension_numbers = #tpu.dot_dimension_numbers<[1], [0], [0], [1], [0, 0, 1, 1], [], []>} : vector<128x48xbf16>, vector<48x128xbf16>, vector<128x128xf32> -> vector<128x128xf32>
    %135 = arith.addf %134, %4 : vector<128x128xf32>
    %cst_71 = arith.constant 0.000000e+00 : f32
    %136 = vector.broadcast %cst_71 : f32 to vector<128x128xf32>
    %137 = arith.maximumf %135, %136 : vector<128x128xf32>
    %138 = arith.maximumf %132, %137 : vector<128x128xf32>
    %c416 = arith.constant 416 : index
    %c0_72 = arith.constant 0 : index
    %139 = vector.load %arg1[%c416, %c0_72] : memref<896x128xbf16, #tpu.memory_space<vmem>>, vector<48x128xbf16>
    %cst_73 = arith.constant dense<0.000000e+00> : vector<128x128xf32>
    %140 = tpu.matmul %1, %139, %cst_73 {dimension_numbers = #tpu.dot_dimension_numbers<[1], [0], [0], [1], [0, 0, 1, 1], [], []>} : vector<128x48xbf16>, vector<48x128xbf16>, vector<128x128xf32> -> vector<128x128xf32>
    %141 = arith.addf %140, %4 : vector<128x128xf32>
    %cst_74 = arith.constant 0.000000e+00 : f32
    %142 = vector.broadcast %cst_74 : f32 to vector<128x128xf32>
    %143 = arith.maximumf %141, %142 : vector<128x128xf32>
    %144 = arith.maximumf %138, %143 : vector<128x128xf32>
    %c432 = arith.constant 432 : index
    %c0_75 = arith.constant 0 : index
    %145 = vector.load %arg1[%c432, %c0_75] : memref<896x128xbf16, #tpu.memory_space<vmem>>, vector<48x128xbf16>
    %cst_76 = arith.constant dense<0.000000e+00> : vector<128x128xf32>
    %146 = tpu.matmul %1, %145, %cst_76 {dimension_numbers = #tpu.dot_dimension_numbers<[1], [0], [0], [1], [0, 0, 1, 1], [], []>} : vector<128x48xbf16>, vector<48x128xbf16>, vector<128x128xf32> -> vector<128x128xf32>
    %147 = arith.addf %146, %4 : vector<128x128xf32>
    %cst_77 = arith.constant 0.000000e+00 : f32
    %148 = vector.broadcast %cst_77 : f32 to vector<128x128xf32>
    %149 = arith.maximumf %147, %148 : vector<128x128xf32>
    %c448 = arith.constant 448 : index
    %c0_78 = arith.constant 0 : index
    %150 = vector.load %arg1[%c448, %c0_78] : memref<896x128xbf16, #tpu.memory_space<vmem>>, vector<48x128xbf16>
    %cst_79 = arith.constant dense<0.000000e+00> : vector<128x128xf32>
    %151 = tpu.matmul %1, %150, %cst_79 {dimension_numbers = #tpu.dot_dimension_numbers<[1], [0], [0], [1], [0, 0, 1, 1], [], []>} : vector<128x48xbf16>, vector<48x128xbf16>, vector<128x128xf32> -> vector<128x128xf32>
    %152 = arith.addf %151, %4 : vector<128x128xf32>
    %cst_80 = arith.constant 0.000000e+00 : f32
    %153 = vector.broadcast %cst_80 : f32 to vector<128x128xf32>
    %154 = arith.maximumf %152, %153 : vector<128x128xf32>
    %155 = arith.maximumf %149, %154 : vector<128x128xf32>
    %c464 = arith.constant 464 : index
    %c0_81 = arith.constant 0 : index
    %156 = vector.load %arg1[%c464, %c0_81] : memref<896x128xbf16, #tpu.memory_space<vmem>>, vector<48x128xbf16>
    %cst_82 = arith.constant dense<0.000000e+00> : vector<128x128xf32>
    %157 = tpu.matmul %1, %156, %cst_82 {dimension_numbers = #tpu.dot_dimension_numbers<[1], [0], [0], [1], [0, 0, 1, 1], [], []>} : vector<128x48xbf16>, vector<48x128xbf16>, vector<128x128xf32> -> vector<128x128xf32>
    %158 = arith.addf %157, %4 : vector<128x128xf32>
    %cst_83 = arith.constant 0.000000e+00 : f32
    %159 = vector.broadcast %cst_83 : f32 to vector<128x128xf32>
    %160 = arith.maximumf %158, %159 : vector<128x128xf32>
    %161 = arith.maximumf %155, %160 : vector<128x128xf32>
    %c480 = arith.constant 480 : index
    %c0_84 = arith.constant 0 : index
    %162 = vector.load %arg1[%c480, %c0_84] : memref<896x128xbf16, #tpu.memory_space<vmem>>, vector<48x128xbf16>
    %cst_85 = arith.constant dense<0.000000e+00> : vector<128x128xf32>
    %163 = tpu.matmul %1, %162, %cst_85 {dimension_numbers = #tpu.dot_dimension_numbers<[1], [0], [0], [1], [0, 0, 1, 1], [], []>} : vector<128x48xbf16>, vector<48x128xbf16>, vector<128x128xf32> -> vector<128x128xf32>
    %164 = arith.addf %163, %4 : vector<128x128xf32>
    %cst_86 = arith.constant 0.000000e+00 : f32
    %165 = vector.broadcast %cst_86 : f32 to vector<128x128xf32>
    %166 = arith.maximumf %164, %165 : vector<128x128xf32>
    %167 = arith.maximumf %161, %166 : vector<128x128xf32>
    %c496 = arith.constant 496 : index
    %c0_87 = arith.constant 0 : index
    %168 = vector.load %arg1[%c496, %c0_87] : memref<896x128xbf16, #tpu.memory_space<vmem>>, vector<48x128xbf16>
    %cst_88 = arith.constant dense<0.000000e+00> : vector<128x128xf32>
    %169 = tpu.matmul %1, %168, %cst_88 {dimension_numbers = #tpu.dot_dimension_numbers<[1], [0], [0], [1], [0, 0, 1, 1], [], []>} : vector<128x48xbf16>, vector<48x128xbf16>, vector<128x128xf32> -> vector<128x128xf32>
    %170 = arith.addf %169, %4 : vector<128x128xf32>
    %cst_89 = arith.constant 0.000000e+00 : f32
    %171 = vector.broadcast %cst_89 : f32 to vector<128x128xf32>
    %172 = arith.maximumf %170, %171 : vector<128x128xf32>
    %173 = arith.maximumf %167, %172 : vector<128x128xf32>
    %c512 = arith.constant 512 : index
    %c0_90 = arith.constant 0 : index
    %174 = vector.load %arg1[%c512, %c0_90] : memref<896x128xbf16, #tpu.memory_space<vmem>>, vector<48x128xbf16>
    %cst_91 = arith.constant dense<0.000000e+00> : vector<128x128xf32>
    %175 = tpu.matmul %1, %174, %cst_91 {dimension_numbers = #tpu.dot_dimension_numbers<[1], [0], [0], [1], [0, 0, 1, 1], [], []>} : vector<128x48xbf16>, vector<48x128xbf16>, vector<128x128xf32> -> vector<128x128xf32>
    %176 = arith.addf %175, %4 : vector<128x128xf32>
    %cst_92 = arith.constant 0.000000e+00 : f32
    %177 = vector.broadcast %cst_92 : f32 to vector<128x128xf32>
    %178 = arith.maximumf %176, %177 : vector<128x128xf32>
    %179 = arith.maximumf %173, %178 : vector<128x128xf32>
    %c528 = arith.constant 528 : index
    %c0_93 = arith.constant 0 : index
    %180 = vector.load %arg1[%c528, %c0_93] : memref<896x128xbf16, #tpu.memory_space<vmem>>, vector<48x128xbf16>
    %cst_94 = arith.constant dense<0.000000e+00> : vector<128x128xf32>
    %181 = tpu.matmul %1, %180, %cst_94 {dimension_numbers = #tpu.dot_dimension_numbers<[1], [0], [0], [1], [0, 0, 1, 1], [], []>} : vector<128x48xbf16>, vector<48x128xbf16>, vector<128x128xf32> -> vector<128x128xf32>
    %182 = arith.addf %181, %4 : vector<128x128xf32>
    %cst_95 = arith.constant 0.000000e+00 : f32
    %183 = vector.broadcast %cst_95 : f32 to vector<128x128xf32>
    %184 = arith.maximumf %182, %183 : vector<128x128xf32>
    %c544 = arith.constant 544 : index
    %c0_96 = arith.constant 0 : index
    %185 = vector.load %arg1[%c544, %c0_96] : memref<896x128xbf16, #tpu.memory_space<vmem>>, vector<48x128xbf16>
    %cst_97 = arith.constant dense<0.000000e+00> : vector<128x128xf32>
    %186 = tpu.matmul %1, %185, %cst_97 {dimension_numbers = #tpu.dot_dimension_numbers<[1], [0], [0], [1], [0, 0, 1, 1], [], []>} : vector<128x48xbf16>, vector<48x128xbf16>, vector<128x128xf32> -> vector<128x128xf32>
    %187 = arith.addf %186, %4 : vector<128x128xf32>
    %cst_98 = arith.constant 0.000000e+00 : f32
    %188 = vector.broadcast %cst_98 : f32 to vector<128x128xf32>
    %189 = arith.maximumf %187, %188 : vector<128x128xf32>
    %190 = arith.maximumf %184, %189 : vector<128x128xf32>
    %c560 = arith.constant 560 : index
    %c0_99 = arith.constant 0 : index
    %191 = vector.load %arg1[%c560, %c0_99] : memref<896x128xbf16, #tpu.memory_space<vmem>>, vector<48x128xbf16>
    %cst_100 = arith.constant dense<0.000000e+00> : vector<128x128xf32>
    %192 = tpu.matmul %1, %191, %cst_100 {dimension_numbers = #tpu.dot_dimension_numbers<[1], [0], [0], [1], [0, 0, 1, 1], [], []>} : vector<128x48xbf16>, vector<48x128xbf16>, vector<128x128xf32> -> vector<128x128xf32>
    %193 = arith.addf %192, %4 : vector<128x128xf32>
    %cst_101 = arith.constant 0.000000e+00 : f32
    %194 = vector.broadcast %cst_101 : f32 to vector<128x128xf32>
    %195 = arith.maximumf %193, %194 : vector<128x128xf32>
    %196 = arith.maximumf %190, %195 : vector<128x128xf32>
    %c576 = arith.constant 576 : index
    %c0_102 = arith.constant 0 : index
    %197 = vector.load %arg1[%c576, %c0_102] : memref<896x128xbf16, #tpu.memory_space<vmem>>, vector<48x128xbf16>
    %cst_103 = arith.constant dense<0.000000e+00> : vector<128x128xf32>
    %198 = tpu.matmul %1, %197, %cst_103 {dimension_numbers = #tpu.dot_dimension_numbers<[1], [0], [0], [1], [0, 0, 1, 1], [], []>} : vector<128x48xbf16>, vector<48x128xbf16>, vector<128x128xf32> -> vector<128x128xf32>
    %199 = arith.addf %198, %4 : vector<128x128xf32>
    %cst_104 = arith.constant 0.000000e+00 : f32
    %200 = vector.broadcast %cst_104 : f32 to vector<128x128xf32>
    %201 = arith.maximumf %199, %200 : vector<128x128xf32>
    %202 = arith.maximumf %196, %201 : vector<128x128xf32>
    %c592 = arith.constant 592 : index
    %c0_105 = arith.constant 0 : index
    %203 = vector.load %arg1[%c592, %c0_105] : memref<896x128xbf16, #tpu.memory_space<vmem>>, vector<48x128xbf16>
    %cst_106 = arith.constant dense<0.000000e+00> : vector<128x128xf32>
    %204 = tpu.matmul %1, %203, %cst_106 {dimension_numbers = #tpu.dot_dimension_numbers<[1], [0], [0], [1], [0, 0, 1, 1], [], []>} : vector<128x48xbf16>, vector<48x128xbf16>, vector<128x128xf32> -> vector<128x128xf32>
    %205 = arith.addf %204, %4 : vector<128x128xf32>
    %cst_107 = arith.constant 0.000000e+00 : f32
    %206 = vector.broadcast %cst_107 : f32 to vector<128x128xf32>
    %207 = arith.maximumf %205, %206 : vector<128x128xf32>
    %208 = arith.maximumf %202, %207 : vector<128x128xf32>
    %c608 = arith.constant 608 : index
    %c0_108 = arith.constant 0 : index
    %209 = vector.load %arg1[%c608, %c0_108] : memref<896x128xbf16, #tpu.memory_space<vmem>>, vector<48x128xbf16>
    %cst_109 = arith.constant dense<0.000000e+00> : vector<128x128xf32>
    %210 = tpu.matmul %1, %209, %cst_109 {dimension_numbers = #tpu.dot_dimension_numbers<[1], [0], [0], [1], [0, 0, 1, 1], [], []>} : vector<128x48xbf16>, vector<48x128xbf16>, vector<128x128xf32> -> vector<128x128xf32>
    %211 = arith.addf %210, %4 : vector<128x128xf32>
    %cst_110 = arith.constant 0.000000e+00 : f32
    %212 = vector.broadcast %cst_110 : f32 to vector<128x128xf32>
    %213 = arith.maximumf %211, %212 : vector<128x128xf32>
    %214 = arith.maximumf %208, %213 : vector<128x128xf32>
    %c624 = arith.constant 624 : index
    %c0_111 = arith.constant 0 : index
    %215 = vector.load %arg1[%c624, %c0_111] : memref<896x128xbf16, #tpu.memory_space<vmem>>, vector<48x128xbf16>
    %cst_112 = arith.constant dense<0.000000e+00> : vector<128x128xf32>
    %216 = tpu.matmul %1, %215, %cst_112 {dimension_numbers = #tpu.dot_dimension_numbers<[1], [0], [0], [1], [0, 0, 1, 1], [], []>} : vector<128x48xbf16>, vector<48x128xbf16>, vector<128x128xf32> -> vector<128x128xf32>
    %217 = arith.addf %216, %4 : vector<128x128xf32>
    %cst_113 = arith.constant 0.000000e+00 : f32
    %218 = vector.broadcast %cst_113 : f32 to vector<128x128xf32>
    %219 = arith.maximumf %217, %218 : vector<128x128xf32>
    %c640 = arith.constant 640 : index
    %c0_114 = arith.constant 0 : index
    %220 = vector.load %arg1[%c640, %c0_114] : memref<896x128xbf16, #tpu.memory_space<vmem>>, vector<48x128xbf16>
    %cst_115 = arith.constant dense<0.000000e+00> : vector<128x128xf32>
    %221 = tpu.matmul %1, %220, %cst_115 {dimension_numbers = #tpu.dot_dimension_numbers<[1], [0], [0], [1], [0, 0, 1, 1], [], []>} : vector<128x48xbf16>, vector<48x128xbf16>, vector<128x128xf32> -> vector<128x128xf32>
    %222 = arith.addf %221, %4 : vector<128x128xf32>
    %cst_116 = arith.constant 0.000000e+00 : f32
    %223 = vector.broadcast %cst_116 : f32 to vector<128x128xf32>
    %224 = arith.maximumf %222, %223 : vector<128x128xf32>
    %225 = arith.maximumf %219, %224 : vector<128x128xf32>
    %c656 = arith.constant 656 : index
    %c0_117 = arith.constant 0 : index
    %226 = vector.load %arg1[%c656, %c0_117] : memref<896x128xbf16, #tpu.memory_space<vmem>>, vector<48x128xbf16>
    %cst_118 = arith.constant dense<0.000000e+00> : vector<128x128xf32>
    %227 = tpu.matmul %1, %226, %cst_118 {dimension_numbers = #tpu.dot_dimension_numbers<[1], [0], [0], [1], [0, 0, 1, 1], [], []>} : vector<128x48xbf16>, vector<48x128xbf16>, vector<128x128xf32> -> vector<128x128xf32>
    %228 = arith.addf %227, %4 : vector<128x128xf32>
    %cst_119 = arith.constant 0.000000e+00 : f32
    %229 = vector.broadcast %cst_119 : f32 to vector<128x128xf32>
    %230 = arith.maximumf %228, %229 : vector<128x128xf32>
    %231 = arith.maximumf %225, %230 : vector<128x128xf32>
    %c672 = arith.constant 672 : index
    %c0_120 = arith.constant 0 : index
    %232 = vector.load %arg1[%c672, %c0_120] : memref<896x128xbf16, #tpu.memory_space<vmem>>, vector<48x128xbf16>
    %cst_121 = arith.constant dense<0.000000e+00> : vector<128x128xf32>
    %233 = tpu.matmul %1, %232, %cst_121 {dimension_numbers = #tpu.dot_dimension_numbers<[1], [0], [0], [1], [0, 0, 1, 1], [], []>} : vector<128x48xbf16>, vector<48x128xbf16>, vector<128x128xf32> -> vector<128x128xf32>
    %234 = arith.addf %233, %4 : vector<128x128xf32>
    %cst_122 = arith.constant 0.000000e+00 : f32
    %235 = vector.broadcast %cst_122 : f32 to vector<128x128xf32>
    %236 = arith.maximumf %234, %235 : vector<128x128xf32>
    %237 = arith.maximumf %231, %236 : vector<128x128xf32>
    %c688 = arith.constant 688 : index
    %c0_123 = arith.constant 0 : index
    %238 = vector.load %arg1[%c688, %c0_123] : memref<896x128xbf16, #tpu.memory_space<vmem>>, vector<48x128xbf16>
    %cst_124 = arith.constant dense<0.000000e+00> : vector<128x128xf32>
    %239 = tpu.matmul %1, %238, %cst_124 {dimension_numbers = #tpu.dot_dimension_numbers<[1], [0], [0], [1], [0, 0, 1, 1], [], []>} : vector<128x48xbf16>, vector<48x128xbf16>, vector<128x128xf32> -> vector<128x128xf32>
    %240 = arith.addf %239, %4 : vector<128x128xf32>
    %cst_125 = arith.constant 0.000000e+00 : f32
    %241 = vector.broadcast %cst_125 : f32 to vector<128x128xf32>
    %242 = arith.maximumf %240, %241 : vector<128x128xf32>
    %243 = arith.maximumf %237, %242 : vector<128x128xf32>
    %c704 = arith.constant 704 : index
    %c0_126 = arith.constant 0 : index
    %244 = vector.load %arg1[%c704, %c0_126] : memref<896x128xbf16, #tpu.memory_space<vmem>>, vector<48x128xbf16>
    %cst_127 = arith.constant dense<0.000000e+00> : vector<128x128xf32>
    %245 = tpu.matmul %1, %244, %cst_127 {dimension_numbers = #tpu.dot_dimension_numbers<[1], [0], [0], [1], [0, 0, 1, 1], [], []>} : vector<128x48xbf16>, vector<48x128xbf16>, vector<128x128xf32> -> vector<128x128xf32>
    %246 = arith.addf %245, %4 : vector<128x128xf32>
    %cst_128 = arith.constant 0.000000e+00 : f32
    %247 = vector.broadcast %cst_128 : f32 to vector<128x128xf32>
    %248 = arith.maximumf %246, %247 : vector<128x128xf32>
    %249 = arith.maximumf %243, %248 : vector<128x128xf32>
    %c720 = arith.constant 720 : index
    %c0_129 = arith.constant 0 : index
    %250 = vector.load %arg1[%c720, %c0_129] : memref<896x128xbf16, #tpu.memory_space<vmem>>, vector<48x128xbf16>
    %cst_130 = arith.constant dense<0.000000e+00> : vector<128x128xf32>
    %251 = tpu.matmul %1, %250, %cst_130 {dimension_numbers = #tpu.dot_dimension_numbers<[1], [0], [0], [1], [0, 0, 1, 1], [], []>} : vector<128x48xbf16>, vector<48x128xbf16>, vector<128x128xf32> -> vector<128x128xf32>
    %252 = arith.addf %251, %4 : vector<128x128xf32>
    %cst_131 = arith.constant 0.000000e+00 : f32
    %253 = vector.broadcast %cst_131 : f32 to vector<128x128xf32>
    %254 = arith.maximumf %252, %253 : vector<128x128xf32>
    %c736 = arith.constant 736 : index
    %c0_132 = arith.constant 0 : index
    %255 = vector.load %arg1[%c736, %c0_132] : memref<896x128xbf16, #tpu.memory_space<vmem>>, vector<48x128xbf16>
    %cst_133 = arith.constant dense<0.000000e+00> : vector<128x128xf32>
    %256 = tpu.matmul %1, %255, %cst_133 {dimension_numbers = #tpu.dot_dimension_numbers<[1], [0], [0], [1], [0, 0, 1, 1], [], []>} : vector<128x48xbf16>, vector<48x128xbf16>, vector<128x128xf32> -> vector<128x128xf32>
    %257 = arith.addf %256, %4 : vector<128x128xf32>
    %cst_134 = arith.constant 0.000000e+00 : f32
    %258 = vector.broadcast %cst_134 : f32 to vector<128x128xf32>
    %259 = arith.maximumf %257, %258 : vector<128x128xf32>
    %260 = arith.maximumf %254, %259 : vector<128x128xf32>
    %c752 = arith.constant 752 : index
    %c0_135 = arith.constant 0 : index
    %261 = vector.load %arg1[%c752, %c0_135] : memref<896x128xbf16, #tpu.memory_space<vmem>>, vector<48x128xbf16>
    %cst_136 = arith.constant dense<0.000000e+00> : vector<128x128xf32>
    %262 = tpu.matmul %1, %261, %cst_136 {dimension_numbers = #tpu.dot_dimension_numbers<[1], [0], [0], [1], [0, 0, 1, 1], [], []>} : vector<128x48xbf16>, vector<48x128xbf16>, vector<128x128xf32> -> vector<128x128xf32>
    %263 = arith.addf %262, %4 : vector<128x128xf32>
    %cst_137 = arith.constant 0.000000e+00 : f32
    %264 = vector.broadcast %cst_137 : f32 to vector<128x128xf32>
    %265 = arith.maximumf %263, %264 : vector<128x128xf32>
    %266 = arith.maximumf %260, %265 : vector<128x128xf32>
    %c768 = arith.constant 768 : index
    %c0_138 = arith.constant 0 : index
    %267 = vector.load %arg1[%c768, %c0_138] : memref<896x128xbf16, #tpu.memory_space<vmem>>, vector<48x128xbf16>
    %cst_139 = arith.constant dense<0.000000e+00> : vector<128x128xf32>
    %268 = tpu.matmul %1, %267, %cst_139 {dimension_numbers = #tpu.dot_dimension_numbers<[1], [0], [0], [1], [0, 0, 1, 1], [], []>} : vector<128x48xbf16>, vector<48x128xbf16>, vector<128x128xf32> -> vector<128x128xf32>
    %269 = arith.addf %268, %4 : vector<128x128xf32>
    %cst_140 = arith.constant 0.000000e+00 : f32
    %270 = vector.broadcast %cst_140 : f32 to vector<128x128xf32>
    %271 = arith.maximumf %269, %270 : vector<128x128xf32>
    %272 = arith.maximumf %266, %271 : vector<128x128xf32>
    %c784 = arith.constant 784 : index
    %c0_141 = arith.constant 0 : index
    %273 = vector.load %arg1[%c784, %c0_141] : memref<896x128xbf16, #tpu.memory_space<vmem>>, vector<48x128xbf16>
    %cst_142 = arith.constant dense<0.000000e+00> : vector<128x128xf32>
    %274 = tpu.matmul %1, %273, %cst_142 {dimension_numbers = #tpu.dot_dimension_numbers<[1], [0], [0], [1], [0, 0, 1, 1], [], []>} : vector<128x48xbf16>, vector<48x128xbf16>, vector<128x128xf32> -> vector<128x128xf32>
    %275 = arith.addf %274, %4 : vector<128x128xf32>
    %cst_143 = arith.constant 0.000000e+00 : f32
    %276 = vector.broadcast %cst_143 : f32 to vector<128x128xf32>
    %277 = arith.maximumf %275, %276 : vector<128x128xf32>
    %278 = arith.maximumf %272, %277 : vector<128x128xf32>
    %c800 = arith.constant 800 : index
    %c0_144 = arith.constant 0 : index
    %279 = vector.load %arg1[%c800, %c0_144] : memref<896x128xbf16, #tpu.memory_space<vmem>>, vector<48x128xbf16>
    %cst_145 = arith.constant dense<0.000000e+00> : vector<128x128xf32>
    %280 = tpu.matmul %1, %279, %cst_145 {dimension_numbers = #tpu.dot_dimension_numbers<[1], [0], [0], [1], [0, 0, 1, 1], [], []>} : vector<128x48xbf16>, vector<48x128xbf16>, vector<128x128xf32> -> vector<128x128xf32>
    %281 = arith.addf %280, %4 : vector<128x128xf32>
    %cst_146 = arith.constant 0.000000e+00 : f32
    %282 = vector.broadcast %cst_146 : f32 to vector<128x128xf32>
    %283 = arith.maximumf %281, %282 : vector<128x128xf32>
    %284 = arith.maximumf %278, %283 : vector<128x128xf32>
    %285 = arith.addf %39, %74 : vector<128x128xf32>
    %286 = vector.extract_strided_slice %285 {offsets = [0, 0], sizes = [64, 128], strides = [1, 1]} : vector<128x128xf32> to vector<64x128xf32>
    %287 = vector.extract_strided_slice %285 {offsets = [64, 0], sizes = [64, 128], strides = [1, 1]} : vector<128x128xf32> to vector<64x128xf32>
    %288 = arith.addf %286, %287 : vector<64x128xf32>
    %cst_147 = arith.constant 2.500000e-01 : f32
    %289 = vector.broadcast %cst_147 : f32 to vector<64x128xf32>
    %290 = arith.mulf %288, %289 : vector<64x128xf32>
    %291 = arith.truncf %290 : vector<64x128xf32> to vector<64x128xbf16>
    %c0_148 = arith.constant 0 : index
    %c0_149 = arith.constant 0 : index
    %292 = vector.load %arg6[%c0_148, %c0_149] : memref<96x64xbf16, #tpu.memory_space<vmem>>, vector<8x64xbf16>
    %cst_150 = arith.constant dense<0.000000e+00> : vector<8x128xf32>
    %293 = tpu.matmul %292, %291, %cst_150 {dimension_numbers = #tpu.dot_dimension_numbers<[1], [0], [0], [1], [0, 0, 1, 1], [], []>} : vector<8x64xbf16>, vector<64x128xbf16>, vector<8x128xf32> -> vector<8x128xf32>
    %294 = arith.addf %0, %293 : vector<8x128xf32>
    %295 = arith.addf %109, %144 : vector<128x128xf32>
    %296 = vector.extract_strided_slice %295 {offsets = [0, 0], sizes = [64, 128], strides = [1, 1]} : vector<128x128xf32> to vector<64x128xf32>
    %297 = vector.extract_strided_slice %295 {offsets = [64, 0], sizes = [64, 128], strides = [1, 1]} : vector<128x128xf32> to vector<64x128xf32>
    %298 = arith.addf %296, %297 : vector<64x128xf32>
    %cst_151 = arith.constant 2.500000e-01 : f32
    %299 = vector.broadcast %cst_151 : f32 to vector<64x128xf32>
    %300 = arith.mulf %298, %299 : vector<64x128xf32>
    %301 = arith.truncf %300 : vector<64x128xf32> to vector<64x128xbf16>
    %c8 = arith.constant 8 : index
    %c0_152 = arith.constant 0 : index
    %302 = vector.load %arg6[%c8, %c0_152] : memref<96x64xbf16, #tpu.memory_space<vmem>>, vector<8x64xbf16>
    %cst_153 = arith.constant dense<0.000000e+00> : vector<8x128xf32>
    %303 = tpu.matmul %302, %301, %cst_153 {dimension_numbers = #tpu.dot_dimension_numbers<[1], [0], [0], [1], [0, 0, 1, 1], [], []>} : vector<8x64xbf16>, vector<64x128xbf16>, vector<8x128xf32> -> vector<8x128xf32>
    %304 = arith.addf %294, %303 : vector<8x128xf32>
    %305 = arith.addf %179, %214 : vector<128x128xf32>
    %306 = vector.extract_strided_slice %305 {offsets = [0, 0], sizes = [64, 128], strides = [1, 1]} : vector<128x128xf32> to vector<64x128xf32>
    %307 = vector.extract_strided_slice %305 {offsets = [64, 0], sizes = [64, 128], strides = [1, 1]} : vector<128x128xf32> to vector<64x128xf32>
    %308 = arith.addf %306, %307 : vector<64x128xf32>
    %cst_154 = arith.constant 2.500000e-01 : f32
    %309 = vector.broadcast %cst_154 : f32 to vector<64x128xf32>
    %310 = arith.mulf %308, %309 : vector<64x128xf32>
    %311 = arith.truncf %310 : vector<64x128xf32> to vector<64x128xbf16>
    %c16 = arith.constant 16 : index
    %c0_155 = arith.constant 0 : index
    %312 = vector.load %arg6[%c16, %c0_155] : memref<96x64xbf16, #tpu.memory_space<vmem>>, vector<8x64xbf16>
    %cst_156 = arith.constant dense<0.000000e+00> : vector<8x128xf32>
    %313 = tpu.matmul %312, %311, %cst_156 {dimension_numbers = #tpu.dot_dimension_numbers<[1], [0], [0], [1], [0, 0, 1, 1], [], []>} : vector<8x64xbf16>, vector<64x128xbf16>, vector<8x128xf32> -> vector<8x128xf32>
    %314 = arith.addf %304, %313 : vector<8x128xf32>
    %315 = arith.addf %249, %284 : vector<128x128xf32>
    %316 = vector.extract_strided_slice %315 {offsets = [0, 0], sizes = [64, 128], strides = [1, 1]} : vector<128x128xf32> to vector<64x128xf32>
    %317 = vector.extract_strided_slice %315 {offsets = [64, 0], sizes = [64, 128], strides = [1, 1]} : vector<128x128xf32> to vector<64x128xf32>
    %318 = arith.addf %316, %317 : vector<64x128xf32>
    %cst_157 = arith.constant 2.500000e-01 : f32
    %319 = vector.broadcast %cst_157 : f32 to vector<64x128xf32>
    %320 = arith.mulf %318, %319 : vector<64x128xf32>
    %321 = arith.truncf %320 : vector<64x128xf32> to vector<64x128xbf16>
    %c24 = arith.constant 24 : index
    %c0_158 = arith.constant 0 : index
    %322 = vector.load %arg6[%c24, %c0_158] : memref<96x64xbf16, #tpu.memory_space<vmem>>, vector<8x64xbf16>
    %cst_159 = arith.constant dense<0.000000e+00> : vector<8x128xf32>
    %323 = tpu.matmul %322, %321, %cst_159 {dimension_numbers = #tpu.dot_dimension_numbers<[1], [0], [0], [1], [0, 0, 1, 1], [], []>} : vector<8x64xbf16>, vector<64x128xbf16>, vector<8x128xf32> -> vector<8x128xf32>
    %324 = arith.addf %314, %323 : vector<8x128xf32>
    %c0_160 = arith.constant 0 : index
    %c0_161 = arith.constant 0 : index
    %325 = vector.load %arg3[%c0_160, %c0_161] : memref<128x96xbf16, #tpu.memory_space<vmem>>, vector<128x96xbf16>
    %c128_162 = arith.constant 128 : index
    %c0_163 = arith.constant 0 : index
    %326 = vector.load %arg5[%c128_162, %c0_163] : memref<384x1xf32, #tpu.memory_space<vmem>>, vector<128x1xf32>
    %327 = vector.shape_cast %326 : vector<128x1xf32> to vector<128x1xf32>
    %328 = vector.broadcast %327 : vector<128x1xf32> to vector<128x128xf32>
    %c32 = arith.constant 32 : index
    %c0_164 = arith.constant 0 : index
    %329 = vector.load %arg1[%c32, %c0_164] : memref<896x128xbf16, #tpu.memory_space<vmem>>, vector<96x128xbf16>
    %cst_165 = arith.constant dense<0.000000e+00> : vector<128x128xf32>
    %330 = tpu.matmul %325, %329, %cst_165 {dimension_numbers = #tpu.dot_dimension_numbers<[1], [0], [0], [1], [0, 0, 1, 1], [], []>} : vector<128x96xbf16>, vector<96x128xbf16>, vector<128x128xf32> -> vector<128x128xf32>
    %331 = arith.addf %330, %328 : vector<128x128xf32>
    %cst_166 = arith.constant 0.000000e+00 : f32
    %332 = vector.broadcast %cst_166 : f32 to vector<128x128xf32>
    %333 = arith.maximumf %331, %332 : vector<128x128xf32>
    %c80_167 = arith.constant 80 : index
    %c0_168 = arith.constant 0 : index
    %334 = vector.load %arg1[%c80_167, %c0_168] : memref<896x128xbf16, #tpu.memory_space<vmem>>, vector<96x128xbf16>
    %cst_169 = arith.constant dense<0.000000e+00> : vector<128x128xf32>
    %335 = tpu.matmul %325, %334, %cst_169 {dimension_numbers = #tpu.dot_dimension_numbers<[1], [0], [0], [1], [0, 0, 1, 1], [], []>} : vector<128x96xbf16>, vector<96x128xbf16>, vector<128x128xf32> -> vector<128x128xf32>
    %336 = arith.addf %335, %328 : vector<128x128xf32>
    %cst_170 = arith.constant 0.000000e+00 : f32
    %337 = vector.broadcast %cst_170 : f32 to vector<128x128xf32>
    %338 = arith.maximumf %336, %337 : vector<128x128xf32>
    %339 = arith.maximumf %333, %338 : vector<128x128xf32>
    %c128_171 = arith.constant 128 : index
    %c0_172 = arith.constant 0 : index
    %340 = vector.load %arg1[%c128_171, %c0_172] : memref<896x128xbf16, #tpu.memory_space<vmem>>, vector<96x128xbf16>
    %cst_173 = arith.constant dense<0.000000e+00> : vector<128x128xf32>
    %341 = tpu.matmul %325, %340, %cst_173 {dimension_numbers = #tpu.dot_dimension_numbers<[1], [0], [0], [1], [0, 0, 1, 1], [], []>} : vector<128x96xbf16>, vector<96x128xbf16>, vector<128x128xf32> -> vector<128x128xf32>
    %342 = arith.addf %341, %328 : vector<128x128xf32>
    %cst_174 = arith.constant 0.000000e+00 : f32
    %343 = vector.broadcast %cst_174 : f32 to vector<128x128xf32>
    %344 = arith.maximumf %342, %343 : vector<128x128xf32>
    %c176_175 = arith.constant 176 : index
    %c0_176 = arith.constant 0 : index
    %345 = vector.load %arg1[%c176_175, %c0_176] : memref<896x128xbf16, #tpu.memory_space<vmem>>, vector<96x128xbf16>
    %cst_177 = arith.constant dense<0.000000e+00> : vector<128x128xf32>
    %346 = tpu.matmul %325, %345, %cst_177 {dimension_numbers = #tpu.dot_dimension_numbers<[1], [0], [0], [1], [0, 0, 1, 1], [], []>} : vector<128x96xbf16>, vector<96x128xbf16>, vector<128x128xf32> -> vector<128x128xf32>
    %347 = arith.addf %346, %328 : vector<128x128xf32>
    %cst_178 = arith.constant 0.000000e+00 : f32
    %348 = vector.broadcast %cst_178 : f32 to vector<128x128xf32>
    %349 = arith.maximumf %347, %348 : vector<128x128xf32>
    %350 = arith.maximumf %344, %349 : vector<128x128xf32>
    %c224_179 = arith.constant 224 : index
    %c0_180 = arith.constant 0 : index
    %351 = vector.load %arg1[%c224_179, %c0_180] : memref<896x128xbf16, #tpu.memory_space<vmem>>, vector<96x128xbf16>
    %cst_181 = arith.constant dense<0.000000e+00> : vector<128x128xf32>
    %352 = tpu.matmul %325, %351, %cst_181 {dimension_numbers = #tpu.dot_dimension_numbers<[1], [0], [0], [1], [0, 0, 1, 1], [], []>} : vector<128x96xbf16>, vector<96x128xbf16>, vector<128x128xf32> -> vector<128x128xf32>
    %353 = arith.addf %352, %328 : vector<128x128xf32>
    %cst_182 = arith.constant 0.000000e+00 : f32
    %354 = vector.broadcast %cst_182 : f32 to vector<128x128xf32>
    %355 = arith.maximumf %353, %354 : vector<128x128xf32>
    %c272_183 = arith.constant 272 : index
    %c0_184 = arith.constant 0 : index
    %356 = vector.load %arg1[%c272_183, %c0_184] : memref<896x128xbf16, #tpu.memory_space<vmem>>, vector<96x128xbf16>
    %cst_185 = arith.constant dense<0.000000e+00> : vector<128x128xf32>
    %357 = tpu.matmul %325, %356, %cst_185 {dimension_numbers = #tpu.dot_dimension_numbers<[1], [0], [0], [1], [0, 0, 1, 1], [], []>} : vector<128x96xbf16>, vector<96x128xbf16>, vector<128x128xf32> -> vector<128x128xf32>
    %358 = arith.addf %357, %328 : vector<128x128xf32>
    %cst_186 = arith.constant 0.000000e+00 : f32
    %359 = vector.broadcast %cst_186 : f32 to vector<128x128xf32>
    %360 = arith.maximumf %358, %359 : vector<128x128xf32>
    %361 = arith.maximumf %355, %360 : vector<128x128xf32>
    %c320_187 = arith.constant 320 : index
    %c0_188 = arith.constant 0 : index
    %362 = vector.load %arg1[%c320_187, %c0_188] : memref<896x128xbf16, #tpu.memory_space<vmem>>, vector<96x128xbf16>
    %cst_189 = arith.constant dense<0.000000e+00> : vector<128x128xf32>
    %363 = tpu.matmul %325, %362, %cst_189 {dimension_numbers = #tpu.dot_dimension_numbers<[1], [0], [0], [1], [0, 0, 1, 1], [], []>} : vector<128x96xbf16>, vector<96x128xbf16>, vector<128x128xf32> -> vector<128x128xf32>
    %364 = arith.addf %363, %328 : vector<128x128xf32>
    %cst_190 = arith.constant 0.000000e+00 : f32
    %365 = vector.broadcast %cst_190 : f32 to vector<128x128xf32>
    %366 = arith.maximumf %364, %365 : vector<128x128xf32>
    %c368_191 = arith.constant 368 : index
    %c0_192 = arith.constant 0 : index
    %367 = vector.load %arg1[%c368_191, %c0_192] : memref<896x128xbf16, #tpu.memory_space<vmem>>, vector<96x128xbf16>
    %cst_193 = arith.constant dense<0.000000e+00> : vector<128x128xf32>
    %368 = tpu.matmul %325, %367, %cst_193 {dimension_numbers = #tpu.dot_dimension_numbers<[1], [0], [0], [1], [0, 0, 1, 1], [], []>} : vector<128x96xbf16>, vector<96x128xbf16>, vector<128x128xf32> -> vector<128x128xf32>
    %369 = arith.addf %368, %328 : vector<128x128xf32>
    %cst_194 = arith.constant 0.000000e+00 : f32
    %370 = vector.broadcast %cst_194 : f32 to vector<128x128xf32>
    %371 = arith.maximumf %369, %370 : vector<128x128xf32>
    %372 = arith.maximumf %366, %371 : vector<128x128xf32>
    %c416_195 = arith.constant 416 : index
    %c0_196 = arith.constant 0 : index
    %373 = vector.load %arg1[%c416_195, %c0_196] : memref<896x128xbf16, #tpu.memory_space<vmem>>, vector<96x128xbf16>
    %cst_197 = arith.constant dense<0.000000e+00> : vector<128x128xf32>
    %374 = tpu.matmul %325, %373, %cst_197 {dimension_numbers = #tpu.dot_dimension_numbers<[1], [0], [0], [1], [0, 0, 1, 1], [], []>} : vector<128x96xbf16>, vector<96x128xbf16>, vector<128x128xf32> -> vector<128x128xf32>
    %375 = arith.addf %374, %328 : vector<128x128xf32>
    %cst_198 = arith.constant 0.000000e+00 : f32
    %376 = vector.broadcast %cst_198 : f32 to vector<128x128xf32>
    %377 = arith.maximumf %375, %376 : vector<128x128xf32>
    %c464_199 = arith.constant 464 : index
    %c0_200 = arith.constant 0 : index
    %378 = vector.load %arg1[%c464_199, %c0_200] : memref<896x128xbf16, #tpu.memory_space<vmem>>, vector<96x128xbf16>
    %cst_201 = arith.constant dense<0.000000e+00> : vector<128x128xf32>
    %379 = tpu.matmul %325, %378, %cst_201 {dimension_numbers = #tpu.dot_dimension_numbers<[1], [0], [0], [1], [0, 0, 1, 1], [], []>} : vector<128x96xbf16>, vector<96x128xbf16>, vector<128x128xf32> -> vector<128x128xf32>
    %380 = arith.addf %379, %328 : vector<128x128xf32>
    %cst_202 = arith.constant 0.000000e+00 : f32
    %381 = vector.broadcast %cst_202 : f32 to vector<128x128xf32>
    %382 = arith.maximumf %380, %381 : vector<128x128xf32>
    %383 = arith.maximumf %377, %382 : vector<128x128xf32>
    %c512_203 = arith.constant 512 : index
    %c0_204 = arith.constant 0 : index
    %384 = vector.load %arg1[%c512_203, %c0_204] : memref<896x128xbf16, #tpu.memory_space<vmem>>, vector<96x128xbf16>
    %cst_205 = arith.constant dense<0.000000e+00> : vector<128x128xf32>
    %385 = tpu.matmul %325, %384, %cst_205 {dimension_numbers = #tpu.dot_dimension_numbers<[1], [0], [0], [1], [0, 0, 1, 1], [], []>} : vector<128x96xbf16>, vector<96x128xbf16>, vector<128x128xf32> -> vector<128x128xf32>
    %386 = arith.addf %385, %328 : vector<128x128xf32>
    %cst_206 = arith.constant 0.000000e+00 : f32
    %387 = vector.broadcast %cst_206 : f32 to vector<128x128xf32>
    %388 = arith.maximumf %386, %387 : vector<128x128xf32>
    %c560_207 = arith.constant 560 : index
    %c0_208 = arith.constant 0 : index
    %389 = vector.load %arg1[%c560_207, %c0_208] : memref<896x128xbf16, #tpu.memory_space<vmem>>, vector<96x128xbf16>
    %cst_209 = arith.constant dense<0.000000e+00> : vector<128x128xf32>
    %390 = tpu.matmul %325, %389, %cst_209 {dimension_numbers = #tpu.dot_dimension_numbers<[1], [0], [0], [1], [0, 0, 1, 1], [], []>} : vector<128x96xbf16>, vector<96x128xbf16>, vector<128x128xf32> -> vector<128x128xf32>
    %391 = arith.addf %390, %328 : vector<128x128xf32>
    %cst_210 = arith.constant 0.000000e+00 : f32
    %392 = vector.broadcast %cst_210 : f32 to vector<128x128xf32>
    %393 = arith.maximumf %391, %392 : vector<128x128xf32>
    %394 = arith.maximumf %388, %393 : vector<128x128xf32>
    %c608_211 = arith.constant 608 : index
    %c0_212 = arith.constant 0 : index
    %395 = vector.load %arg1[%c608_211, %c0_212] : memref<896x128xbf16, #tpu.memory_space<vmem>>, vector<96x128xbf16>
    %cst_213 = arith.constant dense<0.000000e+00> : vector<128x128xf32>
    %396 = tpu.matmul %325, %395, %cst_213 {dimension_numbers = #tpu.dot_dimension_numbers<[1], [0], [0], [1], [0, 0, 1, 1], [], []>} : vector<128x96xbf16>, vector<96x128xbf16>, vector<128x128xf32> -> vector<128x128xf32>
    %397 = arith.addf %396, %328 : vector<128x128xf32>
    %cst_214 = arith.constant 0.000000e+00 : f32
    %398 = vector.broadcast %cst_214 : f32 to vector<128x128xf32>
    %399 = arith.maximumf %397, %398 : vector<128x128xf32>
    %c656_215 = arith.constant 656 : index
    %c0_216 = arith.constant 0 : index
    %400 = vector.load %arg1[%c656_215, %c0_216] : memref<896x128xbf16, #tpu.memory_space<vmem>>, vector<96x128xbf16>
    %cst_217 = arith.constant dense<0.000000e+00> : vector<128x128xf32>
    %401 = tpu.matmul %325, %400, %cst_217 {dimension_numbers = #tpu.dot_dimension_numbers<[1], [0], [0], [1], [0, 0, 1, 1], [], []>} : vector<128x96xbf16>, vector<96x128xbf16>, vector<128x128xf32> -> vector<128x128xf32>
    %402 = arith.addf %401, %328 : vector<128x128xf32>
    %cst_218 = arith.constant 0.000000e+00 : f32
    %403 = vector.broadcast %cst_218 : f32 to vector<128x128xf32>
    %404 = arith.maximumf %402, %403 : vector<128x128xf32>
    %405 = arith.maximumf %399, %404 : vector<128x128xf32>
    %c704_219 = arith.constant 704 : index
    %c0_220 = arith.constant 0 : index
    %406 = vector.load %arg1[%c704_219, %c0_220] : memref<896x128xbf16, #tpu.memory_space<vmem>>, vector<96x128xbf16>
    %cst_221 = arith.constant dense<0.000000e+00> : vector<128x128xf32>
    %407 = tpu.matmul %325, %406, %cst_221 {dimension_numbers = #tpu.dot_dimension_numbers<[1], [0], [0], [1], [0, 0, 1, 1], [], []>} : vector<128x96xbf16>, vector<96x128xbf16>, vector<128x128xf32> -> vector<128x128xf32>
    %408 = arith.addf %407, %328 : vector<128x128xf32>
    %cst_222 = arith.constant 0.000000e+00 : f32
    %409 = vector.broadcast %cst_222 : f32 to vector<128x128xf32>
    %410 = arith.maximumf %408, %409 : vector<128x128xf32>
    %c752_223 = arith.constant 752 : index
    %c0_224 = arith.constant 0 : index
    %411 = vector.load %arg1[%c752_223, %c0_224] : memref<896x128xbf16, #tpu.memory_space<vmem>>, vector<96x128xbf16>
    %cst_225 = arith.constant dense<0.000000e+00> : vector<128x128xf32>
    %412 = tpu.matmul %325, %411, %cst_225 {dimension_numbers = #tpu.dot_dimension_numbers<[1], [0], [0], [1], [0, 0, 1, 1], [], []>} : vector<128x96xbf16>, vector<96x128xbf16>, vector<128x128xf32> -> vector<128x128xf32>
    %413 = arith.addf %412, %328 : vector<128x128xf32>
    %cst_226 = arith.constant 0.000000e+00 : f32
    %414 = vector.broadcast %cst_226 : f32 to vector<128x128xf32>
    %415 = arith.maximumf %413, %414 : vector<128x128xf32>
    %416 = arith.maximumf %410, %415 : vector<128x128xf32>
    %417 = arith.addf %339, %350 : vector<128x128xf32>
    %418 = vector.extract_strided_slice %417 {offsets = [0, 0], sizes = [64, 128], strides = [1, 1]} : vector<128x128xf32> to vector<64x128xf32>
    %419 = vector.extract_strided_slice %417 {offsets = [64, 0], sizes = [64, 128], strides = [1, 1]} : vector<128x128xf32> to vector<64x128xf32>
    %420 = arith.addf %418, %419 : vector<64x128xf32>
    %cst_227 = arith.constant 2.500000e-01 : f32
    %421 = vector.broadcast %cst_227 : f32 to vector<64x128xf32>
    %422 = arith.mulf %420, %421 : vector<64x128xf32>
    %423 = arith.truncf %422 : vector<64x128xf32> to vector<64x128xbf16>
    %c32_228 = arith.constant 32 : index
    %c0_229 = arith.constant 0 : index
    %424 = vector.load %arg6[%c32_228, %c0_229] : memref<96x64xbf16, #tpu.memory_space<vmem>>, vector<8x64xbf16>
    %cst_230 = arith.constant dense<0.000000e+00> : vector<8x128xf32>
    %425 = tpu.matmul %424, %423, %cst_230 {dimension_numbers = #tpu.dot_dimension_numbers<[1], [0], [0], [1], [0, 0, 1, 1], [], []>} : vector<8x64xbf16>, vector<64x128xbf16>, vector<8x128xf32> -> vector<8x128xf32>
    %426 = arith.addf %324, %425 : vector<8x128xf32>
    %427 = arith.addf %361, %372 : vector<128x128xf32>
    %428 = vector.extract_strided_slice %427 {offsets = [0, 0], sizes = [64, 128], strides = [1, 1]} : vector<128x128xf32> to vector<64x128xf32>
    %429 = vector.extract_strided_slice %427 {offsets = [64, 0], sizes = [64, 128], strides = [1, 1]} : vector<128x128xf32> to vector<64x128xf32>
    %430 = arith.addf %428, %429 : vector<64x128xf32>
    %cst_231 = arith.constant 2.500000e-01 : f32
    %431 = vector.broadcast %cst_231 : f32 to vector<64x128xf32>
    %432 = arith.mulf %430, %431 : vector<64x128xf32>
    %433 = arith.truncf %432 : vector<64x128xf32> to vector<64x128xbf16>
    %c40 = arith.constant 40 : index
    %c0_232 = arith.constant 0 : index
    %434 = vector.load %arg6[%c40, %c0_232] : memref<96x64xbf16, #tpu.memory_space<vmem>>, vector<8x64xbf16>
    %cst_233 = arith.constant dense<0.000000e+00> : vector<8x128xf32>
    %435 = tpu.matmul %434, %433, %cst_233 {dimension_numbers = #tpu.dot_dimension_numbers<[1], [0], [0], [1], [0, 0, 1, 1], [], []>} : vector<8x64xbf16>, vector<64x128xbf16>, vector<8x128xf32> -> vector<8x128xf32>
    %436 = arith.addf %426, %435 : vector<8x128xf32>
    %437 = arith.addf %383, %394 : vector<128x128xf32>
    %438 = vector.extract_strided_slice %437 {offsets = [0, 0], sizes = [64, 128], strides = [1, 1]} : vector<128x128xf32> to vector<64x128xf32>
    %439 = vector.extract_strided_slice %437 {offsets = [64, 0], sizes = [64, 128], strides = [1, 1]} : vector<128x128xf32> to vector<64x128xf32>
    %440 = arith.addf %438, %439 : vector<64x128xf32>
    %cst_234 = arith.constant 2.500000e-01 : f32
    %441 = vector.broadcast %cst_234 : f32 to vector<64x128xf32>
    %442 = arith.mulf %440, %441 : vector<64x128xf32>
    %443 = arith.truncf %442 : vector<64x128xf32> to vector<64x128xbf16>
    %c48_235 = arith.constant 48 : index
    %c0_236 = arith.constant 0 : index
    %444 = vector.load %arg6[%c48_235, %c0_236] : memref<96x64xbf16, #tpu.memory_space<vmem>>, vector<8x64xbf16>
    %cst_237 = arith.constant dense<0.000000e+00> : vector<8x128xf32>
    %445 = tpu.matmul %444, %443, %cst_237 {dimension_numbers = #tpu.dot_dimension_numbers<[1], [0], [0], [1], [0, 0, 1, 1], [], []>} : vector<8x64xbf16>, vector<64x128xbf16>, vector<8x128xf32> -> vector<8x128xf32>
    %446 = arith.addf %436, %445 : vector<8x128xf32>
    %447 = arith.addf %405, %416 : vector<128x128xf32>
    %448 = vector.extract_strided_slice %447 {offsets = [0, 0], sizes = [64, 128], strides = [1, 1]} : vector<128x128xf32> to vector<64x128xf32>
    %449 = vector.extract_strided_slice %447 {offsets = [64, 0], sizes = [64, 128], strides = [1, 1]} : vector<128x128xf32> to vector<64x128xf32>
    %450 = arith.addf %448, %449 : vector<64x128xf32>
    %cst_238 = arith.constant 2.500000e-01 : f32
    %451 = vector.broadcast %cst_238 : f32 to vector<64x128xf32>
    %452 = arith.mulf %450, %451 : vector<64x128xf32>
    %453 = arith.truncf %452 : vector<64x128xf32> to vector<64x128xbf16>
    %c56 = arith.constant 56 : index
    %c0_239 = arith.constant 0 : index
    %454 = vector.load %arg6[%c56, %c0_239] : memref<96x64xbf16, #tpu.memory_space<vmem>>, vector<8x64xbf16>
    %cst_240 = arith.constant dense<0.000000e+00> : vector<8x128xf32>
    %455 = tpu.matmul %454, %453, %cst_240 {dimension_numbers = #tpu.dot_dimension_numbers<[1], [0], [0], [1], [0, 0, 1, 1], [], []>} : vector<8x64xbf16>, vector<64x128xbf16>, vector<8x128xf32> -> vector<8x128xf32>
    %456 = arith.addf %446, %455 : vector<8x128xf32>
    %c0_241 = arith.constant 0 : index
    %c0_242 = arith.constant 0 : index
    %457 = vector.load %arg4[%c0_241, %c0_242] : memref<128x192xbf16, #tpu.memory_space<vmem>>, vector<128x192xbf16>
    %c256_243 = arith.constant 256 : index
    %c0_244 = arith.constant 0 : index
    %458 = vector.load %arg5[%c256_243, %c0_244] : memref<384x1xf32, #tpu.memory_space<vmem>>, vector<128x1xf32>
    %459 = vector.shape_cast %458 : vector<128x1xf32> to vector<128x1xf32>
    %460 = vector.broadcast %459 : vector<128x1xf32> to vector<128x128xf32>
    %c0_245 = arith.constant 0 : index
    %c0_246 = arith.constant 0 : index
    %461 = vector.load %arg1[%c0_245, %c0_246] : memref<896x128xbf16, #tpu.memory_space<vmem>>, vector<192x128xbf16>
    %cst_247 = arith.constant dense<0.000000e+00> : vector<128x128xf32>
    %462 = tpu.matmul %457, %461, %cst_247 {dimension_numbers = #tpu.dot_dimension_numbers<[1], [0], [0], [1], [0, 0, 1, 1], [], []>} : vector<128x192xbf16>, vector<192x128xbf16>, vector<128x128xf32> -> vector<128x128xf32>
    %463 = arith.addf %462, %460 : vector<128x128xf32>
    %cst_248 = arith.constant 0.000000e+00 : f32
    %464 = vector.broadcast %cst_248 : f32 to vector<128x128xf32>
    %465 = arith.maximumf %463, %464 : vector<128x128xf32>
    %c96_249 = arith.constant 96 : index
    %c0_250 = arith.constant 0 : index
    %466 = vector.load %arg1[%c96_249, %c0_250] : memref<896x128xbf16, #tpu.memory_space<vmem>>, vector<192x128xbf16>
    %cst_251 = arith.constant dense<0.000000e+00> : vector<128x128xf32>
    %467 = tpu.matmul %457, %466, %cst_251 {dimension_numbers = #tpu.dot_dimension_numbers<[1], [0], [0], [1], [0, 0, 1, 1], [], []>} : vector<128x192xbf16>, vector<192x128xbf16>, vector<128x128xf32> -> vector<128x128xf32>
    %468 = arith.addf %467, %460 : vector<128x128xf32>
    %cst_252 = arith.constant 0.000000e+00 : f32
    %469 = vector.broadcast %cst_252 : f32 to vector<128x128xf32>
    %470 = arith.maximumf %468, %469 : vector<128x128xf32>
    %c192_253 = arith.constant 192 : index
    %c0_254 = arith.constant 0 : index
    %471 = vector.load %arg1[%c192_253, %c0_254] : memref<896x128xbf16, #tpu.memory_space<vmem>>, vector<192x128xbf16>
    %cst_255 = arith.constant dense<0.000000e+00> : vector<128x128xf32>
    %472 = tpu.matmul %457, %471, %cst_255 {dimension_numbers = #tpu.dot_dimension_numbers<[1], [0], [0], [1], [0, 0, 1, 1], [], []>} : vector<128x192xbf16>, vector<192x128xbf16>, vector<128x128xf32> -> vector<128x128xf32>
    %473 = arith.addf %472, %460 : vector<128x128xf32>
    %cst_256 = arith.constant 0.000000e+00 : f32
    %474 = vector.broadcast %cst_256 : f32 to vector<128x128xf32>
    %475 = arith.maximumf %473, %474 : vector<128x128xf32>
    %c288_257 = arith.constant 288 : index
    %c0_258 = arith.constant 0 : index
    %476 = vector.load %arg1[%c288_257, %c0_258] : memref<896x128xbf16, #tpu.memory_space<vmem>>, vector<192x128xbf16>
    %cst_259 = arith.constant dense<0.000000e+00> : vector<128x128xf32>
    %477 = tpu.matmul %457, %476, %cst_259 {dimension_numbers = #tpu.dot_dimension_numbers<[1], [0], [0], [1], [0, 0, 1, 1], [], []>} : vector<128x192xbf16>, vector<192x128xbf16>, vector<128x128xf32> -> vector<128x128xf32>
    %478 = arith.addf %477, %460 : vector<128x128xf32>
    %cst_260 = arith.constant 0.000000e+00 : f32
    %479 = vector.broadcast %cst_260 : f32 to vector<128x128xf32>
    %480 = arith.maximumf %478, %479 : vector<128x128xf32>
    %c384_261 = arith.constant 384 : index
    %c0_262 = arith.constant 0 : index
    %481 = vector.load %arg1[%c384_261, %c0_262] : memref<896x128xbf16, #tpu.memory_space<vmem>>, vector<192x128xbf16>
    %cst_263 = arith.constant dense<0.000000e+00> : vector<128x128xf32>
    %482 = tpu.matmul %457, %481, %cst_263 {dimension_numbers = #tpu.dot_dimension_numbers<[1], [0], [0], [1], [0, 0, 1, 1], [], []>} : vector<128x192xbf16>, vector<192x128xbf16>, vector<128x128xf32> -> vector<128x128xf32>
    %483 = arith.addf %482, %460 : vector<128x128xf32>
    %cst_264 = arith.constant 0.000000e+00 : f32
    %484 = vector.broadcast %cst_264 : f32 to vector<128x128xf32>
    %485 = arith.maximumf %483, %484 : vector<128x128xf32>
    %c480_265 = arith.constant 480 : index
    %c0_266 = arith.constant 0 : index
    %486 = vector.load %arg1[%c480_265, %c0_266] : memref<896x128xbf16, #tpu.memory_space<vmem>>, vector<192x128xbf16>
    %cst_267 = arith.constant dense<0.000000e+00> : vector<128x128xf32>
    %487 = tpu.matmul %457, %486, %cst_267 {dimension_numbers = #tpu.dot_dimension_numbers<[1], [0], [0], [1], [0, 0, 1, 1], [], []>} : vector<128x192xbf16>, vector<192x128xbf16>, vector<128x128xf32> -> vector<128x128xf32>
    %488 = arith.addf %487, %460 : vector<128x128xf32>
    %cst_268 = arith.constant 0.000000e+00 : f32
    %489 = vector.broadcast %cst_268 : f32 to vector<128x128xf32>
    %490 = arith.maximumf %488, %489 : vector<128x128xf32>
    %c576_269 = arith.constant 576 : index
    %c0_270 = arith.constant 0 : index
    %491 = vector.load %arg1[%c576_269, %c0_270] : memref<896x128xbf16, #tpu.memory_space<vmem>>, vector<192x128xbf16>
    %cst_271 = arith.constant dense<0.000000e+00> : vector<128x128xf32>
    %492 = tpu.matmul %457, %491, %cst_271 {dimension_numbers = #tpu.dot_dimension_numbers<[1], [0], [0], [1], [0, 0, 1, 1], [], []>} : vector<128x192xbf16>, vector<192x128xbf16>, vector<128x128xf32> -> vector<128x128xf32>
    %493 = arith.addf %492, %460 : vector<128x128xf32>
    %cst_272 = arith.constant 0.000000e+00 : f32
    %494 = vector.broadcast %cst_272 : f32 to vector<128x128xf32>
    %495 = arith.maximumf %493, %494 : vector<128x128xf32>
    %c672_273 = arith.constant 672 : index
    %c0_274 = arith.constant 0 : index
    %496 = vector.load %arg1[%c672_273, %c0_274] : memref<896x128xbf16, #tpu.memory_space<vmem>>, vector<192x128xbf16>
    %cst_275 = arith.constant dense<0.000000e+00> : vector<128x128xf32>
    %497 = tpu.matmul %457, %496, %cst_275 {dimension_numbers = #tpu.dot_dimension_numbers<[1], [0], [0], [1], [0, 0, 1, 1], [], []>} : vector<128x192xbf16>, vector<192x128xbf16>, vector<128x128xf32> -> vector<128x128xf32>
    %498 = arith.addf %497, %460 : vector<128x128xf32>
    %cst_276 = arith.constant 0.000000e+00 : f32
    %499 = vector.broadcast %cst_276 : f32 to vector<128x128xf32>
    %500 = arith.maximumf %498, %499 : vector<128x128xf32>
    %501 = arith.addf %465, %470 : vector<128x128xf32>
    %502 = vector.extract_strided_slice %501 {offsets = [0, 0], sizes = [64, 128], strides = [1, 1]} : vector<128x128xf32> to vector<64x128xf32>
    %503 = vector.extract_strided_slice %501 {offsets = [64, 0], sizes = [64, 128], strides = [1, 1]} : vector<128x128xf32> to vector<64x128xf32>
    %504 = arith.addf %502, %503 : vector<64x128xf32>
    %cst_277 = arith.constant 2.500000e-01 : f32
    %505 = vector.broadcast %cst_277 : f32 to vector<64x128xf32>
    %506 = arith.mulf %504, %505 : vector<64x128xf32>
    %507 = arith.truncf %506 : vector<64x128xf32> to vector<64x128xbf16>
    %c64_278 = arith.constant 64 : index
    %c0_279 = arith.constant 0 : index
    %508 = vector.load %arg6[%c64_278, %c0_279] : memref<96x64xbf16, #tpu.memory_space<vmem>>, vector<8x64xbf16>
    %cst_280 = arith.constant dense<0.000000e+00> : vector<8x128xf32>
    %509 = tpu.matmul %508, %507, %cst_280 {dimension_numbers = #tpu.dot_dimension_numbers<[1], [0], [0], [1], [0, 0, 1, 1], [], []>} : vector<8x64xbf16>, vector<64x128xbf16>, vector<8x128xf32> -> vector<8x128xf32>
    %510 = arith.addf %456, %509 : vector<8x128xf32>
    %511 = arith.addf %475, %480 : vector<128x128xf32>
    %512 = vector.extract_strided_slice %511 {offsets = [0, 0], sizes = [64, 128], strides = [1, 1]} : vector<128x128xf32> to vector<64x128xf32>
    %513 = vector.extract_strided_slice %511 {offsets = [64, 0], sizes = [64, 128], strides = [1, 1]} : vector<128x128xf32> to vector<64x128xf32>
    %514 = arith.addf %512, %513 : vector<64x128xf32>
    %cst_281 = arith.constant 2.500000e-01 : f32
    %515 = vector.broadcast %cst_281 : f32 to vector<64x128xf32>
    %516 = arith.mulf %514, %515 : vector<64x128xf32>
    %517 = arith.truncf %516 : vector<64x128xf32> to vector<64x128xbf16>
    %c72 = arith.constant 72 : index
    %c0_282 = arith.constant 0 : index
    %518 = vector.load %arg6[%c72, %c0_282] : memref<96x64xbf16, #tpu.memory_space<vmem>>, vector<8x64xbf16>
    %cst_283 = arith.constant dense<0.000000e+00> : vector<8x128xf32>
    %519 = tpu.matmul %518, %517, %cst_283 {dimension_numbers = #tpu.dot_dimension_numbers<[1], [0], [0], [1], [0, 0, 1, 1], [], []>} : vector<8x64xbf16>, vector<64x128xbf16>, vector<8x128xf32> -> vector<8x128xf32>
    %520 = arith.addf %510, %519 : vector<8x128xf32>
    %521 = arith.addf %485, %490 : vector<128x128xf32>
    %522 = vector.extract_strided_slice %521 {offsets = [0, 0], sizes = [64, 128], strides = [1, 1]} : vector<128x128xf32> to vector<64x128xf32>
    %523 = vector.extract_strided_slice %521 {offsets = [64, 0], sizes = [64, 128], strides = [1, 1]} : vector<128x128xf32> to vector<64x128xf32>
    %524 = arith.addf %522, %523 : vector<64x128xf32>
    %cst_284 = arith.constant 2.500000e-01 : f32
    %525 = vector.broadcast %cst_284 : f32 to vector<64x128xf32>
    %526 = arith.mulf %524, %525 : vector<64x128xf32>
    %527 = arith.truncf %526 : vector<64x128xf32> to vector<64x128xbf16>
    %c80_285 = arith.constant 80 : index
    %c0_286 = arith.constant 0 : index
    %528 = vector.load %arg6[%c80_285, %c0_286] : memref<96x64xbf16, #tpu.memory_space<vmem>>, vector<8x64xbf16>
    %cst_287 = arith.constant dense<0.000000e+00> : vector<8x128xf32>
    %529 = tpu.matmul %528, %527, %cst_287 {dimension_numbers = #tpu.dot_dimension_numbers<[1], [0], [0], [1], [0, 0, 1, 1], [], []>} : vector<8x64xbf16>, vector<64x128xbf16>, vector<8x128xf32> -> vector<8x128xf32>
    %530 = arith.addf %520, %529 : vector<8x128xf32>
    %531 = arith.addf %495, %500 : vector<128x128xf32>
    %532 = vector.extract_strided_slice %531 {offsets = [0, 0], sizes = [64, 128], strides = [1, 1]} : vector<128x128xf32> to vector<64x128xf32>
    %533 = vector.extract_strided_slice %531 {offsets = [64, 0], sizes = [64, 128], strides = [1, 1]} : vector<128x128xf32> to vector<64x128xf32>
    %534 = arith.addf %532, %533 : vector<64x128xf32>
    %cst_288 = arith.constant 2.500000e-01 : f32
    %535 = vector.broadcast %cst_288 : f32 to vector<64x128xf32>
    %536 = arith.mulf %534, %535 : vector<64x128xf32>
    %537 = arith.truncf %536 : vector<64x128xf32> to vector<64x128xbf16>
    %c88 = arith.constant 88 : index
    %c0_289 = arith.constant 0 : index
    %538 = vector.load %arg6[%c88, %c0_289] : memref<96x64xbf16, #tpu.memory_space<vmem>>, vector<8x64xbf16>
    %cst_290 = arith.constant dense<0.000000e+00> : vector<8x128xf32>
    %539 = tpu.matmul %538, %537, %cst_290 {dimension_numbers = #tpu.dot_dimension_numbers<[1], [0], [0], [1], [0, 0, 1, 1], [], []>} : vector<8x64xbf16>, vector<64x128xbf16>, vector<8x128xf32> -> vector<8x128xf32>
    %540 = arith.addf %530, %539 : vector<8x128xf32>
    %c0_291 = arith.constant 0 : index
    %c0_292 = arith.constant 0 : index
    %541 = vector.load %arg7[%c0_291, %c0_292] : memref<8x1xf32, #tpu.memory_space<vmem>>, vector<8x1xf32>
    %542 = vector.shape_cast %541 : vector<8x1xf32> to vector<8x1xf32>
    %543 = vector.broadcast %542 : vector<8x1xf32> to vector<8x128xf32>
    %544 = arith.addf %540, %543 : vector<8x128xf32>
    %c0_293 = arith.constant 0 : index
    %c0_294 = arith.constant 0 : index
    %545 = vector.load %arg8[%c0_293, %c0_294] : memref<8x128xf32, #tpu.memory_space<vmem>>, vector<8x128xf32>
    tpu.vector_store %arg8[%c0_293, %c0_294], %544 {strides = array<i32>} : memref<8x128xf32, #tpu.memory_space<vmem>>, vector<8x128xf32>,
    return
  }
  func.func @transform_0(%arg0: i32) -> (i32, i32) {
    %c0_i32 = arith.constant 0 : i32
    %c0_i32_0 = arith.constant 0 : i32
    return %c0_i32, %arg0 : i32, i32
  }
  func.func @transform_1(%arg0: i32) -> (i32, i32) {
    %c0_i32 = arith.constant 0 : i32
    %c0_i32_0 = arith.constant 0 : i32
    %c0_i32_1 = arith.constant 0 : i32
    return %c0_i32, %c0_i32_0 : i32, i32
  }
  func.func @transform_2(%arg0: i32) -> (i32, i32) {
    %c0_i32 = arith.constant 0 : i32
    %c0_i32_0 = arith.constant 0 : i32
    %c0_i32_1 = arith.constant 0 : i32
    return %c0_i32, %c0_i32_0 : i32, i32
  }
  func.func @transform_3(%arg0: i32) -> (i32, i32) {
    %c0_i32 = arith.constant 0 : i32
    %c0_i32_0 = arith.constant 0 : i32
    %c0_i32_1 = arith.constant 0 : i32
    return %c0_i32, %c0_i32_0 : i32, i32
  }
  func.func @transform_4(%arg0: i32) -> (i32, i32) {
    %c0_i32 = arith.constant 0 : i32
    %c0_i32_0 = arith.constant 0 : i32
    %c0_i32_1 = arith.constant 0 : i32
    return %c0_i32, %c0_i32_0 : i32, i32
  }
  func.func @transform_5(%arg0: i32) -> (i32, i32) {
    %c0_i32 = arith.constant 0 : i32
    %c0_i32_0 = arith.constant 0 : i32
    %c0_i32_1 = arith.constant 0 : i32
    return %c0_i32, %c0_i32_0 : i32, i32
  }
  func.func @transform_6(%arg0: i32) -> (i32, i32) {
    %c0_i32 = arith.constant 0 : i32
    %c0_i32_0 = arith.constant 0 : i32
    %c0_i32_1 = arith.constant 0 : i32
    return %c0_i32, %c0_i32_0 : i32, i32
  }
  func.func @transform_7(%arg0: i32) -> (i32, i32) {
    %c0_i32 = arith.constant 0 : i32
    %c0_i32_0 = arith.constant 0 : i32
    return %c0_i32, %arg0 : i32, i32
  }
}

</mosaic_0001>

<llo_original>
// kernel: tile.28
$region0: #{tile.28}
  #allocation0 [shape = 's32[1]{0}', space=sflag, size = 0x4, scoped, tag = 'scoped memory for tile.28']
  %s0 = inlined_call_operand.vmem [shape: f32[64], index: 0, kind: input, shape index: {}]
  %s1 = inlined_call_operand.vmem [shape: f32[2,64], index: 1, kind: output, shape index: {}]
  // Predicated region
  $region2: #{tile.28} parent=0 // pred_check
    _
  $region3: #{tile.28} parent=0 // pred_check_branch
    %3 = sbr.rel (0) target = $region5
  $region4: #{tile.28} parent=0 // pred_region
    _
  $region5: #{tile.28} parent=0 // pred_fallthru
    _
  %v4 = vld [vmem:[%s0] ss:$0 sm:$0xff]
  %5 = vst [vmem:[%s1] sm:$0x3] %v4

// kernel: tile.29
$region0: #{tile.29}
  %s0 = inlined_call_operand.vmem [shape: f32[2,64], index: 0, kind: input, shape index: {}]
  %s1 = inlined_call_operand.vmem [shape: f32[128], index: 1, kind: output, shape index: {}]
  $region1: #{tile.29} parent=0
    #allocation0 [shape = 'u8[4096]{0}', space=vmem, size = 0x1000, scoped, tag = 'scoped mem for output reshape']
    #allocation1 [shape = 'u8[4096]{0}', space=vmem, size = 0x1000, scoped, tag = 'scoped mem for input reshape']
    %s3 = ssub.s32 4, 1
    %v4 = vld [vmem:[%s0] sm:%s3]
    %5 = vst [vmem:[#allocation1] sm:%s3] %v4
    %v6 = vld [vmem:[#allocation1] sm:$0x1]
    %vm7 = vcmask 523264
    %8 = vst.msk [vmem:[#allocation0] sm:$0x1] %vm7, %v6
    %s9 = scalar_lea.vmem [#allocation1], 1
    %v10 = vld [vmem:[%s9] sm:$0x1]
    %11 = vrot.lane.b32.xlu0 %v10, 64
    %v12 = vpop.permute.xlu0 %11
    %vm13 = vcmask 1048064
    %14 = vst.msk [vmem:[#allocation0] sm:$0x1] %vm13, %v12
    %s16 = ssub.s32 2, 1
    %v17 = vld [vmem:[#allocation0] sm:%s16]
    %s19 = ssub.s32 2, 1
    %20 = vst [vmem:[%s1] sm:%s19] %v17

// kernel: blanknet_forward.1
$region0: #{blanknet_forward.1}
  #allocation0 [shape = 'u32[]', space=smem, size = 0x4, offset = 0x4, fixed_abs, tag = 'smem constant byte address 0x4 - core index']
  #allocation1 [shape = 'u32[72,128]{1,0:T(1,128)}', space=vmem, size = 0x9000, scoped, tag = 'internal scratch']
  %s0 = inlined_call_operand.vmem [shape: bf16[896,128], index: 0, kind: input, shape index: {}]
  %s1 = inlined_call_operand.vmem [shape: bf16[128,48], index: 1, kind: input, shape index: {}]
  %s2 = inlined_call_operand.vmem [shape: bf16[128,96], index: 2, kind: input, shape index: {}]
  %s3 = inlined_call_operand.vmem [shape: bf16[128,192], index: 3, kind: input, shape index: {}]
  %s4 = inlined_call_operand.vmem [shape: f32[384,1], index: 4, kind: input, shape index: {}]
  %s5 = inlined_call_operand.vmem [shape: bf16[96,64], index: 5, kind: input, shape index: {}]
  %s6 = inlined_call_operand.vmem [shape: f32[8,1], index: 6, kind: input, shape index: {}]
  %s7 = inlined_call_operand.vmem [shape: f32[8,128], index: 7, kind: output, shape index: {}]
  %s8 = sld [smem:[#allocation0]]
  $region38: #{blanknet_forward.1} parent=0
    _
  %s10 = ssub.s32 1, %s8
  %s11 = scalar_select 0, %s10, %s8
  // Predicated region
  $region2: #{blanknet_forward.1} parent=0 // pred_check
    _
  $region3: #{blanknet_forward.1} parent=0 // pred_check_branch
    %13 = sbr.rel (0) target = $region5
  $region4: #{blanknet_forward.1} parent=0 // pred_region
    _
  $region5: #{blanknet_forward.1} parent=0 // pred_fallthru
    _
  // Predicated region
  $region6: #{blanknet_forward.1} parent=0 // pred_check
    _
  $region7: #{blanknet_forward.1} parent=0 // pred_check_branch
    %15 = sbr.rel (0) target = $region9
  $region8: #{blanknet_forward.1} parent=0 // pred_region
    _
  $region9: #{blanknet_forward.1} parent=0 // pred_fallthru
    _
  // Predicated region
  $region10: #{blanknet_forward.1} parent=0 // pred_check
    _
  $region11: #{blanknet_forward.1} parent=0 // pred_check_branch
    %17 = sbr.rel (0) target = $region13
  $region12: #{blanknet_forward.1} parent=0 // pred_region
    _
  $region13: #{blanknet_forward.1} parent=0 // pred_fallthru
    _
  // Predicated region
  $region14: #{blanknet_forward.1} parent=0 // pred_check
    _
  $region15: #{blanknet_forward.1} parent=0 // pred_check_branch
    %19 = sbr.rel (0) target = $region17
  $region16: #{blanknet_forward.1} parent=0 // pred_region
    _
  $region17: #{blanknet_forward.1} parent=0 // pred_fallthru
    _
  // Predicated region
  $region18: #{blanknet_forward.1} parent=0 // pred_check
    _
  $region19: #{blanknet_forward.1} parent=0 // pred_check_branch
    %21 = sbr.rel (0) target = $region21
  $region20: #{blanknet_forward.1} parent=0 // pred_region
    _
  $region21: #{blanknet_forward.1} parent=0 // pred_fallthru
    _
  // Predicated region
  $region22: #{blanknet_forward.1} parent=0 // pred_check
    _
  $region23: #{blanknet_forward.1} parent=0 // pred_check_branch
    %23 = sbr.rel (0) target = $region25
  $region24: #{blanknet_forward.1} parent=0 // pred_region
    _
  $region25: #{blanknet_forward.1} parent=0 // pred_fallthru
    _
  // Predicated region
  $region26: #{blanknet_forward.1} parent=0 // pred_check
    _
  $region27: #{blanknet_forward.1} parent=0 // pred_check_branch
    %25 = sbr.rel (0) target = $region29
  $region28: #{blanknet_forward.1} parent=0 // pred_region
    _
  $region29: #{blanknet_forward.1} parent=0 // pred_fallthru
    _
  %v27 = vld [vmem:[%s1] sm:$0xf]
  %v28 = vld [vmem:[%s1 + $0x4] sm:$0xf]
  %v29 = vld [vmem:[%s1 + $0x8] sm:$0xf]
  %v30 = vld [vmem:[%s1 + $0xc] sm:$0xf]
  %v31 = vld [vmem:[%s1 + $0x10] sm:$0xf]
  %v32 = vld [vmem:[%s1 + $0x14] sm:$0xf]
  %v33 = vld [vmem:[%s1 + $0x18] sm:$0xf]
  %v34 = vld [vmem:[%s1 + $0x1c] sm:$0xf]
  %v35 = vld [vmem:[%s1 + $0x20] sm:$0xf]
  %v36 = vld [vmem:[%s1 + $0x24] sm:$0xf]
  %v37 = vld [vmem:[%s1 + $0x28] sm:$0xf]
  %v38 = vld [vmem:[%s1 + $0x2c] sm:$0xf]
  %v39 = vld [vmem:[%s1 + $0x30] sm:$0xf]
  %v40 = vld [vmem:[%s1 + $0x34] sm:$0xf]
  %v41 = vld [vmem:[%s1 + $0x38] sm:$0xf]
  %v42 = vld [vmem:[%s1 + $0x3c] sm:$0xf]
  %v43 = vld [vmem:[%s4] sm:$0xff]
  %v44 = vld [vmem:[%s4 + $0x8] sm:$0xff]
  %v45 = vld [vmem:[%s4 + $0x10] sm:$0xff]
  %v46 = vld [vmem:[%s4 + $0x18] sm:$0xff]
  %v47 = vld [vmem:[%s4 + $0x20] sm:$0xff]
  %v48 = vld [vmem:[%s4 + $0x28] sm:$0xff]
  %v49 = vld [vmem:[%s4 + $0x30] sm:$0xff]
  %v50 = vld [vmem:[%s4 + $0x38] sm:$0xff]
  %v51 = vld [vmem:[%s4 + $0x40] sm:$0xff]
  %v52 = vld [vmem:[%s4 + $0x48] sm:$0xff]
  %v53 = vld [vmem:[%s4 + $0x50] sm:$0xff]
  %v54 = vld [vmem:[%s4 + $0x58] sm:$0xff]
  %v55 = vld [vmem:[%s4 + $0x60] sm:$0xff]
  %v56 = vld [vmem:[%s4 + $0x68] sm:$0xff]
  %v57 = vld [vmem:[%s4 + $0x70] sm:$0xff]
  %v58 = vld [vmem:[%s4 + $0x78] sm:$0xff]
  %60 = vset.pattern.permute.xlu0 0
  %61 = vperm.xlu0 %60, %v43
  %v62 = vpop.permute.xlu0 %61
  %65 = vset.pattern.permute.xlu0 0
  %66 = vperm.xlu0 %65, %v44
  %v67 = vpop.permute.xlu0 %66
  %70 = vset.pattern.permute.xlu0 0
  %71 = vperm.xlu0 %70, %v45
  %v72 = vpop.permute.xlu0 %71
  %75 = vset.pattern.permute.xlu0 0
  %76 = vperm.xlu0 %75, %v46
  %v77 = vpop.permute.xlu0 %76
  %80 = vset.pattern.permute.xlu0 0
  %81 = vperm.xlu0 %80, %v47
  %v82 = vpop.permute.xlu0 %81
  %85 = vset.pattern.permute.xlu0 0
  %86 = vperm.xlu0 %85, %v48
  %v87 = vpop.permute.xlu0 %86
  %90 = vset.pattern.permute.xlu0 0
  %91 = vperm.xlu0 %90, %v49
  %v92 = vpop.permute.xlu0 %91
  %95 = vset.pattern.permute.xlu0 0
  %96 = vperm.xlu0 %95, %v50
  %v97 = vpop.permute.xlu0 %96
  %100 = vset.pattern.permute.xlu0 0
  %101 = vperm.xlu0 %100, %v51
  %v102 = vpop.permute.xlu0 %101
  %105 = vset.pattern.permute.xlu0 0
  %106 = vperm.xlu0 %105, %v52
  %v107 = vpop.permute.xlu0 %106
  %110 = vset.pattern.permute.xlu0 0
  %111 = vperm.xlu0 %110, %v53
  %v112 = vpop.permute.xlu0 %111
  %115 = vset.pattern.permute.xlu0 0
  %116 = vperm.xlu0 %115, %v54
  %v117 = vpop.permute.xlu0 %116
  %120 = vset.pattern.permute.xlu0 0
  %121 = vperm.xlu0 %120, %v55
  %v122 = vpop.permute.xlu0 %121
  %125 = vset.pattern.permute.xlu0 0
  %126 = vperm.xlu0 %125, %v56
  %v127 = vpop.permute.xlu0 %126
  %130 = vset.pattern.permute.xlu0 0
  %131 = vperm.xlu0 %130, %v57
  %v132 = vpop.permute.xlu0 %131
  %135 = vset.pattern.permute.xlu0 0
  %136 = vperm.xlu0 %135, %v58
  %v137 = vpop.permute.xlu0 %136
  %v139 = vld [vmem:[%s0 + $0x18] sm:$0xf]
  %v140 = vld [vmem:[%s0 + $0x1c] sm:$0xf]
  %v141 = vld [vmem:[%s0 + $0x20] sm:$0xf]
  %v142 = vld [vmem:[%s0 + $0x24] sm:$0xf]
  %v143 = vld [vmem:[%s0 + $0x28] sm:$0xf]
  %v144 = vld [vmem:[%s0 + $0x2c] sm:$0xf]
  %v161 = vunpack.c.l.b16 %v27
  %v162 = vunpack.c.l.b16 %v28
  %v163 = vunpack.c.l.b16 %v29
  %v164 = vunpack.c.l.b16 %v30
  %v165 = vunpack.c.l.b16 %v31
  %v166 = vunpack.c.l.b16 %v32
  %v167 = vunpack.c.l.b16 %v33
  %v168 = vunpack.c.l.b16 %v34
  %v169 = vunpack.c.l.b16 %v35
  %v170 = vunpack.c.l.b16 %v36
  %v171 = vunpack.c.l.b16 %v37
  %v172 = vunpack.c.l.b16 %v38
  %v173 = vunpack.c.l.b16 %v39
  %v174 = vunpack.c.l.b16 %v40
  %v175 = vunpack.c.l.b16 %v41
  %v176 = vunpack.c.l.b16 %v42
  %v177 = vpack.c.b16 %v162, %v161
  %v178 = vpack.c.b16 %v164, %v163
  %v179 = vpack.c.b16 %v166, %v165
  %v180 = vpack.c.b16 %v168, %v167
  %v181 = vpack.c.b16 %v170, %v169
  %v182 = vpack.c.b16 %v172, %v171
  %v183 = vpack.c.b16 %v174, %v173
  %v184 = vpack.c.b16 %v176, %v175
  %v191 = vunpack.c.l.b16 %v139
  %v192 = vunpack.c.l.b16 %v140
  %v193 = vunpack.c.l.b16 %v141
  %v194 = vunpack.c.l.b16 %v142
  %v195 = vunpack.c.l.b16 %v143
  %v196 = vunpack.c.l.b16 %v144
  %v197 = vpack.c.b16 %v192, %v191
  %v198 = vpack.c.b16 %v194, %v193
  %v199 = vpack.c.b16 %v196, %v195
  %vm203 = vcmask 392192
  %v205 = vsel %vm203, %v177, 0
  %v208 = vsel %vm203, %v178, 0
  %v211 = vsel %vm203, %v179, 0
  %v214 = vsel %vm203, %v180, 0
  %v217 = vsel %vm203, %v181, 0
  %v220 = vsel %vm203, %v182, 0
  %v223 = vsel %vm203, %v183, 0
  %v226 = vsel %vm203, %v184, 0
  %228 = vmatpush.bf16.msra.mxu0 0
  %229 = vmatpush.bf16.msra.mxu0 0
  %230 = vmatpush.bf16.msra.mxu0 0
  %231 = vmatpush.bf16.msra.mxu0 0
  %232 = vmatpush.bf16.msra.mxu0 0
  %233 = vmatpush.bf16.msra.mxu0 %v199
  %234 = vmatpush.bf16.msra.mxu0 %v198
  %235 = vmatpush.bf16.msra.mxu0 %v197
  %236 = vmatmul.bf16.gmra.mxu0 %v205
  %v237 = vpop.f32.mrf.mxu0
  %v238 = vadd.f32 %v62, %v237
  %v239 = vpop.f32.mrf.mxu0
  %v240 = vadd.f32 %v67, %v239
  %241 = vmatmul.bf16.gmra.mxu0 %v208
  %v242 = vpop.f32.mrf.mxu0
  %v243 = vadd.f32 %v72, %v242
  %v244 = vpop.f32.mrf.mxu0
  %v245 = vadd.f32 %v77, %v244
  %246 = vmatmul.bf16.gmra.mxu0 %v211
  %v247 = vpop.f32.mrf.mxu0
  %v248 = vadd.f32 %v82, %v247
  %v249 = vpop.f32.mrf.mxu0
  %v250 = vadd.f32 %v87, %v249
  %251 = vmatmul.bf16.gmra.mxu0 %v214
  %v252 = vpop.f32.mrf.mxu0
  %v253 = vadd.f32 %v92, %v252
  %v254 = vpop.f32.mrf.mxu0
  %v255 = vadd.f32 %v97, %v254
  %256 = vmatmul.bf16.gmra.mxu0 %v217
  %v257 = vpop.f32.mrf.mxu0
  %v258 = vadd.f32 %v102, %v257
  %v259 = vpop.f32.mrf.mxu0
  %v260 = vadd.f32 %v107, %v259
  %261 = vmatmul.bf16.gmra.mxu0 %v220
  %v262 = vpop.f32.mrf.mxu0
  %v263 = vadd.f32 %v112, %v262
  %v264 = vpop.f32.mrf.mxu0
  %v265 = vadd.f32 %v117, %v264
  %266 = vmatmul.bf16.gmra.mxu0 %v223
  %v267 = vpop.f32.mrf.mxu0
  %v268 = vadd.f32 %v122, %v267
  %v269 = vpop.f32.mrf.mxu0
  %v270 = vadd.f32 %v127, %v269
  %271 = vmatmul.bf16.gmra.mxu0 %v226
  %v272 = vpop.f32.mrf.mxu0
  %v273 = vadd.f32 %v132, %v272
  %v274 = vpop.f32.mrf.mxu0
  %v275 = vadd.f32 %v137, %v274
  %276 = vdwg.mxu0
  %v277 = vmax.f32 %v238, 0.0
  %v278 = vmax.f32 %v240, 0.0
  %v279 = vmax.f32 %v243, 0.0
  %v280 = vmax.f32 %v245, 0.0
  %v281 = vmax.f32 %v248, 0.0
  %v282 = vmax.f32 %v250, 0.0
  %v283 = vmax.f32 %v253, 0.0
  %v284 = vmax.f32 %v255, 0.0
  %v285 = vmax.f32 %v258, 0.0
  %v286 = vmax.f32 %v260, 0.0
  %v287 = vmax.f32 %v263, 0.0
  %v288 = vmax.f32 %v265, 0.0
  %v289 = vmax.f32 %v268, 0.0
  %v290 = vmax.f32 %v270, 0.0
  %v291 = vmax.f32 %v273, 0.0
  %v292 = vmax.f32 %v275, 0.0
  %v293 = vld [vmem:[%s0 + $0x20] sm:$0xf]
  %v294 = vld [vmem:[%s0 + $0x24] sm:$0xf]
  %v295 = vld [vmem:[%s0 + $0x28] sm:$0xf]
  %v296 = vld [vmem:[%s0 + $0x2c] sm:$0xf]
  %v297 = vld [vmem:[%s0 + $0x30] sm:$0xf]
  %v298 = vld [vmem:[%s0 + $0x34] sm:$0xf]
  %v305 = vunpack.c.l.b16 %v293
  %v306 = vunpack.c.l.b16 %v294
  %v307 = vunpack.c.l.b16 %v295
  %v308 = vunpack.c.l.b16 %v296
  %v309 = vunpack.c.l.b16 %v297
  %v310 = vunpack.c.l.b16 %v298
  %v311 = vpack.c.b16 %v306, %v305
  %v312 = vpack.c.b16 %v308, %v307
  %v313 = vpack.c.b16 %v310, %v309
  %317 = vmatpush.bf16.msra.mxu0 0
  %318 = vmatpush.bf16.msra.mxu0 0
  %319 = vmatpush.bf16.msra.mxu0 0
  %320 = vmatpush.bf16.msra.mxu0 0
  %321 = vmatpush.bf16.msra.mxu0 0
  %322 = vmatpush.bf16.msra.mxu0 %v313
  %323 = vmatpush.bf16.msra.mxu0 %v312
  %324 = vmatpush.bf16.msra.mxu0 %v311
  %325 = vmatmul.bf16.gmra.mxu0 %v205
  %v326 = vpop.f32.mrf.mxu0
  %v327 = vadd.f32 %v62, %v326
  %v328 = vpop.f32.mrf.mxu0
  %v329 = vadd.f32 %v67, %v328
  %330 = vmatmul.bf16.gmra.mxu0 %v208
  %v331 = vpop.f32.mrf.mxu0
  %v332 = vadd.f32 %v72, %v331
  %v333 = vpop.f32.mrf.mxu0
  %v334 = vadd.f32 %v77, %v333
  %335 = vmatmul.bf16.gmra.mxu0 %v211
  %v336 = vpop.f32.mrf.mxu0
  %v337 = vadd.f32 %v82, %v336
  %v338 = vpop.f32.mrf.mxu0
  %v339 = vadd.f32 %v87, %v338
  %340 = vmatmul.bf16.gmra.mxu0 %v214
  %v341 = vpop.f32.mrf.mxu0
  %v342 = vadd.f32 %v92, %v341
  %v343 = vpop.f32.mrf.mxu0
  %v344 = vadd.f32 %v97, %v343
  %345 = vmatmul.bf16.gmra.mxu0 %v217
  %v346 = vpop.f32.mrf.mxu0
  %v347 = vadd.f32 %v102, %v346
  %v348 = vpop.f32.mrf.mxu0
  %v349 = vadd.f32 %v107, %v348
  %350 = vmatmul.bf16.gmra.mxu0 %v220
  %v351 = vpop.f32.mrf.mxu0
  %v352 = vadd.f32 %v112, %v351
  %v353 = vpop.f32.mrf.mxu0
  %v354 = vadd.f32 %v117, %v353
  %355 = vmatmul.bf16.gmra.mxu0 %v223
  %v356 = vpop.f32.mrf.mxu0
  %v357 = vadd.f32 %v122, %v356
  %v358 = vpop.f32.mrf.mxu0
  %v359 = vadd.f32 %v127, %v358
  %360 = vmatmul.bf16.gmra.mxu0 %v226
  %v361 = vpop.f32.mrf.mxu0
  %v362 = vadd.f32 %v132, %v361
  %v363 = vpop.f32.mrf.mxu0
  %v364 = vadd.f32 %v137, %v363
  %365 = vdwg.mxu0
  %v366 = vmax.f32 %v327, 0.0
  %v367 = vmax.f32 %v329, 0.0
  %v368 = vmax.f32 %v332, 0.0
  %v369 = vmax.f32 %v334, 0.0
  %v370 = vmax.f32 %v337, 0.0
  %v371 = vmax.f32 %v339, 0.0
  %v372 = vmax.f32 %v342, 0.0
  %v373 = vmax.f32 %v344, 0.0
  %v374 = vmax.f32 %v347, 0.0
  %v375 = vmax.f32 %v349, 0.0
  %v376 = vmax.f32 %v352, 0.0
  %v377 = vmax.f32 %v354, 0.0
  %v378 = vmax.f32 %v357, 0.0
  %v379 = vmax.f32 %v359, 0.0
  %v380 = vmax.f32 %v362, 0.0
  %v381 = vmax.f32 %v364, 0.0
  %v382 = vmax.f32 %v277, %v366
  %v383 = vmax.f32 %v278, %v367
  %v384 = vmax.f32 %v279, %v368
  %v385 = vmax.f32 %v280, %v369
  %v386 = vmax.f32 %v281, %v370
  %v387 = vmax.f32 %v282, %v371
  %v388 = vmax.f32 %v283, %v372
  %v389 = vmax.f32 %v284, %v373
  %v390 = vmax.f32 %v285, %v374
  %v391 = vmax.f32 %v286, %v375
  %v392 = vmax.f32 %v287, %v376
  %v393 = vmax.f32 %v288, %v377
  %v394 = vmax.f32 %v289, %v378
  %v395 = vmax.f32 %v290, %v379
  %v396 = vmax.f32 %v291, %v380
  %v397 = vmax.f32 %v292, %v381
  %v398 = vld [vmem:[%s0 + $0x28] sm:$0xf]
  %v399 = vld [vmem:[%s0 + $0x2c] sm:$0xf]
  %v400 = vld [vmem:[%s0 + $0x30] sm:$0xf]
  %v401 = vld [vmem:[%s0 + $0x34] sm:$0xf]
  %v402 = vld [vmem:[%s0 + $0x38] sm:$0xf]
  %v403 = vld [vmem:[%s0 + $0x3c] sm:$0xf]
  %v410 = vunpack.c.l.b16 %v398
  %v411 = vunpack.c.l.b16 %v399
  %v412 = vunpack.c.l.b16 %v400
  %v413 = vunpack.c.l.b16 %v401
  %v414 = vunpack.c.l.b16 %v402
  %v415 = vunpack.c.l.b16 %v403
  %v416 = vpack.c.b16 %v411, %v410
  %v417 = vpack.c.b16 %v413, %v412
  %v418 = vpack.c.b16 %v415, %v414
  %422 = vmatpush.bf16.msra.mxu0 0
  %423 = vmatpush.bf16.msra.mxu0 0
  %424 = vmatpush.bf16.msra.mxu0 0
  %425 = vmatpush.bf16.msra.mxu0 0
  %426 = vmatpush.bf16.msra.mxu0 0
  %427 = vmatpush.bf16.msra.mxu0 %v418
  %428 = vmatpush.bf16.msra.mxu0 %v417
  %429 = vmatpush.bf16.msra.mxu0 %v416
  %430 = vmatmul.bf16.gmra.mxu0 %v205
  %v431 = vpop.f32.mrf.mxu0
  %v432 = vadd.f32 %v62, %v431
  %v433 = vpop.f32.mrf.mxu0
  %v434 = vadd.f32 %v67, %v433
  %435 = vmatmul.bf16.gmra.mxu0 %v208
  %v436 = vpop.f32.mrf.mxu0
  %v437 = vadd.f32 %v72, %v436
  %v438 = vpop.f32.mrf.mxu0
  %v439 = vadd.f32 %v77, %v438
  %440 = vmatmul.bf16.gmra.mxu0 %v211
  %v441 = vpop.f32.mrf.mxu0
  %v442 = vadd.f32 %v82, %v441
  %v443 = vpop.f32.mrf.mxu0
  %v444 = vadd.f32 %v87, %v443
  %445 = vmatmul.bf16.gmra.mxu0 %v214
  %v446 = vpop.f32.mrf.mxu0
  %v447 = vadd.f32 %v92, %v446
  %v448 = vpop.f32.mrf.mxu0
  %v449 = vadd.f32 %v97, %v448
  %450 = vmatmul.bf16.gmra.mxu0 %v217
  %v451 = vpop.f32.mrf.mxu0
  %v452 = vadd.f32 %v102, %v451
  %v453 = vpop.f32.mrf.mxu0
  %v454 = vadd.f32 %v107, %v453
  %455 = vmatmul.bf16.gmra.mxu0 %v220
  %v456 = vpop.f32.mrf.mxu0
  %v457 = vadd.f32 %v112, %v456
  %v458 = vpop.f32.mrf.mxu0
  %v459 = vadd.f32 %v117, %v458
  %460 = vmatmul.bf16.gmra.mxu0 %v223
  %v461 = vpop.f32.mrf.mxu0
  %v462 = vadd.f32 %v122, %v461
  %v463 = vpop.f32.mrf.mxu0
  %v464 = vadd.f32 %v127, %v463
  %465 = vmatmul.bf16.gmra.mxu0 %v226
  %v466 = vpop.f32.mrf.mxu0
  %v467 = vadd.f32 %v132, %v466
  %v468 = vpop.f32.mrf.mxu0
  %v469 = vadd.f32 %v137, %v468
  %470 = vdwg.mxu0
  %v471 = vmax.f32 %v432, 0.0
  %v472 = vmax.f32 %v434, 0.0
  %v473 = vmax.f32 %v437, 0.0
  %v474 = vmax.f32 %v439, 0.0
  %v475 = vmax.f32 %v442, 0.0
  %v476 = vmax.f32 %v444, 0.0
  %v477 = vmax.f32 %v447, 0.0
  %v478 = vmax.f32 %v449, 0.0
  %v479 = vmax.f32 %v452, 0.0
  %v480 = vmax.f32 %v454, 0.0
  %v481 = vmax.f32 %v457, 0.0
  %v482 = vmax.f32 %v459, 0.0
  %v483 = vmax.f32 %v462, 0.0
  %v484 = vmax.f32 %v464, 0.0
  %v485 = vmax.f32 %v467, 0.0
  %v486 = vmax.f32 %v469, 0.0
  %v487 = vmax.f32 %v382, %v471
  %v488 = vmax.f32 %v383, %v472
  %v489 = vmax.f32 %v384, %v473
  %v490 = vmax.f32 %v385, %v474
  %v491 = vmax.f32 %v386, %v475
  %v492 = vmax.f32 %v387, %v476
  %v493 = vmax.f32 %v388, %v477
  %v494 = vmax.f32 %v389, %v478
  %v495 = vmax.f32 %v390, %v479
  %v496 = vmax.f32 %v391, %v480
  %v497 = vmax.f32 %v392, %v481
  %v498 = vmax.f32 %v393, %v482
  %v499 = vmax.f32 %v394, %v483
  %v500 = vmax.f32 %v395, %v484
  %v501 = vmax.f32 %v396, %v485
  %v502 = vmax.f32 %v397, %v486
  %v503 = vld [vmem:[%s0 + $0x30] sm:$0xf]
  %v504 = vld [vmem:[%s0 + $0x34] sm:$0xf]
  %v505 = vld [vmem:[%s0 + $0x38] sm:$0xf]
  %v506 = vld [vmem:[%s0 + $0x3c] sm:$0xf]
  %v507 = vld [vmem:[%s0 + $0x40] sm:$0xf]
  %v508 = vld [vmem:[%s0 + $0x44] sm:$0xf]
  %v515 = vunpack.c.l.b16 %v503
  %v516 = vunpack.c.l.b16 %v504
  %v517 = vunpack.c.l.b16 %v505
  %v518 = vunpack.c.l.b16 %v506
  %v519 = vunpack.c.l.b16 %v507
  %v520 = vunpack.c.l.b16 %v508
  %v521 = vpack.c.b16 %v516, %v515
  %v522 = vpack.c.b16 %v518, %v517
  %v523 = vpack.c.b16 %v520, %v519
  %527 = vmatpush.bf16.msra.mxu0 0
  %528 = vmatpush.bf16.msra.mxu0 0
  %529 = vmatpush.bf16.msra.mxu0 0
  %530 = vmatpush.bf16.msra.mxu0 0
  %531 = vmatpush.bf16.msra.mxu0 0
  %532 = vmatpush.bf16.msra.mxu0 %v523
  %533 = vmatpush.bf16.msra.mxu0 %v522
  %534 = vmatpush.bf16.msra.mxu0 %v521
  %535 = vmatmul.bf16.gmra.mxu0 %v205
  %v536 = vpop.f32.mrf.mxu0
  %v537 = vadd.f32 %v62, %v536
  %v538 = vpop.f32.mrf.mxu0
  %v539 = vadd.f32 %v67, %v538
  %540 = vmatmul.bf16.gmra.mxu0 %v208
  %v541 = vpop.f32.mrf.mxu0
  %v542 = vadd.f32 %v72, %v541
  %v543 = vpop.f32.mrf.mxu0
  %v544 = vadd.f32 %v77, %v543
  %545 = vmatmul.bf16.gmra.mxu0 %v211
  %v546 = vpop.f32.mrf.mxu0
  %v547 = vadd.f32 %v82, %v546
  %v548 = vpop.f32.mrf.mxu0
  %v549 = vadd.f32 %v87, %v548
  %550 = vmatmul.bf16.gmra.mxu0 %v214
  %v551 = vpop.f32.mrf.mxu0
  %v552 = vadd.f32 %v92, %v551
  %v553 = vpop.f32.mrf.mxu0
  %v554 = vadd.f32 %v97, %v553
  %555 = vmatmul.bf16.gmra.mxu0 %v217
  %v556 = vpop.f32.mrf.mxu0
  %v557 = vadd.f32 %v102, %v556
  %v558 = vpop.f32.mrf.mxu0
  %v559 = vadd.f32 %v107, %v558
  %560 = vmatmul.bf16.gmra.mxu0 %v220
  %v561 = vpop.f32.mrf.mxu0
  %v562 = vadd.f32 %v112, %v561
  %v563 = vpop.f32.mrf.mxu0
  %v564 = vadd.f32 %v117, %v563
  %565 = vmatmul.bf16.gmra.mxu0 %v223
  %v566 = vpop.f32.mrf.mxu0
  %v567 = vadd.f32 %v122, %v566
  %v568 = vpop.f32.mrf.mxu0
  %v569 = vadd.f32 %v127, %v568
  %570 = vmatmul.bf16.gmra.mxu0 %v226
  %v571 = vpop.f32.mrf.mxu0
  %v572 = vadd.f32 %v132, %v571
  %v573 = vpop.f32.mrf.mxu0
  %v574 = vadd.f32 %v137, %v573
  %575 = vdwg.mxu0
  %v576 = vmax.f32 %v537, 0.0
  %v577 = vmax.f32 %v539, 0.0
  %v578 = vmax.f32 %v542, 0.0
  %v579 = vmax.f32 %v544, 0.0
  %v580 = vmax.f32 %v547, 0.0
  %v581 = vmax.f32 %v549, 0.0
  %v582 = vmax.f32 %v552, 0.0
  %v583 = vmax.f32 %v554, 0.0
  %v584 = vmax.f32 %v557, 0.0
  %v585 = vmax.f32 %v559, 0.0
  %v586 = vmax.f32 %v562, 0.0
  %v587 = vmax.f32 %v564, 0.0
  %v588 = vmax.f32 %v567, 0.0
  %v589 = vmax.f32 %v569, 0.0
  %v590 = vmax.f32 %v572, 0.0
  %v591 = vmax.f32 %v574, 0.0
  %v592 = vmax.f32 %v487, %v576
  %v593 = vmax.f32 %v488, %v577
  %v594 = vmax.f32 %v489, %v578
  %v595 = vmax.f32 %v490, %v579
  %v596 = vmax.f32 %v491, %v580
  %v597 = vmax.f32 %v492, %v581
  %v598 = vmax.f32 %v493, %v582
  %v599 = vmax.f32 %v494, %v583
  %v600 = vmax.f32 %v495, %v584
  %v601 = vmax.f32 %v496, %v585
  %v602 = vmax.f32 %v497, %v586
  %v603 = vmax.f32 %v498, %v587
  %v604 = vmax.f32 %v499, %v588
  %v605 = vmax.f32 %v500, %v589
  %v606 = vmax.f32 %v501, %v590
  %v607 = vmax.f32 %v502, %v591
  %v608 = vld [vmem:[%s0 + $0x38] sm:$0xf]
  %v609 = vld [vmem:[%s0 + $0x3c] sm:$0xf]
  %v610 = vld [vmem:[%s0 + $0x40] sm:$0xf]
  %v611 = vld [vmem:[%s0 + $0x44] sm:$0xf]
  %v612 = vld [vmem:[%s0 + $0x48] sm:$0xf]
  %v613 = vld [vmem:[%s0 + $0x4c] sm:$0xf]
  %v620 = vunpack.c.l.b16 %v608
  %v621 = vunpack.c.l.b16 %v609
  %v622 = vunpack.c.l.b16 %v610
  %v623 = vunpack.c.l.b16 %v611
  %v624 = vunpack.c.l.b16 %v612
  %v625 = vunpack.c.l.b16 %v613
  %v626 = vpack.c.b16 %v621, %v620
  %v627 = vpack.c.b16 %v623, %v622
  %v628 = vpack.c.b16 %v625, %v624
  %632 = vmatpush.bf16.msra.mxu0 0
  %633 = vmatpush.bf16.msra.mxu0 0
  %634 = vmatpush.bf16.msra.mxu0 0
  %635 = vmatpush.bf16.msra.mxu0 0
  %636 = vmatpush.bf16.msra.mxu0 0
  %637 = vmatpush.bf16.msra.mxu0 %v628
  %638 = vmatpush.bf16.msra.mxu0 %v627
  %639 = vmatpush.bf16.msra.mxu0 %v626
  %640 = vmatmul.bf16.gmra.mxu0 %v205
  %v641 = vpop.f32.mrf.mxu0
  %v642 = vadd.f32 %v62, %v641
  %v643 = vpop.f32.mrf.mxu0
  %v644 = vadd.f32 %v67, %v643
  %645 = vmatmul.bf16.gmra.mxu0 %v208
  %v646 = vpop.f32.mrf.mxu0
  %v647 = vadd.f32 %v72, %v646
  %v648 = vpop.f32.mrf.mxu0
  %v649 = vadd.f32 %v77, %v648
  %650 = vmatmul.bf16.gmra.mxu0 %v211
  %v651 = vpop.f32.mrf.mxu0
  %v652 = vadd.f32 %v82, %v651
  %v653 = vpop.f32.mrf.mxu0
  %v654 = vadd.f32 %v87, %v653
  %655 = vmatmul.bf16.gmra.mxu0 %v214
  %v656 = vpop.f32.mrf.mxu0
  %v657 = vadd.f32 %v92, %v656
  %v658 = vpop.f32.mrf.mxu0
  %v659 = vadd.f32 %v97, %v658
  %660 = vmatmul.bf16.gmra.mxu0 %v217
  %v661 = vpop.f32.mrf.mxu0
  %v662 = vadd.f32 %v102, %v661
  %v663 = vpop.f32.mrf.mxu0
  %v664 = vadd.f32 %v107, %v663
  %665 = vmatmul.bf16.gmra.mxu0 %v220
  %v666 = vpop.f32.mrf.mxu0
  %v667 = vadd.f32 %v112, %v666
  %v668 = vpop.f32.mrf.mxu0
  %v669 = vadd.f32 %v117, %v668
  %670 = vmatmul.bf16.gmra.mxu0 %v223
  %v671 = vpop.f32.mrf.mxu0
  %v672 = vadd.f32 %v122, %v671
  %v673 = vpop.f32.mrf.mxu0
  %v674 = vadd.f32 %v127, %v673
  %675 = vmatmul.bf16.gmra.mxu0 %v226
  %v676 = vpop.f32.mrf.mxu0
  %v677 = vadd.f32 %v132, %v676
  %v678 = vpop.f32.mrf.mxu0
  %v679 = vadd.f32 %v137, %v678
  %680 = vdwg.mxu0
  %v681 = vmax.f32 %v642, 0.0
  %v682 = vmax.f32 %v644, 0.0
  %v683 = vmax.f32 %v647, 0.0
  %v684 = vmax.f32 %v649, 0.0
  %v685 = vmax.f32 %v652, 0.0
  %v686 = vmax.f32 %v654, 0.0
  %v687 = vmax.f32 %v657, 0.0
  %v688 = vmax.f32 %v659, 0.0
  %v689 = vmax.f32 %v662, 0.0
  %v690 = vmax.f32 %v664, 0.0
  %v691 = vmax.f32 %v667, 0.0
  %v692 = vmax.f32 %v669, 0.0
  %v693 = vmax.f32 %v672, 0.0
  %v694 = vmax.f32 %v674, 0.0
  %v695 = vmax.f32 %v677, 0.0
  %v696 = vmax.f32 %v679, 0.0
  %v697 = vmax.f32 %v592, %v681
  %v698 = vmax.f32 %v593, %v682
  %v699 = vmax.f32 %v594, %v683
  %v700 = vmax.f32 %v595, %v684
  %v701 = vmax.f32 %v596, %v685
  %v702 = vmax.f32 %v597, %v686
  %v703 = vmax.f32 %v598, %v687
  %v704 = vmax.f32 %v599, %v688
  %v705 = vmax.f32 %v600, %v689
  %v706 = vmax.f32 %v601, %v690
  %v707 = vmax.f32 %v602, %v691
  %v708 = vmax.f32 %v603, %v692
  %v709 = vmax.f32 %v604, %v693
  %v710 = vmax.f32 %v605, %v694
  %v711 = vmax.f32 %v606, %v695
  %v712 = vmax.f32 %v607, %v696
  %v713 = vld [vmem:[%s0 + $0x40] sm:$0xf]
  %v714 = vld [vmem:[%s0 + $0x44] sm:$0xf]
  %v715 = vld [vmem:[%s0 + $0x48] sm:$0xf]
  %v716 = vld [vmem:[%s0 + $0x4c] sm:$0xf]
  %v717 = vld [vmem:[%s0 + $0x50] sm:$0xf]
  %v718 = vld [vmem:[%s0 + $0x54] sm:$0xf]
  %v725 = vunpack.c.l.b16 %v713
  %v726 = vunpack.c.l.b16 %v714
  %v727 = vunpack.c.l.b16 %v715
  %v728 = vunpack.c.l.b16 %v716
  %v729 = vunpack.c.l.b16 %v717
  %v730 = vunpack.c.l.b16 %v718
  %v731 = vpack.c.b16 %v726, %v725
  %v732 = vpack.c.b16 %v728, %v727
  %v733 = vpack.c.b16 %v730, %v729
  %737 = vmatpush.bf16.msra.mxu0 0
  %738 = vmatpush.bf16.msra.mxu0 0
  %739 = vmatpush.bf16.msra.mxu0 0
  %740 = vmatpush.bf16.msra.mxu0 0
  %741 = vmatpush.bf16.msra.mxu0 0
  %742 = vmatpush.bf16.msra.mxu0 %v733
  %743 = vmatpush.bf16.msra.mxu0 %v732
  %744 = vmatpush.bf16.msra.mxu0 %v731
  %745 = vmatmul.bf16.gmra.mxu0 %v205
  %v746 = vpop.f32.mrf.mxu0
  %v747 = vadd.f32 %v62, %v746
  %v748 = vpop.f32.mrf.mxu0
  %v749 = vadd.f32 %v67, %v748
  %750 = vmatmul.bf16.gmra.mxu0 %v208
  %v751 = vpop.f32.mrf.mxu0
  %v752 = vadd.f32 %v72, %v751
  %v753 = vpop.f32.mrf.mxu0
  %v754 = vadd.f32 %v77, %v753
  %755 = vmatmul.bf16.gmra.mxu0 %v211
  %v756 = vpop.f32.mrf.mxu0
  %v757 = vadd.f32 %v82, %v756
  %v758 = vpop.f32.mrf.mxu0
  %v759 = vadd.f32 %v87, %v758
  %760 = vmatmul.bf16.gmra.mxu0 %v214
  %v761 = vpop.f32.mrf.mxu0
  %v762 = vadd.f32 %v92, %v761
  %v763 = vpop.f32.mrf.mxu0
  %v764 = vadd.f32 %v97, %v763
  %765 = vmatmul.bf16.gmra.mxu0 %v217
  %v766 = vpop.f32.mrf.mxu0
  %v767 = vadd.f32 %v102, %v766
  %v768 = vpop.f32.mrf.mxu0
  %v769 = vadd.f32 %v107, %v768
  %770 = vmatmul.bf16.gmra.mxu0 %v220
  %v771 = vpop.f32.mrf.mxu0
  %v772 = vadd.f32 %v112, %v771
  %v773 = vpop.f32.mrf.mxu0
  %v774 = vadd.f32 %v117, %v773
  %775 = vmatmul.bf16.gmra.mxu0 %v223
  %v776 = vpop.f32.mrf.mxu0
  %v777 = vadd.f32 %v122, %v776
  %v778 = vpop.f32.mrf.mxu0
  %v779 = vadd.f32 %v127, %v778
  %780 = vmatmul.bf16.gmra.mxu0 %v226
  %v781 = vpop.f32.mrf.mxu0
  %v782 = vadd.f32 %v132, %v781
  %v783 = vpop.f32.mrf.mxu0
  %v784 = vadd.f32 %v137, %v783
  %785 = vdwg.mxu0
  %v786 = vmax.f32 %v747, 0.0
  %v787 = vmax.f32 %v749, 0.0
  %v788 = vmax.f32 %v752, 0.0
  %v789 = vmax.f32 %v754, 0.0
  %v790 = vmax.f32 %v757, 0.0
  %v791 = vmax.f32 %v759, 0.0
  %v792 = vmax.f32 %v762, 0.0
  %v793 = vmax.f32 %v764, 0.0
  %v794 = vmax.f32 %v767, 0.0
  %v795 = vmax.f32 %v769, 0.0
  %v796 = vmax.f32 %v772, 0.0
  %v797 = vmax.f32 %v774, 0.0
  %v798 = vmax.f32 %v777, 0.0
  %v799 = vmax.f32 %v779, 0.0
  %v800 = vmax.f32 %v782, 0.0
  %v801 = vmax.f32 %v784, 0.0
  %v802 = vmax.f32 %v697, %v786
  %v803 = vmax.f32 %v698, %v787
  %v804 = vmax.f32 %v699, %v788
  %v805 = vmax.f32 %v700, %v789
  %v806 = vmax.f32 %v701, %v790
  %v807 = vmax.f32 %v702, %v791
  %v808 = vmax.f32 %v703, %v792
  %v809 = vmax.f32 %v704, %v793
  %v810 = vmax.f32 %v705, %v794
  %v811 = vmax.f32 %v706, %v795
  %v812 = vmax.f32 %v707, %v796
  %v813 = vmax.f32 %v708, %v797
  %v814 = vmax.f32 %v709, %v798
  %v815 = vmax.f32 %v710, %v799
  %v816 = vmax.f32 %v711, %v800
  %v817 = vmax.f32 %v712, %v801
  %v818 = vld [vmem:[%s0 + $0x48] sm:$0xf]
  %v819 = vld [vmem:[%s0 + $0x4c] sm:$0xf]
  %v820 = vld [vmem:[%s0 + $0x50] sm:$0xf]
  %v821 = vld [vmem:[%s0 + $0x54] sm:$0xf]
  %v822 = vld [vmem:[%s0 + $0x58] sm:$0xf]
  %v823 = vld [vmem:[%s0 + $0x5c] sm:$0xf]
  %v830 = vunpack.c.l.b16 %v818
  %v831 = vunpack.c.l.b16 %v819
  %v832 = vunpack.c.l.b16 %v820
  %v833 = vunpack.c.l.b16 %v821
  %v834 = vunpack.c.l.b16 %v822
  %v835 = vunpack.c.l.b16 %v823
  %v836 = vpack.c.b16 %v831, %v830
  %v837 = vpack.c.b16 %v833, %v832
  %v838 = vpack.c.b16 %v835, %v834
  %842 = vmatpush.bf16.msra.mxu0 0
  %843 = vmatpush.bf16.msra.mxu0 0
  %844 = vmatpush.bf16.msra.mxu0 0
  %845 = vmatpush.bf16.msra.mxu0 0
  %846 = vmatpush.bf16.msra.mxu0 0
  %847 = vmatpush.bf16.msra.mxu0 %v838
  %848 = vmatpush.bf16.msra.mxu0 %v837
  %849 = vmatpush.bf16.msra.mxu0 %v836
  %850 = vmatmul.bf16.gmra.mxu0 %v205
  %v851 = vpop.f32.mrf.mxu0
  %v852 = vadd.f32 %v62, %v851
  %v853 = vpop.f32.mrf.mxu0
  %v854 = vadd.f32 %v67, %v853
  %855 = vmatmul.bf16.gmra.mxu0 %v208
  %v856 = vpop.f32.mrf.mxu0
  %v857 = vadd.f32 %v72, %v856
  %v858 = vpop.f32.mrf.mxu0
  %v859 = vadd.f32 %v77, %v858
  %860 = vmatmul.bf16.gmra.mxu0 %v211
  %v861 = vpop.f32.mrf.mxu0
  %v862 = vadd.f32 %v82, %v861
  %v863 = vpop.f32.mrf.mxu0
  %v864 = vadd.f32 %v87, %v863
  %865 = vmatmul.bf16.gmra.mxu0 %v214
  %v866 = vpop.f32.mrf.mxu0
  %v867 = vadd.f32 %v92, %v866
  %v868 = vpop.f32.mrf.mxu0
  %v869 = vadd.f32 %v97, %v868
  %870 = vmatmul.bf16.gmra.mxu0 %v217
  %v871 = vpop.f32.mrf.mxu0
  %v872 = vadd.f32 %v102, %v871
  %v873 = vpop.f32.mrf.mxu0
  %v874 = vadd.f32 %v107, %v873
  %875 = vmatmul.bf16.gmra.mxu0 %v220
  %v876 = vpop.f32.mrf.mxu0
  %v877 = vadd.f32 %v112, %v876
  %v878 = vpop.f32.mrf.mxu0
  %v879 = vadd.f32 %v117, %v878
  %880 = vmatmul.bf16.gmra.mxu0 %v223
  %v881 = vpop.f32.mrf.mxu0
  %v882 = vadd.f32 %v122, %v881
  %v883 = vpop.f32.mrf.mxu0
  %v884 = vadd.f32 %v127, %v883
  %885 = vmatmul.bf16.gmra.mxu0 %v226
  %v886 = vpop.f32.mrf.mxu0
  %v887 = vadd.f32 %v132, %v886
  %v888 = vpop.f32.mrf.mxu0
  %v889 = vadd.f32 %v137, %v888
  %890 = vdwg.mxu0
  %v891 = vmax.f32 %v852, 0.0
  %v892 = vmax.f32 %v854, 0.0
  %v893 = vmax.f32 %v857, 0.0
  %v894 = vmax.f32 %v859, 0.0
  %v895 = vmax.f32 %v862, 0.0
  %v896 = vmax.f32 %v864, 0.0
  %v897 = vmax.f32 %v867, 0.0
  %v898 = vmax.f32 %v869, 0.0
  %v899 = vmax.f32 %v872, 0.0
  %v900 = vmax.f32 %v874, 0.0
  %v901 = vmax.f32 %v877, 0.0
  %v902 = vmax.f32 %v879, 0.0
  %v903 = vmax.f32 %v882, 0.0
  %v904 = vmax.f32 %v884, 0.0
  %v905 = vmax.f32 %v887, 0.0
  %v906 = vmax.f32 %v889, 0.0
  %v907 = vld [vmem:[%s0 + $0x50] sm:$0xf]
  %v908 = vld [vmem:[%s0 + $0x54] sm:$0xf]
  %v909 = vld [vmem:[%s0 + $0x58] sm:$0xf]
  %v910 = vld [vmem:[%s0 + $0x5c] sm:$0xf]
  %v911 = vld [vmem:[%s0 + $0x60] sm:$0xf]
  %v912 = vld [vmem:[%s0 + $0x64] sm:$0xf]
  %v919 = vunpack.c.l.b16 %v907
  %v920 = vunpack.c.l.b16 %v908
  %v921 = vunpack.c.l.b16 %v909
  %v922 = vunpack.c.l.b16 %v910
  %v923 = vunpack.c.l.b16 %v911
  %v924 = vunpack.c.l.b16 %v912
  %v925 = vpack.c.b16 %v920, %v919
  %v926 = vpack.c.b16 %v922, %v921
  %v927 = vpack.c.b16 %v924, %v923
  %931 = vmatpush.bf16.msra.mxu0 0
  %932 = vmatpush.bf16.msra.mxu0 0
  %933 = vmatpush.bf16.msra.mxu0 0
  %934 = vmatpush.bf16.msra.mxu0 0
  %935 = vmatpush.bf16.msra.mxu0 0
  %936 = vmatpush.bf16.msra.mxu0 %v927
  %937 = vmatpush.bf16.msra.mxu0 %v926
  %938 = vmatpush.bf16.msra.mxu0 %v925
  %939 = vmatmul.bf16.gmra.mxu0 %v205
  %v940 = vpop.f32.mrf.mxu0
  %v941 = vadd.f32 %v62, %v940
  %v942 = vpop.f32.mrf.mxu0
  %v943 = vadd.f32 %v67, %v942
  %944 = vmatmul.bf16.gmra.mxu0 %v208
  %v945 = vpop.f32.mrf.mxu0
  %v946 = vadd.f32 %v72, %v945
  %v947 = vpop.f32.mrf.mxu0
  %v948 = vadd.f32 %v77, %v947
  %949 = vmatmul.bf16.gmra.mxu0 %v211
  %v950 = vpop.f32.mrf.mxu0
  %v951 = vadd.f32 %v82, %v950
  %v952 = vpop.f32.mrf.mxu0
  %v953 = vadd.f32 %v87, %v952
  %954 = vmatmul.bf16.gmra.mxu0 %v214
  %v955 = vpop.f32.mrf.mxu0
  %v956 = vadd.f32 %v92, %v955
  %v957 = vpop.f32.mrf.mxu0
  %v958 = vadd.f32 %v97, %v957
  %959 = vmatmul.bf16.gmra.mxu0 %v217
  %v960 = vpop.f32.mrf.mxu0
  %v961 = vadd.f32 %v102, %v960
  %v962 = vpop.f32.mrf.mxu0
  %v963 = vadd.f32 %v107, %v962
  %964 = vmatmul.bf16.gmra.mxu0 %v220
  %v965 = vpop.f32.mrf.mxu0
  %v966 = vadd.f32 %v112, %v965
  %v967 = vpop.f32.mrf.mxu0
  %v968 = vadd.f32 %v117, %v967
  %969 = vmatmul.bf16.gmra.mxu0 %v223
  %v970 = vpop.f32.mrf.mxu0
  %v971 = vadd.f32 %v122, %v970
  %v972 = vpop.f32.mrf.mxu0
  %v973 = vadd.f32 %v127, %v972
  %974 = vmatmul.bf16.gmra.mxu0 %v226
  %v975 = vpop.f32.mrf.mxu0
  %v976 = vadd.f32 %v132, %v975
  %v977 = vpop.f32.mrf.mxu0
  %v978 = vadd.f32 %v137, %v977
  %979 = vdwg.mxu0
  %v980 = vmax.f32 %v941, 0.0
  %v981 = vmax.f32 %v943, 0.0
  %v982 = vmax.f32 %v946, 0.0
  %v983 = vmax.f32 %v948, 0.0
  %v984 = vmax.f32 %v951, 0.0
  %v985 = vmax.f32 %v953, 0.0
  %v986 = vmax.f32 %v956, 0.0
  %v987 = vmax.f32 %v958, 0.0
  %v988 = vmax.f32 %v961, 0.0
  %v989 = vmax.f32 %v963, 0.0
  %v990 = vmax.f32 %v966, 0.0
  %v991 = vmax.f32 %v968, 0.0
  %v992 = vmax.f32 %v971, 0.0
  %v993 = vmax.f32 %v973, 0.0
  %v994 = vmax.f32 %v976, 0.0
  %v995 = vmax.f32 %v978, 0.0
  %v996 = vmax.f32 %v891, %v980
  %v997 = vmax.f32 %v892, %v981
  %v998 = vmax.f32 %v893, %v982
  %v999 = vmax.f32 %v894, %v983
  %v1000 = vmax.f32 %v895, %v984
  %v1001 = vmax.f32 %v896, %v985
  %v1002 = vmax.f32 %v897, %v986
  %v1003 = vmax.f32 %v898, %v987
  %v1004 = vmax.f32 %v899, %v988
  %v1005 = vmax.f32 %v900, %v989
  %v1006 = vmax.f32 %v901, %v990
  %v1007 = vmax.f32 %v902, %v991
  %v1008 = vmax.f32 %v903, %v992
  %v1009 = vmax.f32 %v904, %v993
  %v1010 = vmax.f32 %v905, %v994
  %v1011 = vmax.f32 %v906, %v995
  %v1012 = vld [vmem:[%s0 + $0x58] sm:$0xf]
  %v1013 = vld [vmem:[%s0 + $0x5c] sm:$0xf]
  %v1014 = vld [vmem:[%s0 + $0x60] sm:$0xf]
  %v1015 = vld [vmem:[%s0 + $0x64] sm:$0xf]
  %v1016 = vld [vmem:[%s0 + $0x68] sm:$0xf]
  %v1017 = vld [vmem:[%s0 + $0x6c] sm:$0xf]
  %v1024 = vunpack.c.l.b16 %v1012
  %v1025 = vunpack.c.l.b16 %v1013
  %v1026 = vunpack.c.l.b16 %v1014
  %v1027 = vunpack.c.l.b16 %v1015
  %v1028 = vunpack.c.l.b16 %v1016
  %v1029 = vunpack.c.l.b16 %v1017
  %v1030 = vpack.c.b16 %v1025, %v1024
  %v1031 = vpack.c.b16 %v1027, %v1026
  %v1032 = vpack.c.b16 %v1029, %v1028
  %1036 = vmatpush.bf16.msra.mxu0 0
  %1037 = vmatpush.bf16.msra.mxu0 0
  %1038 = vmatpush.bf16.msra.mxu0 0
  %1039 = vmatpush.bf16.msra.mxu0 0
  %1040 = vmatpush.bf16.msra.mxu0 0
  %1041 = vmatpush.bf16.msra.mxu0 %v1032
  %1042 = vmatpush.bf16.msra.mxu0 %v1031
  %1043 = vmatpush.bf16.msra.mxu0 %v1030
  %1044 = vmatmul.bf16.gmra.mxu0 %v205
  %v1045 = vpop.f32.mrf.mxu0
  %v1046 = vadd.f32 %v62, %v1045
  %v1047 = vpop.f32.mrf.mxu0
  %v1048 = vadd.f32 %v67, %v1047
  %1049 = vmatmul.bf16.gmra.mxu0 %v208
  %v1050 = vpop.f32.mrf.mxu0
  %v1051 = vadd.f32 %v72, %v1050
  %v1052 = vpop.f32.mrf.mxu0
  %v1053 = vadd.f32 %v77, %v1052
  %1054 = vmatmul.bf16.gmra.mxu0 %v211
  %v1055 = vpop.f32.mrf.mxu0
  %v1056 = vadd.f32 %v82, %v1055
  %v1057 = vpop.f32.mrf.mxu0
  %v1058 = vadd.f32 %v87, %v1057
  %1059 = vmatmul.bf16.gmra.mxu0 %v214
  %v1060 = vpop.f32.mrf.mxu0
  %v1061 = vadd.f32 %v92, %v1060
  %v1062 = vpop.f32.mrf.mxu0
  %v1063 = vadd.f32 %v97, %v1062
  %1064 = vmatmul.bf16.gmra.mxu0 %v217
  %v1065 = vpop.f32.mrf.mxu0
  %v1066 = vadd.f32 %v102, %v1065
  %v1067 = vpop.f32.mrf.mxu0
  %v1068 = vadd.f32 %v107, %v1067
  %1069 = vmatmul.bf16.gmra.mxu0 %v220
  %v1070 = vpop.f32.mrf.mxu0
  %v1071 = vadd.f32 %v112, %v1070
  %v1072 = vpop.f32.mrf.mxu0
  %v1073 = vadd.f32 %v117, %v1072
  %1074 = vmatmul.bf16.gmra.mxu0 %v223
  %v1075 = vpop.f32.mrf.mxu0
  %v1076 = vadd.f32 %v122, %v1075
  %v1077 = vpop.f32.mrf.mxu0
  %v1078 = vadd.f32 %v127, %v1077
  %1079 = vmatmul.bf16.gmra.mxu0 %v226
  %v1080 = vpop.f32.mrf.mxu0
  %v1081 = vadd.f32 %v132, %v1080
  %v1082 = vpop.f32.mrf.mxu0
  %v1083 = vadd.f32 %v137, %v1082
  %1084 = vdwg.mxu0
  %v1085 = vmax.f32 %v1046, 0.0
  %v1086 = vmax.f32 %v1048, 0.0
  %v1087 = vmax.f32 %v1051, 0.0
  %v1088 = vmax.f32 %v1053, 0.0
  %v1089 = vmax.f32 %v1056, 0.0
  %v1090 = vmax.f32 %v1058, 0.0
  %v1091 = vmax.f32 %v1061, 0.0
  %v1092 = vmax.f32 %v1063, 0.0
  %v1093 = vmax.f32 %v1066, 0.0
  %v1094 = vmax.f32 %v1068, 0.0
  %v1095 = vmax.f32 %v1071, 0.0
  %v1096 = vmax.f32 %v1073, 0.0
  %v1097 = vmax.f32 %v1076, 0.0
  %v1098 = vmax.f32 %v1078, 0.0
  %v1099 = vmax.f32 %v1081, 0.0
  %v1100 = vmax.f32 %v1083, 0.0
  %v1101 = vmax.f32 %v996, %v1085
  %v1102 = vmax.f32 %v997, %v1086
  %v1103 = vmax.f32 %v998, %v1087
  %v1104 = vmax.f32 %v999, %v1088
  %v1105 = vmax.f32 %v1000, %v1089
  %v1106 = vmax.f32 %v1001, %v1090
  %v1107 = vmax.f32 %v1002, %v1091
  %v1108 = vmax.f32 %v1003, %v1092
  %v1109 = vmax.f32 %v1004, %v1093
  %v1110 = vmax.f32 %v1005, %v1094
  %v1111 = vmax.f32 %v1006, %v1095
  %v1112 = vmax.f32 %v1007, %v1096
  %v1113 = vmax.f32 %v1008, %v1097
  %v1114 = vmax.f32 %v1009, %v1098
  %v1115 = vmax.f32 %v1010, %v1099
  %v1116 = vmax.f32 %v1011, %v1100
  %v1117 = vld [vmem:[%s0 + $0x60] sm:$0xf]
  %v1118 = vld [vmem:[%s0 + $0x64] sm:$0xf]
  %v1119 = vld [vmem:[%s0 + $0x68] sm:$0xf]
  %v1120 = vld [vmem:[%s0 + $0x6c] sm:$0xf]
  %v1121 = vld [vmem:[%s0 + $0x70] sm:$0xf]
  %v1122 = vld [vmem:[%s0 + $0x74] sm:$0xf]
  %v1129 = vunpack.c.l.b16 %v1117
  %v1130 = vunpack.c.l.b16 %v1118
  %v1131 = vunpack.c.l.b16 %v1119
  %v1132 = vunpack.c.l.b16 %v1120
  %v1133 = vunpack.c.l.b16 %v1121
  %v1134 = vunpack.c.l.b16 %v1122
  %v1135 = vpack.c.b16 %v1130, %v1129
  %v1136 = vpack.c.b16 %v1132, %v1131
  %v1137 = vpack.c.b16 %v1134, %v1133
  %1141 = vmatpush.bf16.msra.mxu0 0
  %1142 = vmatpush.bf16.msra.mxu0 0
  %1143 = vmatpush.bf16.msra.mxu0 0
  %1144 = vmatpush.bf16.msra.mxu0 0
  %1145 = vmatpush.bf16.msra.mxu0 0
  %1146 = vmatpush.bf16.msra.mxu0 %v1137
  %1147 = vmatpush.bf16.msra.mxu0 %v1136
  %1148 = vmatpush.bf16.msra.mxu0 %v1135
  %1149 = vmatmul.bf16.gmra.mxu0 %v205
  %v1150 = vpop.f32.mrf.mxu0
  %v1151 = vadd.f32 %v62, %v1150
  %v1152 = vpop.f32.mrf.mxu0
  %v1153 = vadd.f32 %v67, %v1152
  %1154 = vmatmul.bf16.gmra.mxu0 %v208
  %v1155 = vpop.f32.mrf.mxu0
  %v1156 = vadd.f32 %v72, %v1155
  %v1157 = vpop.f32.mrf.mxu0
  %v1158 = vadd.f32 %v77, %v1157
  %1159 = vmatmul.bf16.gmra.mxu0 %v211
  %v1160 = vpop.f32.mrf.mxu0
  %v1161 = vadd.f32 %v82, %v1160
  %v1162 = vpop.f32.mrf.mxu0
  %v1163 = vadd.f32 %v87, %v1162
  %1164 = vmatmul.bf16.gmra.mxu0 %v214
  %v1165 = vpop.f32.mrf.mxu0
  %v1166 = vadd.f32 %v92, %v1165
  %v1167 = vpop.f32.mrf.mxu0
  %v1168 = vadd.f32 %v97, %v1167
  %1169 = vmatmul.bf16.gmra.mxu0 %v217
  %v1170 = vpop.f32.mrf.mxu0
  %v1171 = vadd.f32 %v102, %v1170
  %v1172 = vpop.f32.mrf.mxu0
  %v1173 = vadd.f32 %v107, %v1172
  %1174 = vmatmul.bf16.gmra.mxu0 %v220
  %v1175 = vpop.f32.mrf.mxu0
  %v1176 = vadd.f32 %v112, %v1175
  %v1177 = vpop.f32.mrf.mxu0
  %v1178 = vadd.f32 %v117, %v1177
  %1179 = vmatmul.bf16.gmra.mxu0 %v223
  %v1180 = vpop.f32.mrf.mxu0
  %v1181 = vadd.f32 %v122, %v1180
  %v1182 = vpop.f32.mrf.mxu0
  %v1183 = vadd.f32 %v127, %v1182
  %1184 = vmatmul.bf16.gmra.mxu0 %v226
  %v1185 = vpop.f32.mrf.mxu0
  %v1186 = vadd.f32 %v132, %v1185
  %v1187 = vpop.f32.mrf.mxu0
  %v1188 = vadd.f32 %v137, %v1187
  %1189 = vdwg.mxu0
  %v1190 = vmax.f32 %v1151, 0.0
  %v1191 = vmax.f32 %v1153, 0.0
  %v1192 = vmax.f32 %v1156, 0.0
  %v1193 = vmax.f32 %v1158, 0.0
  %v1194 = vmax.f32 %v1161, 0.0
  %v1195 = vmax.f32 %v1163, 0.0
  %v1196 = vmax.f32 %v1166, 0.0
  %v1197 = vmax.f32 %v1168, 0.0
  %v1198 = vmax.f32 %v1171, 0.0
  %v1199 = vmax.f32 %v1173, 0.0
  %v1200 = vmax.f32 %v1176, 0.0
  %v1201 = vmax.f32 %v1178, 0.0
  %v1202 = vmax.f32 %v1181, 0.0
  %v1203 = vmax.f32 %v1183, 0.0
  %v1204 = vmax.f32 %v1186, 0.0
  %v1205 = vmax.f32 %v1188, 0.0
  %v1206 = vmax.f32 %v1101, %v1190
  %v1207 = vmax.f32 %v1102, %v1191
  %v1208 = vmax.f32 %v1103, %v1192
  %v1209 = vmax.f32 %v1104, %v1193
  %v1210 = vmax.f32 %v1105, %v1194
  %v1211 = vmax.f32 %v1106, %v1195
  %v1212 = vmax.f32 %v1107, %v1196
  %v1213 = vmax.f32 %v1108, %v1197
  %v1214 = vmax.f32 %v1109, %v1198
  %v1215 = vmax.f32 %v1110, %v1199
  %v1216 = vmax.f32 %v1111, %v1200
  %v1217 = vmax.f32 %v1112, %v1201
  %v1218 = vmax.f32 %v1113, %v1202
  %v1219 = vmax.f32 %v1114, %v1203
  %v1220 = vmax.f32 %v1115, %v1204
  %v1221 = vmax.f32 %v1116, %v1205
  %v1222 = vld [vmem:[%s0 + $0x68] sm:$0xf]
  %v1223 = vld [vmem:[%s0 + $0x6c] sm:$0xf]
  %v1224 = vld [vmem:[%s0 + $0x70] sm:$0xf]
  %v1225 = vld [vmem:[%s0 + $0x74] sm:$0xf]
  %v1226 = vld [vmem:[%s0 + $0x78] sm:$0xf]
  %v1227 = vld [vmem:[%s0 + $0x7c] sm:$0xf]
  %v1234 = vunpack.c.l.b16 %v1222
  %v1235 = vunpack.c.l.b16 %v1223
  %v1236 = vunpack.c.l.b16 %v1224
  %v1237 = vunpack.c.l.b16 %v1225
  %v1238 = vunpack.c.l.b16 %v1226
  %v1239 = vunpack.c.l.b16 %v1227
  %v1240 = vpack.c.b16 %v1235, %v1234
  %v1241 = vpack.c.b16 %v1237, %v1236
  %v1242 = vpack.c.b16 %v1239, %v1238
  %1246 = vmatpush.bf16.msra.mxu0 0
  %1247 = vmatpush.bf16.msra.mxu0 0
  %1248 = vmatpush.bf16.msra.mxu0 0
  %1249 = vmatpush.bf16.msra.mxu0 0
  %1250 = vmatpush.bf16.msra.mxu0 0
  %1251 = vmatpush.bf16.msra.mxu0 %v1242
  %1252 = vmatpush.bf16.msra.mxu0 %v1241
  %1253 = vmatpush.bf16.msra.mxu0 %v1240
  %1254 = vmatmul.bf16.gmra.mxu0 %v205
  %v1255 = vpop.f32.mrf.mxu0
  %v1256 = vadd.f32 %v62, %v1255
  %v1257 = vpop.f32.mrf.mxu0
  %v1258 = vadd.f32 %v67, %v1257
  %1259 = vmatmul.bf16.gmra.mxu0 %v208
  %v1260 = vpop.f32.mrf.mxu0
  %v1261 = vadd.f32 %v72, %v1260
  %v1262 = vpop.f32.mrf.mxu0
  %v1263 = vadd.f32 %v77, %v1262
  %1264 = vmatmul.bf16.gmra.mxu0 %v211
  %v1265 = vpop.f32.mrf.mxu0
  %v1266 = vadd.f32 %v82, %v1265
  %v1267 = vpop.f32.mrf.mxu0
  %v1268 = vadd.f32 %v87, %v1267
  %1269 = vmatmul.bf16.gmra.mxu0 %v214
  %v1270 = vpop.f32.mrf.mxu0
  %v1271 = vadd.f32 %v92, %v1270
  %v1272 = vpop.f32.mrf.mxu0
  %v1273 = vadd.f32 %v97, %v1272
  %1274 = vmatmul.bf16.gmra.mxu0 %v217
  %v1275 = vpop.f32.mrf.mxu0
  %v1276 = vadd.f32 %v102, %v1275
  %v1277 = vpop.f32.mrf.mxu0
  %v1278 = vadd.f32 %v107, %v1277
  %1279 = vmatmul.bf16.gmra.mxu0 %v220
  %v1280 = vpop.f32.mrf.mxu0
  %v1281 = vadd.f32 %v112, %v1280
  %v1282 = vpop.f32.mrf.mxu0
  %v1283 = vadd.f32 %v117, %v1282
  %1284 = vmatmul.bf16.gmra.mxu0 %v223
  %v1285 = vpop.f32.mrf.mxu0
  %v1286 = vadd.f32 %v122, %v1285
  %v1287 = vpop.f32.mrf.mxu0
  %v1288 = vadd.f32 %v127, %v1287
  %1289 = vmatmul.bf16.gmra.mxu0 %v226
  %v1290 = vpop.f32.mrf.mxu0
  %v1291 = vadd.f32 %v132, %v1290
  %v1292 = vpop.f32.mrf.mxu0
  %v1293 = vadd.f32 %v137, %v1292
  %1294 = vdwg.mxu0
  %v1295 = vmax.f32 %v1256, 0.0
  %v1296 = vmax.f32 %v1258, 0.0
  %v1297 = vmax.f32 %v1261, 0.0
  %v1298 = vmax.f32 %v1263, 0.0
  %v1299 = vmax.f32 %v1266, 0.0
  %v1300 = vmax.f32 %v1268, 0.0
  %v1301 = vmax.f32 %v1271, 0.0
  %v1302 = vmax.f32 %v1273, 0.0
  %v1303 = vmax.f32 %v1276, 0.0
  %v1304 = vmax.f32 %v1278, 0.0
  %v1305 = vmax.f32 %v1281, 0.0
  %v1306 = vmax.f32 %v1283, 0.0
  %v1307 = vmax.f32 %v1286, 0.0
  %v1308 = vmax.f32 %v1288, 0.0
  %v1309 = vmax.f32 %v1291, 0.0
  %v1310 = vmax.f32 %v1293, 0.0
  %v1311 = vmax.f32 %v1206, %v1295
  %v1312 = vmax.f32 %v1207, %v1296
  %v1313 = vmax.f32 %v1208, %v1297
  %v1314 = vmax.f32 %v1209, %v1298
  %v1315 = vmax.f32 %v1210, %v1299
  %v1316 = vmax.f32 %v1211, %v1300
  %v1317 = vmax.f32 %v1212, %v1301
  %v1318 = vmax.f32 %v1213, %v1302
  %v1319 = vmax.f32 %v1214, %v1303
  %v1320 = vmax.f32 %v1215, %v1304
  %v1321 = vmax.f32 %v1216, %v1305
  %v1322 = vmax.f32 %v1217, %v1306
  %v1323 = vmax.f32 %v1218, %v1307
  %v1324 = vmax.f32 %v1219, %v1308
  %v1325 = vmax.f32 %v1220, %v1309
  %v1326 = vmax.f32 %v1221, %v1310
  %v1327 = vld [vmem:[%s0 + $0x70] sm:$0xf]
  %v1328 = vld [vmem:[%s0 + $0x74] sm:$0xf]
  %v1329 = vld [vmem:[%s0 + $0x78] sm:$0xf]
  %v1330 = vld [vmem:[%s0 + $0x7c] sm:$0xf]
  %v1331 = vld [vmem:[%s0 + $0x80] sm:$0xf]
  %v1332 = vld [vmem:[%s0 + $0x84] sm:$0xf]
  %v1339 = vunpack.c.l.b16 %v1327
  %v1340 = vunpack.c.l.b16 %v1328
  %v1341 = vunpack.c.l.b16 %v1329
  %v1342 = vunpack.c.l.b16 %v1330
  %v1343 = vunpack.c.l.b16 %v1331
  %v1344 = vunpack.c.l.b16 %v1332
  %v1345 = vpack.c.b16 %v1340, %v1339
  %v1346 = vpack.c.b16 %v1342, %v1341
  %v1347 = vpack.c.b16 %v1344, %v1343
  %1351 = vmatpush.bf16.msra.mxu0 0
  %1352 = vmatpush.bf16.msra.mxu0 0
  %1353 = vmatpush.bf16.msra.mxu0 0
  %1354 = vmatpush.bf16.msra.mxu0 0
  %1355 = vmatpush.bf16.msra.mxu0 0
  %1356 = vmatpush.bf16.msra.mxu0 %v1347
  %1357 = vmatpush.bf16.msra.mxu0 %v1346
  %1358 = vmatpush.bf16.msra.mxu0 %v1345
  %1359 = vmatmul.bf16.gmra.mxu0 %v205
  %v1360 = vpop.f32.mrf.mxu0
  %v1361 = vadd.f32 %v62, %v1360
  %v1362 = vpop.f32.mrf.mxu0
  %v1363 = vadd.f32 %v67, %v1362
  %1364 = vmatmul.bf16.gmra.mxu0 %v208
  %v1365 = vpop.f32.mrf.mxu0
  %v1366 = vadd.f32 %v72, %v1365
  %v1367 = vpop.f32.mrf.mxu0
  %v1368 = vadd.f32 %v77, %v1367
  %1369 = vmatmul.bf16.gmra.mxu0 %v211
  %v1370 = vpop.f32.mrf.mxu0
  %v1371 = vadd.f32 %v82, %v1370
  %v1372 = vpop.f32.mrf.mxu0
  %v1373 = vadd.f32 %v87, %v1372
  %1374 = vmatmul.bf16.gmra.mxu0 %v214
  %v1375 = vpop.f32.mrf.mxu0
  %v1376 = vadd.f32 %v92, %v1375
  %v1377 = vpop.f32.mrf.mxu0
  %v1378 = vadd.f32 %v97, %v1377
  %1379 = vmatmul.bf16.gmra.mxu0 %v217
  %v1380 = vpop.f32.mrf.mxu0
  %v1381 = vadd.f32 %v102, %v1380
  %v1382 = vpop.f32.mrf.mxu0
  %v1383 = vadd.f32 %v107, %v1382
  %1384 = vmatmul.bf16.gmra.mxu0 %v220
  %v1385 = vpop.f32.mrf.mxu0
  %v1386 = vadd.f32 %v112, %v1385
  %v1387 = vpop.f32.mrf.mxu0
  %v1388 = vadd.f32 %v117, %v1387
  %1389 = vmatmul.bf16.gmra.mxu0 %v223
  %v1390 = vpop.f32.mrf.mxu0
  %v1391 = vadd.f32 %v122, %v1390
  %v1392 = vpop.f32.mrf.mxu0
  %v1393 = vadd.f32 %v127, %v1392
  %1394 = vmatmul.bf16.gmra.mxu0 %v226
  %v1395 = vpop.f32.mrf.mxu0
  %v1396 = vadd.f32 %v132, %v1395
  %v1397 = vpop.f32.mrf.mxu0
  %v1398 = vadd.f32 %v137, %v1397
  %1399 = vdwg.mxu0
  %v1400 = vmax.f32 %v1361, 0.0
  %v1401 = vmax.f32 %v1363, 0.0
  %v1402 = vmax.f32 %v1366, 0.0
  %v1403 = vmax.f32 %v1368, 0.0
  %v1404 = vmax.f32 %v1371, 0.0
  %v1405 = vmax.f32 %v1373, 0.0
  %v1406 = vmax.f32 %v1376, 0.0
  %v1407 = vmax.f32 %v1378, 0.0
  %v1408 = vmax.f32 %v1381, 0.0
  %v1409 = vmax.f32 %v1383, 0.0
  %v1410 = vmax.f32 %v1386, 0.0
  %v1411 = vmax.f32 %v1388, 0.0
  %v1412 = vmax.f32 %v1391, 0.0
  %v1413 = vmax.f32 %v1393, 0.0
  %v1414 = vmax.f32 %v1396, 0.0
  %v1415 = vmax.f32 %v1398, 0.0
  %v1416 = vmax.f32 %v1311, %v1400
  %v1417 = vmax.f32 %v1312, %v1401
  %v1418 = vmax.f32 %v1313, %v1402
  %v1419 = vmax.f32 %v1314, %v1403
  %v1420 = vmax.f32 %v1315, %v1404
  %v1421 = vmax.f32 %v1316, %v1405
  %v1422 = vmax.f32 %v1317, %v1406
  %v1423 = vmax.f32 %v1318, %v1407
  %v1424 = vmax.f32 %v1319, %v1408
  %v1425 = vmax.f32 %v1320, %v1409
  %v1426 = vmax.f32 %v1321, %v1410
  %v1427 = vmax.f32 %v1322, %v1411
  %v1428 = vmax.f32 %v1323, %v1412
  %v1429 = vmax.f32 %v1324, %v1413
  %v1430 = vmax.f32 %v1325, %v1414
  %v1431 = vmax.f32 %v1326, %v1415
  %v1432 = vld [vmem:[%s0 + $0x78] sm:$0xf]
  %v1433 = vld [vmem:[%s0 + $0x7c] sm:$0xf]
  %v1434 = vld [vmem:[%s0 + $0x80] sm:$0xf]
  %v1435 = vld [vmem:[%s0 + $0x84] sm:$0xf]
  %v1436 = vld [vmem:[%s0 + $0x88] sm:$0xf]
  %v1437 = vld [vmem:[%s0 + $0x8c] sm:$0xf]
  %v1444 = vunpack.c.l.b16 %v1432
  %v1445 = vunpack.c.l.b16 %v1433
  %v1446 = vunpack.c.l.b16 %v1434
  %v1447 = vunpack.c.l.b16 %v1435
  %v1448 = vunpack.c.l.b16 %v1436
  %v1449 = vunpack.c.l.b16 %v1437
  %v1450 = vpack.c.b16 %v1445, %v1444
  %v1451 = vpack.c.b16 %v1447, %v1446
  %v1452 = vpack.c.b16 %v1449, %v1448
  %1456 = vmatpush.bf16.msra.mxu0 0
  %1457 = vmatpush.bf16.msra.mxu0 0
  %1458 = vmatpush.bf16.msra.mxu0 0
  %1459 = vmatpush.bf16.msra.mxu0 0
  %1460 = vmatpush.bf16.msra.mxu0 0
  %1461 = vmatpush.bf16.msra.mxu0 %v1452
  %1462 = vmatpush.bf16.msra.mxu0 %v1451
  %1463 = vmatpush.bf16.msra.mxu0 %v1450
  %1464 = vmatmul.bf16.gmra.mxu0 %v205
  %v1465 = vpop.f32.mrf.mxu0
  %v1466 = vadd.f32 %v62, %v1465
  %v1467 = vpop.f32.mrf.mxu0
  %v1468 = vadd.f32 %v67, %v1467
  %1469 = vmatmul.bf16.gmra.mxu0 %v208
  %v1470 = vpop.f32.mrf.mxu0
  %v1471 = vadd.f32 %v72, %v1470
  %v1472 = vpop.f32.mrf.mxu0
  %v1473 = vadd.f32 %v77, %v1472
  %1474 = vmatmul.bf16.gmra.mxu0 %v211
  %v1475 = vpop.f32.mrf.mxu0
  %v1476 = vadd.f32 %v82, %v1475
  %v1477 = vpop.f32.mrf.mxu0
  %v1478 = vadd.f32 %v87, %v1477
  %1479 = vmatmul.bf16.gmra.mxu0 %v214
  %v1480 = vpop.f32.mrf.mxu0
  %v1481 = vadd.f32 %v92, %v1480
  %v1482 = vpop.f32.mrf.mxu0
  %v1483 = vadd.f32 %v97, %v1482
  %1484 = vmatmul.bf16.gmra.mxu0 %v217
  %v1485 = vpop.f32.mrf.mxu0
  %v1486 = vadd.f32 %v102, %v1485
  %v1487 = vpop.f32.mrf.mxu0
  %v1488 = vadd.f32 %v107, %v1487
  %1489 = vmatmul.bf16.gmra.mxu0 %v220
  %v1490 = vpop.f32.mrf.mxu0
  %v1491 = vadd.f32 %v112, %v1490
  %v1492 = vpop.f32.mrf.mxu0
  %v1493 = vadd.f32 %v117, %v1492
  %1494 = vmatmul.bf16.gmra.mxu0 %v223
  %v1495 = vpop.f32.mrf.mxu0
  %v1496 = vadd.f32 %v122, %v1495
  %v1497 = vpop.f32.mrf.mxu0
  %v1498 = vadd.f32 %v127, %v1497
  %1499 = vmatmul.bf16.gmra.mxu0 %v226
  %v1500 = vpop.f32.mrf.mxu0
  %v1501 = vadd.f32 %v132, %v1500
  %v1502 = vpop.f32.mrf.mxu0
  %v1503 = vadd.f32 %v137, %v1502
  %1504 = vdwg.mxu0
  %v1505 = vmax.f32 %v1466, 0.0
  %v1506 = vmax.f32 %v1468, 0.0
  %v1507 = vmax.f32 %v1471, 0.0
  %v1508 = vmax.f32 %v1473, 0.0
  %v1509 = vmax.f32 %v1476, 0.0
  %v1510 = vmax.f32 %v1478, 0.0
  %v1511 = vmax.f32 %v1481, 0.0
  %v1512 = vmax.f32 %v1483, 0.0
  %v1513 = vmax.f32 %v1486, 0.0
  %v1514 = vmax.f32 %v1488, 0.0
  %v1515 = vmax.f32 %v1491, 0.0
  %v1516 = vmax.f32 %v1493, 0.0
  %v1517 = vmax.f32 %v1496, 0.0
  %v1518 = vmax.f32 %v1498, 0.0
  %v1519 = vmax.f32 %v1501, 0.0
  %v1520 = vmax.f32 %v1503, 0.0
  %v1521 = vld [vmem:[%s0 + $0x80] sm:$0xf]
  %v1522 = vld [vmem:[%s0 + $0x84] sm:$0xf]
  %v1523 = vld [vmem:[%s0 + $0x88] sm:$0xf]
  %v1524 = vld [vmem:[%s0 + $0x8c] sm:$0xf]
  %v1525 = vld [vmem:[%s0 + $0x90] sm:$0xf]
  %v1526 = vld [vmem:[%s0 + $0x94] sm:$0xf]
  %v1533 = vunpack.c.l.b16 %v1521
  %v1534 = vunpack.c.l.b16 %v1522
  %v1535 = vunpack.c.l.b16 %v1523
  %v1536 = vunpack.c.l.b16 %v1524
  %v1537 = vunpack.c.l.b16 %v1525
  %v1538 = vunpack.c.l.b16 %v1526
  %v1539 = vpack.c.b16 %v1534, %v1533
  %v1540 = vpack.c.b16 %v1536, %v1535
  %v1541 = vpack.c.b16 %v1538, %v1537
  %1545 = vmatpush.bf16.msra.mxu0 0
  %1546 = vmatpush.bf16.msra.mxu0 0
  %1547 = vmatpush.bf16.msra.mxu0 0
  %1548 = vmatpush.bf16.msra.mxu0 0
  %1549 = vmatpush.bf16.msra.mxu0 0
  %1550 = vmatpush.bf16.msra.mxu0 %v1541
  %1551 = vmatpush.bf16.msra.mxu0 %v1540
  %1552 = vmatpush.bf16.msra.mxu0 %v1539
  %1553 = vmatmul.bf16.gmra.mxu0 %v205
  %v1554 = vpop.f32.mrf.mxu0
  %v1555 = vadd.f32 %v62, %v1554
  %v1556 = vpop.f32.mrf.mxu0
  %v1557 = vadd.f32 %v67, %v1556
  %1558 = vmatmul.bf16.gmra.mxu0 %v208
  %v1559 = vpop.f32.mrf.mxu0
  %v1560 = vadd.f32 %v72, %v1559
  %v1561 = vpop.f32.mrf.mxu0
  %v1562 = vadd.f32 %v77, %v1561
  %1563 = vmatmul.bf16.gmra.mxu0 %v211
  %v1564 = vpop.f32.mrf.mxu0
  %v1565 = vadd.f32 %v82, %v1564
  %v1566 = vpop.f32.mrf.mxu0
  %v1567 = vadd.f32 %v87, %v1566
  %1568 = vmatmul.bf16.gmra.mxu0 %v214
  %v1569 = vpop.f32.mrf.mxu0
  %v1570 = vadd.f32 %v92, %v1569
  %v1571 = vpop.f32.mrf.mxu0
  %v1572 = vadd.f32 %v97, %v1571
  %1573 = vmatmul.bf16.gmra.mxu0 %v217
  %v1574 = vpop.f32.mrf.mxu0
  %v1575 = vadd.f32 %v102, %v1574
  %v1576 = vpop.f32.mrf.mxu0
  %v1577 = vadd.f32 %v107, %v1576
  %1578 = vmatmul.bf16.gmra.mxu0 %v220
  %v1579 = vpop.f32.mrf.mxu0
  %v1580 = vadd.f32 %v112, %v1579
  %v1581 = vpop.f32.mrf.mxu0
  %v1582 = vadd.f32 %v117, %v1581
  %1583 = vmatmul.bf16.gmra.mxu0 %v223
  %v1584 = vpop.f32.mrf.mxu0
  %v1585 = vadd.f32 %v122, %v1584
  %v1586 = vpop.f32.mrf.mxu0
  %v1587 = vadd.f32 %v127, %v1586
  %1588 = vmatmul.bf16.gmra.mxu0 %v226
  %v1589 = vpop.f32.mrf.mxu0
  %v1590 = vadd.f32 %v132, %v1589
  %v1591 = vpop.f32.mrf.mxu0
  %v1592 = vadd.f32 %v137, %v1591
  %1593 = vdwg.mxu0
  %v1594 = vmax.f32 %v1555, 0.0
  %v1595 = vmax.f32 %v1557, 0.0
  %v1596 = vmax.f32 %v1560, 0.0
  %v1597 = vmax.f32 %v1562, 0.0
  %v1598 = vmax.f32 %v1565, 0.0
  %v1599 = vmax.f32 %v1567, 0.0
  %v1600 = vmax.f32 %v1570, 0.0
  %v1601 = vmax.f32 %v1572, 0.0
  %v1602 = vmax.f32 %v1575, 0.0
  %v1603 = vmax.f32 %v1577, 0.0
  %v1604 = vmax.f32 %v1580, 0.0
  %v1605 = vmax.f32 %v1582, 0.0
  %v1606 = vmax.f32 %v1585, 0.0
  %v1607 = vmax.f32 %v1587, 0.0
  %v1608 = vmax.f32 %v1590, 0.0
  %v1609 = vmax.f32 %v1592, 0.0
  %v1610 = vmax.f32 %v1505, %v1594
  %v1611 = vmax.f32 %v1506, %v1595
  %v1612 = vmax.f32 %v1507, %v1596
  %v1613 = vmax.f32 %v1508, %v1597
  %v1614 = vmax.f32 %v1509, %v1598
  %v1615 = vmax.f32 %v1510, %v1599
  %v1616 = vmax.f32 %v1511, %v1600
  %v1617 = vmax.f32 %v1512, %v1601
  %v1618 = vmax.f32 %v1513, %v1602
  %v1619 = vmax.f32 %v1514, %v1603
  %v1620 = vmax.f32 %v1515, %v1604
  %v1621 = vmax.f32 %v1516, %v1605
  %v1622 = vmax.f32 %v1517, %v1606
  %v1623 = vmax.f32 %v1518, %v1607
  %v1624 = vmax.f32 %v1519, %v1608
  %v1625 = vmax.f32 %v1520, %v1609
  %v1626 = vld [vmem:[%s0 + $0x88] sm:$0xf]
  %v1627 = vld [vmem:[%s0 + $0x8c] sm:$0xf]
  %v1628 = vld [vmem:[%s0 + $0x90] sm:$0xf]
  %v1629 = vld [vmem:[%s0 + $0x94] sm:$0xf]
  %v1630 = vld [vmem:[%s0 + $0x98] sm:$0xf]
  %v1631 = vld [vmem:[%s0 + $0x9c] sm:$0xf]
  %v1638 = vunpack.c.l.b16 %v1626
  %v1639 = vunpack.c.l.b16 %v1627
  %v1640 = vunpack.c.l.b16 %v1628
  %v1641 = vunpack.c.l.b16 %v1629
  %v1642 = vunpack.c.l.b16 %v1630
  %v1643 = vunpack.c.l.b16 %v1631
  %v1644 = vpack.c.b16 %v1639, %v1638
  %v1645 = vpack.c.b16 %v1641, %v1640
  %v1646 = vpack.c.b16 %v1643, %v1642
  %1650 = vmatpush.bf16.msra.mxu0 0
  %1651 = vmatpush.bf16.msra.mxu0 0
  %1652 = vmatpush.bf16.msra.mxu0 0
  %1653 = vmatpush.bf16.msra.mxu0 0
  %1654 = vmatpush.bf16.msra.mxu0 0
  %1655 = vmatpush.bf16.msra.mxu0 %v1646
  %1656 = vmatpush.bf16.msra.mxu0 %v1645
  %1657 = vmatpush.bf16.msra.mxu0 %v1644
  %1658 = vmatmul.bf16.gmra.mxu0 %v205
  %v1659 = vpop.f32.mrf.mxu0
  %v1660 = vadd.f32 %v62, %v1659
  %v1661 = vpop.f32.mrf.mxu0
  %v1662 = vadd.f32 %v67, %v1661
  %1663 = vmatmul.bf16.gmra.mxu0 %v208
  %v1664 = vpop.f32.mrf.mxu0
  %v1665 = vadd.f32 %v72, %v1664
  %v1666 = vpop.f32.mrf.mxu0
  %v1667 = vadd.f32 %v77, %v1666
  %1668 = vmatmul.bf16.gmra.mxu0 %v211
  %v1669 = vpop.f32.mrf.mxu0
  %v1670 = vadd.f32 %v82, %v1669
  %v1671 = vpop.f32.mrf.mxu0
  %v1672 = vadd.f32 %v87, %v1671
  %1673 = vmatmul.bf16.gmra.mxu0 %v214
  %v1674 = vpop.f32.mrf.mxu0
  %v1675 = vadd.f32 %v92, %v1674
  %v1676 = vpop.f32.mrf.mxu0
  %v1677 = vadd.f32 %v97, %v1676
  %1678 = vmatmul.bf16.gmra.mxu0 %v217
  %v1679 = vpop.f32.mrf.mxu0
  %v1680 = vadd.f32 %v102, %v1679
  %v1681 = vpop.f32.mrf.mxu0
  %v1682 = vadd.f32 %v107, %v1681
  %1683 = vmatmul.bf16.gmra.mxu0 %v220
  %v1684 = vpop.f32.mrf.mxu0
  %v1685 = vadd.f32 %v112, %v1684
  %v1686 = vpop.f32.mrf.mxu0
  %v1687 = vadd.f32 %v117, %v1686
  %1688 = vmatmul.bf16.gmra.mxu0 %v223
  %v1689 = vpop.f32.mrf.mxu0
  %v1690 = vadd.f32 %v122, %v1689
  %v1691 = vpop.f32.mrf.mxu0
  %v1692 = vadd.f32 %v127, %v1691
  %1693 = vmatmul.bf16.gmra.mxu0 %v226
  %v1694 = vpop.f32.mrf.mxu0
  %v1695 = vadd.f32 %v132, %v1694
  %v1696 = vpop.f32.mrf.mxu0
  %v1697 = vadd.f32 %v137, %v1696
  %1698 = vdwg.mxu0
  %v1699 = vmax.f32 %v1660, 0.0
  %v1700 = vmax.f32 %v1662, 0.0
  %v1701 = vmax.f32 %v1665, 0.0
  %v1702 = vmax.f32 %v1667, 0.0
  %v1703 = vmax.f32 %v1670, 0.0
  %v1704 = vmax.f32 %v1672, 0.0
  %v1705 = vmax.f32 %v1675, 0.0
  %v1706 = vmax.f32 %v1677, 0.0
  %v1707 = vmax.f32 %v1680, 0.0
  %v1708 = vmax.f32 %v1682, 0.0
  %v1709 = vmax.f32 %v1685, 0.0
  %v1710 = vmax.f32 %v1687, 0.0
  %v1711 = vmax.f32 %v1690, 0.0
  %v1712 = vmax.f32 %v1692, 0.0
  %v1713 = vmax.f32 %v1695, 0.0
  %v1714 = vmax.f32 %v1697, 0.0
  %v1715 = vmax.f32 %v1610, %v1699
  %v1716 = vmax.f32 %v1611, %v1700
  %v1717 = vmax.f32 %v1612, %v1701
  %v1718 = vmax.f32 %v1613, %v1702
  %v1719 = vmax.f32 %v1614, %v1703
  %v1720 = vmax.f32 %v1615, %v1704
  %v1721 = vmax.f32 %v1616, %v1705
  %v1722 = vmax.f32 %v1617, %v1706
  %v1723 = vmax.f32 %v1618, %v1707
  %v1724 = vmax.f32 %v1619, %v1708
  %v1725 = vmax.f32 %v1620, %v1709
  %v1726 = vmax.f32 %v1621, %v1710
  %v1727 = vmax.f32 %v1622, %v1711
  %v1728 = vmax.f32 %v1623, %v1712
  %v1729 = vmax.f32 %v1624, %v1713
  %v1730 = vmax.f32 %v1625, %v1714
  %v1731 = vld [vmem:[%s0 + $0x90] sm:$0xf]
  %v1732 = vld [vmem:[%s0 + $0x94] sm:$0xf]
  %v1733 = vld [vmem:[%s0 + $0x98] sm:$0xf]
  %v1734 = vld [vmem:[%s0 + $0x9c] sm:$0xf]
  %v1735 = vld [vmem:[%s0 + $0xa0] sm:$0xf]
  %v1736 = vld [vmem:[%s0 + $0xa4] sm:$0xf]
  %v1743 = vunpack.c.l.b16 %v1731
  %v1744 = vunpack.c.l.b16 %v1732
  %v1745 = vunpack.c.l.b16 %v1733
  %v1746 = vunpack.c.l.b16 %v1734
  %v1747 = vunpack.c.l.b16 %v1735
  %v1748 = vunpack.c.l.b16 %v1736
  %v1749 = vpack.c.b16 %v1744, %v1743
  %v1750 = vpack.c.b16 %v1746, %v1745
  %v1751 = vpack.c.b16 %v1748, %v1747
  %1755 = vmatpush.bf16.msra.mxu0 0
  %1756 = vmatpush.bf16.msra.mxu0 0
  %1757 = vmatpush.bf16.msra.mxu0 0
  %1758 = vmatpush.bf16.msra.mxu0 0
  %1759 = vmatpush.bf16.msra.mxu0 0
  %1760 = vmatpush.bf16.msra.mxu0 %v1751
  %1761 = vmatpush.bf16.msra.mxu0 %v1750
  %1762 = vmatpush.bf16.msra.mxu0 %v1749
  %1763 = vmatmul.bf16.gmra.mxu0 %v205
  %v1764 = vpop.f32.mrf.mxu0
  %v1765 = vadd.f32 %v62, %v1764
  %v1766 = vpop.f32.mrf.mxu0
  %v1767 = vadd.f32 %v67, %v1766
  %1768 = vmatmul.bf16.gmra.mxu0 %v208
  %v1769 = vpop.f32.mrf.mxu0
  %v1770 = vadd.f32 %v72, %v1769
  %v1771 = vpop.f32.mrf.mxu0
  %v1772 = vadd.f32 %v77, %v1771
  %1773 = vmatmul.bf16.gmra.mxu0 %v211
  %v1774 = vpop.f32.mrf.mxu0
  %v1775 = vadd.f32 %v82, %v1774
  %v1776 = vpop.f32.mrf.mxu0
  %v1777 = vadd.f32 %v87, %v1776
  %1778 = vmatmul.bf16.gmra.mxu0 %v214
  %v1779 = vpop.f32.mrf.mxu0
  %v1780 = vadd.f32 %v92, %v1779
  %v1781 = vpop.f32.mrf.mxu0
  %v1782 = vadd.f32 %v97, %v1781
  %1783 = vmatmul.bf16.gmra.mxu0 %v217
  %v1784 = vpop.f32.mrf.mxu0
  %v1785 = vadd.f32 %v102, %v1784
  %v1786 = vpop.f32.mrf.mxu0
  %v1787 = vadd.f32 %v107, %v1786
  %1788 = vmatmul.bf16.gmra.mxu0 %v220
  %v1789 = vpop.f32.mrf.mxu0
  %v1790 = vadd.f32 %v112, %v1789
  %v1791 = vpop.f32.mrf.mxu0
  %v1792 = vadd.f32 %v117, %v1791
  %1793 = vmatmul.bf16.gmra.mxu0 %v223
  %v1794 = vpop.f32.mrf.mxu0
  %v1795 = vadd.f32 %v122, %v1794
  %v1796 = vpop.f32.mrf.mxu0
  %v1797 = vadd.f32 %v127, %v1796
  %1798 = vmatmul.bf16.gmra.mxu0 %v226
  %v1799 = vpop.f32.mrf.mxu0
  %v1800 = vadd.f32 %v132, %v1799
  %v1801 = vpop.f32.mrf.mxu0
  %v1802 = vadd.f32 %v137, %v1801
  %1803 = vdwg.mxu0
  %v1804 = vmax.f32 %v1765, 0.0
  %v1805 = vmax.f32 %v1767, 0.0
  %v1806 = vmax.f32 %v1770, 0.0
  %v1807 = vmax.f32 %v1772, 0.0
  %v1808 = vmax.f32 %v1775, 0.0
  %v1809 = vmax.f32 %v1777, 0.0
  %v1810 = vmax.f32 %v1780, 0.0
  %v1811 = vmax.f32 %v1782, 0.0
  %v1812 = vmax.f32 %v1785, 0.0
  %v1813 = vmax.f32 %v1787, 0.0
  %v1814 = vmax.f32 %v1790, 0.0
  %v1815 = vmax.f32 %v1792, 0.0
  %v1816 = vmax.f32 %v1795, 0.0
  %v1817 = vmax.f32 %v1797, 0.0
  %v1818 = vmax.f32 %v1800, 0.0
  %v1819 = vmax.f32 %v1802, 0.0
  %v1820 = vmax.f32 %v1715, %v1804
  %v1821 = vmax.f32 %v1716, %v1805
  %v1822 = vmax.f32 %v1717, %v1806
  %v1823 = vmax.f32 %v1718, %v1807
  %v1824 = vmax.f32 %v1719, %v1808
  %v1825 = vmax.f32 %v1720, %v1809
  %v1826 = vmax.f32 %v1721, %v1810
  %v1827 = vmax.f32 %v1722, %v1811
  %v1828 = vmax.f32 %v1723, %v1812
  %v1829 = vmax.f32 %v1724, %v1813
  %v1830 = vmax.f32 %v1725, %v1814
  %v1831 = vmax.f32 %v1726, %v1815
  %v1832 = vmax.f32 %v1727, %v1816
  %v1833 = vmax.f32 %v1728, %v1817
  %v1834 = vmax.f32 %v1729, %v1818
  %v1835 = vmax.f32 %v1730, %v1819
  %v1836 = vld [vmem:[%s0 + $0x98] sm:$0xf]
  %v1837 = vld [vmem:[%s0 + $0x9c] sm:$0xf]
  %v1838 = vld [vmem:[%s0 + $0xa0] sm:$0xf]
  %v1839 = vld [vmem:[%s0 + $0xa4] sm:$0xf]
  %v1840 = vld [vmem:[%s0 + $0xa8] sm:$0xf]
  %v1841 = vld [vmem:[%s0 + $0xac] sm:$0xf]
  %v1848 = vunpack.c.l.b16 %v1836
  %v1849 = vunpack.c.l.b16 %v1837
  %v1850 = vunpack.c.l.b16 %v1838
  %v1851 = vunpack.c.l.b16 %v1839
  %v1852 = vunpack.c.l.b16 %v1840
  %v1853 = vunpack.c.l.b16 %v1841
  %v1854 = vpack.c.b16 %v1849, %v1848
  %v1855 = vpack.c.b16 %v1851, %v1850
  %v1856 = vpack.c.b16 %v1853, %v1852
  %1860 = vmatpush.bf16.msra.mxu0 0
  %1861 = vmatpush.bf16.msra.mxu0 0
  %1862 = vmatpush.bf16.msra.mxu0 0
  %1863 = vmatpush.bf16.msra.mxu0 0
  %1864 = vmatpush.bf16.msra.mxu0 0
  %1865 = vmatpush.bf16.msra.mxu0 %v1856
  %1866 = vmatpush.bf16.msra.mxu0 %v1855
  %1867 = vmatpush.bf16.msra.mxu0 %v1854
  %1868 = vmatmul.bf16.gmra.mxu0 %v205
  %v1869 = vpop.f32.mrf.mxu0
  %v1870 = vadd.f32 %v62, %v1869
  %v1871 = vpop.f32.mrf.mxu0
  %v1872 = vadd.f32 %v67, %v1871
  %1873 = vmatmul.bf16.gmra.mxu0 %v208
  %v1874 = vpop.f32.mrf.mxu0
  %v1875 = vadd.f32 %v72, %v1874
  %v1876 = vpop.f32.mrf.mxu0
  %v1877 = vadd.f32 %v77, %v1876
  %1878 = vmatmul.bf16.gmra.mxu0 %v211
  %v1879 = vpop.f32.mrf.mxu0
  %v1880 = vadd.f32 %v82, %v1879
  %v1881 = vpop.f32.mrf.mxu0
  %v1882 = vadd.f32 %v87, %v1881
  %1883 = vmatmul.bf16.gmra.mxu0 %v214
  %v1884 = vpop.f32.mrf.mxu0
  %v1885 = vadd.f32 %v92, %v1884
  %v1886 = vpop.f32.mrf.mxu0
  %v1887 = vadd.f32 %v97, %v1886
  %1888 = vmatmul.bf16.gmra.mxu0 %v217
  %v1889 = vpop.f32.mrf.mxu0
  %v1890 = vadd.f32 %v102, %v1889
  %v1891 = vpop.f32.mrf.mxu0
  %v1892 = vadd.f32 %v107, %v1891
  %1893 = vmatmul.bf16.gmra.mxu0 %v220
  %v1894 = vpop.f32.mrf.mxu0
  %v1895 = vadd.f32 %v112, %v1894
  %v1896 = vpop.f32.mrf.mxu0
  %v1897 = vadd.f32 %v117, %v1896
  %1898 = vmatmul.bf16.gmra.mxu0 %v223
  %v1899 = vpop.f32.mrf.mxu0
  %v1900 = vadd.f32 %v122, %v1899
  %v1901 = vpop.f32.mrf.mxu0
  %v1902 = vadd.f32 %v127, %v1901
  %1903 = vmatmul.bf16.gmra.mxu0 %v226
  %v1904 = vpop.f32.mrf.mxu0
  %v1905 = vadd.f32 %v132, %v1904
  %v1906 = vpop.f32.mrf.mxu0
  %v1907 = vadd.f32 %v137, %v1906
  %1908 = vdwg.mxu0
  %v1909 = vmax.f32 %v1870, 0.0
  %v1910 = vmax.f32 %v1872, 0.0
  %v1911 = vmax.f32 %v1875, 0.0
  %v1912 = vmax.f32 %v1877, 0.0
  %v1913 = vmax.f32 %v1880, 0.0
  %v1914 = vmax.f32 %v1882, 0.0
  %v1915 = vmax.f32 %v1885, 0.0
  %v1916 = vmax.f32 %v1887, 0.0
  %v1917 = vmax.f32 %v1890, 0.0
  %v1918 = vmax.f32 %v1892, 0.0
  %v1919 = vmax.f32 %v1895, 0.0
  %v1920 = vmax.f32 %v1897, 0.0
  %v1921 = vmax.f32 %v1900, 0.0
  %v1922 = vmax.f32 %v1902, 0.0
  %v1923 = vmax.f32 %v1905, 0.0
  %v1924 = vmax.f32 %v1907, 0.0
  %v1925 = vmax.f32 %v1820, %v1909
  %v1926 = vmax.f32 %v1821, %v1910
  %v1927 = vmax.f32 %v1822, %v1911
  %v1928 = vmax.f32 %v1823, %v1912
  %v1929 = vmax.f32 %v1824, %v1913
  %v1930 = vmax.f32 %v1825, %v1914
  %v1931 = vmax.f32 %v1826, %v1915
  %v1932 = vmax.f32 %v1827, %v1916
  %v1933 = vmax.f32 %v1828, %v1917
  %v1934 = vmax.f32 %v1829, %v1918
  %v1935 = vmax.f32 %v1830, %v1919
  %v1936 = vmax.f32 %v1831, %v1920
  %v1937 = vmax.f32 %v1832, %v1921
  %v1938 = vmax.f32 %v1833, %v1922
  %v1939 = vmax.f32 %v1834, %v1923
  %v1940 = vmax.f32 %v1835, %v1924
  %v1941 = vld [vmem:[%s0 + $0xa0] sm:$0xf]
  %v1942 = vld [vmem:[%s0 + $0xa4] sm:$0xf]
  %v1943 = vld [vmem:[%s0 + $0xa8] sm:$0xf]
  %v1944 = vld [vmem:[%s0 + $0xac] sm:$0xf]
  %v1945 = vld [vmem:[%s0 + $0xb0] sm:$0xf]
  %v1946 = vld [vmem:[%s0 + $0xb4] sm:$0xf]
  %v1953 = vunpack.c.l.b16 %v1941
  %v1954 = vunpack.c.l.b16 %v1942
  %v1955 = vunpack.c.l.b16 %v1943
  %v1956 = vunpack.c.l.b16 %v1944
  %v1957 = vunpack.c.l.b16 %v1945
  %v1958 = vunpack.c.l.b16 %v1946
  %v1959 = vpack.c.b16 %v1954, %v1953
  %v1960 = vpack.c.b16 %v1956, %v1955
  %v1961 = vpack.c.b16 %v1958, %v1957
  %1965 = vmatpush.bf16.msra.mxu0 0
  %1966 = vmatpush.bf16.msra.mxu0 0
  %1967 = vmatpush.bf16.msra.mxu0 0
  %1968 = vmatpush.bf16.msra.mxu0 0
  %1969 = vmatpush.bf16.msra.mxu0 0
  %1970 = vmatpush.bf16.msra.mxu0 %v1961
  %1971 = vmatpush.bf16.msra.mxu0 %v1960
  %1972 = vmatpush.bf16.msra.mxu0 %v1959
  %1973 = vmatmul.bf16.gmra.mxu0 %v205
  %v1974 = vpop.f32.mrf.mxu0
  %v1975 = vadd.f32 %v62, %v1974
  %v1976 = vpop.f32.mrf.mxu0
  %v1977 = vadd.f32 %v67, %v1976
  %1978 = vmatmul.bf16.gmra.mxu0 %v208
  %v1979 = vpop.f32.mrf.mxu0
  %v1980 = vadd.f32 %v72, %v1979
  %v1981 = vpop.f32.mrf.mxu0
  %v1982 = vadd.f32 %v77, %v1981
  %1983 = vmatmul.bf16.gmra.mxu0 %v211
  %v1984 = vpop.f32.mrf.mxu0
  %v1985 = vadd.f32 %v82, %v1984
  %v1986 = vpop.f32.mrf.mxu0
  %v1987 = vadd.f32 %v87, %v1986
  %1988 = vmatmul.bf16.gmra.mxu0 %v214
  %v1989 = vpop.f32.mrf.mxu0
  %v1990 = vadd.f32 %v92, %v1989
  %v1991 = vpop.f32.mrf.mxu0
  %v1992 = vadd.f32 %v97, %v1991
  %1993 = vmatmul.bf16.gmra.mxu0 %v217
  %v1994 = vpop.f32.mrf.mxu0
  %v1995 = vadd.f32 %v102, %v1994
  %v1996 = vpop.f32.mrf.mxu0
  %v1997 = vadd.f32 %v107, %v1996
  %1998 = vmatmul.bf16.gmra.mxu0 %v220
  %v1999 = vpop.f32.mrf.mxu0
  %v2000 = vadd.f32 %v112, %v1999
  %v2001 = vpop.f32.mrf.mxu0
  %v2002 = vadd.f32 %v117, %v2001
  %2003 = vmatmul.bf16.gmra.mxu0 %v223
  %v2004 = vpop.f32.mrf.mxu0
  %v2005 = vadd.f32 %v122, %v2004
  %v2006 = vpop.f32.mrf.mxu0
  %v2007 = vadd.f32 %v127, %v2006
  %2008 = vmatmul.bf16.gmra.mxu0 %v226
  %v2009 = vpop.f32.mrf.mxu0
  %v2010 = vadd.f32 %v132, %v2009
  %v2011 = vpop.f32.mrf.mxu0
  %v2012 = vadd.f32 %v137, %v2011
  %2013 = vdwg.mxu0
  %v2014 = vmax.f32 %v1975, 0.0
  %v2015 = vmax.f32 %v1977, 0.0
  %v2016 = vmax.f32 %v1980, 0.0
  %v2017 = vmax.f32 %v1982, 0.0
  %v2018 = vmax.f32 %v1985, 0.0
  %v2019 = vmax.f32 %v1987, 0.0
  %v2020 = vmax.f32 %v1990, 0.0
  %v2021 = vmax.f32 %v1992, 0.0
  %v2022 = vmax.f32 %v1995, 0.0
  %v2023 = vmax.f32 %v1997, 0.0
  %v2024 = vmax.f32 %v2000, 0.0
  %v2025 = vmax.f32 %v2002, 0.0
  %v2026 = vmax.f32 %v2005, 0.0
  %v2027 = vmax.f32 %v2007, 0.0
  %v2028 = vmax.f32 %v2010, 0.0
  %v2029 = vmax.f32 %v2012, 0.0
  %v2030 = vmax.f32 %v1925, %v2014
  %v2031 = vmax.f32 %v1926, %v2015
  %v2032 = vmax.f32 %v1927, %v2016
  %v2033 = vmax.f32 %v1928, %v2017
  %v2034 = vmax.f32 %v1929, %v2018
  %v2035 = vmax.f32 %v1930, %v2019
  %v2036 = vmax.f32 %v1931, %v2020
  %v2037 = vmax.f32 %v1932, %v2021
  %v2038 = vmax.f32 %v1933, %v2022
  %v2039 = vmax.f32 %v1934, %v2023
  %v2040 = vmax.f32 %v1935, %v2024
  %v2041 = vmax.f32 %v1936, %v2025
  %v2042 = vmax.f32 %v1937, %v2026
  %v2043 = vmax.f32 %v1938, %v2027
  %v2044 = vmax.f32 %v1939, %v2028
  %v2045 = vmax.f32 %v1940, %v2029
  %v2046 = vld [vmem:[%s0 + $0xa8] sm:$0xf]
  %v2047 = vld [vmem:[%s0 + $0xac] sm:$0xf]
  %v2048 = vld [vmem:[%s0 + $0xb0] sm:$0xf]
  %v2049 = vld [vmem:[%s0 + $0xb4] sm:$0xf]
  %v2050 = vld [vmem:[%s0 + $0xb8] sm:$0xf]
  %v2051 = vld [vmem:[%s0 + $0xbc] sm:$0xf]
  %v2058 = vunpack.c.l.b16 %v2046
  %v2059 = vunpack.c.l.b16 %v2047
  %v2060 = vunpack.c.l.b16 %v2048
  %v2061 = vunpack.c.l.b16 %v2049
  %v2062 = vunpack.c.l.b16 %v2050
  %v2063 = vunpack.c.l.b16 %v2051
  %v2064 = vpack.c.b16 %v2059, %v2058
  %v2065 = vpack.c.b16 %v2061, %v2060
  %v2066 = vpack.c.b16 %v2063, %v2062
  %2070 = vmatpush.bf16.msra.mxu0 0
  %2071 = vmatpush.bf16.msra.mxu0 0
  %2072 = vmatpush.bf16.msra.mxu0 0
  %2073 = vmatpush.bf16.msra.mxu0 0
  %2074 = vmatpush.bf16.msra.mxu0 0
  %2075 = vmatpush.bf16.msra.mxu0 %v2066
  %2076 = vmatpush.bf16.msra.mxu0 %v2065
  %2077 = vmatpush.bf16.msra.mxu0 %v2064
  %2078 = vmatmul.bf16.gmra.mxu0 %v205
  %v2079 = vpop.f32.mrf.mxu0
  %v2080 = vadd.f32 %v62, %v2079
  %v2081 = vpop.f32.mrf.mxu0
  %v2082 = vadd.f32 %v67, %v2081
  %2083 = vmatmul.bf16.gmra.mxu0 %v208
  %v2084 = vpop.f32.mrf.mxu0
  %v2085 = vadd.f32 %v72, %v2084
  %v2086 = vpop.f32.mrf.mxu0
  %v2087 = vadd.f32 %v77, %v2086
  %2088 = vmatmul.bf16.gmra.mxu0 %v211
  %v2089 = vpop.f32.mrf.mxu0
  %v2090 = vadd.f32 %v82, %v2089
  %v2091 = vpop.f32.mrf.mxu0
  %v2092 = vadd.f32 %v87, %v2091
  %2093 = vmatmul.bf16.gmra.mxu0 %v214
  %v2094 = vpop.f32.mrf.mxu0
  %v2095 = vadd.f32 %v92, %v2094
  %v2096 = vpop.f32.mrf.mxu0
  %v2097 = vadd.f32 %v97, %v2096
  %2098 = vmatmul.bf16.gmra.mxu0 %v217
  %v2099 = vpop.f32.mrf.mxu0
  %v2100 = vadd.f32 %v102, %v2099
  %v2101 = vpop.f32.mrf.mxu0
  %v2102 = vadd.f32 %v107, %v2101
  %2103 = vmatmul.bf16.gmra.mxu0 %v220
  %v2104 = vpop.f32.mrf.mxu0
  %v2105 = vadd.f32 %v112, %v2104
  %v2106 = vpop.f32.mrf.mxu0
  %v2107 = vadd.f32 %v117, %v2106
  %2108 = vmatmul.bf16.gmra.mxu0 %v223
  %v2109 = vpop.f32.mrf.mxu0
  %v2110 = vadd.f32 %v122, %v2109
  %v2111 = vpop.f32.mrf.mxu0
  %v2112 = vadd.f32 %v127, %v2111
  %2113 = vmatmul.bf16.gmra.mxu0 %v226
  %v2114 = vpop.f32.mrf.mxu0
  %v2115 = vadd.f32 %v132, %v2114
  %v2116 = vpop.f32.mrf.mxu0
  %v2117 = vadd.f32 %v137, %v2116
  %2118 = vdwg.mxu0
  %v2119 = vmax.f32 %v2080, 0.0
  %v2120 = vmax.f32 %v2082, 0.0
  %v2121 = vmax.f32 %v2085, 0.0
  %v2122 = vmax.f32 %v2087, 0.0
  %v2123 = vmax.f32 %v2090, 0.0
  %v2124 = vmax.f32 %v2092, 0.0
  %v2125 = vmax.f32 %v2095, 0.0
  %v2126 = vmax.f32 %v2097, 0.0
  %v2127 = vmax.f32 %v2100, 0.0
  %v2128 = vmax.f32 %v2102, 0.0
  %v2129 = vmax.f32 %v2105, 0.0
  %v2130 = vmax.f32 %v2107, 0.0
  %v2131 = vmax.f32 %v2110, 0.0
  %v2132 = vmax.f32 %v2112, 0.0
  %v2133 = vmax.f32 %v2115, 0.0
  %v2134 = vmax.f32 %v2117, 0.0
  %v2135 = vld [vmem:[%s0 + $0xb0] sm:$0xf]
  %v2136 = vld [vmem:[%s0 + $0xb4] sm:$0xf]
  %v2137 = vld [vmem:[%s0 + $0xb8] sm:$0xf]
  %v2138 = vld [vmem:[%s0 + $0xbc] sm:$0xf]
  %v2139 = vld [vmem:[%s0 + $0xc0] sm:$0xf]
  %v2140 = vld [vmem:[%s0 + $0xc4] sm:$0xf]
  %v2147 = vunpack.c.l.b16 %v2135
  %v2148 = vunpack.c.l.b16 %v2136
  %v2149 = vunpack.c.l.b16 %v2137
  %v2150 = vunpack.c.l.b16 %v2138
  %v2151 = vunpack.c.l.b16 %v2139
  %v2152 = vunpack.c.l.b16 %v2140
  %v2153 = vpack.c.b16 %v2148, %v2147
  %v2154 = vpack.c.b16 %v2150, %v2149
  %v2155 = vpack.c.b16 %v2152, %v2151
  %2159 = vmatpush.bf16.msra.mxu0 0
  %2160 = vmatpush.bf16.msra.mxu0 0
  %2161 = vmatpush.bf16.msra.mxu0 0
  %2162 = vmatpush.bf16.msra.mxu0 0
  %2163 = vmatpush.bf16.msra.mxu0 0
  %2164 = vmatpush.bf16.msra.mxu0 %v2155
  %2165 = vmatpush.bf16.msra.mxu0 %v2154
  %2166 = vmatpush.bf16.msra.mxu0 %v2153
  %2167 = vmatmul.bf16.gmra.mxu0 %v205
  %v2168 = vpop.f32.mrf.mxu0
  %v2169 = vadd.f32 %v62, %v2168
  %v2170 = vpop.f32.mrf.mxu0
  %v2171 = vadd.f32 %v67, %v2170
  %2172 = vmatmul.bf16.gmra.mxu0 %v208
  %v2173 = vpop.f32.mrf.mxu0
  %v2174 = vadd.f32 %v72, %v2173
  %v2175 = vpop.f32.mrf.mxu0
  %v2176 = vadd.f32 %v77, %v2175
  %2177 = vmatmul.bf16.gmra.mxu0 %v211
  %v2178 = vpop.f32.mrf.mxu0
  %v2179 = vadd.f32 %v82, %v2178
  %v2180 = vpop.f32.mrf.mxu0
  %v2181 = vadd.f32 %v87, %v2180
  %2182 = vmatmul.bf16.gmra.mxu0 %v214
  %v2183 = vpop.f32.mrf.mxu0
  %v2184 = vadd.f32 %v92, %v2183
  %v2185 = vpop.f32.mrf.mxu0
  %v2186 = vadd.f32 %v97, %v2185
  %2187 = vmatmul.bf16.gmra.mxu0 %v217
  %v2188 = vpop.f32.mrf.mxu0
  %v2189 = vadd.f32 %v102, %v2188
  %v2190 = vpop.f32.mrf.mxu0
  %v2191 = vadd.f32 %v107, %v2190
  %2192 = vmatmul.bf16.gmra.mxu0 %v220
  %v2193 = vpop.f32.mrf.mxu0
  %v2194 = vadd.f32 %v112, %v2193
  %v2195 = vpop.f32.mrf.mxu0
  %v2196 = vadd.f32 %v117, %v2195
  %2197 = vmatmul.bf16.gmra.mxu0 %v223
  %v2198 = vpop.f32.mrf.mxu0
  %v2199 = vadd.f32 %v122, %v2198
  %v2200 = vpop.f32.mrf.mxu0
  %v2201 = vadd.f32 %v127, %v2200
  %2202 = vmatmul.bf16.gmra.mxu0 %v226
  %v2203 = vpop.f32.mrf.mxu0
  %v2204 = vadd.f32 %v132, %v2203
  %v2205 = vpop.f32.mrf.mxu0
  %v2206 = vadd.f32 %v137, %v2205
  %2207 = vdwg.mxu0
  %v2208 = vmax.f32 %v2169, 0.0
  %v2209 = vmax.f32 %v2171, 0.0
  %v2210 = vmax.f32 %v2174, 0.0
  %v2211 = vmax.f32 %v2176, 0.0
  %v2212 = vmax.f32 %v2179, 0.0
  %v2213 = vmax.f32 %v2181, 0.0
  %v2214 = vmax.f32 %v2184, 0.0
  %v2215 = vmax.f32 %v2186, 0.0
  %v2216 = vmax.f32 %v2189, 0.0
  %v2217 = vmax.f32 %v2191, 0.0
  %v2218 = vmax.f32 %v2194, 0.0
  %v2219 = vmax.f32 %v2196, 0.0
  %v2220 = vmax.f32 %v2199, 0.0
  %v2221 = vmax.f32 %v2201, 0.0
  %v2222 = vmax.f32 %v2204, 0.0
  %v2223 = vmax.f32 %v2206, 0.0
  %v2224 = vmax.f32 %v2119, %v2208
  %v2225 = vmax.f32 %v2120, %v2209
  %v2226 = vmax.f32 %v2121, %v2210
  %v2227 = vmax.f32 %v2122, %v2211
  %v2228 = vmax.f32 %v2123, %v2212
  %v2229 = vmax.f32 %v2124, %v2213
  %v2230 = vmax.f32 %v2125, %v2214
  %v2231 = vmax.f32 %v2126, %v2215
  %v2232 = vmax.f32 %v2127, %v2216
  %v2233 = vmax.f32 %v2128, %v2217
  %v2234 = vmax.f32 %v2129, %v2218
  %v2235 = vmax.f32 %v2130, %v2219
  %v2236 = vmax.f32 %v2131, %v2220
  %v2237 = vmax.f32 %v2132, %v2221
  %v2238 = vmax.f32 %v2133, %v2222
  %v2239 = vmax.f32 %v2134, %v2223
  %v2240 = vld [vmem:[%s0 + $0xb8] sm:$0xf]
  %v2241 = vld [vmem:[%s0 + $0xbc] sm:$0xf]
  %v2242 = vld [vmem:[%s0 + $0xc0] sm:$0xf]
  %v2243 = vld [vmem:[%s0 + $0xc4] sm:$0xf]
  %v2244 = vld [vmem:[%s0 + $0xc8] sm:$0xf]
  %v2245 = vld [vmem:[%s0 + $0xcc] sm:$0xf]
  %v2252 = vunpack.c.l.b16 %v2240
  %v2253 = vunpack.c.l.b16 %v2241
  %v2254 = vunpack.c.l.b16 %v2242
  %v2255 = vunpack.c.l.b16 %v2243
  %v2256 = vunpack.c.l.b16 %v2244
  %v2257 = vunpack.c.l.b16 %v2245
  %v2258 = vpack.c.b16 %v2253, %v2252
  %v2259 = vpack.c.b16 %v2255, %v2254
  %v2260 = vpack.c.b16 %v2257, %v2256
  %2264 = vmatpush.bf16.msra.mxu0 0
  %2265 = vmatpush.bf16.msra.mxu0 0
  %2266 = vmatpush.bf16.msra.mxu0 0
  %2267 = vmatpush.bf16.msra.mxu0 0
  %2268 = vmatpush.bf16.msra.mxu0 0
  %2269 = vmatpush.bf16.msra.mxu0 %v2260
  %2270 = vmatpush.bf16.msra.mxu0 %v2259
  %2271 = vmatpush.bf16.msra.mxu0 %v2258
  %2272 = vmatmul.bf16.gmra.mxu0 %v205
  %v2273 = vpop.f32.mrf.mxu0
  %v2274 = vadd.f32 %v62, %v2273
  %v2275 = vpop.f32.mrf.mxu0
  %v2276 = vadd.f32 %v67, %v2275
  %2277 = vmatmul.bf16.gmra.mxu0 %v208
  %v2278 = vpop.f32.mrf.mxu0
  %v2279 = vadd.f32 %v72, %v2278
  %v2280 = vpop.f32.mrf.mxu0
  %v2281 = vadd.f32 %v77, %v2280
  %2282 = vmatmul.bf16.gmra.mxu0 %v211
  %v2283 = vpop.f32.mrf.mxu0
  %v2284 = vadd.f32 %v82, %v2283
  %v2285 = vpop.f32.mrf.mxu0
  %v2286 = vadd.f32 %v87, %v2285
  %2287 = vmatmul.bf16.gmra.mxu0 %v214
  %v2288 = vpop.f32.mrf.mxu0
  %v2289 = vadd.f32 %v92, %v2288
  %v2290 = vpop.f32.mrf.mxu0
  %v2291 = vadd.f32 %v97, %v2290
  %2292 = vmatmul.bf16.gmra.mxu0 %v217
  %v2293 = vpop.f32.mrf.mxu0
  %v2294 = vadd.f32 %v102, %v2293
  %v2295 = vpop.f32.mrf.mxu0
  %v2296 = vadd.f32 %v107, %v2295
  %2297 = vmatmul.bf16.gmra.mxu0 %v220
  %v2298 = vpop.f32.mrf.mxu0
  %v2299 = vadd.f32 %v112, %v2298
  %v2300 = vpop.f32.mrf.mxu0
  %v2301 = vadd.f32 %v117, %v2300
  %2302 = vmatmul.bf16.gmra.mxu0 %v223
  %v2303 = vpop.f32.mrf.mxu0
  %v2304 = vadd.f32 %v122, %v2303
  %v2305 = vpop.f32.mrf.mxu0
  %v2306 = vadd.f32 %v127, %v2305
  %2307 = vmatmul.bf16.gmra.mxu0 %v226
  %v2308 = vpop.f32.mrf.mxu0
  %v2309 = vadd.f32 %v132, %v2308
  %v2310 = vpop.f32.mrf.mxu0
  %v2311 = vadd.f32 %v137, %v2310
  %2312 = vdwg.mxu0
  %v2313 = vmax.f32 %v2274, 0.0
  %v2314 = vmax.f32 %v2276, 0.0
  %v2315 = vmax.f32 %v2279, 0.0
  %v2316 = vmax.f32 %v2281, 0.0
  %v2317 = vmax.f32 %v2284, 0.0
  %v2318 = vmax.f32 %v2286, 0.0
  %v2319 = vmax.f32 %v2289, 0.0
  %v2320 = vmax.f32 %v2291, 0.0
  %v2321 = vmax.f32 %v2294, 0.0
  %v2322 = vmax.f32 %v2296, 0.0
  %v2323 = vmax.f32 %v2299, 0.0
  %v2324 = vmax.f32 %v2301, 0.0
  %v2325 = vmax.f32 %v2304, 0.0
  %v2326 = vmax.f32 %v2306, 0.0
  %v2327 = vmax.f32 %v2309, 0.0
  %v2328 = vmax.f32 %v2311, 0.0
  %v2329 = vmax.f32 %v2224, %v2313
  %v2330 = vmax.f32 %v2225, %v2314
  %v2331 = vmax.f32 %v2226, %v2315
  %v2332 = vmax.f32 %v2227, %v2316
  %v2333 = vmax.f32 %v2228, %v2317
  %v2334 = vmax.f32 %v2229, %v2318
  %v2335 = vmax.f32 %v2230, %v2319
  %v2336 = vmax.f32 %v2231, %v2320
  %v2337 = vmax.f32 %v2232, %v2321
  %v2338 = vmax.f32 %v2233, %v2322
  %v2339 = vmax.f32 %v2234, %v2323
  %v2340 = vmax.f32 %v2235, %v2324
  %v2341 = vmax.f32 %v2236, %v2325
  %v2342 = vmax.f32 %v2237, %v2326
  %v2343 = vmax.f32 %v2238, %v2327
  %v2344 = vmax.f32 %v2239, %v2328
  %v2345 = vld [vmem:[%s0 + $0xc0] sm:$0xf]
  %v2346 = vld [vmem:[%s0 + $0xc4] sm:$0xf]
  %v2347 = vld [vmem:[%s0 + $0xc8] sm:$0xf]
  %v2348 = vld [vmem:[%s0 + $0xcc] sm:$0xf]
  %v2349 = vld [vmem:[%s0 + $0xd0] sm:$0xf]
  %v2350 = vld [vmem:[%s0 + $0xd4] sm:$0xf]
  %v2357 = vunpack.c.l.b16 %v2345
  %v2358 = vunpack.c.l.b16 %v2346
  %v2359 = vunpack.c.l.b16 %v2347
  %v2360 = vunpack.c.l.b16 %v2348
  %v2361 = vunpack.c.l.b16 %v2349
  %v2362 = vunpack.c.l.b16 %v2350
  %v2363 = vpack.c.b16 %v2358, %v2357
  %v2364 = vpack.c.b16 %v2360, %v2359
  %v2365 = vpack.c.b16 %v2362, %v2361
  %2369 = vmatpush.bf16.msra.mxu0 0
  %2370 = vmatpush.bf16.msra.mxu0 0
  %2371 = vmatpush.bf16.msra.mxu0 0
  %2372 = vmatpush.bf16.msra.mxu0 0
  %2373 = vmatpush.bf16.msra.mxu0 0
  %2374 = vmatpush.bf16.msra.mxu0 %v2365
  %2375 = vmatpush.bf16.msra.mxu0 %v2364
  %2376 = vmatpush.bf16.msra.mxu0 %v2363
  %2377 = vmatmul.bf16.gmra.mxu0 %v205
  %v2378 = vpop.f32.mrf.mxu0
  %v2379 = vadd.f32 %v62, %v2378
  %v2380 = vpop.f32.mrf.mxu0
  %v2381 = vadd.f32 %v67, %v2380
  %2382 = vmatmul.bf16.gmra.mxu0 %v208
  %v2383 = vpop.f32.mrf.mxu0
  %v2384 = vadd.f32 %v72, %v2383
  %v2385 = vpop.f32.mrf.mxu0
  %v2386 = vadd.f32 %v77, %v2385
  %2387 = vmatmul.bf16.gmra.mxu0 %v211
  %v2388 = vpop.f32.mrf.mxu0
  %v2389 = vadd.f32 %v82, %v2388
  %v2390 = vpop.f32.mrf.mxu0
  %v2391 = vadd.f32 %v87, %v2390
  %2392 = vmatmul.bf16.gmra.mxu0 %v214
  %v2393 = vpop.f32.mrf.mxu0
  %v2394 = vadd.f32 %v92, %v2393
  %v2395 = vpop.f32.mrf.mxu0
  %v2396 = vadd.f32 %v97, %v2395
  %2397 = vmatmul.bf16.gmra.mxu0 %v217
  %v2398 = vpop.f32.mrf.mxu0
  %v2399 = vadd.f32 %v102, %v2398
  %v2400 = vpop.f32.mrf.mxu0
  %v2401 = vadd.f32 %v107, %v2400
  %2402 = vmatmul.bf16.gmra.mxu0 %v220
  %v2403 = vpop.f32.mrf.mxu0
  %v2404 = vadd.f32 %v112, %v2403
  %v2405 = vpop.f32.mrf.mxu0
  %v2406 = vadd.f32 %v117, %v2405
  %2407 = vmatmul.bf16.gmra.mxu0 %v223
  %v2408 = vpop.f32.mrf.mxu0
  %v2409 = vadd.f32 %v122, %v2408
  %v2410 = vpop.f32.mrf.mxu0
  %v2411 = vadd.f32 %v127, %v2410
  %2412 = vmatmul.bf16.gmra.mxu0 %v226
  %v2413 = vpop.f32.mrf.mxu0
  %v2414 = vadd.f32 %v132, %v2413
  %v2415 = vpop.f32.mrf.mxu0
  %v2416 = vadd.f32 %v137, %v2415
  %2417 = vdwg.mxu0
  %v2418 = vmax.f32 %v2379, 0.0
  %v2419 = vmax.f32 %v2381, 0.0
  %v2420 = vmax.f32 %v2384, 0.0
  %v2421 = vmax.f32 %v2386, 0.0
  %v2422 = vmax.f32 %v2389, 0.0
  %v2423 = vmax.f32 %v2391, 0.0
  %v2424 = vmax.f32 %v2394, 0.0
  %v2425 = vmax.f32 %v2396, 0.0
  %v2426 = vmax.f32 %v2399, 0.0
  %v2427 = vmax.f32 %v2401, 0.0
  %v2428 = vmax.f32 %v2404, 0.0
  %v2429 = vmax.f32 %v2406, 0.0
  %v2430 = vmax.f32 %v2409, 0.0
  %v2431 = vmax.f32 %v2411, 0.0
  %v2432 = vmax.f32 %v2414, 0.0
  %v2433 = vmax.f32 %v2416, 0.0
  %v2434 = vmax.f32 %v2329, %v2418
  %v2435 = vmax.f32 %v2330, %v2419
  %v2436 = vmax.f32 %v2331, %v2420
  %v2437 = vmax.f32 %v2332, %v2421
  %v2438 = vmax.f32 %v2333, %v2422
  %v2439 = vmax.f32 %v2334, %v2423
  %v2440 = vmax.f32 %v2335, %v2424
  %v2441 = vmax.f32 %v2336, %v2425
  %v2442 = vmax.f32 %v2337, %v2426
  %v2443 = vmax.f32 %v2338, %v2427
  %v2444 = vmax.f32 %v2339, %v2428
  %v2445 = vmax.f32 %v2340, %v2429
  %v2446 = vmax.f32 %v2341, %v2430
  %v2447 = vmax.f32 %v2342, %v2431
  %v2448 = vmax.f32 %v2343, %v2432
  %v2449 = vmax.f32 %v2344, %v2433
  %v2450 = vld [vmem:[%s0 + $0xc8] sm:$0xf]
  %v2451 = vld [vmem:[%s0 + $0xcc] sm:$0xf]
  %v2452 = vld [vmem:[%s0 + $0xd0] sm:$0xf]
  %v2453 = vld [vmem:[%s0 + $0xd4] sm:$0xf]
  %v2454 = vld [vmem:[%s0 + $0xd8] sm:$0xf]
  %v2455 = vld [vmem:[%s0 + $0xdc] sm:$0xf]
  %v2462 = vunpack.c.l.b16 %v2450
  %v2463 = vunpack.c.l.b16 %v2451
  %v2464 = vunpack.c.l.b16 %v2452
  %v2465 = vunpack.c.l.b16 %v2453
  %v2466 = vunpack.c.l.b16 %v2454
  %v2467 = vunpack.c.l.b16 %v2455
  %v2468 = vpack.c.b16 %v2463, %v2462
  %v2469 = vpack.c.b16 %v2465, %v2464
  %v2470 = vpack.c.b16 %v2467, %v2466
  %2474 = vmatpush.bf16.msra.mxu0 0
  %2475 = vmatpush.bf16.msra.mxu0 0
  %2476 = vmatpush.bf16.msra.mxu0 0
  %2477 = vmatpush.bf16.msra.mxu0 0
  %2478 = vmatpush.bf16.msra.mxu0 0
  %2479 = vmatpush.bf16.msra.mxu0 %v2470
  %2480 = vmatpush.bf16.msra.mxu0 %v2469
  %2481 = vmatpush.bf16.msra.mxu0 %v2468
  %2482 = vmatmul.bf16.gmra.mxu0 %v205
  %v2483 = vpop.f32.mrf.mxu0
  %v2484 = vadd.f32 %v62, %v2483
  %v2485 = vpop.f32.mrf.mxu0
  %v2486 = vadd.f32 %v67, %v2485
  %2487 = vmatmul.bf16.gmra.mxu0 %v208
  %v2488 = vpop.f32.mrf.mxu0
  %v2489 = vadd.f32 %v72, %v2488
  %v2490 = vpop.f32.mrf.mxu0
  %v2491 = vadd.f32 %v77, %v2490
  %2492 = vmatmul.bf16.gmra.mxu0 %v211
  %v2493 = vpop.f32.mrf.mxu0
  %v2494 = vadd.f32 %v82, %v2493
  %v2495 = vpop.f32.mrf.mxu0
  %v2496 = vadd.f32 %v87, %v2495
  %2497 = vmatmul.bf16.gmra.mxu0 %v214
  %v2498 = vpop.f32.mrf.mxu0
  %v2499 = vadd.f32 %v92, %v2498
  %v2500 = vpop.f32.mrf.mxu0
  %v2501 = vadd.f32 %v97, %v2500
  %2502 = vmatmul.bf16.gmra.mxu0 %v217
  %v2503 = vpop.f32.mrf.mxu0
  %v2504 = vadd.f32 %v102, %v2503
  %v2505 = vpop.f32.mrf.mxu0
  %v2506 = vadd.f32 %v107, %v2505
  %2507 = vmatmul.bf16.gmra.mxu0 %v220
  %v2508 = vpop.f32.mrf.mxu0
  %v2509 = vadd.f32 %v112, %v2508
  %v2510 = vpop.f32.mrf.mxu0
  %v2511 = vadd.f32 %v117, %v2510
  %2512 = vmatmul.bf16.gmra.mxu0 %v223
  %v2513 = vpop.f32.mrf.mxu0
  %v2514 = vadd.f32 %v122, %v2513
  %v2515 = vpop.f32.mrf.mxu0
  %v2516 = vadd.f32 %v127, %v2515
  %2517 = vmatmul.bf16.gmra.mxu0 %v226
  %v2518 = vpop.f32.mrf.mxu0
  %v2519 = vadd.f32 %v132, %v2518
  %v2520 = vpop.f32.mrf.mxu0
  %v2521 = vadd.f32 %v137, %v2520
  %2522 = vdwg.mxu0
  %v2523 = vmax.f32 %v2484, 0.0
  %v2524 = vmax.f32 %v2486, 0.0
  %v2525 = vmax.f32 %v2489, 0.0
  %v2526 = vmax.f32 %v2491, 0.0
  %v2527 = vmax.f32 %v2494, 0.0
  %v2528 = vmax.f32 %v2496, 0.0
  %v2529 = vmax.f32 %v2499, 0.0
  %v2530 = vmax.f32 %v2501, 0.0
  %v2531 = vmax.f32 %v2504, 0.0
  %v2532 = vmax.f32 %v2506, 0.0
  %v2533 = vmax.f32 %v2509, 0.0
  %v2534 = vmax.f32 %v2511, 0.0
  %v2535 = vmax.f32 %v2514, 0.0
  %v2536 = vmax.f32 %v2516, 0.0
  %v2537 = vmax.f32 %v2519, 0.0
  %v2538 = vmax.f32 %v2521, 0.0
  %v2539 = vmax.f32 %v2434, %v2523
  %v2540 = vmax.f32 %v2435, %v2524
  %v2541 = vmax.f32 %v2436, %v2525
  %v2542 = vmax.f32 %v2437, %v2526
  %v2543 = vmax.f32 %v2438, %v2527
  %v2544 = vmax.f32 %v2439, %v2528
  %v2545 = vmax.f32 %v2440, %v2529
  %v2546 = vmax.f32 %v2441, %v2530
  %v2547 = vmax.f32 %v2442, %v2531
  %v2548 = vmax.f32 %v2443, %v2532
  %v2549 = vmax.f32 %v2444, %v2533
  %v2550 = vmax.f32 %v2445, %v2534
  %v2551 = vmax.f32 %v2446, %v2535
  %v2552 = vmax.f32 %v2447, %v2536
  %v2553 = vmax.f32 %v2448, %v2537
  %v2554 = vmax.f32 %v2449, %v2538
  %v2555 = vld [vmem:[%s0 + $0xd0] sm:$0xf]
  %v2556 = vld [vmem:[%s0 + $0xd4] sm:$0xf]
  %v2557 = vld [vmem:[%s0 + $0xd8] sm:$0xf]
  %v2558 = vld [vmem:[%s0 + $0xdc] sm:$0xf]
  %v2559 = vld [vmem:[%s0 + $0xe0] sm:$0xf]
  %v2560 = vld [vmem:[%s0 + $0xe4] sm:$0xf]
  %v2567 = vunpack.c.l.b16 %v2555
  %v2568 = vunpack.c.l.b16 %v2556
  %v2569 = vunpack.c.l.b16 %v2557
  %v2570 = vunpack.c.l.b16 %v2558
  %v2571 = vunpack.c.l.b16 %v2559
  %v2572 = vunpack.c.l.b16 %v2560
  %v2573 = vpack.c.b16 %v2568, %v2567
  %v2574 = vpack.c.b16 %v2570, %v2569
  %v2575 = vpack.c.b16 %v2572, %v2571
  %2579 = vmatpush.bf16.msra.mxu0 0
  %2580 = vmatpush.bf16.msra.mxu0 0
  %2581 = vmatpush.bf16.msra.mxu0 0
  %2582 = vmatpush.bf16.msra.mxu0 0
  %2583 = vmatpush.bf16.msra.mxu0 0
  %2584 = vmatpush.bf16.msra.mxu0 %v2575
  %2585 = vmatpush.bf16.msra.mxu0 %v2574
  %2586 = vmatpush.bf16.msra.mxu0 %v2573
  %2587 = vmatmul.bf16.gmra.mxu0 %v205
  %v2588 = vpop.f32.mrf.mxu0
  %v2589 = vadd.f32 %v62, %v2588
  %v2590 = vpop.f32.mrf.mxu0
  %v2591 = vadd.f32 %v67, %v2590
  %2592 = vmatmul.bf16.gmra.mxu0 %v208
  %v2593 = vpop.f32.mrf.mxu0
  %v2594 = vadd.f32 %v72, %v2593
  %v2595 = vpop.f32.mrf.mxu0
  %v2596 = vadd.f32 %v77, %v2595
  %2597 = vmatmul.bf16.gmra.mxu0 %v211
  %v2598 = vpop.f32.mrf.mxu0
  %v2599 = vadd.f32 %v82, %v2598
  %v2600 = vpop.f32.mrf.mxu0
  %v2601 = vadd.f32 %v87, %v2600
  %2602 = vmatmul.bf16.gmra.mxu0 %v214
  %v2603 = vpop.f32.mrf.mxu0
  %v2604 = vadd.f32 %v92, %v2603
  %v2605 = vpop.f32.mrf.mxu0
  %v2606 = vadd.f32 %v97, %v2605
  %2607 = vmatmul.bf16.gmra.mxu0 %v217
  %v2608 = vpop.f32.mrf.mxu0
  %v2609 = vadd.f32 %v102, %v2608
  %v2610 = vpop.f32.mrf.mxu0
  %v2611 = vadd.f32 %v107, %v2610
  %2612 = vmatmul.bf16.gmra.mxu0 %v220
  %v2613 = vpop.f32.mrf.mxu0
  %v2614 = vadd.f32 %v112, %v2613
  %v2615 = vpop.f32.mrf.mxu0
  %v2616 = vadd.f32 %v117, %v2615
  %2617 = vmatmul.bf16.gmra.mxu0 %v223
  %v2618 = vpop.f32.mrf.mxu0
  %v2619 = vadd.f32 %v122, %v2618
  %v2620 = vpop.f32.mrf.mxu0
  %v2621 = vadd.f32 %v127, %v2620
  %2622 = vmatmul.bf16.gmra.mxu0 %v226
  %v2623 = vpop.f32.mrf.mxu0
  %v2624 = vadd.f32 %v132, %v2623
  %v2625 = vpop.f32.mrf.mxu0
  %v2626 = vadd.f32 %v137, %v2625
  %2627 = vdwg.mxu0
  %v2628 = vmax.f32 %v2589, 0.0
  %v2629 = vmax.f32 %v2591, 0.0
  %v2630 = vmax.f32 %v2594, 0.0
  %v2631 = vmax.f32 %v2596, 0.0
  %v2632 = vmax.f32 %v2599, 0.0
  %v2633 = vmax.f32 %v2601, 0.0
  %v2634 = vmax.f32 %v2604, 0.0
  %v2635 = vmax.f32 %v2606, 0.0
  %v2636 = vmax.f32 %v2609, 0.0
  %v2637 = vmax.f32 %v2611, 0.0
  %v2638 = vmax.f32 %v2614, 0.0
  %v2639 = vmax.f32 %v2616, 0.0
  %v2640 = vmax.f32 %v2619, 0.0
  %v2641 = vmax.f32 %v2621, 0.0
  %v2642 = vmax.f32 %v2624, 0.0
  %v2643 = vmax.f32 %v2626, 0.0
  %v2644 = vmax.f32 %v2539, %v2628
  %v2645 = vmax.f32 %v2540, %v2629
  %v2646 = vmax.f32 %v2541, %v2630
  %v2647 = vmax.f32 %v2542, %v2631
  %v2648 = vmax.f32 %v2543, %v2632
  %v2649 = vmax.f32 %v2544, %v2633
  %v2650 = vmax.f32 %v2545, %v2634
  %v2651 = vmax.f32 %v2546, %v2635
  %v2652 = vmax.f32 %v2547, %v2636
  %v2653 = vmax.f32 %v2548, %v2637
  %v2654 = vmax.f32 %v2549, %v2638
  %v2655 = vmax.f32 %v2550, %v2639
  %v2656 = vmax.f32 %v2551, %v2640
  %v2657 = vmax.f32 %v2552, %v2641
  %v2658 = vmax.f32 %v2553, %v2642
  %v2659 = vmax.f32 %v2554, %v2643
  %v2660 = vld [vmem:[%s0 + $0xd8] sm:$0xf]
  %v2661 = vld [vmem:[%s0 + $0xdc] sm:$0xf]
  %v2662 = vld [vmem:[%s0 + $0xe0] sm:$0xf]
  %v2663 = vld [vmem:[%s0 + $0xe4] sm:$0xf]
  %v2664 = vld [vmem:[%s0 + $0xe8] sm:$0xf]
  %v2665 = vld [vmem:[%s0 + $0xec] sm:$0xf]
  %v2672 = vunpack.c.l.b16 %v2660
  %v2673 = vunpack.c.l.b16 %v2661
  %v2674 = vunpack.c.l.b16 %v2662
  %v2675 = vunpack.c.l.b16 %v2663
  %v2676 = vunpack.c.l.b16 %v2664
  %v2677 = vunpack.c.l.b16 %v2665
  %v2678 = vpack.c.b16 %v2673, %v2672
  %v2679 = vpack.c.b16 %v2675, %v2674
  %v2680 = vpack.c.b16 %v2677, %v2676
  %2684 = vmatpush.bf16.msra.mxu0 0
  %2685 = vmatpush.bf16.msra.mxu0 0
  %2686 = vmatpush.bf16.msra.mxu0 0
  %2687 = vmatpush.bf16.msra.mxu0 0
  %2688 = vmatpush.bf16.msra.mxu0 0
  %2689 = vmatpush.bf16.msra.mxu0 %v2680
  %2690 = vmatpush.bf16.msra.mxu0 %v2679
  %2691 = vmatpush.bf16.msra.mxu0 %v2678
  %2692 = vmatmul.bf16.gmra.mxu0 %v205
  %v2693 = vpop.f32.mrf.mxu0
  %v2694 = vadd.f32 %v62, %v2693
  %v2695 = vpop.f32.mrf.mxu0
  %v2696 = vadd.f32 %v67, %v2695
  %2697 = vmatmul.bf16.gmra.mxu0 %v208
  %v2698 = vpop.f32.mrf.mxu0
  %v2699 = vadd.f32 %v72, %v2698
  %v2700 = vpop.f32.mrf.mxu0
  %v2701 = vadd.f32 %v77, %v2700
  %2702 = vmatmul.bf16.gmra.mxu0 %v211
  %v2703 = vpop.f32.mrf.mxu0
  %v2704 = vadd.f32 %v82, %v2703
  %v2705 = vpop.f32.mrf.mxu0
  %v2706 = vadd.f32 %v87, %v2705
  %2707 = vmatmul.bf16.gmra.mxu0 %v214
  %v2708 = vpop.f32.mrf.mxu0
  %v2709 = vadd.f32 %v92, %v2708
  %v2710 = vpop.f32.mrf.mxu0
  %v2711 = vadd.f32 %v97, %v2710
  %2712 = vmatmul.bf16.gmra.mxu0 %v217
  %v2713 = vpop.f32.mrf.mxu0
  %v2714 = vadd.f32 %v102, %v2713
  %v2715 = vpop.f32.mrf.mxu0
  %v2716 = vadd.f32 %v107, %v2715
  %2717 = vmatmul.bf16.gmra.mxu0 %v220
  %v2718 = vpop.f32.mrf.mxu0
  %v2719 = vadd.f32 %v112, %v2718
  %v2720 = vpop.f32.mrf.mxu0
  %v2721 = vadd.f32 %v117, %v2720
  %2722 = vmatmul.bf16.gmra.mxu0 %v223
  %v2723 = vpop.f32.mrf.mxu0
  %v2724 = vadd.f32 %v122, %v2723
  %v2725 = vpop.f32.mrf.mxu0
  %v2726 = vadd.f32 %v127, %v2725
  %2727 = vmatmul.bf16.gmra.mxu0 %v226
  %v2728 = vpop.f32.mrf.mxu0
  %v2729 = vadd.f32 %v132, %v2728
  %v2730 = vpop.f32.mrf.mxu0
  %v2731 = vadd.f32 %v137, %v2730
  %2732 = vdwg.mxu0
  %v2733 = vmax.f32 %v2694, 0.0
  %v2734 = vmax.f32 %v2696, 0.0
  %v2735 = vmax.f32 %v2699, 0.0
  %v2736 = vmax.f32 %v2701, 0.0
  %v2737 = vmax.f32 %v2704, 0.0
  %v2738 = vmax.f32 %v2706, 0.0
  %v2739 = vmax.f32 %v2709, 0.0
  %v2740 = vmax.f32 %v2711, 0.0
  %v2741 = vmax.f32 %v2714, 0.0
  %v2742 = vmax.f32 %v2716, 0.0
  %v2743 = vmax.f32 %v2719, 0.0
  %v2744 = vmax.f32 %v2721, 0.0
  %v2745 = vmax.f32 %v2724, 0.0
  %v2746 = vmax.f32 %v2726, 0.0
  %v2747 = vmax.f32 %v2729, 0.0
  %v2748 = vmax.f32 %v2731, 0.0
  %v2749 = vld [vmem:[%s0 + $0xe0] sm:$0xf]
  %v2750 = vld [vmem:[%s0 + $0xe4] sm:$0xf]
  %v2751 = vld [vmem:[%s0 + $0xe8] sm:$0xf]
  %v2752 = vld [vmem:[%s0 + $0xec] sm:$0xf]
  %v2753 = vld [vmem:[%s0 + $0xf0] sm:$0xf]
  %v2754 = vld [vmem:[%s0 + $0xf4] sm:$0xf]
  %v2761 = vunpack.c.l.b16 %v2749
  %v2762 = vunpack.c.l.b16 %v2750
  %v2763 = vunpack.c.l.b16 %v2751
  %v2764 = vunpack.c.l.b16 %v2752
  %v2765 = vunpack.c.l.b16 %v2753
  %v2766 = vunpack.c.l.b16 %v2754
  %v2767 = vpack.c.b16 %v2762, %v2761
  %v2768 = vpack.c.b16 %v2764, %v2763
  %v2769 = vpack.c.b16 %v2766, %v2765
  %2773 = vmatpush.bf16.msra.mxu0 0
  %2774 = vmatpush.bf16.msra.mxu0 0
  %2775 = vmatpush.bf16.msra.mxu0 0
  %2776 = vmatpush.bf16.msra.mxu0 0
  %2777 = vmatpush.bf16.msra.mxu0 0
  %2778 = vmatpush.bf16.msra.mxu0 %v2769
  %2779 = vmatpush.bf16.msra.mxu0 %v2768
  %2780 = vmatpush.bf16.msra.mxu0 %v2767
  %2781 = vmatmul.bf16.gmra.mxu0 %v205
  %v2782 = vpop.f32.mrf.mxu0
  %v2783 = vadd.f32 %v62, %v2782
  %v2784 = vpop.f32.mrf.mxu0
  %v2785 = vadd.f32 %v67, %v2784
  %2786 = vmatmul.bf16.gmra.mxu0 %v208
  %v2787 = vpop.f32.mrf.mxu0
  %v2788 = vadd.f32 %v72, %v2787
  %v2789 = vpop.f32.mrf.mxu0
  %v2790 = vadd.f32 %v77, %v2789
  %2791 = vmatmul.bf16.gmra.mxu0 %v211
  %v2792 = vpop.f32.mrf.mxu0
  %v2793 = vadd.f32 %v82, %v2792
  %v2794 = vpop.f32.mrf.mxu0
  %v2795 = vadd.f32 %v87, %v2794
  %2796 = vmatmul.bf16.gmra.mxu0 %v214
  %v2797 = vpop.f32.mrf.mxu0
  %v2798 = vadd.f32 %v92, %v2797
  %v2799 = vpop.f32.mrf.mxu0
  %v2800 = vadd.f32 %v97, %v2799
  %2801 = vmatmul.bf16.gmra.mxu0 %v217
  %v2802 = vpop.f32.mrf.mxu0
  %v2803 = vadd.f32 %v102, %v2802
  %v2804 = vpop.f32.mrf.mxu0
  %v2805 = vadd.f32 %v107, %v2804
  %2806 = vmatmul.bf16.gmra.mxu0 %v220
  %v2807 = vpop.f32.mrf.mxu0
  %v2808 = vadd.f32 %v112, %v2807
  %v2809 = vpop.f32.mrf.mxu0
  %v2810 = vadd.f32 %v117, %v2809
  %2811 = vmatmul.bf16.gmra.mxu0 %v223
  %v2812 = vpop.f32.mrf.mxu0
  %v2813 = vadd.f32 %v122, %v2812
  %v2814 = vpop.f32.mrf.mxu0
  %v2815 = vadd.f32 %v127, %v2814
  %2816 = vmatmul.bf16.gmra.mxu0 %v226
  %v2817 = vpop.f32.mrf.mxu0
  %v2818 = vadd.f32 %v132, %v2817
  %v2819 = vpop.f32.mrf.mxu0
  %v2820 = vadd.f32 %v137, %v2819
  %2821 = vdwg.mxu0
  %v2822 = vmax.f32 %v2783, 0.0
  %v2823 = vmax.f32 %v2785, 0.0
  %v2824 = vmax.f32 %v2788, 0.0
  %v2825 = vmax.f32 %v2790, 0.0
  %v2826 = vmax.f32 %v2793, 0.0
  %v2827 = vmax.f32 %v2795, 0.0
  %v2828 = vmax.f32 %v2798, 0.0
  %v2829 = vmax.f32 %v2800, 0.0
  %v2830 = vmax.f32 %v2803, 0.0
  %v2831 = vmax.f32 %v2805, 0.0
  %v2832 = vmax.f32 %v2808, 0.0
  %v2833 = vmax.f32 %v2810, 0.0
  %v2834 = vmax.f32 %v2813, 0.0
  %v2835 = vmax.f32 %v2815, 0.0
  %v2836 = vmax.f32 %v2818, 0.0
  %v2837 = vmax.f32 %v2820, 0.0
  %v2838 = vmax.f32 %v2733, %v2822
  %v2839 = vmax.f32 %v2734, %v2823
  %v2840 = vmax.f32 %v2735, %v2824
  %v2841 = vmax.f32 %v2736, %v2825
  %v2842 = vmax.f32 %v2737, %v2826
  %v2843 = vmax.f32 %v2738, %v2827
  %v2844 = vmax.f32 %v2739, %v2828
  %v2845 = vmax.f32 %v2740, %v2829
  %v2846 = vmax.f32 %v2741, %v2830
  %v2847 = vmax.f32 %v2742, %v2831
  %v2848 = vmax.f32 %v2743, %v2832
  %v2849 = vmax.f32 %v2744, %v2833
  %v2850 = vmax.f32 %v2745, %v2834
  %v2851 = vmax.f32 %v2746, %v2835
  %v2852 = vmax.f32 %v2747, %v2836
  %v2853 = vmax.f32 %v2748, %v2837
  %v2854 = vld [vmem:[%s0 + $0xe8] sm:$0xf]
  %v2855 = vld [vmem:[%s0 + $0xec] sm:$0xf]
  %v2856 = vld [vmem:[%s0 + $0xf0] sm:$0xf]
  %v2857 = vld [vmem:[%s0 + $0xf4] sm:$0xf]
  %v2858 = vld [vmem:[%s0 + $0xf8] sm:$0xf]
  %v2859 = vld [vmem:[%s0 + $0xfc] sm:$0xf]
  %v2866 = vunpack.c.l.b16 %v2854
  %v2867 = vunpack.c.l.b16 %v2855
  %v2868 = vunpack.c.l.b16 %v2856
  %v2869 = vunpack.c.l.b16 %v2857
  %v2870 = vunpack.c.l.b16 %v2858
  %v2871 = vunpack.c.l.b16 %v2859
  %v2872 = vpack.c.b16 %v2867, %v2866
  %v2873 = vpack.c.b16 %v2869, %v2868
  %v2874 = vpack.c.b16 %v2871, %v2870
  %2878 = vmatpush.bf16.msra.mxu0 0
  %2879 = vmatpush.bf16.msra.mxu0 0
  %2880 = vmatpush.bf16.msra.mxu0 0
  %2881 = vmatpush.bf16.msra.mxu0 0
  %2882 = vmatpush.bf16.msra.mxu0 0
  %2883 = vmatpush.bf16.msra.mxu0 %v2874
  %2884 = vmatpush.bf16.msra.mxu0 %v2873
  %2885 = vmatpush.bf16.msra.mxu0 %v2872
  %2886 = vmatmul.bf16.gmra.mxu0 %v205
  %v2887 = vpop.f32.mrf.mxu0
  %v2888 = vadd.f32 %v62, %v2887
  %v2889 = vpop.f32.mrf.mxu0
  %v2890 = vadd.f32 %v67, %v2889
  %2891 = vmatmul.bf16.gmra.mxu0 %v208
  %v2892 = vpop.f32.mrf.mxu0
  %v2893 = vadd.f32 %v72, %v2892
  %v2894 = vpop.f32.mrf.mxu0
  %v2895 = vadd.f32 %v77, %v2894
  %2896 = vmatmul.bf16.gmra.mxu0 %v211
  %v2897 = vpop.f32.mrf.mxu0
  %v2898 = vadd.f32 %v82, %v2897
  %v2899 = vpop.f32.mrf.mxu0
  %v2900 = vadd.f32 %v87, %v2899
  %2901 = vmatmul.bf16.gmra.mxu0 %v214
  %v2902 = vpop.f32.mrf.mxu0
  %v2903 = vadd.f32 %v92, %v2902
  %v2904 = vpop.f32.mrf.mxu0
  %v2905 = vadd.f32 %v97, %v2904
  %2906 = vmatmul.bf16.gmra.mxu0 %v217
  %v2907 = vpop.f32.mrf.mxu0
  %v2908 = vadd.f32 %v102, %v2907
  %v2909 = vpop.f32.mrf.mxu0
  %v2910 = vadd.f32 %v107, %v2909
  %2911 = vmatmul.bf16.gmra.mxu0 %v220
  %v2912 = vpop.f32.mrf.mxu0
  %v2913 = vadd.f32 %v112, %v2912
  %v2914 = vpop.f32.mrf.mxu0
  %v2915 = vadd.f32 %v117, %v2914
  %2916 = vmatmul.bf16.gmra.mxu0 %v223
  %v2917 = vpop.f32.mrf.mxu0
  %v2918 = vadd.f32 %v122, %v2917
  %v2919 = vpop.f32.mrf.mxu0
  %v2920 = vadd.f32 %v127, %v2919
  %2921 = vmatmul.bf16.gmra.mxu0 %v226
  %v2922 = vpop.f32.mrf.mxu0
  %v2923 = vadd.f32 %v132, %v2922
  %v2924 = vpop.f32.mrf.mxu0
  %v2925 = vadd.f32 %v137, %v2924
  %2926 = vdwg.mxu0
  %v2927 = vmax.f32 %v2888, 0.0
  %v2928 = vmax.f32 %v2890, 0.0
  %v2929 = vmax.f32 %v2893, 0.0
  %v2930 = vmax.f32 %v2895, 0.0
  %v2931 = vmax.f32 %v2898, 0.0
  %v2932 = vmax.f32 %v2900, 0.0
  %v2933 = vmax.f32 %v2903, 0.0
  %v2934 = vmax.f32 %v2905, 0.0
  %v2935 = vmax.f32 %v2908, 0.0
  %v2936 = vmax.f32 %v2910, 0.0
  %v2937 = vmax.f32 %v2913, 0.0
  %v2938 = vmax.f32 %v2915, 0.0
  %v2939 = vmax.f32 %v2918, 0.0
  %v2940 = vmax.f32 %v2920, 0.0
  %v2941 = vmax.f32 %v2923, 0.0
  %v2942 = vmax.f32 %v2925, 0.0
  %v2943 = vmax.f32 %v2838, %v2927
  %v2944 = vmax.f32 %v2839, %v2928
  %v2945 = vmax.f32 %v2840, %v2929
  %v2946 = vmax.f32 %v2841, %v2930
  %v2947 = vmax.f32 %v2842, %v2931
  %v2948 = vmax.f32 %v2843, %v2932
  %v2949 = vmax.f32 %v2844, %v2933
  %v2950 = vmax.f32 %v2845, %v2934
  %v2951 = vmax.f32 %v2846, %v2935
  %v2952 = vmax.f32 %v2847, %v2936
  %v2953 = vmax.f32 %v2848, %v2937
  %v2954 = vmax.f32 %v2849, %v2938
  %v2955 = vmax.f32 %v2850, %v2939
  %v2956 = vmax.f32 %v2851, %v2940
  %v2957 = vmax.f32 %v2852, %v2941
  %v2958 = vmax.f32 %v2853, %v2942
  %v2959 = vld [vmem:[%s0 + $0xf0] sm:$0xf]
  %v2960 = vld [vmem:[%s0 + $0xf4] sm:$0xf]
  %v2961 = vld [vmem:[%s0 + $0xf8] sm:$0xf]
  %v2962 = vld [vmem:[%s0 + $0xfc] sm:$0xf]
  %v2963 = vld [vmem:[%s0 + $0x100] sm:$0xf]
  %v2964 = vld [vmem:[%s0 + $0x104] sm:$0xf]
  %v2971 = vunpack.c.l.b16 %v2959
  %v2972 = vunpack.c.l.b16 %v2960
  %v2973 = vunpack.c.l.b16 %v2961
  %v2974 = vunpack.c.l.b16 %v2962
  %v2975 = vunpack.c.l.b16 %v2963
  %v2976 = vunpack.c.l.b16 %v2964
  %v2977 = vpack.c.b16 %v2972, %v2971
  %v2978 = vpack.c.b16 %v2974, %v2973
  %v2979 = vpack.c.b16 %v2976, %v2975
  %2983 = vmatpush.bf16.msra.mxu0 0
  %2984 = vmatpush.bf16.msra.mxu0 0
  %2985 = vmatpush.bf16.msra.mxu0 0
  %2986 = vmatpush.bf16.msra.mxu0 0
  %2987 = vmatpush.bf16.msra.mxu0 0
  %2988 = vmatpush.bf16.msra.mxu0 %v2979
  %2989 = vmatpush.bf16.msra.mxu0 %v2978
  %2990 = vmatpush.bf16.msra.mxu0 %v2977
  %2991 = vmatmul.bf16.gmra.mxu0 %v205
  %v2992 = vpop.f32.mrf.mxu0
  %v2993 = vadd.f32 %v62, %v2992
  %v2994 = vpop.f32.mrf.mxu0
  %v2995 = vadd.f32 %v67, %v2994
  %2996 = vmatmul.bf16.gmra.mxu0 %v208
  %v2997 = vpop.f32.mrf.mxu0
  %v2998 = vadd.f32 %v72, %v2997
  %v2999 = vpop.f32.mrf.mxu0
  %v3000 = vadd.f32 %v77, %v2999
  %3001 = vmatmul.bf16.gmra.mxu0 %v211
  %v3002 = vpop.f32.mrf.mxu0
  %v3003 = vadd.f32 %v82, %v3002
  %v3004 = vpop.f32.mrf.mxu0
  %v3005 = vadd.f32 %v87, %v3004
  %3006 = vmatmul.bf16.gmra.mxu0 %v214
  %v3007 = vpop.f32.mrf.mxu0
  %v3008 = vadd.f32 %v92, %v3007
  %v3009 = vpop.f32.mrf.mxu0
  %v3010 = vadd.f32 %v97, %v3009
  %3011 = vmatmul.bf16.gmra.mxu0 %v217
  %v3012 = vpop.f32.mrf.mxu0
  %v3013 = vadd.f32 %v102, %v3012
  %v3014 = vpop.f32.mrf.mxu0
  %v3015 = vadd.f32 %v107, %v3014
  %3016 = vmatmul.bf16.gmra.mxu0 %v220
  %v3017 = vpop.f32.mrf.mxu0
  %v3018 = vadd.f32 %v112, %v3017
  %v3019 = vpop.f32.mrf.mxu0
  %v3020 = vadd.f32 %v117, %v3019
  %3021 = vmatmul.bf16.gmra.mxu0 %v223
  %v3022 = vpop.f32.mrf.mxu0
  %v3023 = vadd.f32 %v122, %v3022
  %v3024 = vpop.f32.mrf.mxu0
  %v3025 = vadd.f32 %v127, %v3024
  %3026 = vmatmul.bf16.gmra.mxu0 %v226
  %v3027 = vpop.f32.mrf.mxu0
  %v3028 = vadd.f32 %v132, %v3027
  %v3029 = vpop.f32.mrf.mxu0
  %v3030 = vadd.f32 %v137, %v3029
  %3031 = vdwg.mxu0
  %v3032 = vmax.f32 %v2993, 0.0
  %v3033 = vmax.f32 %v2995, 0.0
  %v3034 = vmax.f32 %v2998, 0.0
  %v3035 = vmax.f32 %v3000, 0.0
  %v3036 = vmax.f32 %v3003, 0.0
  %v3037 = vmax.f32 %v3005, 0.0
  %v3038 = vmax.f32 %v3008, 0.0
  %v3039 = vmax.f32 %v3010, 0.0
  %v3040 = vmax.f32 %v3013, 0.0
  %v3041 = vmax.f32 %v3015, 0.0
  %v3042 = vmax.f32 %v3018, 0.0
  %v3043 = vmax.f32 %v3020, 0.0
  %v3044 = vmax.f32 %v3023, 0.0
  %v3045 = vmax.f32 %v3025, 0.0
  %v3046 = vmax.f32 %v3028, 0.0
  %v3047 = vmax.f32 %v3030, 0.0
  %v3048 = vmax.f32 %v2943, %v3032
  %v3049 = vmax.f32 %v2944, %v3033
  %v3050 = vmax.f32 %v2945, %v3034
  %v3051 = vmax.f32 %v2946, %v3035
  %v3052 = vmax.f32 %v2947, %v3036
  %v3053 = vmax.f32 %v2948, %v3037
  %v3054 = vmax.f32 %v2949, %v3038
  %v3055 = vmax.f32 %v2950, %v3039
  %v3056 = vmax.f32 %v2951, %v3040
  %v3057 = vmax.f32 %v2952, %v3041
  %v3058 = vmax.f32 %v2953, %v3042
  %v3059 = vmax.f32 %v2954, %v3043
  %v3060 = vmax.f32 %v2955, %v3044
  %v3061 = vmax.f32 %v2956, %v3045
  %v3062 = vmax.f32 %v2957, %v3046
  %v3063 = vmax.f32 %v2958, %v3047
  %v3064 = vld [vmem:[%s0 + $0xf8] sm:$0xf]
  %v3065 = vld [vmem:[%s0 + $0xfc] sm:$0xf]
  %v3066 = vld [vmem:[%s0 + $0x100] sm:$0xf]
  %v3067 = vld [vmem:[%s0 + $0x104] sm:$0xf]
  %v3068 = vld [vmem:[%s0 + $0x108] sm:$0xf]
  %v3069 = vld [vmem:[%s0 + $0x10c] sm:$0xf]
  %v3076 = vunpack.c.l.b16 %v3064
  %v3077 = vunpack.c.l.b16 %v3065
  %v3078 = vunpack.c.l.b16 %v3066
  %v3079 = vunpack.c.l.b16 %v3067
  %v3080 = vunpack.c.l.b16 %v3068
  %v3081 = vunpack.c.l.b16 %v3069
  %v3082 = vpack.c.b16 %v3077, %v3076
  %v3083 = vpack.c.b16 %v3079, %v3078
  %v3084 = vpack.c.b16 %v3081, %v3080
  %3088 = vmatpush.bf16.msra.mxu0 0
  %3089 = vmatpush.bf16.msra.mxu0 0
  %3090 = vmatpush.bf16.msra.mxu0 0
  %3091 = vmatpush.bf16.msra.mxu0 0
  %3092 = vmatpush.bf16.msra.mxu0 0
  %3093 = vmatpush.bf16.msra.mxu0 %v3084
  %3094 = vmatpush.bf16.msra.mxu0 %v3083
  %3095 = vmatpush.bf16.msra.mxu0 %v3082
  %3096 = vmatmul.bf16.gmra.mxu0 %v205
  %v3097 = vpop.f32.mrf.mxu0
  %v3098 = vadd.f32 %v62, %v3097
  %v3099 = vpop.f32.mrf.mxu0
  %v3100 = vadd.f32 %v67, %v3099
  %3101 = vmatmul.bf16.gmra.mxu0 %v208
  %v3102 = vpop.f32.mrf.mxu0
  %v3103 = vadd.f32 %v72, %v3102
  %v3104 = vpop.f32.mrf.mxu0
  %v3105 = vadd.f32 %v77, %v3104
  %3106 = vmatmul.bf16.gmra.mxu0 %v211
  %v3107 = vpop.f32.mrf.mxu0
  %v3108 = vadd.f32 %v82, %v3107
  %v3109 = vpop.f32.mrf.mxu0
  %v3110 = vadd.f32 %v87, %v3109
  %3111 = vmatmul.bf16.gmra.mxu0 %v214
  %v3112 = vpop.f32.mrf.mxu0
  %v3113 = vadd.f32 %v92, %v3112
  %v3114 = vpop.f32.mrf.mxu0
  %v3115 = vadd.f32 %v97, %v3114
  %3116 = vmatmul.bf16.gmra.mxu0 %v217
  %v3117 = vpop.f32.mrf.mxu0
  %v3118 = vadd.f32 %v102, %v3117
  %v3119 = vpop.f32.mrf.mxu0
  %v3120 = vadd.f32 %v107, %v3119
  %3121 = vmatmul.bf16.gmra.mxu0 %v220
  %v3122 = vpop.f32.mrf.mxu0
  %v3123 = vadd.f32 %v112, %v3122
  %v3124 = vpop.f32.mrf.mxu0
  %v3125 = vadd.f32 %v117, %v3124
  %3126 = vmatmul.bf16.gmra.mxu0 %v223
  %v3127 = vpop.f32.mrf.mxu0
  %v3128 = vadd.f32 %v122, %v3127
  %v3129 = vpop.f32.mrf.mxu0
  %v3130 = vadd.f32 %v127, %v3129
  %3131 = vmatmul.bf16.gmra.mxu0 %v226
  %v3132 = vpop.f32.mrf.mxu0
  %v3133 = vadd.f32 %v132, %v3132
  %v3134 = vpop.f32.mrf.mxu0
  %v3135 = vadd.f32 %v137, %v3134
  %3136 = vdwg.mxu0
  %v3137 = vmax.f32 %v3098, 0.0
  %v3138 = vmax.f32 %v3100, 0.0
  %v3139 = vmax.f32 %v3103, 0.0
  %v3140 = vmax.f32 %v3105, 0.0
  %v3141 = vmax.f32 %v3108, 0.0
  %v3142 = vmax.f32 %v3110, 0.0
  %v3143 = vmax.f32 %v3113, 0.0
  %v3144 = vmax.f32 %v3115, 0.0
  %v3145 = vmax.f32 %v3118, 0.0
  %v3146 = vmax.f32 %v3120, 0.0
  %v3147 = vmax.f32 %v3123, 0.0
  %v3148 = vmax.f32 %v3125, 0.0
  %v3149 = vmax.f32 %v3128, 0.0
  %v3150 = vmax.f32 %v3130, 0.0
  %v3151 = vmax.f32 %v3133, 0.0
  %v3152 = vmax.f32 %v3135, 0.0
  %v3153 = vmax.f32 %v3048, %v3137
  %v3154 = vmax.f32 %v3049, %v3138
  %v3155 = vmax.f32 %v3050, %v3139
  %v3156 = vmax.f32 %v3051, %v3140
  %v3157 = vmax.f32 %v3052, %v3141
  %v3158 = vmax.f32 %v3053, %v3142
  %v3159 = vmax.f32 %v3054, %v3143
  %v3160 = vmax.f32 %v3055, %v3144
  %v3161 = vmax.f32 %v3056, %v3145
  %v3162 = vmax.f32 %v3057, %v3146
  %v3163 = vmax.f32 %v3058, %v3147
  %v3164 = vmax.f32 %v3059, %v3148
  %v3165 = vmax.f32 %v3060, %v3149
  %v3166 = vmax.f32 %v3061, %v3150
  %v3167 = vmax.f32 %v3062, %v3151
  %v3168 = vmax.f32 %v3063, %v3152
  %v3169 = vld [vmem:[%s0 + $0x100] sm:$0xf]
  %v3170 = vld [vmem:[%s0 + $0x104] sm:$0xf]
  %v3171 = vld [vmem:[%s0 + $0x108] sm:$0xf]
  %v3172 = vld [vmem:[%s0 + $0x10c] sm:$0xf]
  %v3173 = vld [vmem:[%s0 + $0x110] sm:$0xf]
  %v3174 = vld [vmem:[%s0 + $0x114] sm:$0xf]
  %v3181 = vunpack.c.l.b16 %v3169
  %v3182 = vunpack.c.l.b16 %v3170
  %v3183 = vunpack.c.l.b16 %v3171
  %v3184 = vunpack.c.l.b16 %v3172
  %v3185 = vunpack.c.l.b16 %v3173
  %v3186 = vunpack.c.l.b16 %v3174
  %v3187 = vpack.c.b16 %v3182, %v3181
  %v3188 = vpack.c.b16 %v3184, %v3183
  %v3189 = vpack.c.b16 %v3186, %v3185
  %3193 = vmatpush.bf16.msra.mxu0 0
  %3194 = vmatpush.bf16.msra.mxu0 0
  %3195 = vmatpush.bf16.msra.mxu0 0
  %3196 = vmatpush.bf16.msra.mxu0 0
  %3197 = vmatpush.bf16.msra.mxu0 0
  %3198 = vmatpush.bf16.msra.mxu0 %v3189
  %3199 = vmatpush.bf16.msra.mxu0 %v3188
  %3200 = vmatpush.bf16.msra.mxu0 %v3187
  %3201 = vmatmul.bf16.gmra.mxu0 %v205
  %v3202 = vpop.f32.mrf.mxu0
  %v3203 = vadd.f32 %v62, %v3202
  %v3204 = vpop.f32.mrf.mxu0
  %v3205 = vadd.f32 %v67, %v3204
  %3206 = vmatmul.bf16.gmra.mxu0 %v208
  %v3207 = vpop.f32.mrf.mxu0
  %v3208 = vadd.f32 %v72, %v3207
  %v3209 = vpop.f32.mrf.mxu0
  %v3210 = vadd.f32 %v77, %v3209
  %3211 = vmatmul.bf16.gmra.mxu0 %v211
  %v3212 = vpop.f32.mrf.mxu0
  %v3213 = vadd.f32 %v82, %v3212
  %v3214 = vpop.f32.mrf.mxu0
  %v3215 = vadd.f32 %v87, %v3214
  %3216 = vmatmul.bf16.gmra.mxu0 %v214
  %v3217 = vpop.f32.mrf.mxu0
  %v3218 = vadd.f32 %v92, %v3217
  %v3219 = vpop.f32.mrf.mxu0
  %v3220 = vadd.f32 %v97, %v3219
  %3221 = vmatmul.bf16.gmra.mxu0 %v217
  %v3222 = vpop.f32.mrf.mxu0
  %v3223 = vadd.f32 %v102, %v3222
  %v3224 = vpop.f32.mrf.mxu0
  %v3225 = vadd.f32 %v107, %v3224
  %3226 = vmatmul.bf16.gmra.mxu0 %v220
  %v3227 = vpop.f32.mrf.mxu0
  %v3228 = vadd.f32 %v112, %v3227
  %v3229 = vpop.f32.mrf.mxu0
  %v3230 = vadd.f32 %v117, %v3229
  %3231 = vmatmul.bf16.gmra.mxu0 %v223
  %v3232 = vpop.f32.mrf.mxu0
  %v3233 = vadd.f32 %v122, %v3232
  %v3234 = vpop.f32.mrf.mxu0
  %v3235 = vadd.f32 %v127, %v3234
  %3236 = vmatmul.bf16.gmra.mxu0 %v226
  %v3237 = vpop.f32.mrf.mxu0
  %v3238 = vadd.f32 %v132, %v3237
  %v3239 = vpop.f32.mrf.mxu0
  %v3240 = vadd.f32 %v137, %v3239
  %3241 = vdwg.mxu0
  %v3242 = vmax.f32 %v3203, 0.0
  %v3243 = vmax.f32 %v3205, 0.0
  %v3244 = vmax.f32 %v3208, 0.0
  %v3245 = vmax.f32 %v3210, 0.0
  %v3246 = vmax.f32 %v3213, 0.0
  %v3247 = vmax.f32 %v3215, 0.0
  %v3248 = vmax.f32 %v3218, 0.0
  %v3249 = vmax.f32 %v3220, 0.0
  %v3250 = vmax.f32 %v3223, 0.0
  %v3251 = vmax.f32 %v3225, 0.0
  %v3252 = vmax.f32 %v3228, 0.0
  %v3253 = vmax.f32 %v3230, 0.0
  %v3254 = vmax.f32 %v3233, 0.0
  %v3255 = vmax.f32 %v3235, 0.0
  %v3256 = vmax.f32 %v3238, 0.0
  %v3257 = vmax.f32 %v3240, 0.0
  %v3258 = vmax.f32 %v3153, %v3242
  %v3259 = vmax.f32 %v3154, %v3243
  %v3260 = vmax.f32 %v3155, %v3244
  %v3261 = vmax.f32 %v3156, %v3245
  %v3262 = vmax.f32 %v3157, %v3246
  %v3263 = vmax.f32 %v3158, %v3247
  %v3264 = vmax.f32 %v3159, %v3248
  %v3265 = vmax.f32 %v3160, %v3249
  %v3266 = vmax.f32 %v3161, %v3250
  %v3267 = vmax.f32 %v3162, %v3251
  %v3268 = vmax.f32 %v3163, %v3252
  %v3269 = vmax.f32 %v3164, %v3253
  %v3270 = vmax.f32 %v3165, %v3254
  %v3271 = vmax.f32 %v3166, %v3255
  %v3272 = vmax.f32 %v3167, %v3256
  %v3273 = vmax.f32 %v3168, %v3257
  %v3274 = vld [vmem:[%s0 + $0x108] sm:$0xf]
  %v3275 = vld [vmem:[%s0 + $0x10c] sm:$0xf]
  %v3276 = vld [vmem:[%s0 + $0x110] sm:$0xf]
  %v3277 = vld [vmem:[%s0 + $0x114] sm:$0xf]
  %v3278 = vld [vmem:[%s0 + $0x118] sm:$0xf]
  %v3279 = vld [vmem:[%s0 + $0x11c] sm:$0xf]
  %v3286 = vunpack.c.l.b16 %v3274
  %v3287 = vunpack.c.l.b16 %v3275
  %v3288 = vunpack.c.l.b16 %v3276
  %v3289 = vunpack.c.l.b16 %v3277
  %v3290 = vunpack.c.l.b16 %v3278
  %v3291 = vunpack.c.l.b16 %v3279
  %v3292 = vpack.c.b16 %v3287, %v3286
  %v3293 = vpack.c.b16 %v3289, %v3288
  %v3294 = vpack.c.b16 %v3291, %v3290
  %3298 = vmatpush.bf16.msra.mxu0 0
  %3299 = vmatpush.bf16.msra.mxu0 0
  %3300 = vmatpush.bf16.msra.mxu0 0
  %3301 = vmatpush.bf16.msra.mxu0 0
  %3302 = vmatpush.bf16.msra.mxu0 0
  %3303 = vmatpush.bf16.msra.mxu0 %v3294
  %3304 = vmatpush.bf16.msra.mxu0 %v3293
  %3305 = vmatpush.bf16.msra.mxu0 %v3292
  %3306 = vmatmul.bf16.gmra.mxu0 %v205
  %v3307 = vpop.f32.mrf.mxu0
  %v3308 = vadd.f32 %v62, %v3307
  %v3309 = vpop.f32.mrf.mxu0
  %v3310 = vadd.f32 %v67, %v3309
  %3311 = vmatmul.bf16.gmra.mxu0 %v208
  %v3312 = vpop.f32.mrf.mxu0
  %v3313 = vadd.f32 %v72, %v3312
  %v3314 = vpop.f32.mrf.mxu0
  %v3315 = vadd.f32 %v77, %v3314
  %3316 = vmatmul.bf16.gmra.mxu0 %v211
  %v3317 = vpop.f32.mrf.mxu0
  %v3318 = vadd.f32 %v82, %v3317
  %v3319 = vpop.f32.mrf.mxu0
  %v3320 = vadd.f32 %v87, %v3319
  %3321 = vmatmul.bf16.gmra.mxu0 %v214
  %v3322 = vpop.f32.mrf.mxu0
  %v3323 = vadd.f32 %v92, %v3322
  %v3324 = vpop.f32.mrf.mxu0
  %v3325 = vadd.f32 %v97, %v3324
  %3326 = vmatmul.bf16.gmra.mxu0 %v217
  %v3327 = vpop.f32.mrf.mxu0
  %v3328 = vadd.f32 %v102, %v3327
  %v3329 = vpop.f32.mrf.mxu0
  %v3330 = vadd.f32 %v107, %v3329
  %3331 = vmatmul.bf16.gmra.mxu0 %v220
  %v3332 = vpop.f32.mrf.mxu0
  %v3333 = vadd.f32 %v112, %v3332
  %v3334 = vpop.f32.mrf.mxu0
  %v3335 = vadd.f32 %v117, %v3334
  %3336 = vmatmul.bf16.gmra.mxu0 %v223
  %v3337 = vpop.f32.mrf.mxu0
  %v3338 = vadd.f32 %v122, %v3337
  %v3339 = vpop.f32.mrf.mxu0
  %v3340 = vadd.f32 %v127, %v3339
  %3341 = vmatmul.bf16.gmra.mxu0 %v226
  %v3342 = vpop.f32.mrf.mxu0
  %v3343 = vadd.f32 %v132, %v3342
  %v3344 = vpop.f32.mrf.mxu0
  %v3345 = vadd.f32 %v137, %v3344
  %3346 = vdwg.mxu0
  %v3347 = vmax.f32 %v3308, 0.0
  %v3348 = vmax.f32 %v3310, 0.0
  %v3349 = vmax.f32 %v3313, 0.0
  %v3350 = vmax.f32 %v3315, 0.0
  %v3351 = vmax.f32 %v3318, 0.0
  %v3352 = vmax.f32 %v3320, 0.0
  %v3353 = vmax.f32 %v3323, 0.0
  %v3354 = vmax.f32 %v3325, 0.0
  %v3355 = vmax.f32 %v3328, 0.0
  %v3356 = vmax.f32 %v3330, 0.0
  %v3357 = vmax.f32 %v3333, 0.0
  %v3358 = vmax.f32 %v3335, 0.0
  %v3359 = vmax.f32 %v3338, 0.0
  %v3360 = vmax.f32 %v3340, 0.0
  %v3361 = vmax.f32 %v3343, 0.0
  %v3362 = vmax.f32 %v3345, 0.0
  %v3363 = vld [vmem:[%s0 + $0x110] sm:$0xf]
  %v3364 = vld [vmem:[%s0 + $0x114] sm:$0xf]
  %v3365 = vld [vmem:[%s0 + $0x118] sm:$0xf]
  %v3366 = vld [vmem:[%s0 + $0x11c] sm:$0xf]
  %v3367 = vld [vmem:[%s0 + $0x120] sm:$0xf]
  %v3368 = vld [vmem:[%s0 + $0x124] sm:$0xf]
  %v3375 = vunpack.c.l.b16 %v3363
  %v3376 = vunpack.c.l.b16 %v3364
  %v3377 = vunpack.c.l.b16 %v3365
  %v3378 = vunpack.c.l.b16 %v3366
  %v3379 = vunpack.c.l.b16 %v3367
  %v3380 = vunpack.c.l.b16 %v3368
  %v3381 = vpack.c.b16 %v3376, %v3375
  %v3382 = vpack.c.b16 %v3378, %v3377
  %v3383 = vpack.c.b16 %v3380, %v3379
  %3387 = vmatpush.bf16.msra.mxu0 0
  %3388 = vmatpush.bf16.msra.mxu0 0
  %3389 = vmatpush.bf16.msra.mxu0 0
  %3390 = vmatpush.bf16.msra.mxu0 0
  %3391 = vmatpush.bf16.msra.mxu0 0
  %3392 = vmatpush.bf16.msra.mxu0 %v3383
  %3393 = vmatpush.bf16.msra.mxu0 %v3382
  %3394 = vmatpush.bf16.msra.mxu0 %v3381
  %3395 = vmatmul.bf16.gmra.mxu0 %v205
  %v3396 = vpop.f32.mrf.mxu0
  %v3397 = vadd.f32 %v62, %v3396
  %v3398 = vpop.f32.mrf.mxu0
  %v3399 = vadd.f32 %v67, %v3398
  %3400 = vmatmul.bf16.gmra.mxu0 %v208
  %v3401 = vpop.f32.mrf.mxu0
  %v3402 = vadd.f32 %v72, %v3401
  %v3403 = vpop.f32.mrf.mxu0
  %v3404 = vadd.f32 %v77, %v3403
  %3405 = vmatmul.bf16.gmra.mxu0 %v211
  %v3406 = vpop.f32.mrf.mxu0
  %v3407 = vadd.f32 %v82, %v3406
  %v3408 = vpop.f32.mrf.mxu0
  %v3409 = vadd.f32 %v87, %v3408
  %3410 = vmatmul.bf16.gmra.mxu0 %v214
  %v3411 = vpop.f32.mrf.mxu0
  %v3412 = vadd.f32 %v92, %v3411
  %v3413 = vpop.f32.mrf.mxu0
  %v3414 = vadd.f32 %v97, %v3413
  %3415 = vmatmul.bf16.gmra.mxu0 %v217
  %v3416 = vpop.f32.mrf.mxu0
  %v3417 = vadd.f32 %v102, %v3416
  %v3418 = vpop.f32.mrf.mxu0
  %v3419 = vadd.f32 %v107, %v3418
  %3420 = vmatmul.bf16.gmra.mxu0 %v220
  %v3421 = vpop.f32.mrf.mxu0
  %v3422 = vadd.f32 %v112, %v3421
  %v3423 = vpop.f32.mrf.mxu0
  %v3424 = vadd.f32 %v117, %v3423
  %3425 = vmatmul.bf16.gmra.mxu0 %v223
  %v3426 = vpop.f32.mrf.mxu0
  %v3427 = vadd.f32 %v122, %v3426
  %v3428 = vpop.f32.mrf.mxu0
  %v3429 = vadd.f32 %v127, %v3428
  %3430 = vmatmul.bf16.gmra.mxu0 %v226
  %v3431 = vpop.f32.mrf.mxu0
  %v3432 = vadd.f32 %v132, %v3431
  %v3433 = vpop.f32.mrf.mxu0
  %v3434 = vadd.f32 %v137, %v3433
  %3435 = vdwg.mxu0
  %v3436 = vmax.f32 %v3397, 0.0
  %v3437 = vmax.f32 %v3399, 0.0
  %v3438 = vmax.f32 %v3402, 0.0
  %v3439 = vmax.f32 %v3404, 0.0
  %v3440 = vmax.f32 %v3407, 0.0
  %v3441 = vmax.f32 %v3409, 0.0
  %v3442 = vmax.f32 %v3412, 0.0
  %v3443 = vmax.f32 %v3414, 0.0
  %v3444 = vmax.f32 %v3417, 0.0
  %v3445 = vmax.f32 %v3419, 0.0
  %v3446 = vmax.f32 %v3422, 0.0
  %v3447 = vmax.f32 %v3424, 0.0
  %v3448 = vmax.f32 %v3427, 0.0
  %v3449 = vmax.f32 %v3429, 0.0
  %v3450 = vmax.f32 %v3432, 0.0
  %v3451 = vmax.f32 %v3434, 0.0
  %v3452 = vmax.f32 %v3347, %v3436
  %v3453 = vmax.f32 %v3348, %v3437
  %v3454 = vmax.f32 %v3349, %v3438
  %v3455 = vmax.f32 %v3350, %v3439
  %v3456 = vmax.f32 %v3351, %v3440
  %v3457 = vmax.f32 %v3352, %v3441
  %v3458 = vmax.f32 %v3353, %v3442
  %v3459 = vmax.f32 %v3354, %v3443
  %v3460 = vmax.f32 %v3355, %v3444
  %v3461 = vmax.f32 %v3356, %v3445
  %v3462 = vmax.f32 %v3357, %v3446
  %v3463 = vmax.f32 %v3358, %v3447
  %v3464 = vmax.f32 %v3359, %v3448
  %v3465 = vmax.f32 %v3360, %v3449
  %v3466 = vmax.f32 %v3361, %v3450
  %v3467 = vmax.f32 %v3362, %v3451
  %v3468 = vld [vmem:[%s0 + $0x118] sm:$0xf]
  %v3469 = vld [vmem:[%s0 + $0x11c] sm:$0xf]
  %v3470 = vld [vmem:[%s0 + $0x120] sm:$0xf]
  %v3471 = vld [vmem:[%s0 + $0x124] sm:$0xf]
  %v3472 = vld [vmem:[%s0 + $0x128] sm:$0xf]
  %v3473 = vld [vmem:[%s0 + $0x12c] sm:$0xf]
  %v3480 = vunpack.c.l.b16 %v3468
  %v3481 = vunpack.c.l.b16 %v3469
  %v3482 = vunpack.c.l.b16 %v3470
  %v3483 = vunpack.c.l.b16 %v3471
  %v3484 = vunpack.c.l.b16 %v3472
  %v3485 = vunpack.c.l.b16 %v3473
  %v3486 = vpack.c.b16 %v3481, %v3480
  %v3487 = vpack.c.b16 %v3483, %v3482
  %v3488 = vpack.c.b16 %v3485, %v3484
  %3492 = vmatpush.bf16.msra.mxu0 0
  %3493 = vmatpush.bf16.msra.mxu0 0
  %3494 = vmatpush.bf16.msra.mxu0 0
  %3495 = vmatpush.bf16.msra.mxu0 0
  %3496 = vmatpush.bf16.msra.mxu0 0
  %3497 = vmatpush.bf16.msra.mxu0 %v3488
  %3498 = vmatpush.bf16.msra.mxu0 %v3487
  %3499 = vmatpush.bf16.msra.mxu0 %v3486
  %3500 = vmatmul.bf16.gmra.mxu0 %v205
  %v3501 = vpop.f32.mrf.mxu0
  %v3502 = vadd.f32 %v62, %v3501
  %v3503 = vpop.f32.mrf.mxu0
  %v3504 = vadd.f32 %v67, %v3503
  %3505 = vmatmul.bf16.gmra.mxu0 %v208
  %v3506 = vpop.f32.mrf.mxu0
  %v3507 = vadd.f32 %v72, %v3506
  %v3508 = vpop.f32.mrf.mxu0
  %v3509 = vadd.f32 %v77, %v3508
  %3510 = vmatmul.bf16.gmra.mxu0 %v211
  %v3511 = vpop.f32.mrf.mxu0
  %v3512 = vadd.f32 %v82, %v3511
  %v3513 = vpop.f32.mrf.mxu0
  %v3514 = vadd.f32 %v87, %v3513
  %3515 = vmatmul.bf16.gmra.mxu0 %v214
  %v3516 = vpop.f32.mrf.mxu0
  %v3517 = vadd.f32 %v92, %v3516
  %v3518 = vpop.f32.mrf.mxu0
  %v3519 = vadd.f32 %v97, %v3518
  %3520 = vmatmul.bf16.gmra.mxu0 %v217
  %v3521 = vpop.f32.mrf.mxu0
  %v3522 = vadd.f32 %v102, %v3521
  %v3523 = vpop.f32.mrf.mxu0
  %v3524 = vadd.f32 %v107, %v3523
  %3525 = vmatmul.bf16.gmra.mxu0 %v220
  %v3526 = vpop.f32.mrf.mxu0
  %v3527 = vadd.f32 %v112, %v3526
  %v3528 = vpop.f32.mrf.mxu0
  %v3529 = vadd.f32 %v117, %v3528
  %3530 = vmatmul.bf16.gmra.mxu0 %v223
  %v3531 = vpop.f32.mrf.mxu0
  %v3532 = vadd.f32 %v122, %v3531
  %v3533 = vpop.f32.mrf.mxu0
  %v3534 = vadd.f32 %v127, %v3533
  %3535 = vmatmul.bf16.gmra.mxu0 %v226
  %v3536 = vpop.f32.mrf.mxu0
  %v3537 = vadd.f32 %v132, %v3536
  %v3538 = vpop.f32.mrf.mxu0
  %v3539 = vadd.f32 %v137, %v3538
  %3540 = vdwg.mxu0
  %v3541 = vmax.f32 %v3502, 0.0
  %v3542 = vmax.f32 %v3504, 0.0
  %v3543 = vmax.f32 %v3507, 0.0
  %v3544 = vmax.f32 %v3509, 0.0
  %v3545 = vmax.f32 %v3512, 0.0
  %v3546 = vmax.f32 %v3514, 0.0
  %v3547 = vmax.f32 %v3517, 0.0
  %v3548 = vmax.f32 %v3519, 0.0
  %v3549 = vmax.f32 %v3522, 0.0
  %v3550 = vmax.f32 %v3524, 0.0
  %v3551 = vmax.f32 %v3527, 0.0
  %v3552 = vmax.f32 %v3529, 0.0
  %v3553 = vmax.f32 %v3532, 0.0
  %v3554 = vmax.f32 %v3534, 0.0
  %v3555 = vmax.f32 %v3537, 0.0
  %v3556 = vmax.f32 %v3539, 0.0
  %v3557 = vmax.f32 %v3452, %v3541
  %v3558 = vmax.f32 %v3453, %v3542
  %v3559 = vmax.f32 %v3454, %v3543
  %v3560 = vmax.f32 %v3455, %v3544
  %v3561 = vmax.f32 %v3456, %v3545
  %v3562 = vmax.f32 %v3457, %v3546
  %v3563 = vmax.f32 %v3458, %v3547
  %v3564 = vmax.f32 %v3459, %v3548
  %v3565 = vmax.f32 %v3460, %v3549
  %v3566 = vmax.f32 %v3461, %v3550
  %v3567 = vmax.f32 %v3462, %v3551
  %v3568 = vmax.f32 %v3463, %v3552
  %v3569 = vmax.f32 %v3464, %v3553
  %v3570 = vmax.f32 %v3465, %v3554
  %v3571 = vmax.f32 %v3466, %v3555
  %v3572 = vmax.f32 %v3467, %v3556
  %v3573 = vld [vmem:[%s0 + $0x120] sm:$0xf]
  %v3574 = vld [vmem:[%s0 + $0x124] sm:$0xf]
  %v3575 = vld [vmem:[%s0 + $0x128] sm:$0xf]
  %v3576 = vld [vmem:[%s0 + $0x12c] sm:$0xf]
  %v3577 = vld [vmem:[%s0 + $0x130] sm:$0xf]
  %v3578 = vld [vmem:[%s0 + $0x134] sm:$0xf]
  %v3585 = vunpack.c.l.b16 %v3573
  %v3586 = vunpack.c.l.b16 %v3574
  %v3587 = vunpack.c.l.b16 %v3575
  %v3588 = vunpack.c.l.b16 %v3576
  %v3589 = vunpack.c.l.b16 %v3577
  %v3590 = vunpack.c.l.b16 %v3578
  %v3591 = vpack.c.b16 %v3586, %v3585
  %v3592 = vpack.c.b16 %v3588, %v3587
  %v3593 = vpack.c.b16 %v3590, %v3589
  %3597 = vmatpush.bf16.msra.mxu0 0
  %3598 = vmatpush.bf16.msra.mxu0 0
  %3599 = vmatpush.bf16.msra.mxu0 0
  %3600 = vmatpush.bf16.msra.mxu0 0
  %3601 = vmatpush.bf16.msra.mxu0 0
  %3602 = vmatpush.bf16.msra.mxu0 %v3593
  %3603 = vmatpush.bf16.msra.mxu0 %v3592
  %3604 = vmatpush.bf16.msra.mxu0 %v3591
  %3605 = vmatmul.bf16.gmra.mxu0 %v205
  %v3606 = vpop.f32.mrf.mxu0
  %v3607 = vadd.f32 %v62, %v3606
  %v3608 = vpop.f32.mrf.mxu0
  %v3609 = vadd.f32 %v67, %v3608
  %3610 = vmatmul.bf16.gmra.mxu0 %v208
  %v3611 = vpop.f32.mrf.mxu0
  %v3612 = vadd.f32 %v72, %v3611
  %v3613 = vpop.f32.mrf.mxu0
  %v3614 = vadd.f32 %v77, %v3613
  %3615 = vmatmul.bf16.gmra.mxu0 %v211
  %v3616 = vpop.f32.mrf.mxu0
  %v3617 = vadd.f32 %v82, %v3616
  %v3618 = vpop.f32.mrf.mxu0
  %v3619 = vadd.f32 %v87, %v3618
  %3620 = vmatmul.bf16.gmra.mxu0 %v214
  %v3621 = vpop.f32.mrf.mxu0
  %v3622 = vadd.f32 %v92, %v3621
  %v3623 = vpop.f32.mrf.mxu0
  %v3624 = vadd.f32 %v97, %v3623
  %3625 = vmatmul.bf16.gmra.mxu0 %v217
  %v3626 = vpop.f32.mrf.mxu0
  %v3627 = vadd.f32 %v102, %v3626
  %v3628 = vpop.f32.mrf.mxu0
  %v3629 = vadd.f32 %v107, %v3628
  %3630 = vmatmul.bf16.gmra.mxu0 %v220
  %v3631 = vpop.f32.mrf.mxu0
  %v3632 = vadd.f32 %v112, %v3631
  %v3633 = vpop.f32.mrf.mxu0
  %v3634 = vadd.f32 %v117, %v3633
  %3635 = vmatmul.bf16.gmra.mxu0 %v223
  %v3636 = vpop.f32.mrf.mxu0
  %v3637 = vadd.f32 %v122, %v3636
  %v3638 = vpop.f32.mrf.mxu0
  %v3639 = vadd.f32 %v127, %v3638
  %3640 = vmatmul.bf16.gmra.mxu0 %v226
  %v3641 = vpop.f32.mrf.mxu0
  %v3642 = vadd.f32 %v132, %v3641
  %v3643 = vpop.f32.mrf.mxu0
  %v3644 = vadd.f32 %v137, %v3643
  %3645 = vdwg.mxu0
  %v3646 = vmax.f32 %v3607, 0.0
  %v3647 = vmax.f32 %v3609, 0.0
  %v3648 = vmax.f32 %v3612, 0.0
  %v3649 = vmax.f32 %v3614, 0.0
  %v3650 = vmax.f32 %v3617, 0.0
  %v3651 = vmax.f32 %v3619, 0.0
  %v3652 = vmax.f32 %v3622, 0.0
  %v3653 = vmax.f32 %v3624, 0.0
  %v3654 = vmax.f32 %v3627, 0.0
  %v3655 = vmax.f32 %v3629, 0.0
  %v3656 = vmax.f32 %v3632, 0.0
  %v3657 = vmax.f32 %v3634, 0.0
  %v3658 = vmax.f32 %v3637, 0.0
  %v3659 = vmax.f32 %v3639, 0.0
  %v3660 = vmax.f32 %v3642, 0.0
  %v3661 = vmax.f32 %v3644, 0.0
  %v3662 = vmax.f32 %v3557, %v3646
  %v3663 = vmax.f32 %v3558, %v3647
  %v3664 = vmax.f32 %v3559, %v3648
  %v3665 = vmax.f32 %v3560, %v3649
  %v3666 = vmax.f32 %v3561, %v3650
  %v3667 = vmax.f32 %v3562, %v3651
  %v3668 = vmax.f32 %v3563, %v3652
  %v3669 = vmax.f32 %v3564, %v3653
  %v3670 = vmax.f32 %v3565, %v3654
  %v3671 = vmax.f32 %v3566, %v3655
  %v3672 = vmax.f32 %v3567, %v3656
  %v3673 = vmax.f32 %v3568, %v3657
  %v3674 = vmax.f32 %v3569, %v3658
  %v3675 = vmax.f32 %v3570, %v3659
  %v3676 = vmax.f32 %v3571, %v3660
  %v3677 = vmax.f32 %v3572, %v3661
  %v3678 = vld [vmem:[%s0 + $0x128] sm:$0xf]
  %v3679 = vld [vmem:[%s0 + $0x12c] sm:$0xf]
  %v3680 = vld [vmem:[%s0 + $0x130] sm:$0xf]
  %v3681 = vld [vmem:[%s0 + $0x134] sm:$0xf]
  %v3682 = vld [vmem:[%s0 + $0x138] sm:$0xf]
  %v3683 = vld [vmem:[%s0 + $0x13c] sm:$0xf]
  %v3690 = vunpack.c.l.b16 %v3678
  %v3691 = vunpack.c.l.b16 %v3679
  %v3692 = vunpack.c.l.b16 %v3680
  %v3693 = vunpack.c.l.b16 %v3681
  %v3694 = vunpack.c.l.b16 %v3682
  %v3695 = vunpack.c.l.b16 %v3683
  %v3696 = vpack.c.b16 %v3691, %v3690
  %v3697 = vpack.c.b16 %v3693, %v3692
  %v3698 = vpack.c.b16 %v3695, %v3694
  %3702 = vmatpush.bf16.msra.mxu0 0
  %3703 = vmatpush.bf16.msra.mxu0 0
  %3704 = vmatpush.bf16.msra.mxu0 0
  %3705 = vmatpush.bf16.msra.mxu0 0
  %3706 = vmatpush.bf16.msra.mxu0 0
  %3707 = vmatpush.bf16.msra.mxu0 %v3698
  %3708 = vmatpush.bf16.msra.mxu0 %v3697
  %3709 = vmatpush.bf16.msra.mxu0 %v3696
  %3710 = vmatmul.bf16.gmra.mxu0 %v205
  %v3711 = vpop.f32.mrf.mxu0
  %v3712 = vadd.f32 %v62, %v3711
  %v3713 = vpop.f32.mrf.mxu0
  %v3714 = vadd.f32 %v67, %v3713
  %3715 = vmatmul.bf16.gmra.mxu0 %v208
  %v3716 = vpop.f32.mrf.mxu0
  %v3717 = vadd.f32 %v72, %v3716
  %v3718 = vpop.f32.mrf.mxu0
  %v3719 = vadd.f32 %v77, %v3718
  %3720 = vmatmul.bf16.gmra.mxu0 %v211
  %v3721 = vpop.f32.mrf.mxu0
  %v3722 = vadd.f32 %v82, %v3721
  %v3723 = vpop.f32.mrf.mxu0
  %v3724 = vadd.f32 %v87, %v3723
  %3725 = vmatmul.bf16.gmra.mxu0 %v214
  %v3726 = vpop.f32.mrf.mxu0
  %v3727 = vadd.f32 %v92, %v3726
  %v3728 = vpop.f32.mrf.mxu0
  %v3729 = vadd.f32 %v97, %v3728
  %3730 = vmatmul.bf16.gmra.mxu0 %v217
  %v3731 = vpop.f32.mrf.mxu0
  %v3732 = vadd.f32 %v102, %v3731
  %v3733 = vpop.f32.mrf.mxu0
  %v3734 = vadd.f32 %v107, %v3733
  %3735 = vmatmul.bf16.gmra.mxu0 %v220
  %v3736 = vpop.f32.mrf.mxu0
  %v3737 = vadd.f32 %v112, %v3736
  %v3738 = vpop.f32.mrf.mxu0
  %v3739 = vadd.f32 %v117, %v3738
  %3740 = vmatmul.bf16.gmra.mxu0 %v223
  %v3741 = vpop.f32.mrf.mxu0
  %v3742 = vadd.f32 %v122, %v3741
  %v3743 = vpop.f32.mrf.mxu0
  %v3744 = vadd.f32 %v127, %v3743
  %3745 = vmatmul.bf16.gmra.mxu0 %v226
  %v3746 = vpop.f32.mrf.mxu0
  %v3747 = vadd.f32 %v132, %v3746
  %v3748 = vpop.f32.mrf.mxu0
  %v3749 = vadd.f32 %v137, %v3748
  %3750 = vdwg.mxu0
  %v3751 = vmax.f32 %v3712, 0.0
  %v3752 = vmax.f32 %v3714, 0.0
  %v3753 = vmax.f32 %v3717, 0.0
  %v3754 = vmax.f32 %v3719, 0.0
  %v3755 = vmax.f32 %v3722, 0.0
  %v3756 = vmax.f32 %v3724, 0.0
  %v3757 = vmax.f32 %v3727, 0.0
  %v3758 = vmax.f32 %v3729, 0.0
  %v3759 = vmax.f32 %v3732, 0.0
  %v3760 = vmax.f32 %v3734, 0.0
  %v3761 = vmax.f32 %v3737, 0.0
  %v3762 = vmax.f32 %v3739, 0.0
  %v3763 = vmax.f32 %v3742, 0.0
  %v3764 = vmax.f32 %v3744, 0.0
  %v3765 = vmax.f32 %v3747, 0.0
  %v3766 = vmax.f32 %v3749, 0.0
  %v3767 = vmax.f32 %v3662, %v3751
  %v3768 = vmax.f32 %v3663, %v3752
  %v3769 = vmax.f32 %v3664, %v3753
  %v3770 = vmax.f32 %v3665, %v3754
  %v3771 = vmax.f32 %v3666, %v3755
  %v3772 = vmax.f32 %v3667, %v3756
  %v3773 = vmax.f32 %v3668, %v3757
  %v3774 = vmax.f32 %v3669, %v3758
  %v3775 = vmax.f32 %v3670, %v3759
  %v3776 = vmax.f32 %v3671, %v3760
  %v3777 = vmax.f32 %v3672, %v3761
  %v3778 = vmax.f32 %v3673, %v3762
  %v3779 = vmax.f32 %v3674, %v3763
  %v3780 = vmax.f32 %v3675, %v3764
  %v3781 = vmax.f32 %v3676, %v3765
  %v3782 = vmax.f32 %v3677, %v3766
  %v3783 = vld [vmem:[%s0 + $0x130] sm:$0xf]
  %v3784 = vld [vmem:[%s0 + $0x134] sm:$0xf]
  %v3785 = vld [vmem:[%s0 + $0x138] sm:$0xf]
  %v3786 = vld [vmem:[%s0 + $0x13c] sm:$0xf]
  %v3787 = vld [vmem:[%s0 + $0x140] sm:$0xf]
  %v3788 = vld [vmem:[%s0 + $0x144] sm:$0xf]
  %v3795 = vunpack.c.l.b16 %v3783
  %v3796 = vunpack.c.l.b16 %v3784
  %v3797 = vunpack.c.l.b16 %v3785
  %v3798 = vunpack.c.l.b16 %v3786
  %v3799 = vunpack.c.l.b16 %v3787
  %v3800 = vunpack.c.l.b16 %v3788
  %v3801 = vpack.c.b16 %v3796, %v3795
  %v3802 = vpack.c.b16 %v3798, %v3797
  %v3803 = vpack.c.b16 %v3800, %v3799
  %3807 = vmatpush.bf16.msra.mxu0 0
  %3808 = vmatpush.bf16.msra.mxu0 0
  %3809 = vmatpush.bf16.msra.mxu0 0
  %3810 = vmatpush.bf16.msra.mxu0 0
  %3811 = vmatpush.bf16.msra.mxu0 0
  %3812 = vmatpush.bf16.msra.mxu0 %v3803
  %3813 = vmatpush.bf16.msra.mxu0 %v3802
  %3814 = vmatpush.bf16.msra.mxu0 %v3801
  %3815 = vmatmul.bf16.gmra.mxu0 %v205
  %v3816 = vpop.f32.mrf.mxu0
  %v3817 = vadd.f32 %v62, %v3816
  %v3818 = vpop.f32.mrf.mxu0
  %v3819 = vadd.f32 %v67, %v3818
  %3820 = vmatmul.bf16.gmra.mxu0 %v208
  %v3821 = vpop.f32.mrf.mxu0
  %v3822 = vadd.f32 %v72, %v3821
  %v3823 = vpop.f32.mrf.mxu0
  %v3824 = vadd.f32 %v77, %v3823
  %3825 = vmatmul.bf16.gmra.mxu0 %v211
  %v3826 = vpop.f32.mrf.mxu0
  %v3827 = vadd.f32 %v82, %v3826
  %v3828 = vpop.f32.mrf.mxu0
  %v3829 = vadd.f32 %v87, %v3828
  %3830 = vmatmul.bf16.gmra.mxu0 %v214
  %v3831 = vpop.f32.mrf.mxu0
  %v3832 = vadd.f32 %v92, %v3831
  %v3833 = vpop.f32.mrf.mxu0
  %v3834 = vadd.f32 %v97, %v3833
  %3835 = vmatmul.bf16.gmra.mxu0 %v217
  %v3836 = vpop.f32.mrf.mxu0
  %v3837 = vadd.f32 %v102, %v3836
  %v3838 = vpop.f32.mrf.mxu0
  %v3839 = vadd.f32 %v107, %v3838
  %3840 = vmatmul.bf16.gmra.mxu0 %v220
  %v3841 = vpop.f32.mrf.mxu0
  %v3842 = vadd.f32 %v112, %v3841
  %v3843 = vpop.f32.mrf.mxu0
  %v3844 = vadd.f32 %v117, %v3843
  %3845 = vmatmul.bf16.gmra.mxu0 %v223
  %v3846 = vpop.f32.mrf.mxu0
  %v3847 = vadd.f32 %v122, %v3846
  %v3848 = vpop.f32.mrf.mxu0
  %v3849 = vadd.f32 %v127, %v3848
  %3850 = vmatmul.bf16.gmra.mxu0 %v226
  %v3851 = vpop.f32.mrf.mxu0
  %v3852 = vadd.f32 %v132, %v3851
  %v3853 = vpop.f32.mrf.mxu0
  %v3854 = vadd.f32 %v137, %v3853
  %3855 = vdwg.mxu0
  %v3856 = vmax.f32 %v3817, 0.0
  %v3857 = vmax.f32 %v3819, 0.0
  %v3858 = vmax.f32 %v3822, 0.0
  %v3859 = vmax.f32 %v3824, 0.0
  %v3860 = vmax.f32 %v3827, 0.0
  %v3861 = vmax.f32 %v3829, 0.0
  %v3862 = vmax.f32 %v3832, 0.0
  %v3863 = vmax.f32 %v3834, 0.0
  %v3864 = vmax.f32 %v3837, 0.0
  %v3865 = vmax.f32 %v3839, 0.0
  %v3866 = vmax.f32 %v3842, 0.0
  %v3867 = vmax.f32 %v3844, 0.0
  %v3868 = vmax.f32 %v3847, 0.0
  %v3869 = vmax.f32 %v3849, 0.0
  %v3870 = vmax.f32 %v3852, 0.0
  %v3871 = vmax.f32 %v3854, 0.0
  %v3872 = vmax.f32 %v3767, %v3856
  %v3873 = vmax.f32 %v3768, %v3857
  %v3874 = vmax.f32 %v3769, %v3858
  %v3875 = vmax.f32 %v3770, %v3859
  %v3876 = vmax.f32 %v3771, %v3860
  %v3877 = vmax.f32 %v3772, %v3861
  %v3878 = vmax.f32 %v3773, %v3862
  %v3879 = vmax.f32 %v3774, %v3863
  %v3880 = vmax.f32 %v3775, %v3864
  %v3881 = vmax.f32 %v3776, %v3865
  %v3882 = vmax.f32 %v3777, %v3866
  %v3883 = vmax.f32 %v3778, %v3867
  %v3884 = vmax.f32 %v3779, %v3868
  %v3885 = vmax.f32 %v3780, %v3869
  %v3886 = vmax.f32 %v3781, %v3870
  %v3887 = vmax.f32 %v3782, %v3871
  %v3888 = vld [vmem:[%s0 + $0x138] sm:$0xf]
  %v3889 = vld [vmem:[%s0 + $0x13c] sm:$0xf]
  %v3890 = vld [vmem:[%s0 + $0x140] sm:$0xf]
  %v3891 = vld [vmem:[%s0 + $0x144] sm:$0xf]
  %v3892 = vld [vmem:[%s0 + $0x148] sm:$0xf]
  %v3893 = vld [vmem:[%s0 + $0x14c] sm:$0xf]
  %v3900 = vunpack.c.l.b16 %v3888
  %v3901 = vunpack.c.l.b16 %v3889
  %v3902 = vunpack.c.l.b16 %v3890
  %v3903 = vunpack.c.l.b16 %v3891
  %v3904 = vunpack.c.l.b16 %v3892
  %v3905 = vunpack.c.l.b16 %v3893
  %v3906 = vpack.c.b16 %v3901, %v3900
  %v3907 = vpack.c.b16 %v3903, %v3902
  %v3908 = vpack.c.b16 %v3905, %v3904
  %3912 = vmatpush.bf16.msra.mxu0 0
  %3913 = vmatpush.bf16.msra.mxu0 0
  %3914 = vmatpush.bf16.msra.mxu0 0
  %3915 = vmatpush.bf16.msra.mxu0 0
  %3916 = vmatpush.bf16.msra.mxu0 0
  %3917 = vmatpush.bf16.msra.mxu0 %v3908
  %3918 = vmatpush.bf16.msra.mxu0 %v3907
  %3919 = vmatpush.bf16.msra.mxu0 %v3906
  %3920 = vmatmul.bf16.gmra.mxu0 %v205
  %v3921 = vpop.f32.mrf.mxu0
  %v3922 = vadd.f32 %v62, %v3921
  %v3923 = vpop.f32.mrf.mxu0
  %v3924 = vadd.f32 %v67, %v3923
  %3925 = vmatmul.bf16.gmra.mxu0 %v208
  %v3926 = vpop.f32.mrf.mxu0
  %v3927 = vadd.f32 %v72, %v3926
  %v3928 = vpop.f32.mrf.mxu0
  %v3929 = vadd.f32 %v77, %v3928
  %3930 = vmatmul.bf16.gmra.mxu0 %v211
  %v3931 = vpop.f32.mrf.mxu0
  %v3932 = vadd.f32 %v82, %v3931
  %v3933 = vpop.f32.mrf.mxu0
  %v3934 = vadd.f32 %v87, %v3933
  %3935 = vmatmul.bf16.gmra.mxu0 %v214
  %v3936 = vpop.f32.mrf.mxu0
  %v3937 = vadd.f32 %v92, %v3936
  %v3938 = vpop.f32.mrf.mxu0
  %v3939 = vadd.f32 %v97, %v3938
  %3940 = vmatmul.bf16.gmra.mxu0 %v217
  %v3941 = vpop.f32.mrf.mxu0
  %v3942 = vadd.f32 %v102, %v3941
  %v3943 = vpop.f32.mrf.mxu0
  %v3944 = vadd.f32 %v107, %v3943
  %3945 = vmatmul.bf16.gmra.mxu0 %v220
  %v3946 = vpop.f32.mrf.mxu0
  %v3947 = vadd.f32 %v112, %v3946
  %v3948 = vpop.f32.mrf.mxu0
  %v3949 = vadd.f32 %v117, %v3948
  %3950 = vmatmul.bf16.gmra.mxu0 %v223
  %v3951 = vpop.f32.mrf.mxu0
  %v3952 = vadd.f32 %v122, %v3951
  %v3953 = vpop.f32.mrf.mxu0
  %v3954 = vadd.f32 %v127, %v3953
  %3955 = vmatmul.bf16.gmra.mxu0 %v226
  %v3956 = vpop.f32.mrf.mxu0
  %v3957 = vadd.f32 %v132, %v3956
  %v3958 = vpop.f32.mrf.mxu0
  %v3959 = vadd.f32 %v137, %v3958
  %3960 = vdwg.mxu0
  %v3961 = vmax.f32 %v3922, 0.0
  %v3962 = vmax.f32 %v3924, 0.0
  %v3963 = vmax.f32 %v3927, 0.0
  %v3964 = vmax.f32 %v3929, 0.0
  %v3965 = vmax.f32 %v3932, 0.0
  %v3966 = vmax.f32 %v3934, 0.0
  %v3967 = vmax.f32 %v3937, 0.0
  %v3968 = vmax.f32 %v3939, 0.0
  %v3969 = vmax.f32 %v3942, 0.0
  %v3970 = vmax.f32 %v3944, 0.0
  %v3971 = vmax.f32 %v3947, 0.0
  %v3972 = vmax.f32 %v3949, 0.0
  %v3973 = vmax.f32 %v3952, 0.0
  %v3974 = vmax.f32 %v3954, 0.0
  %v3975 = vmax.f32 %v3957, 0.0
  %v3976 = vmax.f32 %v3959, 0.0
  %v3977 = vld [vmem:[%s0 + $0x140] sm:$0xf]
  %v3978 = vld [vmem:[%s0 + $0x144] sm:$0xf]
  %v3979 = vld [vmem:[%s0 + $0x148] sm:$0xf]
  %v3980 = vld [vmem:[%s0 + $0x14c] sm:$0xf]
  %v3981 = vld [vmem:[%s0 + $0x150] sm:$0xf]
  %v3982 = vld [vmem:[%s0 + $0x154] sm:$0xf]
  %v3989 = vunpack.c.l.b16 %v3977
  %v3990 = vunpack.c.l.b16 %v3978
  %v3991 = vunpack.c.l.b16 %v3979
  %v3992 = vunpack.c.l.b16 %v3980
  %v3993 = vunpack.c.l.b16 %v3981
  %v3994 = vunpack.c.l.b16 %v3982
  %v3995 = vpack.c.b16 %v3990, %v3989
  %v3996 = vpack.c.b16 %v3992, %v3991
  %v3997 = vpack.c.b16 %v3994, %v3993
  %4001 = vmatpush.bf16.msra.mxu0 0
  %4002 = vmatpush.bf16.msra.mxu0 0
  %4003 = vmatpush.bf16.msra.mxu0 0
  %4004 = vmatpush.bf16.msra.mxu0 0
  %4005 = vmatpush.bf16.msra.mxu0 0
  %4006 = vmatpush.bf16.msra.mxu0 %v3997
  %4007 = vmatpush.bf16.msra.mxu0 %v3996
  %4008 = vmatpush.bf16.msra.mxu0 %v3995
  %4009 = vmatmul.bf16.gmra.mxu0 %v205
  %v4010 = vpop.f32.mrf.mxu0
  %v4011 = vadd.f32 %v62, %v4010
  %v4012 = vpop.f32.mrf.mxu0
  %v4013 = vadd.f32 %v67, %v4012
  %4014 = vmatmul.bf16.gmra.mxu0 %v208
  %v4015 = vpop.f32.mrf.mxu0
  %v4016 = vadd.f32 %v72, %v4015
  %v4017 = vpop.f32.mrf.mxu0
  %v4018 = vadd.f32 %v77, %v4017
  %4019 = vmatmul.bf16.gmra.mxu0 %v211
  %v4020 = vpop.f32.mrf.mxu0
  %v4021 = vadd.f32 %v82, %v4020
  %v4022 = vpop.f32.mrf.mxu0
  %v4023 = vadd.f32 %v87, %v4022
  %4024 = vmatmul.bf16.gmra.mxu0 %v214
  %v4025 = vpop.f32.mrf.mxu0
  %v4026 = vadd.f32 %v92, %v4025
  %v4027 = vpop.f32.mrf.mxu0
  %v4028 = vadd.f32 %v97, %v4027
  %4029 = vmatmul.bf16.gmra.mxu0 %v217
  %v4030 = vpop.f32.mrf.mxu0
  %v4031 = vadd.f32 %v102, %v4030
  %v4032 = vpop.f32.mrf.mxu0
  %v4033 = vadd.f32 %v107, %v4032
  %4034 = vmatmul.bf16.gmra.mxu0 %v220
  %v4035 = vpop.f32.mrf.mxu0
  %v4036 = vadd.f32 %v112, %v4035
  %v4037 = vpop.f32.mrf.mxu0
  %v4038 = vadd.f32 %v117, %v4037
  %4039 = vmatmul.bf16.gmra.mxu0 %v223
  %v4040 = vpop.f32.mrf.mxu0
  %v4041 = vadd.f32 %v122, %v4040
  %v4042 = vpop.f32.mrf.mxu0
  %v4043 = vadd.f32 %v127, %v4042
  %4044 = vmatmul.bf16.gmra.mxu0 %v226
  %v4045 = vpop.f32.mrf.mxu0
  %v4046 = vadd.f32 %v132, %v4045
  %v4047 = vpop.f32.mrf.mxu0
  %v4048 = vadd.f32 %v137, %v4047
  %4049 = vdwg.mxu0
  %v4050 = vmax.f32 %v4011, 0.0
  %v4051 = vmax.f32 %v4013, 0.0
  %v4052 = vmax.f32 %v4016, 0.0
  %v4053 = vmax.f32 %v4018, 0.0
  %v4054 = vmax.f32 %v4021, 0.0
  %v4055 = vmax.f32 %v4023, 0.0
  %v4056 = vmax.f32 %v4026, 0.0
  %v4057 = vmax.f32 %v4028, 0.0
  %v4058 = vmax.f32 %v4031, 0.0
  %v4059 = vmax.f32 %v4033, 0.0
  %v4060 = vmax.f32 %v4036, 0.0
  %v4061 = vmax.f32 %v4038, 0.0
  %v4062 = vmax.f32 %v4041, 0.0
  %v4063 = vmax.f32 %v4043, 0.0
  %v4064 = vmax.f32 %v4046, 0.0
  %v4065 = vmax.f32 %v4048, 0.0
  %v4066 = vmax.f32 %v3961, %v4050
  %v4067 = vmax.f32 %v3962, %v4051
  %v4068 = vmax.f32 %v3963, %v4052
  %v4069 = vmax.f32 %v3964, %v4053
  %v4070 = vmax.f32 %v3965, %v4054
  %v4071 = vmax.f32 %v3966, %v4055
  %v4072 = vmax.f32 %v3967, %v4056
  %v4073 = vmax.f32 %v3968, %v4057
  %v4074 = vmax.f32 %v3969, %v4058
  %v4075 = vmax.f32 %v3970, %v4059
  %v4076 = vmax.f32 %v3971, %v4060
  %v4077 = vmax.f32 %v3972, %v4061
  %v4078 = vmax.f32 %v3973, %v4062
  %v4079 = vmax.f32 %v3974, %v4063
  %v4080 = vmax.f32 %v3975, %v4064
  %v4081 = vmax.f32 %v3976, %v4065
  %v4082 = vld [vmem:[%s0 + $0x148] sm:$0xf]
  %v4083 = vld [vmem:[%s0 + $0x14c] sm:$0xf]
  %v4084 = vld [vmem:[%s0 + $0x150] sm:$0xf]
  %v4085 = vld [vmem:[%s0 + $0x154] sm:$0xf]
  %v4086 = vld [vmem:[%s0 + $0x158] sm:$0xf]
  %v4087 = vld [vmem:[%s0 + $0x15c] sm:$0xf]
  %v4094 = vunpack.c.l.b16 %v4082
  %v4095 = vunpack.c.l.b16 %v4083
  %v4096 = vunpack.c.l.b16 %v4084
  %v4097 = vunpack.c.l.b16 %v4085
  %v4098 = vunpack.c.l.b16 %v4086
  %v4099 = vunpack.c.l.b16 %v4087
  %v4100 = vpack.c.b16 %v4095, %v4094
  %v4101 = vpack.c.b16 %v4097, %v4096
  %v4102 = vpack.c.b16 %v4099, %v4098
  %4106 = vmatpush.bf16.msra.mxu0 0
  %4107 = vmatpush.bf16.msra.mxu0 0
  %4108 = vmatpush.bf16.msra.mxu0 0
  %4109 = vmatpush.bf16.msra.mxu0 0
  %4110 = vmatpush.bf16.msra.mxu0 0
  %4111 = vmatpush.bf16.msra.mxu0 %v4102
  %4112 = vmatpush.bf16.msra.mxu0 %v4101
  %4113 = vmatpush.bf16.msra.mxu0 %v4100
  %4114 = vmatmul.bf16.gmra.mxu0 %v205
  %v4115 = vpop.f32.mrf.mxu0
  %v4116 = vadd.f32 %v62, %v4115
  %v4117 = vpop.f32.mrf.mxu0
  %v4118 = vadd.f32 %v67, %v4117
  %4119 = vmatmul.bf16.gmra.mxu0 %v208
  %v4120 = vpop.f32.mrf.mxu0
  %v4121 = vadd.f32 %v72, %v4120
  %v4122 = vpop.f32.mrf.mxu0
  %v4123 = vadd.f32 %v77, %v4122
  %4124 = vmatmul.bf16.gmra.mxu0 %v211
  %v4125 = vpop.f32.mrf.mxu0
  %v4126 = vadd.f32 %v82, %v4125
  %v4127 = vpop.f32.mrf.mxu0
  %v4128 = vadd.f32 %v87, %v4127
  %4129 = vmatmul.bf16.gmra.mxu0 %v214
  %v4130 = vpop.f32.mrf.mxu0
  %v4131 = vadd.f32 %v92, %v4130
  %v4132 = vpop.f32.mrf.mxu0
  %v4133 = vadd.f32 %v97, %v4132
  %4134 = vmatmul.bf16.gmra.mxu0 %v217
  %v4135 = vpop.f32.mrf.mxu0
  %v4136 = vadd.f32 %v102, %v4135
  %v4137 = vpop.f32.mrf.mxu0
  %v4138 = vadd.f32 %v107, %v4137
  %4139 = vmatmul.bf16.gmra.mxu0 %v220
  %v4140 = vpop.f32.mrf.mxu0
  %v4141 = vadd.f32 %v112, %v4140
  %v4142 = vpop.f32.mrf.mxu0
  %v4143 = vadd.f32 %v117, %v4142
  %4144 = vmatmul.bf16.gmra.mxu0 %v223
  %v4145 = vpop.f32.mrf.mxu0
  %v4146 = vadd.f32 %v122, %v4145
  %v4147 = vpop.f32.mrf.mxu0
  %v4148 = vadd.f32 %v127, %v4147
  %4149 = vmatmul.bf16.gmra.mxu0 %v226
  %v4150 = vpop.f32.mrf.mxu0
  %v4151 = vadd.f32 %v132, %v4150
  %v4152 = vpop.f32.mrf.mxu0
  %v4153 = vadd.f32 %v137, %v4152
  %4154 = vdwg.mxu0
  %v4155 = vmax.f32 %v4116, 0.0
  %v4156 = vmax.f32 %v4118, 0.0
  %v4157 = vmax.f32 %v4121, 0.0
  %v4158 = vmax.f32 %v4123, 0.0
  %v4159 = vmax.f32 %v4126, 0.0
  %v4160 = vmax.f32 %v4128, 0.0
  %v4161 = vmax.f32 %v4131, 0.0
  %v4162 = vmax.f32 %v4133, 0.0
  %v4163 = vmax.f32 %v4136, 0.0
  %v4164 = vmax.f32 %v4138, 0.0
  %v4165 = vmax.f32 %v4141, 0.0
  %v4166 = vmax.f32 %v4143, 0.0
  %v4167 = vmax.f32 %v4146, 0.0
  %v4168 = vmax.f32 %v4148, 0.0
  %v4169 = vmax.f32 %v4151, 0.0
  %v4170 = vmax.f32 %v4153, 0.0
  %v4171 = vmax.f32 %v4066, %v4155
  %v4172 = vmax.f32 %v4067, %v4156
  %v4173 = vmax.f32 %v4068, %v4157
  %v4174 = vmax.f32 %v4069, %v4158
  %v4175 = vmax.f32 %v4070, %v4159
  %v4176 = vmax.f32 %v4071, %v4160
  %v4177 = vmax.f32 %v4072, %v4161
  %v4178 = vmax.f32 %v4073, %v4162
  %v4179 = vmax.f32 %v4074, %v4163
  %v4180 = vmax.f32 %v4075, %v4164
  %v4181 = vmax.f32 %v4076, %v4165
  %v4182 = vmax.f32 %v4077, %v4166
  %v4183 = vmax.f32 %v4078, %v4167
  %v4184 = vmax.f32 %v4079, %v4168
  %v4185 = vmax.f32 %v4080, %v4169
  %v4186 = vmax.f32 %v4081, %v4170
  %v4187 = vld [vmem:[%s0 + $0x150] sm:$0xf]
  %v4188 = vld [vmem:[%s0 + $0x154] sm:$0xf]
  %v4189 = vld [vmem:[%s0 + $0x158] sm:$0xf]
  %v4190 = vld [vmem:[%s0 + $0x15c] sm:$0xf]
  %v4191 = vld [vmem:[%s0 + $0x160] sm:$0xf]
  %v4192 = vld [vmem:[%s0 + $0x164] sm:$0xf]
  %v4199 = vunpack.c.l.b16 %v4187
  %v4200 = vunpack.c.l.b16 %v4188
  %v4201 = vunpack.c.l.b16 %v4189
  %v4202 = vunpack.c.l.b16 %v4190
  %v4203 = vunpack.c.l.b16 %v4191
  %v4204 = vunpack.c.l.b16 %v4192
  %v4205 = vpack.c.b16 %v4200, %v4199
  %v4206 = vpack.c.b16 %v4202, %v4201
  %v4207 = vpack.c.b16 %v4204, %v4203
  %4211 = vmatpush.bf16.msra.mxu0 0
  %4212 = vmatpush.bf16.msra.mxu0 0
  %4213 = vmatpush.bf16.msra.mxu0 0
  %4214 = vmatpush.bf16.msra.mxu0 0
  %4215 = vmatpush.bf16.msra.mxu0 0
  %4216 = vmatpush.bf16.msra.mxu0 %v4207
  %4217 = vmatpush.bf16.msra.mxu0 %v4206
  %4218 = vmatpush.bf16.msra.mxu0 %v4205
  %4219 = vmatmul.bf16.gmra.mxu0 %v205
  %v4220 = vpop.f32.mrf.mxu0
  %v4221 = vadd.f32 %v62, %v4220
  %v4222 = vpop.f32.mrf.mxu0
  %v4223 = vadd.f32 %v67, %v4222
  %4224 = vmatmul.bf16.gmra.mxu0 %v208
  %v4225 = vpop.f32.mrf.mxu0
  %v4226 = vadd.f32 %v72, %v4225
  %v4227 = vpop.f32.mrf.mxu0
  %v4228 = vadd.f32 %v77, %v4227
  %4229 = vmatmul.bf16.gmra.mxu0 %v211
  %v4230 = vpop.f32.mrf.mxu0
  %v4231 = vadd.f32 %v82, %v4230
  %v4232 = vpop.f32.mrf.mxu0
  %v4233 = vadd.f32 %v87, %v4232
  %4234 = vmatmul.bf16.gmra.mxu0 %v214
  %v4235 = vpop.f32.mrf.mxu0
  %v4236 = vadd.f32 %v92, %v4235
  %v4237 = vpop.f32.mrf.mxu0
  %v4238 = vadd.f32 %v97, %v4237
  %4239 = vmatmul.bf16.gmra.mxu0 %v217
  %v4240 = vpop.f32.mrf.mxu0
  %v4241 = vadd.f32 %v102, %v4240
  %v4242 = vpop.f32.mrf.mxu0
  %v4243 = vadd.f32 %v107, %v4242
  %4244 = vmatmul.bf16.gmra.mxu0 %v220
  %v4245 = vpop.f32.mrf.mxu0
  %v4246 = vadd.f32 %v112, %v4245
  %v4247 = vpop.f32.mrf.mxu0
  %v4248 = vadd.f32 %v117, %v4247
  %4249 = vmatmul.bf16.gmra.mxu0 %v223
  %v4250 = vpop.f32.mrf.mxu0
  %v4251 = vadd.f32 %v122, %v4250
  %v4252 = vpop.f32.mrf.mxu0
  %v4253 = vadd.f32 %v127, %v4252
  %4254 = vmatmul.bf16.gmra.mxu0 %v226
  %v4255 = vpop.f32.mrf.mxu0
  %v4256 = vadd.f32 %v132, %v4255
  %v4257 = vpop.f32.mrf.mxu0
  %v4258 = vadd.f32 %v137, %v4257
  %4259 = vdwg.mxu0
  %v4260 = vmax.f32 %v4221, 0.0
  %v4261 = vmax.f32 %v4223, 0.0
  %v4262 = vmax.f32 %v4226, 0.0
  %v4263 = vmax.f32 %v4228, 0.0
  %v4264 = vmax.f32 %v4231, 0.0
  %v4265 = vmax.f32 %v4233, 0.0
  %v4266 = vmax.f32 %v4236, 0.0
  %v4267 = vmax.f32 %v4238, 0.0
  %v4268 = vmax.f32 %v4241, 0.0
  %v4269 = vmax.f32 %v4243, 0.0
  %v4270 = vmax.f32 %v4246, 0.0
  %v4271 = vmax.f32 %v4248, 0.0
  %v4272 = vmax.f32 %v4251, 0.0
  %v4273 = vmax.f32 %v4253, 0.0
  %v4274 = vmax.f32 %v4256, 0.0
  %v4275 = vmax.f32 %v4258, 0.0
  %v4276 = vmax.f32 %v4171, %v4260
  %v4277 = vmax.f32 %v4172, %v4261
  %v4278 = vmax.f32 %v4173, %v4262
  %v4279 = vmax.f32 %v4174, %v4263
  %v4280 = vmax.f32 %v4175, %v4264
  %v4281 = vmax.f32 %v4176, %v4265
  %v4282 = vmax.f32 %v4177, %v4266
  %v4283 = vmax.f32 %v4178, %v4267
  %v4284 = vmax.f32 %v4179, %v4268
  %v4285 = vmax.f32 %v4180, %v4269
  %v4286 = vmax.f32 %v4181, %v4270
  %v4287 = vmax.f32 %v4182, %v4271
  %v4288 = vmax.f32 %v4183, %v4272
  %v4289 = vmax.f32 %v4184, %v4273
  %v4290 = vmax.f32 %v4185, %v4274
  %v4291 = vmax.f32 %v4186, %v4275
  %v4292 = vld [vmem:[%s0 + $0x158] sm:$0xf]
  %v4293 = vld [vmem:[%s0 + $0x15c] sm:$0xf]
  %v4294 = vld [vmem:[%s0 + $0x160] sm:$0xf]
  %v4295 = vld [vmem:[%s0 + $0x164] sm:$0xf]
  %v4296 = vld [vmem:[%s0 + $0x168] sm:$0xf]
  %v4297 = vld [vmem:[%s0 + $0x16c] sm:$0xf]
  %v4304 = vunpack.c.l.b16 %v4292
  %v4305 = vunpack.c.l.b16 %v4293
  %v4306 = vunpack.c.l.b16 %v4294
  %v4307 = vunpack.c.l.b16 %v4295
  %v4308 = vunpack.c.l.b16 %v4296
  %v4309 = vunpack.c.l.b16 %v4297
  %v4310 = vpack.c.b16 %v4305, %v4304
  %v4311 = vpack.c.b16 %v4307, %v4306
  %v4312 = vpack.c.b16 %v4309, %v4308
  %4316 = vmatpush.bf16.msra.mxu0 0
  %4317 = vmatpush.bf16.msra.mxu0 0
  %4318 = vmatpush.bf16.msra.mxu0 0
  %4319 = vmatpush.bf16.msra.mxu0 0
  %4320 = vmatpush.bf16.msra.mxu0 0
  %4321 = vmatpush.bf16.msra.mxu0 %v4312
  %4322 = vmatpush.bf16.msra.mxu0 %v4311
  %4323 = vmatpush.bf16.msra.mxu0 %v4310
  %4324 = vmatmul.bf16.gmra.mxu0 %v205
  %v4325 = vpop.f32.mrf.mxu0
  %v4326 = vadd.f32 %v62, %v4325
  %v4327 = vpop.f32.mrf.mxu0
  %v4328 = vadd.f32 %v67, %v4327
  %4329 = vmatmul.bf16.gmra.mxu0 %v208
  %v4330 = vpop.f32.mrf.mxu0
  %v4331 = vadd.f32 %v72, %v4330
  %v4332 = vpop.f32.mrf.mxu0
  %v4333 = vadd.f32 %v77, %v4332
  %4334 = vmatmul.bf16.gmra.mxu0 %v211
  %v4335 = vpop.f32.mrf.mxu0
  %v4336 = vadd.f32 %v82, %v4335
  %v4337 = vpop.f32.mrf.mxu0
  %v4338 = vadd.f32 %v87, %v4337
  %4339 = vmatmul.bf16.gmra.mxu0 %v214
  %v4340 = vpop.f32.mrf.mxu0
  %v4341 = vadd.f32 %v92, %v4340
  %v4342 = vpop.f32.mrf.mxu0
  %v4343 = vadd.f32 %v97, %v4342
  %4344 = vmatmul.bf16.gmra.mxu0 %v217
  %v4345 = vpop.f32.mrf.mxu0
  %v4346 = vadd.f32 %v102, %v4345
  %v4347 = vpop.f32.mrf.mxu0
  %v4348 = vadd.f32 %v107, %v4347
  %4349 = vmatmul.bf16.gmra.mxu0 %v220
  %v4350 = vpop.f32.mrf.mxu0
  %v4351 = vadd.f32 %v112, %v4350
  %v4352 = vpop.f32.mrf.mxu0
  %v4353 = vadd.f32 %v117, %v4352
  %4354 = vmatmul.bf16.gmra.mxu0 %v223
  %v4355 = vpop.f32.mrf.mxu0
  %v4356 = vadd.f32 %v122, %v4355
  %v4357 = vpop.f32.mrf.mxu0
  %v4358 = vadd.f32 %v127, %v4357
  %4359 = vmatmul.bf16.gmra.mxu0 %v226
  %v4360 = vpop.f32.mrf.mxu0
  %v4361 = vadd.f32 %v132, %v4360
  %v4362 = vpop.f32.mrf.mxu0
  %v4363 = vadd.f32 %v137, %v4362
  %4364 = vdwg.mxu0
  %v4365 = vmax.f32 %v4326, 0.0
  %v4366 = vmax.f32 %v4328, 0.0
  %v4367 = vmax.f32 %v4331, 0.0
  %v4368 = vmax.f32 %v4333, 0.0
  %v4369 = vmax.f32 %v4336, 0.0
  %v4370 = vmax.f32 %v4338, 0.0
  %v4371 = vmax.f32 %v4341, 0.0
  %v4372 = vmax.f32 %v4343, 0.0
  %v4373 = vmax.f32 %v4346, 0.0
  %v4374 = vmax.f32 %v4348, 0.0
  %v4375 = vmax.f32 %v4351, 0.0
  %v4376 = vmax.f32 %v4353, 0.0
  %v4377 = vmax.f32 %v4356, 0.0
  %v4378 = vmax.f32 %v4358, 0.0
  %v4379 = vmax.f32 %v4361, 0.0
  %v4380 = vmax.f32 %v4363, 0.0
  %v4381 = vmax.f32 %v4276, %v4365
  %v4382 = vmax.f32 %v4277, %v4366
  %v4383 = vmax.f32 %v4278, %v4367
  %v4384 = vmax.f32 %v4279, %v4368
  %v4385 = vmax.f32 %v4280, %v4369
  %v4386 = vmax.f32 %v4281, %v4370
  %v4387 = vmax.f32 %v4282, %v4371
  %v4388 = vmax.f32 %v4283, %v4372
  %v4389 = vmax.f32 %v4284, %v4373
  %v4390 = vmax.f32 %v4285, %v4374
  %v4391 = vmax.f32 %v4286, %v4375
  %v4392 = vmax.f32 %v4287, %v4376
  %v4393 = vmax.f32 %v4288, %v4377
  %v4394 = vmax.f32 %v4289, %v4378
  %v4395 = vmax.f32 %v4290, %v4379
  %v4396 = vmax.f32 %v4291, %v4380
  %v4397 = vld [vmem:[%s0 + $0x160] sm:$0xf]
  %v4398 = vld [vmem:[%s0 + $0x164] sm:$0xf]
  %v4399 = vld [vmem:[%s0 + $0x168] sm:$0xf]
  %v4400 = vld [vmem:[%s0 + $0x16c] sm:$0xf]
  %v4401 = vld [vmem:[%s0 + $0x170] sm:$0xf]
  %v4402 = vld [vmem:[%s0 + $0x174] sm:$0xf]
  %v4409 = vunpack.c.l.b16 %v4397
  %v4410 = vunpack.c.l.b16 %v4398
  %v4411 = vunpack.c.l.b16 %v4399
  %v4412 = vunpack.c.l.b16 %v4400
  %v4413 = vunpack.c.l.b16 %v4401
  %v4414 = vunpack.c.l.b16 %v4402
  %v4415 = vpack.c.b16 %v4410, %v4409
  %v4416 = vpack.c.b16 %v4412, %v4411
  %v4417 = vpack.c.b16 %v4414, %v4413
  %4421 = vmatpush.bf16.msra.mxu0 0
  %4422 = vmatpush.bf16.msra.mxu0 0
  %4423 = vmatpush.bf16.msra.mxu0 0
  %4424 = vmatpush.bf16.msra.mxu0 0
  %4425 = vmatpush.bf16.msra.mxu0 0
  %4426 = vmatpush.bf16.msra.mxu0 %v4417
  %4427 = vmatpush.bf16.msra.mxu0 %v4416
  %4428 = vmatpush.bf16.msra.mxu0 %v4415
  %4429 = vmatmul.bf16.gmra.mxu0 %v205
  %v4430 = vpop.f32.mrf.mxu0
  %v4431 = vadd.f32 %v62, %v4430
  %v4432 = vpop.f32.mrf.mxu0
  %v4433 = vadd.f32 %v67, %v4432
  %4434 = vmatmul.bf16.gmra.mxu0 %v208
  %v4435 = vpop.f32.mrf.mxu0
  %v4436 = vadd.f32 %v72, %v4435
  %v4437 = vpop.f32.mrf.mxu0
  %v4438 = vadd.f32 %v77, %v4437
  %4439 = vmatmul.bf16.gmra.mxu0 %v211
  %v4440 = vpop.f32.mrf.mxu0
  %v4441 = vadd.f32 %v82, %v4440
  %v4442 = vpop.f32.mrf.mxu0
  %v4443 = vadd.f32 %v87, %v4442
  %4444 = vmatmul.bf16.gmra.mxu0 %v214
  %v4445 = vpop.f32.mrf.mxu0
  %v4446 = vadd.f32 %v92, %v4445
  %v4447 = vpop.f32.mrf.mxu0
  %v4448 = vadd.f32 %v97, %v4447
  %4449 = vmatmul.bf16.gmra.mxu0 %v217
  %v4450 = vpop.f32.mrf.mxu0
  %v4451 = vadd.f32 %v102, %v4450
  %v4452 = vpop.f32.mrf.mxu0
  %v4453 = vadd.f32 %v107, %v4452
  %4454 = vmatmul.bf16.gmra.mxu0 %v220
  %v4455 = vpop.f32.mrf.mxu0
  %v4456 = vadd.f32 %v112, %v4455
  %v4457 = vpop.f32.mrf.mxu0
  %v4458 = vadd.f32 %v117, %v4457
  %4459 = vmatmul.bf16.gmra.mxu0 %v223
  %v4460 = vpop.f32.mrf.mxu0
  %v4461 = vadd.f32 %v122, %v4460
  %v4462 = vpop.f32.mrf.mxu0
  %v4463 = vadd.f32 %v127, %v4462
  %4464 = vmatmul.bf16.gmra.mxu0 %v226
  %v4465 = vpop.f32.mrf.mxu0
  %v4466 = vadd.f32 %v132, %v4465
  %v4467 = vpop.f32.mrf.mxu0
  %v4468 = vadd.f32 %v137, %v4467
  %4469 = vdwg.mxu0
  %v4470 = vmax.f32 %v4431, 0.0
  %v4471 = vmax.f32 %v4433, 0.0
  %v4472 = vmax.f32 %v4436, 0.0
  %v4473 = vmax.f32 %v4438, 0.0
  %v4474 = vmax.f32 %v4441, 0.0
  %v4475 = vmax.f32 %v4443, 0.0
  %v4476 = vmax.f32 %v4446, 0.0
  %v4477 = vmax.f32 %v4448, 0.0
  %v4478 = vmax.f32 %v4451, 0.0
  %v4479 = vmax.f32 %v4453, 0.0
  %v4480 = vmax.f32 %v4456, 0.0
  %v4481 = vmax.f32 %v4458, 0.0
  %v4482 = vmax.f32 %v4461, 0.0
  %v4483 = vmax.f32 %v4463, 0.0
  %v4484 = vmax.f32 %v4466, 0.0
  %v4485 = vmax.f32 %v4468, 0.0
  %v4486 = vmax.f32 %v4381, %v4470
  %v4487 = vmax.f32 %v4382, %v4471
  %v4488 = vmax.f32 %v4383, %v4472
  %v4489 = vmax.f32 %v4384, %v4473
  %v4490 = vmax.f32 %v4385, %v4474
  %v4491 = vmax.f32 %v4386, %v4475
  %v4492 = vmax.f32 %v4387, %v4476
  %v4493 = vmax.f32 %v4388, %v4477
  %v4494 = vmax.f32 %v4389, %v4478
  %v4495 = vmax.f32 %v4390, %v4479
  %v4496 = vmax.f32 %v4391, %v4480
  %v4497 = vmax.f32 %v4392, %v4481
  %v4498 = vmax.f32 %v4393, %v4482
  %v4499 = vmax.f32 %v4394, %v4483
  %v4500 = vmax.f32 %v4395, %v4484
  %v4501 = vmax.f32 %v4396, %v4485
  %v4502 = vld [vmem:[%s0 + $0x168] sm:$0xf]
  %v4503 = vld [vmem:[%s0 + $0x16c] sm:$0xf]
  %v4504 = vld [vmem:[%s0 + $0x170] sm:$0xf]
  %v4505 = vld [vmem:[%s0 + $0x174] sm:$0xf]
  %v4506 = vld [vmem:[%s0 + $0x178] sm:$0xf]
  %v4507 = vld [vmem:[%s0 + $0x17c] sm:$0xf]
  %v4514 = vunpack.c.l.b16 %v4502
  %v4515 = vunpack.c.l.b16 %v4503
  %v4516 = vunpack.c.l.b16 %v4504
  %v4517 = vunpack.c.l.b16 %v4505
  %v4518 = vunpack.c.l.b16 %v4506
  %v4519 = vunpack.c.l.b16 %v4507
  %v4520 = vpack.c.b16 %v4515, %v4514
  %v4521 = vpack.c.b16 %v4517, %v4516
  %v4522 = vpack.c.b16 %v4519, %v4518
  %4526 = vmatpush.bf16.msra.mxu0 0
  %4527 = vmatpush.bf16.msra.mxu0 0
  %4528 = vmatpush.bf16.msra.mxu0 0
  %4529 = vmatpush.bf16.msra.mxu0 0
  %4530 = vmatpush.bf16.msra.mxu0 0
  %4531 = vmatpush.bf16.msra.mxu0 %v4522
  %4532 = vmatpush.bf16.msra.mxu0 %v4521
  %4533 = vmatpush.bf16.msra.mxu0 %v4520
  %4534 = vmatmul.bf16.gmra.mxu0 %v205
  %v4535 = vpop.f32.mrf.mxu0
  %v4536 = vadd.f32 %v62, %v4535
  %v4537 = vpop.f32.mrf.mxu0
  %v4538 = vadd.f32 %v67, %v4537
  %4539 = vmatmul.bf16.gmra.mxu0 %v208
  %v4540 = vpop.f32.mrf.mxu0
  %v4541 = vadd.f32 %v72, %v4540
  %v4542 = vpop.f32.mrf.mxu0
  %v4543 = vadd.f32 %v77, %v4542
  %4544 = vmatmul.bf16.gmra.mxu0 %v211
  %v4545 = vpop.f32.mrf.mxu0
  %v4546 = vadd.f32 %v82, %v4545
  %v4547 = vpop.f32.mrf.mxu0
  %v4548 = vadd.f32 %v87, %v4547
  %4549 = vmatmul.bf16.gmra.mxu0 %v214
  %v4550 = vpop.f32.mrf.mxu0
  %v4551 = vadd.f32 %v92, %v4550
  %v4552 = vpop.f32.mrf.mxu0
  %v4553 = vadd.f32 %v97, %v4552
  %4554 = vmatmul.bf16.gmra.mxu0 %v217
  %v4555 = vpop.f32.mrf.mxu0
  %v4556 = vadd.f32 %v102, %v4555
  %v4557 = vpop.f32.mrf.mxu0
  %v4558 = vadd.f32 %v107, %v4557
  %4559 = vmatmul.bf16.gmra.mxu0 %v220
  %v4560 = vpop.f32.mrf.mxu0
  %v4561 = vadd.f32 %v112, %v4560
  %v4562 = vpop.f32.mrf.mxu0
  %v4563 = vadd.f32 %v117, %v4562
  %4564 = vmatmul.bf16.gmra.mxu0 %v223
  %v4565 = vpop.f32.mrf.mxu0
  %v4566 = vadd.f32 %v122, %v4565
  %v4567 = vpop.f32.mrf.mxu0
  %v4568 = vadd.f32 %v127, %v4567
  %4569 = vmatmul.bf16.gmra.mxu0 %v226
  %v4570 = vpop.f32.mrf.mxu0
  %v4571 = vadd.f32 %v132, %v4570
  %v4572 = vpop.f32.mrf.mxu0
  %v4573 = vadd.f32 %v137, %v4572
  %4574 = vdwg.mxu0
  %v4575 = vmax.f32 %v4536, 0.0
  %v4576 = vmax.f32 %v4538, 0.0
  %v4577 = vmax.f32 %v4541, 0.0
  %v4578 = vmax.f32 %v4543, 0.0
  %v4579 = vmax.f32 %v4546, 0.0
  %v4580 = vmax.f32 %v4548, 0.0
  %v4581 = vmax.f32 %v4551, 0.0
  %v4582 = vmax.f32 %v4553, 0.0
  %v4583 = vmax.f32 %v4556, 0.0
  %v4584 = vmax.f32 %v4558, 0.0
  %v4585 = vmax.f32 %v4561, 0.0
  %v4586 = vmax.f32 %v4563, 0.0
  %v4587 = vmax.f32 %v4566, 0.0
  %v4588 = vmax.f32 %v4568, 0.0
  %v4589 = vmax.f32 %v4571, 0.0
  %v4590 = vmax.f32 %v4573, 0.0
  %v4591 = vld [vmem:[%s0 + $0x170] sm:$0xf]
  %v4592 = vld [vmem:[%s0 + $0x174] sm:$0xf]
  %v4593 = vld [vmem:[%s0 + $0x178] sm:$0xf]
  %v4594 = vld [vmem:[%s0 + $0x17c] sm:$0xf]
  %v4595 = vld [vmem:[%s0 + $0x180] sm:$0xf]
  %v4596 = vld [vmem:[%s0 + $0x184] sm:$0xf]
  %v4603 = vunpack.c.l.b16 %v4591
  %v4604 = vunpack.c.l.b16 %v4592
  %v4605 = vunpack.c.l.b16 %v4593
  %v4606 = vunpack.c.l.b16 %v4594
  %v4607 = vunpack.c.l.b16 %v4595
  %v4608 = vunpack.c.l.b16 %v4596
  %v4609 = vpack.c.b16 %v4604, %v4603
  %v4610 = vpack.c.b16 %v4606, %v4605
  %v4611 = vpack.c.b16 %v4608, %v4607
  %4615 = vmatpush.bf16.msra.mxu0 0
  %4616 = vmatpush.bf16.msra.mxu0 0
  %4617 = vmatpush.bf16.msra.mxu0 0
  %4618 = vmatpush.bf16.msra.mxu0 0
  %4619 = vmatpush.bf16.msra.mxu0 0
  %4620 = vmatpush.bf16.msra.mxu0 %v4611
  %4621 = vmatpush.bf16.msra.mxu0 %v4610
  %4622 = vmatpush.bf16.msra.mxu0 %v4609
  %4623 = vmatmul.bf16.gmra.mxu0 %v205
  %v4624 = vpop.f32.mrf.mxu0
  %v4625 = vadd.f32 %v62, %v4624
  %v4626 = vpop.f32.mrf.mxu0
  %v4627 = vadd.f32 %v67, %v4626
  %4628 = vmatmul.bf16.gmra.mxu0 %v208
  %v4629 = vpop.f32.mrf.mxu0
  %v4630 = vadd.f32 %v72, %v4629
  %v4631 = vpop.f32.mrf.mxu0
  %v4632 = vadd.f32 %v77, %v4631
  %4633 = vmatmul.bf16.gmra.mxu0 %v211
  %v4634 = vpop.f32.mrf.mxu0
  %v4635 = vadd.f32 %v82, %v4634
  %v4636 = vpop.f32.mrf.mxu0
  %v4637 = vadd.f32 %v87, %v4636
  %4638 = vmatmul.bf16.gmra.mxu0 %v214
  %v4639 = vpop.f32.mrf.mxu0
  %v4640 = vadd.f32 %v92, %v4639
  %v4641 = vpop.f32.mrf.mxu0
  %v4642 = vadd.f32 %v97, %v4641
  %4643 = vmatmul.bf16.gmra.mxu0 %v217
  %v4644 = vpop.f32.mrf.mxu0
  %v4645 = vadd.f32 %v102, %v4644
  %v4646 = vpop.f32.mrf.mxu0
  %v4647 = vadd.f32 %v107, %v4646
  %4648 = vmatmul.bf16.gmra.mxu0 %v220
  %v4649 = vpop.f32.mrf.mxu0
  %v4650 = vadd.f32 %v112, %v4649
  %v4651 = vpop.f32.mrf.mxu0
  %v4652 = vadd.f32 %v117, %v4651
  %4653 = vmatmul.bf16.gmra.mxu0 %v223
  %v4654 = vpop.f32.mrf.mxu0
  %v4655 = vadd.f32 %v122, %v4654
  %v4656 = vpop.f32.mrf.mxu0
  %v4657 = vadd.f32 %v127, %v4656
  %4658 = vmatmul.bf16.gmra.mxu0 %v226
  %v4659 = vpop.f32.mrf.mxu0
  %v4660 = vadd.f32 %v132, %v4659
  %v4661 = vpop.f32.mrf.mxu0
  %v4662 = vadd.f32 %v137, %v4661
  %4663 = vdwg.mxu0
  %v4664 = vmax.f32 %v4625, 0.0
  %v4665 = vmax.f32 %v4627, 0.0
  %v4666 = vmax.f32 %v4630, 0.0
  %v4667 = vmax.f32 %v4632, 0.0
  %v4668 = vmax.f32 %v4635, 0.0
  %v4669 = vmax.f32 %v4637, 0.0
  %v4670 = vmax.f32 %v4640, 0.0
  %v4671 = vmax.f32 %v4642, 0.0
  %v4672 = vmax.f32 %v4645, 0.0
  %v4673 = vmax.f32 %v4647, 0.0
  %v4674 = vmax.f32 %v4650, 0.0
  %v4675 = vmax.f32 %v4652, 0.0
  %v4676 = vmax.f32 %v4655, 0.0
  %v4677 = vmax.f32 %v4657, 0.0
  %v4678 = vmax.f32 %v4660, 0.0
  %v4679 = vmax.f32 %v4662, 0.0
  %v4680 = vmax.f32 %v4575, %v4664
  %v4681 = vmax.f32 %v4576, %v4665
  %v4682 = vmax.f32 %v4577, %v4666
  %v4683 = vmax.f32 %v4578, %v4667
  %v4684 = vmax.f32 %v4579, %v4668
  %v4685 = vmax.f32 %v4580, %v4669
  %v4686 = vmax.f32 %v4581, %v4670
  %v4687 = vmax.f32 %v4582, %v4671
  %v4688 = vmax.f32 %v4583, %v4672
  %v4689 = vmax.f32 %v4584, %v4673
  %v4690 = vmax.f32 %v4585, %v4674
  %v4691 = vmax.f32 %v4586, %v4675
  %v4692 = vmax.f32 %v4587, %v4676
  %v4693 = vmax.f32 %v4588, %v4677
  %v4694 = vmax.f32 %v4589, %v4678
  %v4695 = vmax.f32 %v4590, %v4679
  %v4696 = vld [vmem:[%s0 + $0x178] sm:$0xf]
  %v4697 = vld [vmem:[%s0 + $0x17c] sm:$0xf]
  %v4698 = vld [vmem:[%s0 + $0x180] sm:$0xf]
  %v4699 = vld [vmem:[%s0 + $0x184] sm:$0xf]
  %v4700 = vld [vmem:[%s0 + $0x188] sm:$0xf]
  %v4701 = vld [vmem:[%s0 + $0x18c] sm:$0xf]
  %v4708 = vunpack.c.l.b16 %v4696
  %v4709 = vunpack.c.l.b16 %v4697
  %v4710 = vunpack.c.l.b16 %v4698
  %v4711 = vunpack.c.l.b16 %v4699
  %v4712 = vunpack.c.l.b16 %v4700
  %v4713 = vunpack.c.l.b16 %v4701
  %v4714 = vpack.c.b16 %v4709, %v4708
  %v4715 = vpack.c.b16 %v4711, %v4710
  %v4716 = vpack.c.b16 %v4713, %v4712
  %4720 = vmatpush.bf16.msra.mxu0 0
  %4721 = vmatpush.bf16.msra.mxu0 0
  %4722 = vmatpush.bf16.msra.mxu0 0
  %4723 = vmatpush.bf16.msra.mxu0 0
  %4724 = vmatpush.bf16.msra.mxu0 0
  %4725 = vmatpush.bf16.msra.mxu0 %v4716
  %4726 = vmatpush.bf16.msra.mxu0 %v4715
  %4727 = vmatpush.bf16.msra.mxu0 %v4714
  %4728 = vmatmul.bf16.gmra.mxu0 %v205
  %v4729 = vpop.f32.mrf.mxu0
  %v4730 = vadd.f32 %v62, %v4729
  %v4731 = vpop.f32.mrf.mxu0
  %v4732 = vadd.f32 %v67, %v4731
  %4733 = vmatmul.bf16.gmra.mxu0 %v208
  %v4734 = vpop.f32.mrf.mxu0
  %v4735 = vadd.f32 %v72, %v4734
  %v4736 = vpop.f32.mrf.mxu0
  %v4737 = vadd.f32 %v77, %v4736
  %4738 = vmatmul.bf16.gmra.mxu0 %v211
  %v4739 = vpop.f32.mrf.mxu0
  %v4740 = vadd.f32 %v82, %v4739
  %v4741 = vpop.f32.mrf.mxu0
  %v4742 = vadd.f32 %v87, %v4741
  %4743 = vmatmul.bf16.gmra.mxu0 %v214
  %v4744 = vpop.f32.mrf.mxu0
  %v4745 = vadd.f32 %v92, %v4744
  %v4746 = vpop.f32.mrf.mxu0
  %v4747 = vadd.f32 %v97, %v4746
  %4748 = vmatmul.bf16.gmra.mxu0 %v217
  %v4749 = vpop.f32.mrf.mxu0
  %v4750 = vadd.f32 %v102, %v4749
  %v4751 = vpop.f32.mrf.mxu0
  %v4752 = vadd.f32 %v107, %v4751
  %4753 = vmatmul.bf16.gmra.mxu0 %v220
  %v4754 = vpop.f32.mrf.mxu0
  %v4755 = vadd.f32 %v112, %v4754
  %v4756 = vpop.f32.mrf.mxu0
  %v4757 = vadd.f32 %v117, %v4756
  %4758 = vmatmul.bf16.gmra.mxu0 %v223
  %v4759 = vpop.f32.mrf.mxu0
  %v4760 = vadd.f32 %v122, %v4759
  %v4761 = vpop.f32.mrf.mxu0
  %v4762 = vadd.f32 %v127, %v4761
  %4763 = vmatmul.bf16.gmra.mxu0 %v226
  %v4764 = vpop.f32.mrf.mxu0
  %v4765 = vadd.f32 %v132, %v4764
  %v4766 = vpop.f32.mrf.mxu0
  %v4767 = vadd.f32 %v137, %v4766
  %4768 = vdwg.mxu0
  %v4769 = vmax.f32 %v4730, 0.0
  %v4770 = vmax.f32 %v4732, 0.0
  %v4771 = vmax.f32 %v4735, 0.0
  %v4772 = vmax.f32 %v4737, 0.0
  %v4773 = vmax.f32 %v4740, 0.0
  %v4774 = vmax.f32 %v4742, 0.0
  %v4775 = vmax.f32 %v4745, 0.0
  %v4776 = vmax.f32 %v4747, 0.0
  %v4777 = vmax.f32 %v4750, 0.0
  %v4778 = vmax.f32 %v4752, 0.0
  %v4779 = vmax.f32 %v4755, 0.0
  %v4780 = vmax.f32 %v4757, 0.0
  %v4781 = vmax.f32 %v4760, 0.0
  %v4782 = vmax.f32 %v4762, 0.0
  %v4783 = vmax.f32 %v4765, 0.0
  %v4784 = vmax.f32 %v4767, 0.0
  %v4785 = vmax.f32 %v4680, %v4769
  %v4786 = vmax.f32 %v4681, %v4770
  %v4787 = vmax.f32 %v4682, %v4771
  %v4788 = vmax.f32 %v4683, %v4772
  %v4789 = vmax.f32 %v4684, %v4773
  %v4790 = vmax.f32 %v4685, %v4774
  %v4791 = vmax.f32 %v4686, %v4775
  %v4792 = vmax.f32 %v4687, %v4776
  %v4793 = vmax.f32 %v4688, %v4777
  %v4794 = vmax.f32 %v4689, %v4778
  %v4795 = vmax.f32 %v4690, %v4779
  %v4796 = vmax.f32 %v4691, %v4780
  %v4797 = vmax.f32 %v4692, %v4781
  %v4798 = vmax.f32 %v4693, %v4782
  %v4799 = vmax.f32 %v4694, %v4783
  %v4800 = vmax.f32 %v4695, %v4784
  %v4801 = vld [vmem:[%s0 + $0x180] sm:$0xf]
  %v4802 = vld [vmem:[%s0 + $0x184] sm:$0xf]
  %v4803 = vld [vmem:[%s0 + $0x188] sm:$0xf]
  %v4804 = vld [vmem:[%s0 + $0x18c] sm:$0xf]
  %v4805 = vld [vmem:[%s0 + $0x190] sm:$0xf]
  %v4806 = vld [vmem:[%s0 + $0x194] sm:$0xf]
  %v4813 = vunpack.c.l.b16 %v4801
  %v4814 = vunpack.c.l.b16 %v4802
  %v4815 = vunpack.c.l.b16 %v4803
  %v4816 = vunpack.c.l.b16 %v4804
  %v4817 = vunpack.c.l.b16 %v4805
  %v4818 = vunpack.c.l.b16 %v4806
  %v4819 = vpack.c.b16 %v4814, %v4813
  %v4820 = vpack.c.b16 %v4816, %v4815
  %v4821 = vpack.c.b16 %v4818, %v4817
  %4825 = vmatpush.bf16.msra.mxu0 0
  %4826 = vmatpush.bf16.msra.mxu0 0
  %4827 = vmatpush.bf16.msra.mxu0 0
  %4828 = vmatpush.bf16.msra.mxu0 0
  %4829 = vmatpush.bf16.msra.mxu0 0
  %4830 = vmatpush.bf16.msra.mxu0 %v4821
  %4831 = vmatpush.bf16.msra.mxu0 %v4820
  %4832 = vmatpush.bf16.msra.mxu0 %v4819
  %4833 = vmatmul.bf16.gmra.mxu0 %v205
  %v4834 = vpop.f32.mrf.mxu0
  %v4835 = vadd.f32 %v62, %v4834
  %v4836 = vpop.f32.mrf.mxu0
  %v4837 = vadd.f32 %v67, %v4836
  %4838 = vmatmul.bf16.gmra.mxu0 %v208
  %v4839 = vpop.f32.mrf.mxu0
  %v4840 = vadd.f32 %v72, %v4839
  %v4841 = vpop.f32.mrf.mxu0
  %v4842 = vadd.f32 %v77, %v4841
  %4843 = vmatmul.bf16.gmra.mxu0 %v211
  %v4844 = vpop.f32.mrf.mxu0
  %v4845 = vadd.f32 %v82, %v4844
  %v4846 = vpop.f32.mrf.mxu0
  %v4847 = vadd.f32 %v87, %v4846
  %4848 = vmatmul.bf16.gmra.mxu0 %v214
  %v4849 = vpop.f32.mrf.mxu0
  %v4850 = vadd.f32 %v92, %v4849
  %v4851 = vpop.f32.mrf.mxu0
  %v4852 = vadd.f32 %v97, %v4851
  %4853 = vmatmul.bf16.gmra.mxu0 %v217
  %v4854 = vpop.f32.mrf.mxu0
  %v4855 = vadd.f32 %v102, %v4854
  %v4856 = vpop.f32.mrf.mxu0
  %v4857 = vadd.f32 %v107, %v4856
  %4858 = vmatmul.bf16.gmra.mxu0 %v220
  %v4859 = vpop.f32.mrf.mxu0
  %v4860 = vadd.f32 %v112, %v4859
  %v4861 = vpop.f32.mrf.mxu0
  %v4862 = vadd.f32 %v117, %v4861
  %4863 = vmatmul.bf16.gmra.mxu0 %v223
  %v4864 = vpop.f32.mrf.mxu0
  %v4865 = vadd.f32 %v122, %v4864
  %v4866 = vpop.f32.mrf.mxu0
  %v4867 = vadd.f32 %v127, %v4866
  %4868 = vmatmul.bf16.gmra.mxu0 %v226
  %v4869 = vpop.f32.mrf.mxu0
  %v4870 = vadd.f32 %v132, %v4869
  %v4871 = vpop.f32.mrf.mxu0
  %v4872 = vadd.f32 %v137, %v4871
  %4873 = vdwg.mxu0
  %v4874 = vmax.f32 %v4835, 0.0
  %v4875 = vmax.f32 %v4837, 0.0
  %v4876 = vmax.f32 %v4840, 0.0
  %v4877 = vmax.f32 %v4842, 0.0
  %v4878 = vmax.f32 %v4845, 0.0
  %v4879 = vmax.f32 %v4847, 0.0
  %v4880 = vmax.f32 %v4850, 0.0
  %v4881 = vmax.f32 %v4852, 0.0
  %v4882 = vmax.f32 %v4855, 0.0
  %v4883 = vmax.f32 %v4857, 0.0
  %v4884 = vmax.f32 %v4860, 0.0
  %v4885 = vmax.f32 %v4862, 0.0
  %v4886 = vmax.f32 %v4865, 0.0
  %v4887 = vmax.f32 %v4867, 0.0
  %v4888 = vmax.f32 %v4870, 0.0
  %v4889 = vmax.f32 %v4872, 0.0
  %v4890 = vmax.f32 %v4785, %v4874
  %v4891 = vmax.f32 %v4786, %v4875
  %v4892 = vmax.f32 %v4787, %v4876
  %v4893 = vmax.f32 %v4788, %v4877
  %v4894 = vmax.f32 %v4789, %v4878
  %v4895 = vmax.f32 %v4790, %v4879
  %v4896 = vmax.f32 %v4791, %v4880
  %v4897 = vmax.f32 %v4792, %v4881
  %v4898 = vmax.f32 %v4793, %v4882
  %v4899 = vmax.f32 %v4794, %v4883
  %v4900 = vmax.f32 %v4795, %v4884
  %v4901 = vmax.f32 %v4796, %v4885
  %v4902 = vmax.f32 %v4797, %v4886
  %v4903 = vmax.f32 %v4798, %v4887
  %v4904 = vmax.f32 %v4799, %v4888
  %v4905 = vmax.f32 %v4800, %v4889
  %v4906 = vld [vmem:[%s0 + $0x188] sm:$0xf]
  %v4907 = vld [vmem:[%s0 + $0x18c] sm:$0xf]
  %v4908 = vld [vmem:[%s0 + $0x190] sm:$0xf]
  %v4909 = vld [vmem:[%s0 + $0x194] sm:$0xf]
  %v4910 = vld [vmem:[%s0 + $0x198] sm:$0xf]
  %v4911 = vld [vmem:[%s0 + $0x19c] sm:$0xf]
  %v4918 = vunpack.c.l.b16 %v4906
  %v4919 = vunpack.c.l.b16 %v4907
  %v4920 = vunpack.c.l.b16 %v4908
  %v4921 = vunpack.c.l.b16 %v4909
  %v4922 = vunpack.c.l.b16 %v4910
  %v4923 = vunpack.c.l.b16 %v4911
  %v4924 = vpack.c.b16 %v4919, %v4918
  %v4925 = vpack.c.b16 %v4921, %v4920
  %v4926 = vpack.c.b16 %v4923, %v4922
  %4930 = vmatpush.bf16.msra.mxu0 0
  %4931 = vmatpush.bf16.msra.mxu0 0
  %4932 = vmatpush.bf16.msra.mxu0 0
  %4933 = vmatpush.bf16.msra.mxu0 0
  %4934 = vmatpush.bf16.msra.mxu0 0
  %4935 = vmatpush.bf16.msra.mxu0 %v4926
  %4936 = vmatpush.bf16.msra.mxu0 %v4925
  %4937 = vmatpush.bf16.msra.mxu0 %v4924
  %4938 = vmatmul.bf16.gmra.mxu0 %v205
  %v4939 = vpop.f32.mrf.mxu0
  %v4940 = vadd.f32 %v62, %v4939
  %v4941 = vpop.f32.mrf.mxu0
  %v4942 = vadd.f32 %v67, %v4941
  %4943 = vmatmul.bf16.gmra.mxu0 %v208
  %v4944 = vpop.f32.mrf.mxu0
  %v4945 = vadd.f32 %v72, %v4944
  %v4946 = vpop.f32.mrf.mxu0
  %v4947 = vadd.f32 %v77, %v4946
  %4948 = vmatmul.bf16.gmra.mxu0 %v211
  %v4949 = vpop.f32.mrf.mxu0
  %v4950 = vadd.f32 %v82, %v4949
  %v4951 = vpop.f32.mrf.mxu0
  %v4952 = vadd.f32 %v87, %v4951
  %4953 = vmatmul.bf16.gmra.mxu0 %v214
  %v4954 = vpop.f32.mrf.mxu0
  %v4955 = vadd.f32 %v92, %v4954
  %v4956 = vpop.f32.mrf.mxu0
  %v4957 = vadd.f32 %v97, %v4956
  %4958 = vmatmul.bf16.gmra.mxu0 %v217
  %v4959 = vpop.f32.mrf.mxu0
  %v4960 = vadd.f32 %v102, %v4959
  %v4961 = vpop.f32.mrf.mxu0
  %v4962 = vadd.f32 %v107, %v4961
  %4963 = vmatmul.bf16.gmra.mxu0 %v220
  %v4964 = vpop.f32.mrf.mxu0
  %v4965 = vadd.f32 %v112, %v4964
  %v4966 = vpop.f32.mrf.mxu0
  %v4967 = vadd.f32 %v117, %v4966
  %4968 = vmatmul.bf16.gmra.mxu0 %v223
  %v4969 = vpop.f32.mrf.mxu0
  %v4970 = vadd.f32 %v122, %v4969
  %v4971 = vpop.f32.mrf.mxu0
  %v4972 = vadd.f32 %v127, %v4971
  %4973 = vmatmul.bf16.gmra.mxu0 %v226
  %v4974 = vpop.f32.mrf.mxu0
  %v4975 = vadd.f32 %v132, %v4974
  %v4976 = vpop.f32.mrf.mxu0
  %v4977 = vadd.f32 %v137, %v4976
  %4978 = vdwg.mxu0
  %v4979 = vmax.f32 %v4940, 0.0
  %v4980 = vmax.f32 %v4942, 0.0
  %v4981 = vmax.f32 %v4945, 0.0
  %v4982 = vmax.f32 %v4947, 0.0
  %v4983 = vmax.f32 %v4950, 0.0
  %v4984 = vmax.f32 %v4952, 0.0
  %v4985 = vmax.f32 %v4955, 0.0
  %v4986 = vmax.f32 %v4957, 0.0
  %v4987 = vmax.f32 %v4960, 0.0
  %v4988 = vmax.f32 %v4962, 0.0
  %v4989 = vmax.f32 %v4965, 0.0
  %v4990 = vmax.f32 %v4967, 0.0
  %v4991 = vmax.f32 %v4970, 0.0
  %v4992 = vmax.f32 %v4972, 0.0
  %v4993 = vmax.f32 %v4975, 0.0
  %v4994 = vmax.f32 %v4977, 0.0
  %v4995 = vmax.f32 %v4890, %v4979
  %v4996 = vmax.f32 %v4891, %v4980
  %v4997 = vmax.f32 %v4892, %v4981
  %v4998 = vmax.f32 %v4893, %v4982
  %v4999 = vmax.f32 %v4894, %v4983
  %v5000 = vmax.f32 %v4895, %v4984
  %v5001 = vmax.f32 %v4896, %v4985
  %v5002 = vmax.f32 %v4897, %v4986
  %v5003 = vmax.f32 %v4898, %v4987
  %v5004 = vmax.f32 %v4899, %v4988
  %v5005 = vmax.f32 %v4900, %v4989
  %v5006 = vmax.f32 %v4901, %v4990
  %v5007 = vmax.f32 %v4902, %v4991
  %v5008 = vmax.f32 %v4903, %v4992
  %v5009 = vmax.f32 %v4904, %v4993
  %v5010 = vmax.f32 %v4905, %v4994
  %v5011 = vld [vmem:[%s0 + $0x190] sm:$0xf]
  %v5012 = vld [vmem:[%s0 + $0x194] sm:$0xf]
  %v5013 = vld [vmem:[%s0 + $0x198] sm:$0xf]
  %v5014 = vld [vmem:[%s0 + $0x19c] sm:$0xf]
  %v5015 = vld [vmem:[%s0 + $0x1a0] sm:$0xf]
  %v5016 = vld [vmem:[%s0 + $0x1a4] sm:$0xf]
  %v5023 = vunpack.c.l.b16 %v5011
  %v5024 = vunpack.c.l.b16 %v5012
  %v5025 = vunpack.c.l.b16 %v5013
  %v5026 = vunpack.c.l.b16 %v5014
  %v5027 = vunpack.c.l.b16 %v5015
  %v5028 = vunpack.c.l.b16 %v5016
  %v5029 = vpack.c.b16 %v5024, %v5023
  %v5030 = vpack.c.b16 %v5026, %v5025
  %v5031 = vpack.c.b16 %v5028, %v5027
  %5035 = vmatpush.bf16.msra.mxu0 0
  %5036 = vmatpush.bf16.msra.mxu0 0
  %5037 = vmatpush.bf16.msra.mxu0 0
  %5038 = vmatpush.bf16.msra.mxu0 0
  %5039 = vmatpush.bf16.msra.mxu0 0
  %5040 = vmatpush.bf16.msra.mxu0 %v5031
  %5041 = vmatpush.bf16.msra.mxu0 %v5030
  %5042 = vmatpush.bf16.msra.mxu0 %v5029
  %5043 = vmatmul.bf16.gmra.mxu0 %v205
  %v5044 = vpop.f32.mrf.mxu0
  %v5045 = vadd.f32 %v62, %v5044
  %v5046 = vpop.f32.mrf.mxu0
  %v5047 = vadd.f32 %v67, %v5046
  %5048 = vmatmul.bf16.gmra.mxu0 %v208
  %v5049 = vpop.f32.mrf.mxu0
  %v5050 = vadd.f32 %v72, %v5049
  %v5051 = vpop.f32.mrf.mxu0
  %v5052 = vadd.f32 %v77, %v5051
  %5053 = vmatmul.bf16.gmra.mxu0 %v211
  %v5054 = vpop.f32.mrf.mxu0
  %v5055 = vadd.f32 %v82, %v5054
  %v5056 = vpop.f32.mrf.mxu0
  %v5057 = vadd.f32 %v87, %v5056
  %5058 = vmatmul.bf16.gmra.mxu0 %v214
  %v5059 = vpop.f32.mrf.mxu0
  %v5060 = vadd.f32 %v92, %v5059
  %v5061 = vpop.f32.mrf.mxu0
  %v5062 = vadd.f32 %v97, %v5061
  %5063 = vmatmul.bf16.gmra.mxu0 %v217
  %v5064 = vpop.f32.mrf.mxu0
  %v5065 = vadd.f32 %v102, %v5064
  %v5066 = vpop.f32.mrf.mxu0
  %v5067 = vadd.f32 %v107, %v5066
  %5068 = vmatmul.bf16.gmra.mxu0 %v220
  %v5069 = vpop.f32.mrf.mxu0
  %v5070 = vadd.f32 %v112, %v5069
  %v5071 = vpop.f32.mrf.mxu0
  %v5072 = vadd.f32 %v117, %v5071
  %5073 = vmatmul.bf16.gmra.mxu0 %v223
  %v5074 = vpop.f32.mrf.mxu0
  %v5075 = vadd.f32 %v122, %v5074
  %v5076 = vpop.f32.mrf.mxu0
  %v5077 = vadd.f32 %v127, %v5076
  %5078 = vmatmul.bf16.gmra.mxu0 %v226
  %v5079 = vpop.f32.mrf.mxu0
  %v5080 = vadd.f32 %v132, %v5079
  %v5081 = vpop.f32.mrf.mxu0
  %v5082 = vadd.f32 %v137, %v5081
  %5083 = vdwg.mxu0
  %v5084 = vmax.f32 %v5045, 0.0
  %v5085 = vmax.f32 %v5047, 0.0
  %v5086 = vmax.f32 %v5050, 0.0
  %v5087 = vmax.f32 %v5052, 0.0
  %v5088 = vmax.f32 %v5055, 0.0
  %v5089 = vmax.f32 %v5057, 0.0
  %v5090 = vmax.f32 %v5060, 0.0
  %v5091 = vmax.f32 %v5062, 0.0
  %v5092 = vmax.f32 %v5065, 0.0
  %v5093 = vmax.f32 %v5067, 0.0
  %v5094 = vmax.f32 %v5070, 0.0
  %v5095 = vmax.f32 %v5072, 0.0
  %v5096 = vmax.f32 %v5075, 0.0
  %v5097 = vmax.f32 %v5077, 0.0
  %v5098 = vmax.f32 %v5080, 0.0
  %v5099 = vmax.f32 %v5082, 0.0
  %v5100 = vmax.f32 %v4995, %v5084
  %v5101 = vmax.f32 %v4996, %v5085
  %v5102 = vmax.f32 %v4997, %v5086
  %v5103 = vmax.f32 %v4998, %v5087
  %v5104 = vmax.f32 %v4999, %v5088
  %v5105 = vmax.f32 %v5000, %v5089
  %v5106 = vmax.f32 %v5001, %v5090
  %v5107 = vmax.f32 %v5002, %v5091
  %v5108 = vmax.f32 %v5003, %v5092
  %v5109 = vmax.f32 %v5004, %v5093
  %v5110 = vmax.f32 %v5005, %v5094
  %v5111 = vmax.f32 %v5006, %v5095
  %v5112 = vmax.f32 %v5007, %v5096
  %v5113 = vmax.f32 %v5008, %v5097
  %v5114 = vmax.f32 %v5009, %v5098
  %v5115 = vmax.f32 %v5010, %v5099
  %v5116 = vadd.f32 %v802, %v1416
  %v5117 = vadd.f32 %v803, %v1417
  %v5118 = vadd.f32 %v804, %v1418
  %v5119 = vadd.f32 %v805, %v1419
  %v5120 = vadd.f32 %v806, %v1420
  %v5121 = vadd.f32 %v807, %v1421
  %v5122 = vadd.f32 %v808, %v1422
  %v5123 = vadd.f32 %v809, %v1423
  %v5124 = vadd.f32 %v810, %v1424
  %v5125 = vadd.f32 %v811, %v1425
  %v5126 = vadd.f32 %v812, %v1426
  %v5127 = vadd.f32 %v813, %v1427
  %v5128 = vadd.f32 %v814, %v1428
  %v5129 = vadd.f32 %v815, %v1429
  %v5130 = vadd.f32 %v816, %v1430
  %v5131 = vadd.f32 %v817, %v1431
  %v5132 = vadd.f32 %v5116, %v5124
  %v5133 = vadd.f32 %v5117, %v5125
  %v5134 = vadd.f32 %v5118, %v5126
  %v5135 = vadd.f32 %v5119, %v5127
  %v5136 = vadd.f32 %v5120, %v5128
  %v5137 = vadd.f32 %v5121, %v5129
  %v5138 = vadd.f32 %v5122, %v5130
  %v5139 = vadd.f32 %v5123, %v5131
  %v5140 = vmul.f32 %v5132, 0.25
  %v5141 = vmul.f32 %v5133, 0.25
  %v5142 = vmul.f32 %v5134, 0.25
  %v5143 = vmul.f32 %v5135, 0.25
  %v5144 = vmul.f32 %v5136, 0.25
  %v5145 = vmul.f32 %v5137, 0.25
  %v5146 = vmul.f32 %v5138, 0.25
  %v5147 = vmul.f32 %v5139, 0.25
  %v5148 = vpack.c.bf16 %v5141, %v5140
  %v5149 = vpack.c.bf16 %v5143, %v5142
  %v5150 = vpack.c.bf16 %v5145, %v5144
  %v5151 = vpack.c.bf16 %v5147, %v5146
  %v5152 = vld [vmem:[%s5] sm:$0xf]
  %v5153 = vadd.f32 %v2030, %v2644
  %v5154 = vadd.f32 %v2031, %v2645
  %v5155 = vadd.f32 %v2032, %v2646
  %v5156 = vadd.f32 %v2033, %v2647
  %v5157 = vadd.f32 %v2034, %v2648
  %v5158 = vadd.f32 %v2035, %v2649
  %v5159 = vadd.f32 %v2036, %v2650
  %v5160 = vadd.f32 %v2037, %v2651
  %v5161 = vadd.f32 %v2038, %v2652
  %v5162 = vadd.f32 %v2039, %v2653
  %v5163 = vadd.f32 %v2040, %v2654
  %v5164 = vadd.f32 %v2041, %v2655
  %v5165 = vadd.f32 %v2042, %v2656
  %v5166 = vadd.f32 %v2043, %v2657
  %v5167 = vadd.f32 %v2044, %v2658
  %v5168 = vadd.f32 %v2045, %v2659
  %v5169 = vadd.f32 %v5153, %v5161
  %v5170 = vadd.f32 %v5154, %v5162
  %v5171 = vadd.f32 %v5155, %v5163
  %v5172 = vadd.f32 %v5156, %v5164
  %v5173 = vadd.f32 %v5157, %v5165
  %v5174 = vadd.f32 %v5158, %v5166
  %v5175 = vadd.f32 %v5159, %v5167
  %v5176 = vadd.f32 %v5160, %v5168
  %v5177 = vmul.f32 %v5169, 0.25
  %v5178 = vmul.f32 %v5170, 0.25
  %v5179 = vmul.f32 %v5171, 0.25
  %v5180 = vmul.f32 %v5172, 0.25
  %v5181 = vmul.f32 %v5173, 0.25
  %v5182 = vmul.f32 %v5174, 0.25
  %v5183 = vmul.f32 %v5175, 0.25
  %v5184 = vmul.f32 %v5176, 0.25
  %v5185 = vpack.c.bf16 %v5178, %v5177
  %v5186 = vpack.c.bf16 %v5180, %v5179
  %v5187 = vpack.c.bf16 %v5182, %v5181
  %v5188 = vpack.c.bf16 %v5184, %v5183
  %v5189 = vld [vmem:[%s5 + $0x4] sm:$0xf]
  %vm5190 = vcmask 523264
  %v5192 = vsel %vm5190, %v5189, 0
  %5194 = vmatpush.bf16.msra.mxu0 0
  %5195 = vmatpush.bf16.msra.mxu0 0
  %5196 = vmatpush.bf16.msra.mxu0 0
  %5197 = vmatpush.bf16.msra.mxu0 0
  %5198 = vmatpush.bf16.msra.mxu0 %v5188
  %5199 = vmatpush.bf16.msra.mxu0 %v5187
  %5200 = vmatpush.bf16.msra.mxu0 %v5186
  %5201 = vmatpush.bf16.msra.mxu0 %v5185
  %5202 = vmatmul.bf16.gmra.mxu0 %v5192
  %v5203 = vpop.f32.mrf.mxu0
  %v5204 = vadd.f32 0.0, %v5203
  %v5205 = vpop.f32.mrf.mxu0
  %5206 = vdwg.mxu0
  %v5208 = vsel %vm5190, %v5152, 0
  %5210 = vmatpush.bf16.msra.mxu0 0
  %5211 = vmatpush.bf16.msra.mxu0 0
  %5212 = vmatpush.bf16.msra.mxu0 0
  %5213 = vmatpush.bf16.msra.mxu0 0
  %5214 = vmatpush.bf16.msra.mxu0 %v5151
  %5215 = vmatpush.bf16.msra.mxu0 %v5150
  %5216 = vmatpush.bf16.msra.mxu0 %v5149
  %5217 = vmatpush.bf16.msra.mxu0 %v5148
  %5218 = vmatmul.bf16.gmra.mxu0 %v5208
  %v5219 = vpop.f32.mrf.mxu0
  %v5220 = vadd.f32 %v5204, %v5219
  %v5221 = vpop.f32.mrf.mxu0
  %5222 = vdwg.mxu0
  %v5223 = vadd.f32 %v3258, %v3872
  %v5224 = vadd.f32 %v3259, %v3873
  %v5225 = vadd.f32 %v3260, %v3874
  %v5226 = vadd.f32 %v3261, %v3875
  %v5227 = vadd.f32 %v3262, %v3876
  %v5228 = vadd.f32 %v3263, %v3877
  %v5229 = vadd.f32 %v3264, %v3878
  %v5230 = vadd.f32 %v3265, %v3879
  %v5231 = vadd.f32 %v3266, %v3880
  %v5232 = vadd.f32 %v3267, %v3881
  %v5233 = vadd.f32 %v3268, %v3882
  %v5234 = vadd.f32 %v3269, %v3883
  %v5235 = vadd.f32 %v3270, %v3884
  %v5236 = vadd.f32 %v3271, %v3885
  %v5237 = vadd.f32 %v3272, %v3886
  %v5238 = vadd.f32 %v3273, %v3887
  %v5239 = vadd.f32 %v5223, %v5231
  %v5240 = vadd.f32 %v5224, %v5232
  %v5241 = vadd.f32 %v5225, %v5233
  %v5242 = vadd.f32 %v5226, %v5234
  %v5243 = vadd.f32 %v5227, %v5235
  %v5244 = vadd.f32 %v5228, %v5236
  %v5245 = vadd.f32 %v5229, %v5237
  %v5246 = vadd.f32 %v5230, %v5238
  %v5247 = vmul.f32 %v5239, 0.25
  %v5248 = vmul.f32 %v5240, 0.25
  %v5249 = vmul.f32 %v5241, 0.25
  %v5250 = vmul.f32 %v5242, 0.25
  %v5251 = vmul.f32 %v5243, 0.25
  %v5252 = vmul.f32 %v5244, 0.25
  %v5253 = vmul.f32 %v5245, 0.25
  %v5254 = vmul.f32 %v5246, 0.25
  %v5255 = vpack.c.bf16 %v5248, %v5247
  %v5256 = vpack.c.bf16 %v5250, %v5249
  %v5257 = vpack.c.bf16 %v5252, %v5251
  %v5258 = vpack.c.bf16 %v5254, %v5253
  %v5259 = vld [vmem:[%s5 + $0x8] sm:$0xf]
  %v5261 = vsel %vm5190, %v5259, 0
  %5263 = vmatpush.bf16.msra.mxu0 0
  %5264 = vmatpush.bf16.msra.mxu0 0
  %5265 = vmatpush.bf16.msra.mxu0 0
  %5266 = vmatpush.bf16.msra.mxu0 0
  %5267 = vmatpush.bf16.msra.mxu0 %v5258
  %5268 = vmatpush.bf16.msra.mxu0 %v5257
  %5269 = vmatpush.bf16.msra.mxu0 %v5256
  %5270 = vmatpush.bf16.msra.mxu0 %v5255
  %5271 = vmatmul.bf16.gmra.mxu0 %v5261
  %v5272 = vpop.f32.mrf.mxu0
  %v5273 = vadd.f32 0.0, %v5272
  %v5274 = vpop.f32.mrf.mxu0
  %5275 = vdwg.mxu0
  %v5276 = vadd.f32 %v5220, %v5273
  %v5277 = vadd.f32 %v4486, %v5100
  %v5278 = vadd.f32 %v4487, %v5101
  %v5279 = vadd.f32 %v4488, %v5102
  %v5280 = vadd.f32 %v4489, %v5103
  %v5281 = vadd.f32 %v4490, %v5104
  %v5282 = vadd.f32 %v4491, %v5105
  %v5283 = vadd.f32 %v4492, %v5106
  %v5284 = vadd.f32 %v4493, %v5107
  %v5285 = vadd.f32 %v4494, %v5108
  %v5286 = vadd.f32 %v4495, %v5109
  %v5287 = vadd.f32 %v4496, %v5110
  %v5288 = vadd.f32 %v4497, %v5111
  %v5289 = vadd.f32 %v4498, %v5112
  %v5290 = vadd.f32 %v4499, %v5113
  %v5291 = vadd.f32 %v4500, %v5114
  %v5292 = vadd.f32 %v4501, %v5115
  %v5293 = vadd.f32 %v5277, %v5285
  %v5294 = vadd.f32 %v5278, %v5286
  %v5295 = vadd.f32 %v5279, %v5287
  %v5296 = vadd.f32 %v5280, %v5288
  %v5297 = vadd.f32 %v5281, %v5289
  %v5298 = vadd.f32 %v5282, %v5290
  %v5299 = vadd.f32 %v5283, %v5291
  %v5300 = vadd.f32 %v5284, %v5292
  %v5301 = vmul.f32 %v5293, 0.25
  %v5302 = vmul.f32 %v5294, 0.25
  %v5303 = vmul.f32 %v5295, 0.25
  %v5304 = vmul.f32 %v5296, 0.25
  %v5305 = vmul.f32 %v5297, 0.25
  %v5306 = vmul.f32 %v5298, 0.25
  %v5307 = vmul.f32 %v5299, 0.25
  %v5308 = vmul.f32 %v5300, 0.25
  %v5309 = vpack.c.bf16 %v5302, %v5301
  %v5310 = vpack.c.bf16 %v5304, %v5303
  %v5311 = vpack.c.bf16 %v5306, %v5305
  %v5312 = vpack.c.bf16 %v5308, %v5307
  %v5313 = vld [vmem:[%s5 + $0xc] sm:$0xf]
  %v5315 = vsel %vm5190, %v5313, 0
  %5317 = vmatpush.bf16.msra.mxu0 0
  %5318 = vmatpush.bf16.msra.mxu0 0
  %5319 = vmatpush.bf16.msra.mxu0 0
  %5320 = vmatpush.bf16.msra.mxu0 0
  %5321 = vmatpush.bf16.msra.mxu0 %v5312
  %5322 = vmatpush.bf16.msra.mxu0 %v5311
  %5323 = vmatpush.bf16.msra.mxu0 %v5310
  %5324 = vmatpush.bf16.msra.mxu0 %v5309
  %5325 = vmatmul.bf16.gmra.mxu0 %v5315
  %v5326 = vpop.f32.mrf.mxu0
  %v5327 = vadd.f32 0.0, %v5326
  %v5328 = vpop.f32.mrf.mxu0
  %5329 = vdwg.mxu0
  %v5330 = vadd.f32 %v5276, %v5327
  %v5331 = vld [vmem:[%s2] sm:$0xf]
  %v5332 = vld [vmem:[%s2 + $0x4] sm:$0xf]
  %v5333 = vld [vmem:[%s2 + $0x8] sm:$0xf]
  %v5334 = vld [vmem:[%s2 + $0xc] sm:$0xf]
  %v5335 = vld [vmem:[%s2 + $0x10] sm:$0xf]
  %v5336 = vld [vmem:[%s2 + $0x14] sm:$0xf]
  %v5337 = vld [vmem:[%s2 + $0x18] sm:$0xf]
  %v5338 = vld [vmem:[%s2 + $0x1c] sm:$0xf]
  %v5339 = vld [vmem:[%s2 + $0x20] sm:$0xf]
  %v5340 = vld [vmem:[%s2 + $0x24] sm:$0xf]
  %v5341 = vld [vmem:[%s2 + $0x28] sm:$0xf]
  %v5342 = vld [vmem:[%s2 + $0x2c] sm:$0xf]
  %v5343 = vld [vmem:[%s2 + $0x30] sm:$0xf]
  %v5344 = vld [vmem:[%s2 + $0x34] sm:$0xf]
  %v5345 = vld [vmem:[%s2 + $0x38] sm:$0xf]
  %v5346 = vld [vmem:[%s2 + $0x3c] sm:$0xf]
  %v5347 = vld [vmem:[%s4 + $0x80] sm:$0xff]
  %v5348 = vld [vmem:[%s4 + $0x88] sm:$0xff]
  %v5349 = vld [vmem:[%s4 + $0x90] sm:$0xff]
  %v5350 = vld [vmem:[%s4 + $0x98] sm:$0xff]
  %v5351 = vld [vmem:[%s4 + $0xa0] sm:$0xff]
  %v5352 = vld [vmem:[%s4 + $0xa8] sm:$0xff]
  %v5353 = vld [vmem:[%s4 + $0xb0] sm:$0xff]
  %v5354 = vld [vmem:[%s4 + $0xb8] sm:$0xff]
  %v5355 = vld [vmem:[%s4 + $0xc0] sm:$0xff]
  %v5356 = vld [vmem:[%s4 + $0xc8] sm:$0xff]
  %v5357 = vld [vmem:[%s4 + $0xd0] sm:$0xff]
  %v5358 = vld [vmem:[%s4 + $0xd8] sm:$0xff]
  %v5359 = vld [vmem:[%s4 + $0xe0] sm:$0xff]
  %v5360 = vld [vmem:[%s4 + $0xe8] sm:$0xff]
  %v5361 = vld [vmem:[%s4 + $0xf0] sm:$0xff]
  %v5362 = vld [vmem:[%s4 + $0xf8] sm:$0xff]
  %5364 = vset.pattern.permute.xlu0 0
  %5365 = vperm.xlu0 %5364, %v5347
  %v5366 = vpop.permute.xlu0 %5365
  %5369 = vset.pattern.permute.xlu0 0
  %5370 = vperm.xlu0 %5369, %v5348
  %v5371 = vpop.permute.xlu0 %5370
  %5374 = vset.pattern.permute.xlu0 0
  %5375 = vperm.xlu0 %5374, %v5349
  %v5376 = vpop.permute.xlu0 %5375
  %5379 = vset.pattern.permute.xlu0 0
  %5380 = vperm.xlu0 %5379, %v5350
  %v5381 = vpop.permute.xlu0 %5380
  %5384 = vset.pattern.permute.xlu0 0
  %5385 = vperm.xlu0 %5384, %v5351
  %v5386 = vpop.permute.xlu0 %5385
  %5389 = vset.pattern.permute.xlu0 0
  %5390 = vperm.xlu0 %5389, %v5352
  %v5391 = vpop.permute.xlu0 %5390
  %5394 = vset.pattern.permute.xlu0 0
  %5395 = vperm.xlu0 %5394, %v5353
  %v5396 = vpop.permute.xlu0 %5395
  %5399 = vset.pattern.permute.xlu0 0
  %5400 = vperm.xlu0 %5399, %v5354
  %v5401 = vpop.permute.xlu0 %5400
  %5404 = vset.pattern.permute.xlu0 0
  %5405 = vperm.xlu0 %5404, %v5355
  %v5406 = vpop.permute.xlu0 %5405
  %5409 = vset.pattern.permute.xlu0 0
  %5410 = vperm.xlu0 %5409, %v5356
  %v5411 = vpop.permute.xlu0 %5410
  %5414 = vset.pattern.permute.xlu0 0
  %5415 = vperm.xlu0 %5414, %v5357
  %v5416 = vpop.permute.xlu0 %5415
  %5419 = vset.pattern.permute.xlu0 0
  %5420 = vperm.xlu0 %5419, %v5358
  %v5421 = vpop.permute.xlu0 %5420
  %5424 = vset.pattern.permute.xlu0 0
  %5425 = vperm.xlu0 %5424, %v5359
  %v5426 = vpop.permute.xlu0 %5425
  %5429 = vset.pattern.permute.xlu0 0
  %5430 = vperm.xlu0 %5429, %v5360
  %v5431 = vpop.permute.xlu0 %5430
  %5434 = vset.pattern.permute.xlu0 0
  %5435 = vperm.xlu0 %5434, %v5361
  %v5436 = vpop.permute.xlu0 %5435
  %5439 = vset.pattern.permute.xlu0 0
  %5440 = vperm.xlu0 %5439, %v5362
  %v5441 = vpop.permute.xlu0 %5440
  %v5443 = vld [vmem:[%s0 + $0x10] sm:$0xf]
  %v5444 = vld [vmem:[%s0 + $0x14] sm:$0xf]
  %v5445 = vld [vmem:[%s0 + $0x18] sm:$0xf]
  %v5446 = vld [vmem:[%s0 + $0x1c] sm:$0xf]
  %v5447 = vld [vmem:[%s0 + $0x20] sm:$0xf]
  %v5448 = vld [vmem:[%s0 + $0x24] sm:$0xf]
  %v5465 = vunpack.c.l.b16 %v5331
  %v5466 = vunpack.c.l.b16 %v5332
  %v5467 = vunpack.c.l.b16 %v5333
  %v5468 = vunpack.c.l.b16 %v5334
  %v5469 = vunpack.c.l.b16 %v5335
  %v5470 = vunpack.c.l.b16 %v5336
  %v5471 = vunpack.c.l.b16 %v5337
  %v5472 = vunpack.c.l.b16 %v5338
  %v5473 = vunpack.c.l.b16 %v5339
  %v5474 = vunpack.c.l.b16 %v5340
  %v5475 = vunpack.c.l.b16 %v5341
  %v5476 = vunpack.c.l.b16 %v5342
  %v5477 = vunpack.c.l.b16 %v5343
  %v5478 = vunpack.c.l.b16 %v5344
  %v5479 = vunpack.c.l.b16 %v5345
  %v5480 = vunpack.c.l.b16 %v5346
  %v5481 = vpack.c.b16 %v5466, %v5465
  %v5482 = vpack.c.b16 %v5468, %v5467
  %v5483 = vpack.c.b16 %v5470, %v5469
  %v5484 = vpack.c.b16 %v5472, %v5471
  %v5485 = vpack.c.b16 %v5474, %v5473
  %v5486 = vpack.c.b16 %v5476, %v5475
  %v5487 = vpack.c.b16 %v5478, %v5477
  %v5488 = vpack.c.b16 %v5480, %v5479
  %v5495 = vunpack.c.l.b16 %v5443
  %v5496 = vunpack.c.l.b16 %v5444
  %v5497 = vunpack.c.l.b16 %v5445
  %v5498 = vunpack.c.l.b16 %v5446
  %v5499 = vunpack.c.l.b16 %v5447
  %v5500 = vunpack.c.l.b16 %v5448
  %v5501 = vpack.c.b16 %v5496, %v5495
  %v5502 = vpack.c.b16 %v5498, %v5497
  %v5503 = vpack.c.b16 %v5500, %v5499
  %vm5507 = vcmask 785408
  %v5509 = vsel %vm5507, %v5481, 0
  %v5512 = vsel %vm5507, %v5482, 0
  %v5515 = vsel %vm5507, %v5483, 0
  %v5518 = vsel %vm5507, %v5484, 0
  %v5521 = vsel %vm5507, %v5485, 0
  %v5524 = vsel %vm5507, %v5486, 0
  %v5527 = vsel %vm5507, %v5487, 0
  %v5530 = vsel %vm5507, %v5488, 0
  %5532 = vmatpush.bf16.msra.mxu0 0
  %5533 = vmatpush.bf16.msra.mxu0 0
  %5534 = vmatpush.bf16.msra.mxu0 %v418
  %5535 = vmatpush.bf16.msra.mxu0 %v417
  %5536 = vmatpush.bf16.msra.mxu0 %v416
  %5537 = vmatpush.bf16.msra.mxu0 %v5503
  %5538 = vmatpush.bf16.msra.mxu0 %v5502
  %5539 = vmatpush.bf16.msra.mxu0 %v5501
  %5540 = vmatmul.bf16.gmra.mxu0 %v5509
  %v5541 = vpop.f32.mrf.mxu0
  %v5542 = vadd.f32 %v5366, %v5541
  %v5543 = vpop.f32.mrf.mxu0
  %v5544 = vadd.f32 %v5371, %v5543
  %5545 = vmatmul.bf16.gmra.mxu0 %v5512
  %v5546 = vpop.f32.mrf.mxu0
  %v5547 = vadd.f32 %v5376, %v5546
  %v5548 = vpop.f32.mrf.mxu0
  %v5549 = vadd.f32 %v5381, %v5548
  %5550 = vmatmul.bf16.gmra.mxu0 %v5515
  %v5551 = vpop.f32.mrf.mxu0
  %v5552 = vadd.f32 %v5386, %v5551
  %v5553 = vpop.f32.mrf.mxu0
  %v5554 = vadd.f32 %v5391, %v5553
  %5555 = vmatmul.bf16.gmra.mxu0 %v5518
  %v5556 = vpop.f32.mrf.mxu0
  %v5557 = vadd.f32 %v5396, %v5556
  %v5558 = vpop.f32.mrf.mxu0
  %v5559 = vadd.f32 %v5401, %v5558
  %5560 = vmatmul.bf16.gmra.mxu0 %v5521
  %v5561 = vpop.f32.mrf.mxu0
  %v5562 = vadd.f32 %v5406, %v5561
  %v5563 = vpop.f32.mrf.mxu0
  %v5564 = vadd.f32 %v5411, %v5563
  %5565 = vmatmul.bf16.gmra.mxu0 %v5524
  %v5566 = vpop.f32.mrf.mxu0
  %v5567 = vadd.f32 %v5416, %v5566
  %v5568 = vpop.f32.mrf.mxu0
  %v5569 = vadd.f32 %v5421, %v5568
  %5570 = vmatmul.bf16.gmra.mxu0 %v5527
  %v5571 = vpop.f32.mrf.mxu0
  %v5572 = vadd.f32 %v5426, %v5571
  %v5573 = vpop.f32.mrf.mxu0
  %v5574 = vadd.f32 %v5431, %v5573
  %5575 = vmatmul.bf16.gmra.mxu0 %v5530
  %v5576 = vpop.f32.mrf.mxu0
  %v5577 = vadd.f32 %v5436, %v5576
  %v5578 = vpop.f32.mrf.mxu0
  %v5579 = vadd.f32 %v5441, %v5578
  %5580 = vdwg.mxu0
  %v5581 = vmax.f32 %v5542, 0.0
  %v5582 = vmax.f32 %v5544, 0.0
  %v5583 = vmax.f32 %v5547, 0.0
  %v5584 = vmax.f32 %v5549, 0.0
  %v5585 = vmax.f32 %v5552, 0.0
  %v5586 = vmax.f32 %v5554, 0.0
  %v5587 = vmax.f32 %v5557, 0.0
  %v5588 = vmax.f32 %v5559, 0.0
  %v5589 = vmax.f32 %v5562, 0.0
  %v5590 = vmax.f32 %v5564, 0.0
  %v5591 = vmax.f32 %v5567, 0.0
  %v5592 = vmax.f32 %v5569, 0.0
  %v5593 = vmax.f32 %v5572, 0.0
  %v5594 = vmax.f32 %v5574, 0.0
  %v5595 = vmax.f32 %v5577, 0.0
  %v5596 = vmax.f32 %v5579, 0.0
  %v5597 = vld [vmem:[%s0 + $0x28] sm:$0xf]
  %v5598 = vld [vmem:[%s0 + $0x2c] sm:$0xf]
  %v5599 = vld [vmem:[%s0 + $0x30] sm:$0xf]
  %v5600 = vld [vmem:[%s0 + $0x34] sm:$0xf]
  %v5601 = vld [vmem:[%s0 + $0x38] sm:$0xf]
  %v5602 = vld [vmem:[%s0 + $0x3c] sm:$0xf]
  %v5609 = vunpack.c.l.b16 %v5597
  %v5610 = vunpack.c.l.b16 %v5598
  %v5611 = vunpack.c.l.b16 %v5599
  %v5612 = vunpack.c.l.b16 %v5600
  %v5613 = vunpack.c.l.b16 %v5601
  %v5614 = vunpack.c.l.b16 %v5602
  %v5615 = vpack.c.b16 %v5610, %v5609
  %v5616 = vpack.c.b16 %v5612, %v5611
  %v5617 = vpack.c.b16 %v5614, %v5613
  %5621 = vmatpush.bf16.msra.mxu0 0
  %5622 = vmatpush.bf16.msra.mxu0 0
  %5623 = vmatpush.bf16.msra.mxu0 %v733
  %5624 = vmatpush.bf16.msra.mxu0 %v732
  %5625 = vmatpush.bf16.msra.mxu0 %v731
  %5626 = vmatpush.bf16.msra.mxu0 %v5617
  %5627 = vmatpush.bf16.msra.mxu0 %v5616
  %5628 = vmatpush.bf16.msra.mxu0 %v5615
  %5629 = vmatmul.bf16.gmra.mxu0 %v5509
  %v5630 = vpop.f32.mrf.mxu0
  %v5631 = vadd.f32 %v5366, %v5630
  %v5632 = vpop.f32.mrf.mxu0
  %v5633 = vadd.f32 %v5371, %v5632
  %5634 = vmatmul.bf16.gmra.mxu0 %v5512
  %v5635 = vpop.f32.mrf.mxu0
  %v5636 = vadd.f32 %v5376, %v5635
  %v5637 = vpop.f32.mrf.mxu0
  %v5638 = vadd.f32 %v5381, %v5637
  %5639 = vmatmul.bf16.gmra.mxu0 %v5515
  %v5640 = vpop.f32.mrf.mxu0
  %v5641 = vadd.f32 %v5386, %v5640
  %v5642 = vpop.f32.mrf.mxu0
  %v5643 = vadd.f32 %v5391, %v5642
  %5644 = vmatmul.bf16.gmra.mxu0 %v5518
  %v5645 = vpop.f32.mrf.mxu0
  %v5646 = vadd.f32 %v5396, %v5645
  %v5647 = vpop.f32.mrf.mxu0
  %v5648 = vadd.f32 %v5401, %v5647
  %5649 = vmatmul.bf16.gmra.mxu0 %v5521
  %v5650 = vpop.f32.mrf.mxu0
  %v5651 = vadd.f32 %v5406, %v5650
  %v5652 = vpop.f32.mrf.mxu0
  %v5653 = vadd.f32 %v5411, %v5652
  %5654 = vmatmul.bf16.gmra.mxu0 %v5524
  %v5655 = vpop.f32.mrf.mxu0
  %v5656 = vadd.f32 %v5416, %v5655
  %v5657 = vpop.f32.mrf.mxu0
  %v5658 = vadd.f32 %v5421, %v5657
  %5659 = vmatmul.bf16.gmra.mxu0 %v5527
  %v5660 = vpop.f32.mrf.mxu0
  %v5661 = vadd.f32 %v5426, %v5660
  %v5662 = vpop.f32.mrf.mxu0
  %v5663 = vadd.f32 %v5431, %v5662
  %5664 = vmatmul.bf16.gmra.mxu0 %v5530
  %v5665 = vpop.f32.mrf.mxu0
  %v5666 = vadd.f32 %v5436, %v5665
  %v5667 = vpop.f32.mrf.mxu0
  %v5668 = vadd.f32 %v5441, %v5667
  %5669 = vdwg.mxu0
  %v5670 = vmax.f32 %v5631, 0.0
  %v5671 = vmax.f32 %v5633, 0.0
  %v5672 = vmax.f32 %v5636, 0.0
  %v5673 = vmax.f32 %v5638, 0.0
  %v5674 = vmax.f32 %v5641, 0.0
  %v5675 = vmax.f32 %v5643, 0.0
  %v5676 = vmax.f32 %v5646, 0.0
  %v5677 = vmax.f32 %v5648, 0.0
  %v5678 = vmax.f32 %v5651, 0.0
  %v5679 = vmax.f32 %v5653, 0.0
  %v5680 = vmax.f32 %v5656, 0.0
  %v5681 = vmax.f32 %v5658, 0.0
  %v5682 = vmax.f32 %v5661, 0.0
  %v5683 = vmax.f32 %v5663, 0.0
  %v5684 = vmax.f32 %v5666, 0.0
  %v5685 = vmax.f32 %v5668, 0.0
  %v5686 = vmax.f32 %v5581, %v5670
  %v5687 = vmax.f32 %v5582, %v5671
  %v5688 = vmax.f32 %v5583, %v5672
  %v5689 = vmax.f32 %v5584, %v5673
  %v5690 = vmax.f32 %v5585, %v5674
  %v5691 = vmax.f32 %v5586, %v5675
  %v5692 = vmax.f32 %v5587, %v5676
  %v5693 = vmax.f32 %v5588, %v5677
  %v5694 = vmax.f32 %v5589, %v5678
  %v5695 = vmax.f32 %v5590, %v5679
  %v5696 = vmax.f32 %v5591, %v5680
  %v5697 = vmax.f32 %v5592, %v5681
  %v5698 = vmax.f32 %v5593, %v5682
  %v5699 = vmax.f32 %v5594, %v5683
  %v5700 = vmax.f32 %v5595, %v5684
  %v5701 = vmax.f32 %v5596, %v5685
  %v5702 = vld [vmem:[%s0 + $0x40] sm:$0xf]
  %v5703 = vld [vmem:[%s0 + $0x44] sm:$0xf]
  %v5704 = vld [vmem:[%s0 + $0x48] sm:$0xf]
  %v5705 = vld [vmem:[%s0 + $0x4c] sm:$0xf]
  %v5706 = vld [vmem:[%s0 + $0x50] sm:$0xf]
  %v5707 = vld [vmem:[%s0 + $0x54] sm:$0xf]
  %v5714 = vunpack.c.l.b16 %v5702
  %v5715 = vunpack.c.l.b16 %v5703
  %v5716 = vunpack.c.l.b16 %v5704
  %v5717 = vunpack.c.l.b16 %v5705
  %v5718 = vunpack.c.l.b16 %v5706
  %v5719 = vunpack.c.l.b16 %v5707
  %v5720 = vpack.c.b16 %v5715, %v5714
  %v5721 = vpack.c.b16 %v5717, %v5716
  %v5722 = vpack.c.b16 %v5719, %v5718
  %5726 = vmatpush.bf16.msra.mxu0 0
  %5727 = vmatpush.bf16.msra.mxu0 0
  %5728 = vmatpush.bf16.msra.mxu0 %v1032
  %5729 = vmatpush.bf16.msra.mxu0 %v1031
  %5730 = vmatpush.bf16.msra.mxu0 %v1030
  %5731 = vmatpush.bf16.msra.mxu0 %v5722
  %5732 = vmatpush.bf16.msra.mxu0 %v5721
  %5733 = vmatpush.bf16.msra.mxu0 %v5720
  %5734 = vmatmul.bf16.gmra.mxu0 %v5509
  %v5735 = vpop.f32.mrf.mxu0
  %v5736 = vadd.f32 %v5366, %v5735
  %v5737 = vpop.f32.mrf.mxu0
  %v5738 = vadd.f32 %v5371, %v5737
  %5739 = vmatmul.bf16.gmra.mxu0 %v5512
  %v5740 = vpop.f32.mrf.mxu0
  %v5741 = vadd.f32 %v5376, %v5740
  %v5742 = vpop.f32.mrf.mxu0
  %v5743 = vadd.f32 %v5381, %v5742
  %5744 = vmatmul.bf16.gmra.mxu0 %v5515
  %v5745 = vpop.f32.mrf.mxu0
  %v5746 = vadd.f32 %v5386, %v5745
  %v5747 = vpop.f32.mrf.mxu0
  %v5748 = vadd.f32 %v5391, %v5747
  %5749 = vmatmul.bf16.gmra.mxu0 %v5518
  %v5750 = vpop.f32.mrf.mxu0
  %v5751 = vadd.f32 %v5396, %v5750
  %v5752 = vpop.f32.mrf.mxu0
  %v5753 = vadd.f32 %v5401, %v5752
  %5754 = vmatmul.bf16.gmra.mxu0 %v5521
  %v5755 = vpop.f32.mrf.mxu0
  %v5756 = vadd.f32 %v5406, %v5755
  %v5757 = vpop.f32.mrf.mxu0
  %v5758 = vadd.f32 %v5411, %v5757
  %5759 = vmatmul.bf16.gmra.mxu0 %v5524
  %v5760 = vpop.f32.mrf.mxu0
  %v5761 = vadd.f32 %v5416, %v5760
  %v5762 = vpop.f32.mrf.mxu0
  %v5763 = vadd.f32 %v5421, %v5762
  %5764 = vmatmul.bf16.gmra.mxu0 %v5527
  %v5765 = vpop.f32.mrf.mxu0
  %v5766 = vadd.f32 %v5426, %v5765
  %v5767 = vpop.f32.mrf.mxu0
  %v5768 = vadd.f32 %v5431, %v5767
  %5769 = vmatmul.bf16.gmra.mxu0 %v5530
  %v5770 = vpop.f32.mrf.mxu0
  %v5771 = vadd.f32 %v5436, %v5770
  %v5772 = vpop.f32.mrf.mxu0
  %v5773 = vadd.f32 %v5441, %v5772
  %5774 = vdwg.mxu0
  %v5775 = vmax.f32 %v5736, 0.0
  %v5776 = vmax.f32 %v5738, 0.0
  %v5777 = vmax.f32 %v5741, 0.0
  %v5778 = vmax.f32 %v5743, 0.0
  %v5779 = vmax.f32 %v5746, 0.0
  %v5780 = vmax.f32 %v5748, 0.0
  %v5781 = vmax.f32 %v5751, 0.0
  %v5782 = vmax.f32 %v5753, 0.0
  %v5783 = vmax.f32 %v5756, 0.0
  %v5784 = vmax.f32 %v5758, 0.0
  %v5785 = vmax.f32 %v5761, 0.0
  %v5786 = vmax.f32 %v5763, 0.0
  %v5787 = vmax.f32 %v5766, 0.0
  %v5788 = vmax.f32 %v5768, 0.0
  %v5789 = vmax.f32 %v5771, 0.0
  %v5790 = vmax.f32 %v5773, 0.0
  %v5791 = vld [vmem:[%s0 + $0x58] sm:$0xf]
  %v5792 = vld [vmem:[%s0 + $0x5c] sm:$0xf]
  %v5793 = vld [vmem:[%s0 + $0x60] sm:$0xf]
  %v5794 = vld [vmem:[%s0 + $0x64] sm:$0xf]
  %v5795 = vld [vmem:[%s0 + $0x68] sm:$0xf]
  %v5796 = vld [vmem:[%s0 + $0x6c] sm:$0xf]
  %v5803 = vunpack.c.l.b16 %v5791
  %v5804 = vunpack.c.l.b16 %v5792
  %v5805 = vunpack.c.l.b16 %v5793
  %v5806 = vunpack.c.l.b16 %v5794
  %v5807 = vunpack.c.l.b16 %v5795
  %v5808 = vunpack.c.l.b16 %v5796
  %v5809 = vpack.c.b16 %v5804, %v5803
  %v5810 = vpack.c.b16 %v5806, %v5805
  %v5811 = vpack.c.b16 %v5808, %v5807
  %5815 = vmatpush.bf16.msra.mxu0 0
  %5816 = vmatpush.bf16.msra.mxu0 0
  %5817 = vmatpush.bf16.msra.mxu0 %v1347
  %5818 = vmatpush.bf16.msra.mxu0 %v1346
  %5819 = vmatpush.bf16.msra.mxu0 %v1345
  %5820 = vmatpush.bf16.msra.mxu0 %v5811
  %5821 = vmatpush.bf16.msra.mxu0 %v5810
  %5822 = vmatpush.bf16.msra.mxu0 %v5809
  %5823 = vmatmul.bf16.gmra.mxu0 %v5509
  %v5824 = vpop.f32.mrf.mxu0
  %v5825 = vadd.f32 %v5366, %v5824
  %v5826 = vpop.f32.mrf.mxu0
  %v5827 = vadd.f32 %v5371, %v5826
  %5828 = vmatmul.bf16.gmra.mxu0 %v5512
  %v5829 = vpop.f32.mrf.mxu0
  %v5830 = vadd.f32 %v5376, %v5829
  %v5831 = vpop.f32.mrf.mxu0
  %v5832 = vadd.f32 %v5381, %v5831
  %5833 = vmatmul.bf16.gmra.mxu0 %v5515
  %v5834 = vpop.f32.mrf.mxu0
  %v5835 = vadd.f32 %v5386, %v5834
  %v5836 = vpop.f32.mrf.mxu0
  %v5837 = vadd.f32 %v5391, %v5836
  %5838 = vmatmul.bf16.gmra.mxu0 %v5518
  %v5839 = vpop.f32.mrf.mxu0
  %v5840 = vadd.f32 %v5396, %v5839
  %v5841 = vpop.f32.mrf.mxu0
  %v5842 = vadd.f32 %v5401, %v5841
  %5843 = vmatmul.bf16.gmra.mxu0 %v5521
  %v5844 = vpop.f32.mrf.mxu0
  %v5845 = vadd.f32 %v5406, %v5844
  %v5846 = vpop.f32.mrf.mxu0
  %v5847 = vadd.f32 %v5411, %v5846
  %5848 = vmatmul.bf16.gmra.mxu0 %v5524
  %v5849 = vpop.f32.mrf.mxu0
  %v5850 = vadd.f32 %v5416, %v5849
  %v5851 = vpop.f32.mrf.mxu0
  %v5852 = vadd.f32 %v5421, %v5851
  %5853 = vmatmul.bf16.gmra.mxu0 %v5527
  %v5854 = vpop.f32.mrf.mxu0
  %v5855 = vadd.f32 %v5426, %v5854
  %v5856 = vpop.f32.mrf.mxu0
  %v5857 = vadd.f32 %v5431, %v5856
  %5858 = vmatmul.bf16.gmra.mxu0 %v5530
  %v5859 = vpop.f32.mrf.mxu0
  %v5860 = vadd.f32 %v5436, %v5859
  %v5861 = vpop.f32.mrf.mxu0
  %v5862 = vadd.f32 %v5441, %v5861
  %5863 = vdwg.mxu0
  %v5864 = vmax.f32 %v5825, 0.0
  %v5865 = vmax.f32 %v5827, 0.0
  %v5866 = vmax.f32 %v5830, 0.0
  %v5867 = vmax.f32 %v5832, 0.0
  %v5868 = vmax.f32 %v5835, 0.0
  %v5869 = vmax.f32 %v5837, 0.0
  %v5870 = vmax.f32 %v5840, 0.0
  %v5871 = vmax.f32 %v5842, 0.0
  %v5872 = vmax.f32 %v5845, 0.0
  %v5873 = vmax.f32 %v5847, 0.0
  %v5874 = vmax.f32 %v5850, 0.0
  %v5875 = vmax.f32 %v5852, 0.0
  %v5876 = vmax.f32 %v5855, 0.0
  %v5877 = vmax.f32 %v5857, 0.0
  %v5878 = vmax.f32 %v5860, 0.0
  %v5879 = vmax.f32 %v5862, 0.0
  %v5880 = vmax.f32 %v5775, %v5864
  %v5881 = vmax.f32 %v5776, %v5865
  %v5882 = vmax.f32 %v5777, %v5866
  %v5883 = vmax.f32 %v5778, %v5867
  %v5884 = vmax.f32 %v5779, %v5868
  %v5885 = vmax.f32 %v5780, %v5869
  %v5886 = vmax.f32 %v5781, %v5870
  %v5887 = vmax.f32 %v5782, %v5871
  %v5888 = vmax.f32 %v5783, %v5872
  %v5889 = vmax.f32 %v5784, %v5873
  %v5890 = vmax.f32 %v5785, %v5874
  %v5891 = vmax.f32 %v5786, %v5875
  %v5892 = vmax.f32 %v5787, %v5876
  %v5893 = vmax.f32 %v5788, %v5877
  %v5894 = vmax.f32 %v5789, %v5878
  %v5895 = vmax.f32 %v5790, %v5879
  %v5896 = vld [vmem:[%s0 + $0x70] sm:$0xf]
  %v5897 = vld [vmem:[%s0 + $0x74] sm:$0xf]
  %v5898 = vld [vmem:[%s0 + $0x78] sm:$0xf]
  %v5899 = vld [vmem:[%s0 + $0x7c] sm:$0xf]
  %v5900 = vld [vmem:[%s0 + $0x80] sm:$0xf]
  %v5901 = vld [vmem:[%s0 + $0x84] sm:$0xf]
  %v5908 = vunpack.c.l.b16 %v5896
  %v5909 = vunpack.c.l.b16 %v5897
  %v5910 = vunpack.c.l.b16 %v5898
  %v5911 = vunpack.c.l.b16 %v5899
  %v5912 = vunpack.c.l.b16 %v5900
  %v5913 = vunpack.c.l.b16 %v5901
  %v5914 = vpack.c.b16 %v5909, %v5908
  %v5915 = vpack.c.b16 %v5911, %v5910
  %v5916 = vpack.c.b16 %v5913, %v5912
  %5920 = vmatpush.bf16.msra.mxu0 0
  %5921 = vmatpush.bf16.msra.mxu0 0
  %5922 = vmatpush.bf16.msra.mxu0 %v1646
  %5923 = vmatpush.bf16.msra.mxu0 %v1645
  %5924 = vmatpush.bf16.msra.mxu0 %v1644
  %5925 = vmatpush.bf16.msra.mxu0 %v5916
  %5926 = vmatpush.bf16.msra.mxu0 %v5915
  %5927 = vmatpush.bf16.msra.mxu0 %v5914
  %5928 = vmatmul.bf16.gmra.mxu0 %v5509
  %v5929 = vpop.f32.mrf.mxu0
  %v5930 = vadd.f32 %v5366, %v5929
  %v5931 = vpop.f32.mrf.mxu0
  %v5932 = vadd.f32 %v5371, %v5931
  %5933 = vmatmul.bf16.gmra.mxu0 %v5512
  %v5934 = vpop.f32.mrf.mxu0
  %v5935 = vadd.f32 %v5376, %v5934
  %v5936 = vpop.f32.mrf.mxu0
  %v5937 = vadd.f32 %v5381, %v5936
  %5938 = vmatmul.bf16.gmra.mxu0 %v5515
  %v5939 = vpop.f32.mrf.mxu0
  %v5940 = vadd.f32 %v5386, %v5939
  %v5941 = vpop.f32.mrf.mxu0
  %v5942 = vadd.f32 %v5391, %v5941
  %5943 = vmatmul.bf16.gmra.mxu0 %v5518
  %v5944 = vpop.f32.mrf.mxu0
  %v5945 = vadd.f32 %v5396, %v5944
  %v5946 = vpop.f32.mrf.mxu0
  %v5947 = vadd.f32 %v5401, %v5946
  %5948 = vmatmul.bf16.gmra.mxu0 %v5521
  %v5949 = vpop.f32.mrf.mxu0
  %v5950 = vadd.f32 %v5406, %v5949
  %v5951 = vpop.f32.mrf.mxu0
  %v5952 = vadd.f32 %v5411, %v5951
  %5953 = vmatmul.bf16.gmra.mxu0 %v5524
  %v5954 = vpop.f32.mrf.mxu0
  %v5955 = vadd.f32 %v5416, %v5954
  %v5956 = vpop.f32.mrf.mxu0
  %v5957 = vadd.f32 %v5421, %v5956
  %5958 = vmatmul.bf16.gmra.mxu0 %v5527
  %v5959 = vpop.f32.mrf.mxu0
  %v5960 = vadd.f32 %v5426, %v5959
  %v5961 = vpop.f32.mrf.mxu0
  %v5962 = vadd.f32 %v5431, %v5961
  %5963 = vmatmul.bf16.gmra.mxu0 %v5530
  %v5964 = vpop.f32.mrf.mxu0
  %v5965 = vadd.f32 %v5436, %v5964
  %v5966 = vpop.f32.mrf.mxu0
  %v5967 = vadd.f32 %v5441, %v5966
  %5968 = vdwg.mxu0
  %v5969 = vmax.f32 %v5930, 0.0
  %v5970 = vmax.f32 %v5932, 0.0
  %v5971 = vmax.f32 %v5935, 0.0
  %v5972 = vmax.f32 %v5937, 0.0
  %v5973 = vmax.f32 %v5940, 0.0
  %v5974 = vmax.f32 %v5942, 0.0
  %v5975 = vmax.f32 %v5945, 0.0
  %v5976 = vmax.f32 %v5947, 0.0
  %v5977 = vmax.f32 %v5950, 0.0
  %v5978 = vmax.f32 %v5952, 0.0
  %v5979 = vmax.f32 %v5955, 0.0
  %v5980 = vmax.f32 %v5957, 0.0
  %v5981 = vmax.f32 %v5960, 0.0
  %v5982 = vmax.f32 %v5962, 0.0
  %v5983 = vmax.f32 %v5965, 0.0
  %v5984 = vmax.f32 %v5967, 0.0
  %v5985 = vld [vmem:[%s0 + $0x88] sm:$0xf]
  %v5986 = vld [vmem:[%s0 + $0x8c] sm:$0xf]
  %v5987 = vld [vmem:[%s0 + $0x90] sm:$0xf]
  %v5988 = vld [vmem:[%s0 + $0x94] sm:$0xf]
  %v5989 = vld [vmem:[%s0 + $0x98] sm:$0xf]
  %v5990 = vld [vmem:[%s0 + $0x9c] sm:$0xf]
  %v5997 = vunpack.c.l.b16 %v5985
  %v5998 = vunpack.c.l.b16 %v5986
  %v5999 = vunpack.c.l.b16 %v5987
  %v6000 = vunpack.c.l.b16 %v5988
  %v6001 = vunpack.c.l.b16 %v5989
  %v6002 = vunpack.c.l.b16 %v5990
  %v6003 = vpack.c.b16 %v5998, %v5997
  %v6004 = vpack.c.b16 %v6000, %v5999
  %v6005 = vpack.c.b16 %v6002, %v6001
  %6009 = vmatpush.bf16.msra.mxu0 0
  %6010 = vmatpush.bf16.msra.mxu0 0
  %6011 = vmatpush.bf16.msra.mxu0 %v1961
  %6012 = vmatpush.bf16.msra.mxu0 %v1960
  %6013 = vmatpush.bf16.msra.mxu0 %v1959
  %6014 = vmatpush.bf16.msra.mxu0 %v6005
  %6015 = vmatpush.bf16.msra.mxu0 %v6004
  %6016 = vmatpush.bf16.msra.mxu0 %v6003
  %6017 = vmatmul.bf16.gmra.mxu0 %v5509
  %v6018 = vpop.f32.mrf.mxu0
  %v6019 = vadd.f32 %v5366, %v6018
  %v6020 = vpop.f32.mrf.mxu0
  %v6021 = vadd.f32 %v5371, %v6020
  %6022 = vmatmul.bf16.gmra.mxu0 %v5512
  %v6023 = vpop.f32.mrf.mxu0
  %v6024 = vadd.f32 %v5376, %v6023
  %v6025 = vpop.f32.mrf.mxu0
  %v6026 = vadd.f32 %v5381, %v6025
  %6027 = vmatmul.bf16.gmra.mxu0 %v5515
  %v6028 = vpop.f32.mrf.mxu0
  %v6029 = vadd.f32 %v5386, %v6028
  %v6030 = vpop.f32.mrf.mxu0
  %v6031 = vadd.f32 %v5391, %v6030
  %6032 = vmatmul.bf16.gmra.mxu0 %v5518
  %v6033 = vpop.f32.mrf.mxu0
  %v6034 = vadd.f32 %v5396, %v6033
  %v6035 = vpop.f32.mrf.mxu0
  %v6036 = vadd.f32 %v5401, %v6035
  %6037 = vmatmul.bf16.gmra.mxu0 %v5521
  %v6038 = vpop.f32.mrf.mxu0
  %v6039 = vadd.f32 %v5406, %v6038
  %v6040 = vpop.f32.mrf.mxu0
  %v6041 = vadd.f32 %v5411, %v6040
  %6042 = vmatmul.bf16.gmra.mxu0 %v5524
  %v6043 = vpop.f32.mrf.mxu0
  %v6044 = vadd.f32 %v5416, %v6043
  %v6045 = vpop.f32.mrf.mxu0
  %v6046 = vadd.f32 %v5421, %v6045
  %6047 = vmatmul.bf16.gmra.mxu0 %v5527
  %v6048 = vpop.f32.mrf.mxu0
  %v6049 = vadd.f32 %v5426, %v6048
  %v6050 = vpop.f32.mrf.mxu0
  %v6051 = vadd.f32 %v5431, %v6050
  %6052 = vmatmul.bf16.gmra.mxu0 %v5530
  %v6053 = vpop.f32.mrf.mxu0
  %v6054 = vadd.f32 %v5436, %v6053
  %v6055 = vpop.f32.mrf.mxu0
  %v6056 = vadd.f32 %v5441, %v6055
  %6057 = vdwg.mxu0
  %v6058 = vmax.f32 %v6019, 0.0
  %v6059 = vmax.f32 %v6021, 0.0
  %v6060 = vmax.f32 %v6024, 0.0
  %v6061 = vmax.f32 %v6026, 0.0
  %v6062 = vmax.f32 %v6029, 0.0
  %v6063 = vmax.f32 %v6031, 0.0
  %v6064 = vmax.f32 %v6034, 0.0
  %v6065 = vmax.f32 %v6036, 0.0
  %v6066 = vmax.f32 %v6039, 0.0
  %v6067 = vmax.f32 %v6041, 0.0
  %v6068 = vmax.f32 %v6044, 0.0
  %v6069 = vmax.f32 %v6046, 0.0
  %v6070 = vmax.f32 %v6049, 0.0
  %v6071 = vmax.f32 %v6051, 0.0
  %v6072 = vmax.f32 %v6054, 0.0
  %v6073 = vmax.f32 %v6056, 0.0
  %v6074 = vmax.f32 %v5969, %v6058
  %v6075 = vmax.f32 %v5970, %v6059
  %v6076 = vmax.f32 %v5971, %v6060
  %v6077 = vmax.f32 %v5972, %v6061
  %v6078 = vmax.f32 %v5973, %v6062
  %v6079 = vmax.f32 %v5974, %v6063
  %v6080 = vmax.f32 %v5975, %v6064
  %v6081 = vmax.f32 %v5976, %v6065
  %v6082 = vmax.f32 %v5977, %v6066
  %v6083 = vmax.f32 %v5978, %v6067
  %v6084 = vmax.f32 %v5979, %v6068
  %v6085 = vmax.f32 %v5980, %v6069
  %v6086 = vmax.f32 %v5981, %v6070
  %v6087 = vmax.f32 %v5982, %v6071
  %v6088 = vmax.f32 %v5983, %v6072
  %v6089 = vmax.f32 %v5984, %v6073
  %v6090 = vld [vmem:[%s0 + $0xa0] sm:$0xf]
  %v6091 = vld [vmem:[%s0 + $0xa4] sm:$0xf]
  %v6092 = vld [vmem:[%s0 + $0xa8] sm:$0xf]
  %v6093 = vld [vmem:[%s0 + $0xac] sm:$0xf]
  %v6094 = vld [vmem:[%s0 + $0xb0] sm:$0xf]
  %v6095 = vld [vmem:[%s0 + $0xb4] sm:$0xf]
  %v6102 = vunpack.c.l.b16 %v6090
  %v6103 = vunpack.c.l.b16 %v6091
  %v6104 = vunpack.c.l.b16 %v6092
  %v6105 = vunpack.c.l.b16 %v6093
  %v6106 = vunpack.c.l.b16 %v6094
  %v6107 = vunpack.c.l.b16 %v6095
  %v6108 = vpack.c.b16 %v6103, %v6102
  %v6109 = vpack.c.b16 %v6105, %v6104
  %v6110 = vpack.c.b16 %v6107, %v6106
  %6114 = vmatpush.bf16.msra.mxu0 0
  %6115 = vmatpush.bf16.msra.mxu0 0
  %6116 = vmatpush.bf16.msra.mxu0 %v2260
  %6117 = vmatpush.bf16.msra.mxu0 %v2259
  %6118 = vmatpush.bf16.msra.mxu0 %v2258
  %6119 = vmatpush.bf16.msra.mxu0 %v6110
  %6120 = vmatpush.bf16.msra.mxu0 %v6109
  %6121 = vmatpush.bf16.msra.mxu0 %v6108
  %6122 = vmatmul.bf16.gmra.mxu0 %v5509
  %v6123 = vpop.f32.mrf.mxu0
  %v6124 = vadd.f32 %v5366, %v6123
  %v6125 = vpop.f32.mrf.mxu0
  %v6126 = vadd.f32 %v5371, %v6125
  %6127 = vmatmul.bf16.gmra.mxu0 %v5512
  %v6128 = vpop.f32.mrf.mxu0
  %v6129 = vadd.f32 %v5376, %v6128
  %v6130 = vpop.f32.mrf.mxu0
  %v6131 = vadd.f32 %v5381, %v6130
  %6132 = vmatmul.bf16.gmra.mxu0 %v5515
  %v6133 = vpop.f32.mrf.mxu0
  %v6134 = vadd.f32 %v5386, %v6133
  %v6135 = vpop.f32.mrf.mxu0
  %v6136 = vadd.f32 %v5391, %v6135
  %6137 = vmatmul.bf16.gmra.mxu0 %v5518
  %v6138 = vpop.f32.mrf.mxu0
  %v6139 = vadd.f32 %v5396, %v6138
  %v6140 = vpop.f32.mrf.mxu0
  %v6141 = vadd.f32 %v5401, %v6140
  %6142 = vmatmul.bf16.gmra.mxu0 %v5521
  %v6143 = vpop.f32.mrf.mxu0
  %v6144 = vadd.f32 %v5406, %v6143
  %v6145 = vpop.f32.mrf.mxu0
  %v6146 = vadd.f32 %v5411, %v6145
  %6147 = vmatmul.bf16.gmra.mxu0 %v5524
  %v6148 = vpop.f32.mrf.mxu0
  %v6149 = vadd.f32 %v5416, %v6148
  %v6150 = vpop.f32.mrf.mxu0
  %v6151 = vadd.f32 %v5421, %v6150
  %6152 = vmatmul.bf16.gmra.mxu0 %v5527
  %v6153 = vpop.f32.mrf.mxu0
  %v6154 = vadd.f32 %v5426, %v6153
  %v6155 = vpop.f32.mrf.mxu0
  %v6156 = vadd.f32 %v5431, %v6155
  %6157 = vmatmul.bf16.gmra.mxu0 %v5530
  %v6158 = vpop.f32.mrf.mxu0
  %v6159 = vadd.f32 %v5436, %v6158
  %v6160 = vpop.f32.mrf.mxu0
  %v6161 = vadd.f32 %v5441, %v6160
  %6162 = vdwg.mxu0
  %v6163 = vmax.f32 %v6124, 0.0
  %v6164 = vmax.f32 %v6126, 0.0
  %v6165 = vmax.f32 %v6129, 0.0
  %v6166 = vmax.f32 %v6131, 0.0
  %v6167 = vmax.f32 %v6134, 0.0
  %v6168 = vmax.f32 %v6136, 0.0
  %v6169 = vmax.f32 %v6139, 0.0
  %v6170 = vmax.f32 %v6141, 0.0
  %v6171 = vmax.f32 %v6144, 0.0
  %v6172 = vmax.f32 %v6146, 0.0
  %v6173 = vmax.f32 %v6149, 0.0
  %v6174 = vmax.f32 %v6151, 0.0
  %v6175 = vmax.f32 %v6154, 0.0
  %v6176 = vmax.f32 %v6156, 0.0
  %v6177 = vmax.f32 %v6159, 0.0
  %v6178 = vmax.f32 %v6161, 0.0
  %v6179 = vld [vmem:[%s0 + $0xb8] sm:$0xf]
  %v6180 = vld [vmem:[%s0 + $0xbc] sm:$0xf]
  %v6181 = vld [vmem:[%s0 + $0xc0] sm:$0xf]
  %v6182 = vld [vmem:[%s0 + $0xc4] sm:$0xf]
  %v6183 = vld [vmem:[%s0 + $0xc8] sm:$0xf]
  %v6184 = vld [vmem:[%s0 + $0xcc] sm:$0xf]
  %v6191 = vunpack.c.l.b16 %v6179
  %v6192 = vunpack.c.l.b16 %v6180
  %v6193 = vunpack.c.l.b16 %v6181
  %v6194 = vunpack.c.l.b16 %v6182
  %v6195 = vunpack.c.l.b16 %v6183
  %v6196 = vunpack.c.l.b16 %v6184
  %v6197 = vpack.c.b16 %v6192, %v6191
  %v6198 = vpack.c.b16 %v6194, %v6193
  %v6199 = vpack.c.b16 %v6196, %v6195
  %6203 = vmatpush.bf16.msra.mxu0 0
  %6204 = vmatpush.bf16.msra.mxu0 0
  %6205 = vmatpush.bf16.msra.mxu0 %v2575
  %6206 = vmatpush.bf16.msra.mxu0 %v2574
  %6207 = vmatpush.bf16.msra.mxu0 %v2573
  %6208 = vmatpush.bf16.msra.mxu0 %v6199
  %6209 = vmatpush.bf16.msra.mxu0 %v6198
  %6210 = vmatpush.bf16.msra.mxu0 %v6197
  %6211 = vmatmul.bf16.gmra.mxu0 %v5509
  %v6212 = vpop.f32.mrf.mxu0
  %v6213 = vadd.f32 %v5366, %v6212
  %v6214 = vpop.f32.mrf.mxu0
  %v6215 = vadd.f32 %v5371, %v6214
  %6216 = vmatmul.bf16.gmra.mxu0 %v5512
  %v6217 = vpop.f32.mrf.mxu0
  %v6218 = vadd.f32 %v5376, %v6217
  %v6219 = vpop.f32.mrf.mxu0
  %v6220 = vadd.f32 %v5381, %v6219
  %6221 = vmatmul.bf16.gmra.mxu0 %v5515
  %v6222 = vpop.f32.mrf.mxu0
  %v6223 = vadd.f32 %v5386, %v6222
  %v6224 = vpop.f32.mrf.mxu0
  %v6225 = vadd.f32 %v5391, %v6224
  %6226 = vmatmul.bf16.gmra.mxu0 %v5518
  %v6227 = vpop.f32.mrf.mxu0
  %v6228 = vadd.f32 %v5396, %v6227
  %v6229 = vpop.f32.mrf.mxu0
  %v6230 = vadd.f32 %v5401, %v6229
  %6231 = vmatmul.bf16.gmra.mxu0 %v5521
  %v6232 = vpop.f32.mrf.mxu0
  %v6233 = vadd.f32 %v5406, %v6232
  %v6234 = vpop.f32.mrf.mxu0
  %v6235 = vadd.f32 %v5411, %v6234
  %6236 = vmatmul.bf16.gmra.mxu0 %v5524
  %v6237 = vpop.f32.mrf.mxu0
  %v6238 = vadd.f32 %v5416, %v6237
  %v6239 = vpop.f32.mrf.mxu0
  %v6240 = vadd.f32 %v5421, %v6239
  %6241 = vmatmul.bf16.gmra.mxu0 %v5527
  %v6242 = vpop.f32.mrf.mxu0
  %v6243 = vadd.f32 %v5426, %v6242
  %v6244 = vpop.f32.mrf.mxu0
  %v6245 = vadd.f32 %v5431, %v6244
  %6246 = vmatmul.bf16.gmra.mxu0 %v5530
  %v6247 = vpop.f32.mrf.mxu0
  %v6248 = vadd.f32 %v5436, %v6247
  %v6249 = vpop.f32.mrf.mxu0
  %v6250 = vadd.f32 %v5441, %v6249
  %6251 = vdwg.mxu0
  %v6252 = vmax.f32 %v6213, 0.0
  %v6253 = vmax.f32 %v6215, 0.0
  %v6254 = vmax.f32 %v6218, 0.0
  %v6255 = vmax.f32 %v6220, 0.0
  %v6256 = vmax.f32 %v6223, 0.0
  %v6257 = vmax.f32 %v6225, 0.0
  %v6258 = vmax.f32 %v6228, 0.0
  %v6259 = vmax.f32 %v6230, 0.0
  %v6260 = vmax.f32 %v6233, 0.0
  %v6261 = vmax.f32 %v6235, 0.0
  %v6262 = vmax.f32 %v6238, 0.0
  %v6263 = vmax.f32 %v6240, 0.0
  %v6264 = vmax.f32 %v6243, 0.0
  %v6265 = vmax.f32 %v6245, 0.0
  %v6266 = vmax.f32 %v6248, 0.0
  %v6267 = vmax.f32 %v6250, 0.0
  %v6268 = vmax.f32 %v6163, %v6252
  %v6269 = vmax.f32 %v6164, %v6253
  %v6270 = vmax.f32 %v6165, %v6254
  %v6271 = vmax.f32 %v6166, %v6255
  %v6272 = vmax.f32 %v6167, %v6256
  %v6273 = vmax.f32 %v6168, %v6257
  %v6274 = vmax.f32 %v6169, %v6258
  %v6275 = vmax.f32 %v6170, %v6259
  %v6276 = vmax.f32 %v6171, %v6260
  %v6277 = vmax.f32 %v6172, %v6261
  %v6278 = vmax.f32 %v6173, %v6262
  %v6279 = vmax.f32 %v6174, %v6263
  %v6280 = vmax.f32 %v6175, %v6264
  %v6281 = vmax.f32 %v6176, %v6265
  %v6282 = vmax.f32 %v6177, %v6266
  %v6283 = vmax.f32 %v6178, %v6267
  %v6284 = vld [vmem:[%s0 + $0xd0] sm:$0xf]
  %v6285 = vld [vmem:[%s0 + $0xd4] sm:$0xf]
  %v6286 = vld [vmem:[%s0 + $0xd8] sm:$0xf]
  %v6287 = vld [vmem:[%s0 + $0xdc] sm:$0xf]
  %v6288 = vld [vmem:[%s0 + $0xe0] sm:$0xf]
  %v6289 = vld [vmem:[%s0 + $0xe4] sm:$0xf]
  %v6296 = vunpack.c.l.b16 %v6284
  %v6297 = vunpack.c.l.b16 %v6285
  %v6298 = vunpack.c.l.b16 %v6286
  %v6299 = vunpack.c.l.b16 %v6287
  %v6300 = vunpack.c.l.b16 %v6288
  %v6301 = vunpack.c.l.b16 %v6289
  %v6302 = vpack.c.b16 %v6297, %v6296
  %v6303 = vpack.c.b16 %v6299, %v6298
  %v6304 = vpack.c.b16 %v6301, %v6300
  %6308 = vmatpush.bf16.msra.mxu0 0
  %6309 = vmatpush.bf16.msra.mxu0 0
  %6310 = vmatpush.bf16.msra.mxu0 %v2874
  %6311 = vmatpush.bf16.msra.mxu0 %v2873
  %6312 = vmatpush.bf16.msra.mxu0 %v2872
  %6313 = vmatpush.bf16.msra.mxu0 %v6304
  %6314 = vmatpush.bf16.msra.mxu0 %v6303
  %6315 = vmatpush.bf16.msra.mxu0 %v6302
  %6316 = vmatmul.bf16.gmra.mxu0 %v5509
  %v6317 = vpop.f32.mrf.mxu0
  %v6318 = vadd.f32 %v5366, %v6317
  %v6319 = vpop.f32.mrf.mxu0
  %v6320 = vadd.f32 %v5371, %v6319
  %6321 = vmatmul.bf16.gmra.mxu0 %v5512
  %v6322 = vpop.f32.mrf.mxu0
  %v6323 = vadd.f32 %v5376, %v6322
  %v6324 = vpop.f32.mrf.mxu0
  %v6325 = vadd.f32 %v5381, %v6324
  %6326 = vmatmul.bf16.gmra.mxu0 %v5515
  %v6327 = vpop.f32.mrf.mxu0
  %v6328 = vadd.f32 %v5386, %v6327
  %v6329 = vpop.f32.mrf.mxu0
  %v6330 = vadd.f32 %v5391, %v6329
  %6331 = vmatmul.bf16.gmra.mxu0 %v5518
  %v6332 = vpop.f32.mrf.mxu0
  %v6333 = vadd.f32 %v5396, %v6332
  %v6334 = vpop.f32.mrf.mxu0
  %v6335 = vadd.f32 %v5401, %v6334
  %6336 = vmatmul.bf16.gmra.mxu0 %v5521
  %v6337 = vpop.f32.mrf.mxu0
  %v6338 = vadd.f32 %v5406, %v6337
  %v6339 = vpop.f32.mrf.mxu0
  %v6340 = vadd.f32 %v5411, %v6339
  %6341 = vmatmul.bf16.gmra.mxu0 %v5524
  %v6342 = vpop.f32.mrf.mxu0
  %v6343 = vadd.f32 %v5416, %v6342
  %v6344 = vpop.f32.mrf.mxu0
  %v6345 = vadd.f32 %v5421, %v6344
  %6346 = vmatmul.bf16.gmra.mxu0 %v5527
  %v6347 = vpop.f32.mrf.mxu0
  %v6348 = vadd.f32 %v5426, %v6347
  %v6349 = vpop.f32.mrf.mxu0
  %v6350 = vadd.f32 %v5431, %v6349
  %6351 = vmatmul.bf16.gmra.mxu0 %v5530
  %v6352 = vpop.f32.mrf.mxu0
  %v6353 = vadd.f32 %v5436, %v6352
  %v6354 = vpop.f32.mrf.mxu0
  %v6355 = vadd.f32 %v5441, %v6354
  %6356 = vdwg.mxu0
  %v6357 = vmax.f32 %v6318, 0.0
  %v6358 = vmax.f32 %v6320, 0.0
  %v6359 = vmax.f32 %v6323, 0.0
  %v6360 = vmax.f32 %v6325, 0.0
  %v6361 = vmax.f32 %v6328, 0.0
  %v6362 = vmax.f32 %v6330, 0.0
  %v6363 = vmax.f32 %v6333, 0.0
  %v6364 = vmax.f32 %v6335, 0.0
  %v6365 = vmax.f32 %v6338, 0.0
  %v6366 = vmax.f32 %v6340, 0.0
  %v6367 = vmax.f32 %v6343, 0.0
  %v6368 = vmax.f32 %v6345, 0.0
  %v6369 = vmax.f32 %v6348, 0.0
  %v6370 = vmax.f32 %v6350, 0.0
  %v6371 = vmax.f32 %v6353, 0.0
  %v6372 = vmax.f32 %v6355, 0.0
  %v6373 = vld [vmem:[%s0 + $0xe8] sm:$0xf]
  %v6374 = vld [vmem:[%s0 + $0xec] sm:$0xf]
  %v6375 = vld [vmem:[%s0 + $0xf0] sm:$0xf]
  %v6376 = vld [vmem:[%s0 + $0xf4] sm:$0xf]
  %v6377 = vld [vmem:[%s0 + $0xf8] sm:$0xf]
  %v6378 = vld [vmem:[%s0 + $0xfc] sm:$0xf]
  %v6385 = vunpack.c.l.b16 %v6373
  %v6386 = vunpack.c.l.b16 %v6374
  %v6387 = vunpack.c.l.b16 %v6375
  %v6388 = vunpack.c.l.b16 %v6376
  %v6389 = vunpack.c.l.b16 %v6377
  %v6390 = vunpack.c.l.b16 %v6378
  %v6391 = vpack.c.b16 %v6386, %v6385
  %v6392 = vpack.c.b16 %v6388, %v6387
  %v6393 = vpack.c.b16 %v6390, %v6389
  %6397 = vmatpush.bf16.msra.mxu0 0
  %6398 = vmatpush.bf16.msra.mxu0 0
  %6399 = vmatpush.bf16.msra.mxu0 %v3189
  %6400 = vmatpush.bf16.msra.mxu0 %v3188
  %6401 = vmatpush.bf16.msra.mxu0 %v3187
  %6402 = vmatpush.bf16.msra.mxu0 %v6393
  %6403 = vmatpush.bf16.msra.mxu0 %v6392
  %6404 = vmatpush.bf16.msra.mxu0 %v6391
  %6405 = vmatmul.bf16.gmra.mxu0 %v5509
  %v6406 = vpop.f32.mrf.mxu0
  %v6407 = vadd.f32 %v5366, %v6406
  %v6408 = vpop.f32.mrf.mxu0
  %v6409 = vadd.f32 %v5371, %v6408
  %6410 = vmatmul.bf16.gmra.mxu0 %v5512
  %v6411 = vpop.f32.mrf.mxu0
  %v6412 = vadd.f32 %v5376, %v6411
  %v6413 = vpop.f32.mrf.mxu0
  %v6414 = vadd.f32 %v5381, %v6413
  %6415 = vmatmul.bf16.gmra.mxu0 %v5515
  %v6416 = vpop.f32.mrf.mxu0
  %v6417 = vadd.f32 %v5386, %v6416
  %v6418 = vpop.f32.mrf.mxu0
  %v6419 = vadd.f32 %v5391, %v6418
  %6420 = vmatmul.bf16.gmra.mxu0 %v5518
  %v6421 = vpop.f32.mrf.mxu0
  %v6422 = vadd.f32 %v5396, %v6421
  %v6423 = vpop.f32.mrf.mxu0
  %v6424 = vadd.f32 %v5401, %v6423
  %6425 = vmatmul.bf16.gmra.mxu0 %v5521
  %v6426 = vpop.f32.mrf.mxu0
  %v6427 = vadd.f32 %v5406, %v6426
  %v6428 = vpop.f32.mrf.mxu0
  %v6429 = vadd.f32 %v5411, %v6428
  %6430 = vmatmul.bf16.gmra.mxu0 %v5524
  %v6431 = vpop.f32.mrf.mxu0
  %v6432 = vadd.f32 %v5416, %v6431
  %v6433 = vpop.f32.mrf.mxu0
  %v6434 = vadd.f32 %v5421, %v6433
  %6435 = vmatmul.bf16.gmra.mxu0 %v5527
  %v6436 = vpop.f32.mrf.mxu0
  %v6437 = vadd.f32 %v5426, %v6436
  %v6438 = vpop.f32.mrf.mxu0
  %v6439 = vadd.f32 %v5431, %v6438
  %6440 = vmatmul.bf16.gmra.mxu0 %v5530
  %v6441 = vpop.f32.mrf.mxu0
  %v6442 = vadd.f32 %v5436, %v6441
  %v6443 = vpop.f32.mrf.mxu0
  %v6444 = vadd.f32 %v5441, %v6443
  %6445 = vdwg.mxu0
  %v6446 = vmax.f32 %v6407, 0.0
  %v6447 = vmax.f32 %v6409, 0.0
  %v6448 = vmax.f32 %v6412, 0.0
  %v6449 = vmax.f32 %v6414, 0.0
  %v6450 = vmax.f32 %v6417, 0.0
  %v6451 = vmax.f32 %v6419, 0.0
  %v6452 = vmax.f32 %v6422, 0.0
  %v6453 = vmax.f32 %v6424, 0.0
  %v6454 = vmax.f32 %v6427, 0.0
  %v6455 = vmax.f32 %v6429, 0.0
  %v6456 = vmax.f32 %v6432, 0.0
  %v6457 = vmax.f32 %v6434, 0.0
  %v6458 = vmax.f32 %v6437, 0.0
  %v6459 = vmax.f32 %v6439, 0.0
  %v6460 = vmax.f32 %v6442, 0.0
  %v6461 = vmax.f32 %v6444, 0.0
  %v6462 = vmax.f32 %v6357, %v6446
  %v6463 = vmax.f32 %v6358, %v6447
  %v6464 = vmax.f32 %v6359, %v6448
  %v6465 = vmax.f32 %v6360, %v6449
  %v6466 = vmax.f32 %v6361, %v6450
  %v6467 = vmax.f32 %v6362, %v6451
  %v6468 = vmax.f32 %v6363, %v6452
  %v6469 = vmax.f32 %v6364, %v6453
  %v6470 = vmax.f32 %v6365, %v6454
  %v6471 = vmax.f32 %v6366, %v6455
  %v6472 = vmax.f32 %v6367, %v6456
  %v6473 = vmax.f32 %v6368, %v6457
  %v6474 = vmax.f32 %v6369, %v6458
  %v6475 = vmax.f32 %v6370, %v6459
  %v6476 = vmax.f32 %v6371, %v6460
  %v6477 = vmax.f32 %v6372, %v6461
  %v6478 = vld [vmem:[%s0 + $0x100] sm:$0xf]
  %v6479 = vld [vmem:[%s0 + $0x104] sm:$0xf]
  %v6480 = vld [vmem:[%s0 + $0x108] sm:$0xf]
  %v6481 = vld [vmem:[%s0 + $0x10c] sm:$0xf]
  %v6482 = vld [vmem:[%s0 + $0x110] sm:$0xf]
  %v6483 = vld [vmem:[%s0 + $0x114] sm:$0xf]
  %v6490 = vunpack.c.l.b16 %v6478
  %v6491 = vunpack.c.l.b16 %v6479
  %v6492 = vunpack.c.l.b16 %v6480
  %v6493 = vunpack.c.l.b16 %v6481
  %v6494 = vunpack.c.l.b16 %v6482
  %v6495 = vunpack.c.l.b16 %v6483
  %v6496 = vpack.c.b16 %v6491, %v6490
  %v6497 = vpack.c.b16 %v6493, %v6492
  %v6498 = vpack.c.b16 %v6495, %v6494
  %6502 = vmatpush.bf16.msra.mxu0 0
  %6503 = vmatpush.bf16.msra.mxu0 0
  %6504 = vmatpush.bf16.msra.mxu0 %v3488
  %6505 = vmatpush.bf16.msra.mxu0 %v3487
  %6506 = vmatpush.bf16.msra.mxu0 %v3486
  %6507 = vmatpush.bf16.msra.mxu0 %v6498
  %6508 = vmatpush.bf16.msra.mxu0 %v6497
  %6509 = vmatpush.bf16.msra.mxu0 %v6496
  %6510 = vmatmul.bf16.gmra.mxu0 %v5509
  %v6511 = vpop.f32.mrf.mxu0
  %v6512 = vadd.f32 %v5366, %v6511
  %v6513 = vpop.f32.mrf.mxu0
  %v6514 = vadd.f32 %v5371, %v6513
  %6515 = vmatmul.bf16.gmra.mxu0 %v5512
  %v6516 = vpop.f32.mrf.mxu0
  %v6517 = vadd.f32 %v5376, %v6516
  %v6518 = vpop.f32.mrf.mxu0
  %v6519 = vadd.f32 %v5381, %v6518
  %6520 = vmatmul.bf16.gmra.mxu0 %v5515
  %v6521 = vpop.f32.mrf.mxu0
  %v6522 = vadd.f32 %v5386, %v6521
  %v6523 = vpop.f32.mrf.mxu0
  %v6524 = vadd.f32 %v5391, %v6523
  %6525 = vmatmul.bf16.gmra.mxu0 %v5518
  %v6526 = vpop.f32.mrf.mxu0
  %v6527 = vadd.f32 %v5396, %v6526
  %v6528 = vpop.f32.mrf.mxu0
  %v6529 = vadd.f32 %v5401, %v6528
  %6530 = vmatmul.bf16.gmra.mxu0 %v5521
  %v6531 = vpop.f32.mrf.mxu0
  %v6532 = vadd.f32 %v5406, %v6531
  %v6533 = vpop.f32.mrf.mxu0
  %v6534 = vadd.f32 %v5411, %v6533
  %6535 = vmatmul.bf16.gmra.mxu0 %v5524
  %v6536 = vpop.f32.mrf.mxu0
  %v6537 = vadd.f32 %v5416, %v6536
  %v6538 = vpop.f32.mrf.mxu0
  %v6539 = vadd.f32 %v5421, %v6538
  %6540 = vmatmul.bf16.gmra.mxu0 %v5527
  %v6541 = vpop.f32.mrf.mxu0
  %v6542 = vadd.f32 %v5426, %v6541
  %v6543 = vpop.f32.mrf.mxu0
  %v6544 = vadd.f32 %v5431, %v6543
  %6545 = vmatmul.bf16.gmra.mxu0 %v5530
  %v6546 = vpop.f32.mrf.mxu0
  %v6547 = vadd.f32 %v5436, %v6546
  %v6548 = vpop.f32.mrf.mxu0
  %v6549 = vadd.f32 %v5441, %v6548
  %6550 = vdwg.mxu0
  %v6551 = vmax.f32 %v6512, 0.0
  %v6552 = vmax.f32 %v6514, 0.0
  %v6553 = vmax.f32 %v6517, 0.0
  %v6554 = vmax.f32 %v6519, 0.0
  %v6555 = vmax.f32 %v6522, 0.0
  %v6556 = vmax.f32 %v6524, 0.0
  %v6557 = vmax.f32 %v6527, 0.0
  %v6558 = vmax.f32 %v6529, 0.0
  %v6559 = vmax.f32 %v6532, 0.0
  %v6560 = vmax.f32 %v6534, 0.0
  %v6561 = vmax.f32 %v6537, 0.0
  %v6562 = vmax.f32 %v6539, 0.0
  %v6563 = vmax.f32 %v6542, 0.0
  %v6564 = vmax.f32 %v6544, 0.0
  %v6565 = vmax.f32 %v6547, 0.0
  %v6566 = vmax.f32 %v6549, 0.0
  %v6567 = vld [vmem:[%s0 + $0x118] sm:$0xf]
  %v6568 = vld [vmem:[%s0 + $0x11c] sm:$0xf]
  %v6569 = vld [vmem:[%s0 + $0x120] sm:$0xf]
  %v6570 = vld [vmem:[%s0 + $0x124] sm:$0xf]
  %v6571 = vld [vmem:[%s0 + $0x128] sm:$0xf]
  %v6572 = vld [vmem:[%s0 + $0x12c] sm:$0xf]
  %v6579 = vunpack.c.l.b16 %v6567
  %v6580 = vunpack.c.l.b16 %v6568
  %v6581 = vunpack.c.l.b16 %v6569
  %v6582 = vunpack.c.l.b16 %v6570
  %v6583 = vunpack.c.l.b16 %v6571
  %v6584 = vunpack.c.l.b16 %v6572
  %v6585 = vpack.c.b16 %v6580, %v6579
  %v6586 = vpack.c.b16 %v6582, %v6581
  %v6587 = vpack.c.b16 %v6584, %v6583
  %6591 = vmatpush.bf16.msra.mxu0 0
  %6592 = vmatpush.bf16.msra.mxu0 0
  %6593 = vmatpush.bf16.msra.mxu0 %v3803
  %6594 = vmatpush.bf16.msra.mxu0 %v3802
  %6595 = vmatpush.bf16.msra.mxu0 %v3801
  %6596 = vmatpush.bf16.msra.mxu0 %v6587
  %6597 = vmatpush.bf16.msra.mxu0 %v6586
  %6598 = vmatpush.bf16.msra.mxu0 %v6585
  %6599 = vmatmul.bf16.gmra.mxu0 %v5509
  %v6600 = vpop.f32.mrf.mxu0
  %v6601 = vadd.f32 %v5366, %v6600
  %v6602 = vpop.f32.mrf.mxu0
  %v6603 = vadd.f32 %v5371, %v6602
  %6604 = vmatmul.bf16.gmra.mxu0 %v5512
  %v6605 = vpop.f32.mrf.mxu0
  %v6606 = vadd.f32 %v5376, %v6605
  %v6607 = vpop.f32.mrf.mxu0
  %v6608 = vadd.f32 %v5381, %v6607
  %6609 = vmatmul.bf16.gmra.mxu0 %v5515
  %v6610 = vpop.f32.mrf.mxu0
  %v6611 = vadd.f32 %v5386, %v6610
  %v6612 = vpop.f32.mrf.mxu0
  %v6613 = vadd.f32 %v5391, %v6612
  %6614 = vmatmul.bf16.gmra.mxu0 %v5518
  %v6615 = vpop.f32.mrf.mxu0
  %v6616 = vadd.f32 %v5396, %v6615
  %v6617 = vpop.f32.mrf.mxu0
  %v6618 = vadd.f32 %v5401, %v6617
  %6619 = vmatmul.bf16.gmra.mxu0 %v5521
  %v6620 = vpop.f32.mrf.mxu0
  %v6621 = vadd.f32 %v5406, %v6620
  %v6622 = vpop.f32.mrf.mxu0
  %v6623 = vadd.f32 %v5411, %v6622
  %6624 = vmatmul.bf16.gmra.mxu0 %v5524
  %v6625 = vpop.f32.mrf.mxu0
  %v6626 = vadd.f32 %v5416, %v6625
  %v6627 = vpop.f32.mrf.mxu0
  %v6628 = vadd.f32 %v5421, %v6627
  %6629 = vmatmul.bf16.gmra.mxu0 %v5527
  %v6630 = vpop.f32.mrf.mxu0
  %v6631 = vadd.f32 %v5426, %v6630
  %v6632 = vpop.f32.mrf.mxu0
  %v6633 = vadd.f32 %v5431, %v6632
  %6634 = vmatmul.bf16.gmra.mxu0 %v5530
  %v6635 = vpop.f32.mrf.mxu0
  %v6636 = vadd.f32 %v5436, %v6635
  %v6637 = vpop.f32.mrf.mxu0
  %v6638 = vadd.f32 %v5441, %v6637
  %6639 = vdwg.mxu0
  %v6640 = vmax.f32 %v6601, 0.0
  %v6641 = vmax.f32 %v6603, 0.0
  %v6642 = vmax.f32 %v6606, 0.0
  %v6643 = vmax.f32 %v6608, 0.0
  %v6644 = vmax.f32 %v6611, 0.0
  %v6645 = vmax.f32 %v6613, 0.0
  %v6646 = vmax.f32 %v6616, 0.0
  %v6647 = vmax.f32 %v6618, 0.0
  %v6648 = vmax.f32 %v6621, 0.0
  %v6649 = vmax.f32 %v6623, 0.0
  %v6650 = vmax.f32 %v6626, 0.0
  %v6651 = vmax.f32 %v6628, 0.0
  %v6652 = vmax.f32 %v6631, 0.0
  %v6653 = vmax.f32 %v6633, 0.0
  %v6654 = vmax.f32 %v6636, 0.0
  %v6655 = vmax.f32 %v6638, 0.0
  %v6656 = vmax.f32 %v6551, %v6640
  %v6657 = vmax.f32 %v6552, %v6641
  %v6658 = vmax.f32 %v6553, %v6642
  %v6659 = vmax.f32 %v6554, %v6643
  %v6660 = vmax.f32 %v6555, %v6644
  %v6661 = vmax.f32 %v6556, %v6645
  %v6662 = vmax.f32 %v6557, %v6646
  %v6663 = vmax.f32 %v6558, %v6647
  %v6664 = vmax.f32 %v6559, %v6648
  %v6665 = vmax.f32 %v6560, %v6649
  %v6666 = vmax.f32 %v6561, %v6650
  %v6667 = vmax.f32 %v6562, %v6651
  %v6668 = vmax.f32 %v6563, %v6652
  %v6669 = vmax.f32 %v6564, %v6653
  %v6670 = vmax.f32 %v6565, %v6654
  %v6671 = vmax.f32 %v6566, %v6655
  %v6672 = vld [vmem:[%s0 + $0x130] sm:$0xf]
  %v6673 = vld [vmem:[%s0 + $0x134] sm:$0xf]
  %v6674 = vld [vmem:[%s0 + $0x138] sm:$0xf]
  %v6675 = vld [vmem:[%s0 + $0x13c] sm:$0xf]
  %v6676 = vld [vmem:[%s0 + $0x140] sm:$0xf]
  %v6677 = vld [vmem:[%s0 + $0x144] sm:$0xf]
  %v6684 = vunpack.c.l.b16 %v6672
  %v6685 = vunpack.c.l.b16 %v6673
  %v6686 = vunpack.c.l.b16 %v6674
  %v6687 = vunpack.c.l.b16 %v6675
  %v6688 = vunpack.c.l.b16 %v6676
  %v6689 = vunpack.c.l.b16 %v6677
  %v6690 = vpack.c.b16 %v6685, %v6684
  %v6691 = vpack.c.b16 %v6687, %v6686
  %v6692 = vpack.c.b16 %v6689, %v6688
  %6696 = vmatpush.bf16.msra.mxu0 0
  %6697 = vmatpush.bf16.msra.mxu0 0
  %6698 = vmatpush.bf16.msra.mxu0 %v4102
  %6699 = vmatpush.bf16.msra.mxu0 %v4101
  %6700 = vmatpush.bf16.msra.mxu0 %v4100
  %6701 = vmatpush.bf16.msra.mxu0 %v6692
  %6702 = vmatpush.bf16.msra.mxu0 %v6691
  %6703 = vmatpush.bf16.msra.mxu0 %v6690
  %6704 = vmatmul.bf16.gmra.mxu0 %v5509
  %v6705 = vpop.f32.mrf.mxu0
  %v6706 = vadd.f32 %v5366, %v6705
  %v6707 = vpop.f32.mrf.mxu0
  %v6708 = vadd.f32 %v5371, %v6707
  %6709 = vmatmul.bf16.gmra.mxu0 %v5512
  %v6710 = vpop.f32.mrf.mxu0
  %v6711 = vadd.f32 %v5376, %v6710
  %v6712 = vpop.f32.mrf.mxu0
  %v6713 = vadd.f32 %v5381, %v6712
  %6714 = vmatmul.bf16.gmra.mxu0 %v5515
  %v6715 = vpop.f32.mrf.mxu0
  %v6716 = vadd.f32 %v5386, %v6715
  %v6717 = vpop.f32.mrf.mxu0
  %v6718 = vadd.f32 %v5391, %v6717
  %6719 = vmatmul.bf16.gmra.mxu0 %v5518
  %v6720 = vpop.f32.mrf.mxu0
  %v6721 = vadd.f32 %v5396, %v6720
  %v6722 = vpop.f32.mrf.mxu0
  %v6723 = vadd.f32 %v5401, %v6722
  %6724 = vmatmul.bf16.gmra.mxu0 %v5521
  %v6725 = vpop.f32.mrf.mxu0
  %v6726 = vadd.f32 %v5406, %v6725
  %v6727 = vpop.f32.mrf.mxu0
  %v6728 = vadd.f32 %v5411, %v6727
  %6729 = vmatmul.bf16.gmra.mxu0 %v5524
  %v6730 = vpop.f32.mrf.mxu0
  %v6731 = vadd.f32 %v5416, %v6730
  %v6732 = vpop.f32.mrf.mxu0
  %v6733 = vadd.f32 %v5421, %v6732
  %6734 = vmatmul.bf16.gmra.mxu0 %v5527
  %v6735 = vpop.f32.mrf.mxu0
  %v6736 = vadd.f32 %v5426, %v6735
  %v6737 = vpop.f32.mrf.mxu0
  %v6738 = vadd.f32 %v5431, %v6737
  %6739 = vmatmul.bf16.gmra.mxu0 %v5530
  %v6740 = vpop.f32.mrf.mxu0
  %v6741 = vadd.f32 %v5436, %v6740
  %v6742 = vpop.f32.mrf.mxu0
  %v6743 = vadd.f32 %v5441, %v6742
  %6744 = vdwg.mxu0
  %v6745 = vmax.f32 %v6706, 0.0
  %v6746 = vmax.f32 %v6708, 0.0
  %v6747 = vmax.f32 %v6711, 0.0
  %v6748 = vmax.f32 %v6713, 0.0
  %v6749 = vmax.f32 %v6716, 0.0
  %v6750 = vmax.f32 %v6718, 0.0
  %v6751 = vmax.f32 %v6721, 0.0
  %v6752 = vmax.f32 %v6723, 0.0
  %v6753 = vmax.f32 %v6726, 0.0
  %v6754 = vmax.f32 %v6728, 0.0
  %v6755 = vmax.f32 %v6731, 0.0
  %v6756 = vmax.f32 %v6733, 0.0
  %v6757 = vmax.f32 %v6736, 0.0
  %v6758 = vmax.f32 %v6738, 0.0
  %v6759 = vmax.f32 %v6741, 0.0
  %v6760 = vmax.f32 %v6743, 0.0
  %v6761 = vld [vmem:[%s0 + $0x148] sm:$0xf]
  %v6762 = vld [vmem:[%s0 + $0x14c] sm:$0xf]
  %v6763 = vld [vmem:[%s0 + $0x150] sm:$0xf]
  %v6764 = vld [vmem:[%s0 + $0x154] sm:$0xf]
  %v6765 = vld [vmem:[%s0 + $0x158] sm:$0xf]
  %v6766 = vld [vmem:[%s0 + $0x15c] sm:$0xf]
  %v6773 = vunpack.c.l.b16 %v6761
  %v6774 = vunpack.c.l.b16 %v6762
  %v6775 = vunpack.c.l.b16 %v6763
  %v6776 = vunpack.c.l.b16 %v6764
  %v6777 = vunpack.c.l.b16 %v6765
  %v6778 = vunpack.c.l.b16 %v6766
  %v6779 = vpack.c.b16 %v6774, %v6773
  %v6780 = vpack.c.b16 %v6776, %v6775
  %v6781 = vpack.c.b16 %v6778, %v6777
  %6785 = vmatpush.bf16.msra.mxu0 0
  %6786 = vmatpush.bf16.msra.mxu0 0
  %6787 = vmatpush.bf16.msra.mxu0 %v4417
  %6788 = vmatpush.bf16.msra.mxu0 %v4416
  %6789 = vmatpush.bf16.msra.mxu0 %v4415
  %6790 = vmatpush.bf16.msra.mxu0 %v6781
  %6791 = vmatpush.bf16.msra.mxu0 %v6780
  %6792 = vmatpush.bf16.msra.mxu0 %v6779
  %6793 = vmatmul.bf16.gmra.mxu0 %v5509
  %v6794 = vpop.f32.mrf.mxu0
  %v6795 = vadd.f32 %v5366, %v6794
  %v6796 = vpop.f32.mrf.mxu0
  %v6797 = vadd.f32 %v5371, %v6796
  %6798 = vmatmul.bf16.gmra.mxu0 %v5512
  %v6799 = vpop.f32.mrf.mxu0
  %v6800 = vadd.f32 %v5376, %v6799
  %v6801 = vpop.f32.mrf.mxu0
  %v6802 = vadd.f32 %v5381, %v6801
  %6803 = vmatmul.bf16.gmra.mxu0 %v5515
  %v6804 = vpop.f32.mrf.mxu0
  %v6805 = vadd.f32 %v5386, %v6804
  %v6806 = vpop.f32.mrf.mxu0
  %v6807 = vadd.f32 %v5391, %v6806
  %6808 = vmatmul.bf16.gmra.mxu0 %v5518
  %v6809 = vpop.f32.mrf.mxu0
  %v6810 = vadd.f32 %v5396, %v6809
  %v6811 = vpop.f32.mrf.mxu0
  %v6812 = vadd.f32 %v5401, %v6811
  %6813 = vmatmul.bf16.gmra.mxu0 %v5521
  %v6814 = vpop.f32.mrf.mxu0
  %v6815 = vadd.f32 %v5406, %v6814
  %v6816 = vpop.f32.mrf.mxu0
  %v6817 = vadd.f32 %v5411, %v6816
  %6818 = vmatmul.bf16.gmra.mxu0 %v5524
  %v6819 = vpop.f32.mrf.mxu0
  %v6820 = vadd.f32 %v5416, %v6819
  %v6821 = vpop.f32.mrf.mxu0
  %v6822 = vadd.f32 %v5421, %v6821
  %6823 = vmatmul.bf16.gmra.mxu0 %v5527
  %v6824 = vpop.f32.mrf.mxu0
  %v6825 = vadd.f32 %v5426, %v6824
  %v6826 = vpop.f32.mrf.mxu0
  %v6827 = vadd.f32 %v5431, %v6826
  %6828 = vmatmul.bf16.gmra.mxu0 %v5530
  %v6829 = vpop.f32.mrf.mxu0
  %v6830 = vadd.f32 %v5436, %v6829
  %v6831 = vpop.f32.mrf.mxu0
  %v6832 = vadd.f32 %v5441, %v6831
  %6833 = vdwg.mxu0
  %v6834 = vmax.f32 %v6795, 0.0
  %v6835 = vmax.f32 %v6797, 0.0
  %v6836 = vmax.f32 %v6800, 0.0
  %v6837 = vmax.f32 %v6802, 0.0
  %v6838 = vmax.f32 %v6805, 0.0
  %v6839 = vmax.f32 %v6807, 0.0
  %v6840 = vmax.f32 %v6810, 0.0
  %v6841 = vmax.f32 %v6812, 0.0
  %v6842 = vmax.f32 %v6815, 0.0
  %v6843 = vmax.f32 %v6817, 0.0
  %v6844 = vmax.f32 %v6820, 0.0
  %v6845 = vmax.f32 %v6822, 0.0
  %v6846 = vmax.f32 %v6825, 0.0
  %v6847 = vmax.f32 %v6827, 0.0
  %v6848 = vmax.f32 %v6830, 0.0
  %v6849 = vmax.f32 %v6832, 0.0
  %v6850 = vmax.f32 %v6745, %v6834
  %v6851 = vmax.f32 %v6746, %v6835
  %v6852 = vmax.f32 %v6747, %v6836
  %v6853 = vmax.f32 %v6748, %v6837
  %v6854 = vmax.f32 %v6749, %v6838
  %v6855 = vmax.f32 %v6750, %v6839
  %v6856 = vmax.f32 %v6751, %v6840
  %v6857 = vmax.f32 %v6752, %v6841
  %v6858 = vmax.f32 %v6753, %v6842
  %v6859 = vmax.f32 %v6754, %v6843
  %v6860 = vmax.f32 %v6755, %v6844
  %v6861 = vmax.f32 %v6756, %v6845
  %v6862 = vmax.f32 %v6757, %v6846
  %v6863 = vmax.f32 %v6758, %v6847
  %v6864 = vmax.f32 %v6759, %v6848
  %v6865 = vmax.f32 %v6760, %v6849
  %v6866 = vld [vmem:[%s0 + $0x160] sm:$0xf]
  %v6867 = vld [vmem:[%s0 + $0x164] sm:$0xf]
  %v6868 = vld [vmem:[%s0 + $0x168] sm:$0xf]
  %v6869 = vld [vmem:[%s0 + $0x16c] sm:$0xf]
  %v6870 = vld [vmem:[%s0 + $0x170] sm:$0xf]
  %v6871 = vld [vmem:[%s0 + $0x174] sm:$0xf]
  %v6878 = vunpack.c.l.b16 %v6866
  %v6879 = vunpack.c.l.b16 %v6867
  %v6880 = vunpack.c.l.b16 %v6868
  %v6881 = vunpack.c.l.b16 %v6869
  %v6882 = vunpack.c.l.b16 %v6870
  %v6883 = vunpack.c.l.b16 %v6871
  %v6884 = vpack.c.b16 %v6879, %v6878
  %v6885 = vpack.c.b16 %v6881, %v6880
  %v6886 = vpack.c.b16 %v6883, %v6882
  %6890 = vmatpush.bf16.msra.mxu0 0
  %6891 = vmatpush.bf16.msra.mxu0 0
  %6892 = vmatpush.bf16.msra.mxu0 %v4716
  %6893 = vmatpush.bf16.msra.mxu0 %v4715
  %6894 = vmatpush.bf16.msra.mxu0 %v4714
  %6895 = vmatpush.bf16.msra.mxu0 %v6886
  %6896 = vmatpush.bf16.msra.mxu0 %v6885
  %6897 = vmatpush.bf16.msra.mxu0 %v6884
  %6898 = vmatmul.bf16.gmra.mxu0 %v5509
  %v6899 = vpop.f32.mrf.mxu0
  %v6900 = vadd.f32 %v5366, %v6899
  %v6901 = vpop.f32.mrf.mxu0
  %v6902 = vadd.f32 %v5371, %v6901
  %6903 = vmatmul.bf16.gmra.mxu0 %v5512
  %v6904 = vpop.f32.mrf.mxu0
  %v6905 = vadd.f32 %v5376, %v6904
  %v6906 = vpop.f32.mrf.mxu0
  %v6907 = vadd.f32 %v5381, %v6906
  %6908 = vmatmul.bf16.gmra.mxu0 %v5515
  %v6909 = vpop.f32.mrf.mxu0
  %v6910 = vadd.f32 %v5386, %v6909
  %v6911 = vpop.f32.mrf.mxu0
  %v6912 = vadd.f32 %v5391, %v6911
  %6913 = vmatmul.bf16.gmra.mxu0 %v5518
  %v6914 = vpop.f32.mrf.mxu0
  %v6915 = vadd.f32 %v5396, %v6914
  %v6916 = vpop.f32.mrf.mxu0
  %v6917 = vadd.f32 %v5401, %v6916
  %6918 = vmatmul.bf16.gmra.mxu0 %v5521
  %v6919 = vpop.f32.mrf.mxu0
  %v6920 = vadd.f32 %v5406, %v6919
  %v6921 = vpop.f32.mrf.mxu0
  %v6922 = vadd.f32 %v5411, %v6921
  %6923 = vmatmul.bf16.gmra.mxu0 %v5524
  %v6924 = vpop.f32.mrf.mxu0
  %v6925 = vadd.f32 %v5416, %v6924
  %v6926 = vpop.f32.mrf.mxu0
  %v6927 = vadd.f32 %v5421, %v6926
  %6928 = vmatmul.bf16.gmra.mxu0 %v5527
  %v6929 = vpop.f32.mrf.mxu0
  %v6930 = vadd.f32 %v5426, %v6929
  %v6931 = vpop.f32.mrf.mxu0
  %v6932 = vadd.f32 %v5431, %v6931
  %6933 = vmatmul.bf16.gmra.mxu0 %v5530
  %v6934 = vpop.f32.mrf.mxu0
  %v6935 = vadd.f32 %v5436, %v6934
  %v6936 = vpop.f32.mrf.mxu0
  %v6937 = vadd.f32 %v5441, %v6936
  %6938 = vdwg.mxu0
  %v6939 = vmax.f32 %v6900, 0.0
  %v6940 = vmax.f32 %v6902, 0.0
  %v6941 = vmax.f32 %v6905, 0.0
  %v6942 = vmax.f32 %v6907, 0.0
  %v6943 = vmax.f32 %v6910, 0.0
  %v6944 = vmax.f32 %v6912, 0.0
  %v6945 = vmax.f32 %v6915, 0.0
  %v6946 = vmax.f32 %v6917, 0.0
  %v6947 = vmax.f32 %v6920, 0.0
  %v6948 = vmax.f32 %v6922, 0.0
  %v6949 = vmax.f32 %v6925, 0.0
  %v6950 = vmax.f32 %v6927, 0.0
  %v6951 = vmax.f32 %v6930, 0.0
  %v6952 = vmax.f32 %v6932, 0.0
  %v6953 = vmax.f32 %v6935, 0.0
  %v6954 = vmax.f32 %v6937, 0.0
  %v6955 = vld [vmem:[%s0 + $0x178] sm:$0xf]
  %v6956 = vld [vmem:[%s0 + $0x17c] sm:$0xf]
  %v6957 = vld [vmem:[%s0 + $0x180] sm:$0xf]
  %v6958 = vld [vmem:[%s0 + $0x184] sm:$0xf]
  %v6959 = vld [vmem:[%s0 + $0x188] sm:$0xf]
  %v6960 = vld [vmem:[%s0 + $0x18c] sm:$0xf]
  %v6967 = vunpack.c.l.b16 %v6955
  %v6968 = vunpack.c.l.b16 %v6956
  %v6969 = vunpack.c.l.b16 %v6957
  %v6970 = vunpack.c.l.b16 %v6958
  %v6971 = vunpack.c.l.b16 %v6959
  %v6972 = vunpack.c.l.b16 %v6960
  %v6973 = vpack.c.b16 %v6968, %v6967
  %v6974 = vpack.c.b16 %v6970, %v6969
  %v6975 = vpack.c.b16 %v6972, %v6971
  %6979 = vmatpush.bf16.msra.mxu0 0
  %6980 = vmatpush.bf16.msra.mxu0 0
  %6981 = vmatpush.bf16.msra.mxu0 %v5031
  %6982 = vmatpush.bf16.msra.mxu0 %v5030
  %6983 = vmatpush.bf16.msra.mxu0 %v5029
  %6984 = vmatpush.bf16.msra.mxu0 %v6975
  %6985 = vmatpush.bf16.msra.mxu0 %v6974
  %6986 = vmatpush.bf16.msra.mxu0 %v6973
  %6987 = vmatmul.bf16.gmra.mxu0 %v5509
  %v6988 = vpop.f32.mrf.mxu0
  %v6989 = vadd.f32 %v5366, %v6988
  %v6990 = vpop.f32.mrf.mxu0
  %v6991 = vadd.f32 %v5371, %v6990
  %6992 = vmatmul.bf16.gmra.mxu0 %v5512
  %v6993 = vpop.f32.mrf.mxu0
  %v6994 = vadd.f32 %v5376, %v6993
  %v6995 = vpop.f32.mrf.mxu0
  %v6996 = vadd.f32 %v5381, %v6995
  %6997 = vmatmul.bf16.gmra.mxu0 %v5515
  %v6998 = vpop.f32.mrf.mxu0
  %v6999 = vadd.f32 %v5386, %v6998
  %v7000 = vpop.f32.mrf.mxu0
  %v7001 = vadd.f32 %v5391, %v7000
  %7002 = vmatmul.bf16.gmra.mxu0 %v5518
  %v7003 = vpop.f32.mrf.mxu0
  %v7004 = vadd.f32 %v5396, %v7003
  %v7005 = vpop.f32.mrf.mxu0
  %v7006 = vadd.f32 %v5401, %v7005
  %7007 = vmatmul.bf16.gmra.mxu0 %v5521
  %v7008 = vpop.f32.mrf.mxu0
  %v7009 = vadd.f32 %v5406, %v7008
  %v7010 = vpop.f32.mrf.mxu0
  %v7011 = vadd.f32 %v5411, %v7010
  %7012 = vmatmul.bf16.gmra.mxu0 %v5524
  %v7013 = vpop.f32.mrf.mxu0
  %v7014 = vadd.f32 %v5416, %v7013
  %v7015 = vpop.f32.mrf.mxu0
  %v7016 = vadd.f32 %v5421, %v7015
  %7017 = vmatmul.bf16.gmra.mxu0 %v5527
  %v7018 = vpop.f32.mrf.mxu0
  %v7019 = vadd.f32 %v5426, %v7018
  %v7020 = vpop.f32.mrf.mxu0
  %v7021 = vadd.f32 %v5431, %v7020
  %7022 = vmatmul.bf16.gmra.mxu0 %v5530
  %v7023 = vpop.f32.mrf.mxu0
  %v7024 = vadd.f32 %v5436, %v7023
  %v7025 = vpop.f32.mrf.mxu0
  %v7026 = vadd.f32 %v5441, %v7025
  %7027 = vdwg.mxu0
  %v7028 = vmax.f32 %v6989, 0.0
  %v7029 = vmax.f32 %v6991, 0.0
  %v7030 = vmax.f32 %v6994, 0.0
  %v7031 = vmax.f32 %v6996, 0.0
  %v7032 = vmax.f32 %v6999, 0.0
  %v7033 = vmax.f32 %v7001, 0.0
  %v7034 = vmax.f32 %v7004, 0.0
  %v7035 = vmax.f32 %v7006, 0.0
  %v7036 = vmax.f32 %v7009, 0.0
  %v7037 = vmax.f32 %v7011, 0.0
  %v7038 = vmax.f32 %v7014, 0.0
  %v7039 = vmax.f32 %v7016, 0.0
  %v7040 = vmax.f32 %v7019, 0.0
  %v7041 = vmax.f32 %v7021, 0.0
  %v7042 = vmax.f32 %v7024, 0.0
  %v7043 = vmax.f32 %v7026, 0.0
  %v7044 = vmax.f32 %v6939, %v7028
  %v7045 = vmax.f32 %v6940, %v7029
  %v7046 = vmax.f32 %v6941, %v7030
  %v7047 = vmax.f32 %v6942, %v7031
  %v7048 = vmax.f32 %v6943, %v7032
  %v7049 = vmax.f32 %v6944, %v7033
  %v7050 = vmax.f32 %v6945, %v7034
  %v7051 = vmax.f32 %v6946, %v7035
  %v7052 = vmax.f32 %v6947, %v7036
  %v7053 = vmax.f32 %v6948, %v7037
  %v7054 = vmax.f32 %v6949, %v7038
  %v7055 = vmax.f32 %v6950, %v7039
  %v7056 = vmax.f32 %v6951, %v7040
  %v7057 = vmax.f32 %v6952, %v7041
  %v7058 = vmax.f32 %v6953, %v7042
  %v7059 = vmax.f32 %v6954, %v7043
  %v7060 = vadd.f32 %v5686, %v5880
  %v7061 = vadd.f32 %v5687, %v5881
  %v7062 = vadd.f32 %v5688, %v5882
  %v7063 = vadd.f32 %v5689, %v5883
  %v7064 = vadd.f32 %v5690, %v5884
  %v7065 = vadd.f32 %v5691, %v5885
  %v7066 = vadd.f32 %v5692, %v5886
  %v7067 = vadd.f32 %v5693, %v5887
  %v7068 = vadd.f32 %v5694, %v5888
  %v7069 = vadd.f32 %v5695, %v5889
  %v7070 = vadd.f32 %v5696, %v5890
  %v7071 = vadd.f32 %v5697, %v5891
  %v7072 = vadd.f32 %v5698, %v5892
  %v7073 = vadd.f32 %v5699, %v5893
  %v7074 = vadd.f32 %v5700, %v5894
  %v7075 = vadd.f32 %v5701, %v5895
  %v7076 = vadd.f32 %v7060, %v7068
  %v7077 = vadd.f32 %v7061, %v7069
  %v7078 = vadd.f32 %v7062, %v7070
  %v7079 = vadd.f32 %v7063, %v7071
  %v7080 = vadd.f32 %v7064, %v7072
  %v7081 = vadd.f32 %v7065, %v7073
  %v7082 = vadd.f32 %v7066, %v7074
  %v7083 = vadd.f32 %v7067, %v7075
  %v7084 = vmul.f32 %v7076, 0.25
  %v7085 = vmul.f32 %v7077, 0.25
  %v7086 = vmul.f32 %v7078, 0.25
  %v7087 = vmul.f32 %v7079, 0.25
  %v7088 = vmul.f32 %v7080, 0.25
  %v7089 = vmul.f32 %v7081, 0.25
  %v7090 = vmul.f32 %v7082, 0.25
  %v7091 = vmul.f32 %v7083, 0.25
  %v7092 = vpack.c.bf16 %v7085, %v7084
  %v7093 = vpack.c.bf16 %v7087, %v7086
  %v7094 = vpack.c.bf16 %v7089, %v7088
  %v7095 = vpack.c.bf16 %v7091, %v7090
  %v7096 = vld [vmem:[%s5 + $0x10] sm:$0xf]
  %v7098 = vsel %vm5190, %v7096, 0
  %7100 = vmatpush.bf16.msra.mxu0 0
  %7101 = vmatpush.bf16.msra.mxu0 0
  %7102 = vmatpush.bf16.msra.mxu0 0
  %7103 = vmatpush.bf16.msra.mxu0 0
  %7104 = vmatpush.bf16.msra.mxu0 %v7095
  %7105 = vmatpush.bf16.msra.mxu0 %v7094
  %7106 = vmatpush.bf16.msra.mxu0 %v7093
  %7107 = vmatpush.bf16.msra.mxu0 %v7092
  %7108 = vmatmul.bf16.gmra.mxu0 %v7098
  %v7109 = vpop.f32.mrf.mxu0
  %v7110 = vadd.f32 0.0, %v7109
  %v7111 = vpop.f32.mrf.mxu0
  %7112 = vdwg.mxu0
  %v7113 = vadd.f32 %v5330, %v7110
  %v7114 = vadd.f32 %v6074, %v6268
  %v7115 = vadd.f32 %v6075, %v6269
  %v7116 = vadd.f32 %v6076, %v6270
  %v7117 = vadd.f32 %v6077, %v6271
  %v7118 = vadd.f32 %v6078, %v6272
  %v7119 = vadd.f32 %v6079, %v6273
  %v7120 = vadd.f32 %v6080, %v6274
  %v7121 = vadd.f32 %v6081, %v6275
  %v7122 = vadd.f32 %v6082, %v6276
  %v7123 = vadd.f32 %v6083, %v6277
  %v7124 = vadd.f32 %v6084, %v6278
  %v7125 = vadd.f32 %v6085, %v6279
  %v7126 = vadd.f32 %v6086, %v6280
  %v7127 = vadd.f32 %v6087, %v6281
  %v7128 = vadd.f32 %v6088, %v6282
  %v7129 = vadd.f32 %v6089, %v6283
  %v7130 = vadd.f32 %v7114, %v7122
  %v7131 = vadd.f32 %v7115, %v7123
  %v7132 = vadd.f32 %v7116, %v7124
  %v7133 = vadd.f32 %v7117, %v7125
  %v7134 = vadd.f32 %v7118, %v7126
  %v7135 = vadd.f32 %v7119, %v7127
  %v7136 = vadd.f32 %v7120, %v7128
  %v7137 = vadd.f32 %v7121, %v7129
  %v7138 = vmul.f32 %v7130, 0.25
  %v7139 = vmul.f32 %v7131, 0.25
  %v7140 = vmul.f32 %v7132, 0.25
  %v7141 = vmul.f32 %v7133, 0.25
  %v7142 = vmul.f32 %v7134, 0.25
  %v7143 = vmul.f32 %v7135, 0.25
  %v7144 = vmul.f32 %v7136, 0.25
  %v7145 = vmul.f32 %v7137, 0.25
  %v7146 = vpack.c.bf16 %v7139, %v7138
  %v7147 = vpack.c.bf16 %v7141, %v7140
  %v7148 = vpack.c.bf16 %v7143, %v7142
  %v7149 = vpack.c.bf16 %v7145, %v7144
  %v7150 = vld [vmem:[%s5 + $0x14] sm:$0xf]
  %v7152 = vsel %vm5190, %v7150, 0
  %7154 = vmatpush.bf16.msra.mxu0 0
  %7155 = vmatpush.bf16.msra.mxu0 0
  %7156 = vmatpush.bf16.msra.mxu0 0
  %7157 = vmatpush.bf16.msra.mxu0 0
  %7158 = vmatpush.bf16.msra.mxu0 %v7149
  %7159 = vmatpush.bf16.msra.mxu0 %v7148
  %7160 = vmatpush.bf16.msra.mxu0 %v7147
  %7161 = vmatpush.bf16.msra.mxu0 %v7146
  %7162 = vmatmul.bf16.gmra.mxu0 %v7152
  %v7163 = vpop.f32.mrf.mxu0
  %v7164 = vadd.f32 0.0, %v7163
  %v7165 = vpop.f32.mrf.mxu0
  %7166 = vdwg.mxu0
  %v7167 = vadd.f32 %v7113, %v7164
  %v7168 = vadd.f32 %v6462, %v6656
  %v7169 = vadd.f32 %v6463, %v6657
  %v7170 = vadd.f32 %v6464, %v6658
  %v7171 = vadd.f32 %v6465, %v6659
  %v7172 = vadd.f32 %v6466, %v6660
  %v7173 = vadd.f32 %v6467, %v6661
  %v7174 = vadd.f32 %v6468, %v6662
  %v7175 = vadd.f32 %v6469, %v6663
  %v7176 = vadd.f32 %v6470, %v6664
  %v7177 = vadd.f32 %v6471, %v6665
  %v7178 = vadd.f32 %v6472, %v6666
  %v7179 = vadd.f32 %v6473, %v6667
  %v7180 = vadd.f32 %v6474, %v6668
  %v7181 = vadd.f32 %v6475, %v6669
  %v7182 = vadd.f32 %v6476, %v6670
  %v7183 = vadd.f32 %v6477, %v6671
  %v7184 = vadd.f32 %v7168, %v7176
  %v7185 = vadd.f32 %v7169, %v7177
  %v7186 = vadd.f32 %v7170, %v7178
  %v7187 = vadd.f32 %v7171, %v7179
  %v7188 = vadd.f32 %v7172, %v7180
  %v7189 = vadd.f32 %v7173, %v7181
  %v7190 = vadd.f32 %v7174, %v7182
  %v7191 = vadd.f32 %v7175, %v7183
  %v7192 = vmul.f32 %v7184, 0.25
  %v7193 = vmul.f32 %v7185, 0.25
  %v7194 = vmul.f32 %v7186, 0.25
  %v7195 = vmul.f32 %v7187, 0.25
  %v7196 = vmul.f32 %v7188, 0.25
  %v7197 = vmul.f32 %v7189, 0.25
  %v7198 = vmul.f32 %v7190, 0.25
  %v7199 = vmul.f32 %v7191, 0.25
  %v7200 = vpack.c.bf16 %v7193, %v7192
  %v7201 = vpack.c.bf16 %v7195, %v7194
  %v7202 = vpack.c.bf16 %v7197, %v7196
  %v7203 = vpack.c.bf16 %v7199, %v7198
  %v7204 = vld [vmem:[%s5 + $0x18] sm:$0xf]
  %v7206 = vsel %vm5190, %v7204, 0
  %7208 = vmatpush.bf16.msra.mxu0 0
  %7209 = vmatpush.bf16.msra.mxu0 0
  %7210 = vmatpush.bf16.msra.mxu0 0
  %7211 = vmatpush.bf16.msra.mxu0 0
  %7212 = vmatpush.bf16.msra.mxu0 %v7203
  %7213 = vmatpush.bf16.msra.mxu0 %v7202
  %7214 = vmatpush.bf16.msra.mxu0 %v7201
  %7215 = vmatpush.bf16.msra.mxu0 %v7200
  %7216 = vmatmul.bf16.gmra.mxu0 %v7206
  %v7217 = vpop.f32.mrf.mxu0
  %v7218 = vadd.f32 0.0, %v7217
  %v7219 = vpop.f32.mrf.mxu0
  %7220 = vdwg.mxu0
  %v7221 = vadd.f32 %v7167, %v7218
  %v7222 = vadd.f32 %v6850, %v7044
  %v7223 = vadd.f32 %v6851, %v7045
  %v7224 = vadd.f32 %v6852, %v7046
  %v7225 = vadd.f32 %v6853, %v7047
  %v7226 = vadd.f32 %v6854, %v7048
  %v7227 = vadd.f32 %v6855, %v7049
  %v7228 = vadd.f32 %v6856, %v7050
  %v7229 = vadd.f32 %v6857, %v7051
  %v7230 = vadd.f32 %v6858, %v7052
  %v7231 = vadd.f32 %v6859, %v7053
  %v7232 = vadd.f32 %v6860, %v7054
  %v7233 = vadd.f32 %v6861, %v7055
  %v7234 = vadd.f32 %v6862, %v7056
  %v7235 = vadd.f32 %v6863, %v7057
  %v7236 = vadd.f32 %v6864, %v7058
  %v7237 = vadd.f32 %v6865, %v7059
  %v7238 = vadd.f32 %v7222, %v7230
  %v7239 = vadd.f32 %v7223, %v7231
  %v7240 = vadd.f32 %v7224, %v7232
  %v7241 = vadd.f32 %v7225, %v7233
  %v7242 = vadd.f32 %v7226, %v7234
  %v7243 = vadd.f32 %v7227, %v7235
  %v7244 = vadd.f32 %v7228, %v7236
  %v7245 = vadd.f32 %v7229, %v7237
  %v7246 = vmul.f32 %v7238, 0.25
  %v7247 = vmul.f32 %v7239, 0.25
  %v7248 = vmul.f32 %v7240, 0.25
  %v7249 = vmul.f32 %v7241, 0.25
  %v7250 = vmul.f32 %v7242, 0.25
  %v7251 = vmul.f32 %v7243, 0.25
  %v7252 = vmul.f32 %v7244, 0.25
  %v7253 = vmul.f32 %v7245, 0.25
  %v7254 = vpack.c.bf16 %v7247, %v7246
  %v7255 = vpack.c.bf16 %v7249, %v7248
  %v7256 = vpack.c.bf16 %v7251, %v7250
  %v7257 = vpack.c.bf16 %v7253, %v7252
  %v7258 = vld [vmem:[%s5 + $0x1c] sm:$0xf]
  %v7260 = vsel %vm5190, %v7258, 0
  %7262 = vmatpush.bf16.msra.mxu0 0
  %7263 = vmatpush.bf16.msra.mxu0 0
  %7264 = vmatpush.bf16.msra.mxu0 0
  %7265 = vmatpush.bf16.msra.mxu0 0
  %7266 = vmatpush.bf16.msra.mxu0 %v7257
  %7267 = vmatpush.bf16.msra.mxu0 %v7256
  %7268 = vmatpush.bf16.msra.mxu0 %v7255
  %7269 = vmatpush.bf16.msra.mxu0 %v7254
  %7270 = vmatmul.bf16.gmra.mxu0 %v7260
  %v7271 = vpop.f32.mrf.mxu0
  %v7272 = vadd.f32 0.0, %v7271
  %v7273 = vpop.f32.mrf.mxu0
  %7274 = vdwg.mxu0
  %v7275 = vadd.f32 %v7221, %v7272
  %v7276 = vld [vmem:[%s3] sm:$0xff]
  %v7277 = vld [vmem:[%s3 + $0x8] sm:$0xff]
  %v7278 = vld [vmem:[%s3 + $0x10] sm:$0xff]
  %v7279 = vld [vmem:[%s3 + $0x18] sm:$0xff]
  %v7280 = vld [vmem:[%s3 + $0x20] sm:$0xff]
  %v7281 = vld [vmem:[%s3 + $0x28] sm:$0xff]
  %v7282 = vld [vmem:[%s3 + $0x30] sm:$0xff]
  %v7283 = vld [vmem:[%s3 + $0x38] sm:$0xff]
  %v7284 = vld [vmem:[%s3 + $0x40] sm:$0xff]
  %v7285 = vld [vmem:[%s3 + $0x48] sm:$0xff]
  %v7286 = vld [vmem:[%s3 + $0x50] sm:$0xff]
  %v7287 = vld [vmem:[%s3 + $0x58] sm:$0xff]
  %v7288 = vld [vmem:[%s3 + $0x60] sm:$0xff]
  %v7289 = vld [vmem:[%s3 + $0x68] sm:$0xff]
  %v7290 = vld [vmem:[%s3 + $0x70] sm:$0xff]
  %v7291 = vld [vmem:[%s3 + $0x78] sm:$0xff]
  %v7292 = vld [vmem:[%s4 + $0x100] sm:$0xff]
  %v7293 = vld [vmem:[%s4 + $0x108] sm:$0xff]
  %v7294 = vld [vmem:[%s4 + $0x110] sm:$0xff]
  %v7295 = vld [vmem:[%s4 + $0x118] sm:$0xff]
  %v7296 = vld [vmem:[%s4 + $0x120] sm:$0xff]
  %v7297 = vld [vmem:[%s4 + $0x128] sm:$0xff]
  %v7298 = vld [vmem:[%s4 + $0x130] sm:$0xff]
  %v7299 = vld [vmem:[%s4 + $0x138] sm:$0xff]
  %v7300 = vld [vmem:[%s4 + $0x140] sm:$0xff]
  %v7301 = vld [vmem:[%s4 + $0x148] sm:$0xff]
  %v7302 = vld [vmem:[%s4 + $0x150] sm:$0xff]
  %v7303 = vld [vmem:[%s4 + $0x158] sm:$0xff]
  %v7304 = vld [vmem:[%s4 + $0x160] sm:$0xff]
  %v7305 = vld [vmem:[%s4 + $0x168] sm:$0xff]
  %v7306 = vld [vmem:[%s4 + $0x170] sm:$0xff]
  %v7307 = vld [vmem:[%s4 + $0x178] sm:$0xff]
  %7309 = vset.pattern.permute.xlu0 0
  %7310 = vperm.xlu0 %7309, %v7292
  %v7311 = vpop.permute.xlu0 %7310
  %7314 = vset.pattern.permute.xlu0 0
  %7315 = vperm.xlu0 %7314, %v7293
  %v7316 = vpop.permute.xlu0 %7315
  %7319 = vset.pattern.permute.xlu0 0
  %7320 = vperm.xlu0 %7319, %v7294
  %v7321 = vpop.permute.xlu0 %7320
  %7324 = vset.pattern.permute.xlu0 0
  %7325 = vperm.xlu0 %7324, %v7295
  %v7326 = vpop.permute.xlu0 %7325
  %7329 = vset.pattern.permute.xlu0 0
  %7330 = vperm.xlu0 %7329, %v7296
  %v7331 = vpop.permute.xlu0 %7330
  %7334 = vset.pattern.permute.xlu0 0
  %7335 = vperm.xlu0 %7334, %v7297
  %v7336 = vpop.permute.xlu0 %7335
  %7339 = vset.pattern.permute.xlu0 0
  %7340 = vperm.xlu0 %7339, %v7298
  %v7341 = vpop.permute.xlu0 %7340
  %7344 = vset.pattern.permute.xlu0 0
  %7345 = vperm.xlu0 %7344, %v7299
  %v7346 = vpop.permute.xlu0 %7345
  %7349 = vset.pattern.permute.xlu0 0
  %7350 = vperm.xlu0 %7349, %v7300
  %v7351 = vpop.permute.xlu0 %7350
  %7354 = vset.pattern.permute.xlu0 0
  %7355 = vperm.xlu0 %7354, %v7301
  %v7356 = vpop.permute.xlu0 %7355
  %7359 = vset.pattern.permute.xlu0 0
  %7360 = vperm.xlu0 %7359, %v7302
  %v7361 = vpop.permute.xlu0 %7360
  %7364 = vset.pattern.permute.xlu0 0
  %7365 = vperm.xlu0 %7364, %v7303
  %v7366 = vpop.permute.xlu0 %7365
  %7369 = vset.pattern.permute.xlu0 0
  %7370 = vperm.xlu0 %7369, %v7304
  %v7371 = vpop.permute.xlu0 %7370
  %7374 = vset.pattern.permute.xlu0 0
  %7375 = vperm.xlu0 %7374, %v7305
  %v7376 = vpop.permute.xlu0 %7375
  %7379 = vset.pattern.permute.xlu0 0
  %7380 = vperm.xlu0 %7379, %v7306
  %v7381 = vpop.permute.xlu0 %7380
  %7384 = vset.pattern.permute.xlu0 0
  %7385 = vperm.xlu0 %7384, %v7307
  %v7386 = vpop.permute.xlu0 %7385
  %v7388 = vld [vmem:[%s0] sm:$0xf]
  %v7389 = vld [vmem:[%s0 + $0x4] sm:$0xf]
  %v7390 = vld [vmem:[%s0 + $0x8] sm:$0xf]
  %v7391 = vld [vmem:[%s0 + $0xc] sm:$0xf]
  %v7392 = vld [vmem:[%s0 + $0x10] sm:$0xf]
  %v7393 = vld [vmem:[%s0 + $0x14] sm:$0xf]
  %v7394 = vld [vmem:[%s0 + $0x18] sm:$0xf]
  %v7395 = vld [vmem:[%s0 + $0x1c] sm:$0xf]
  %v7396 = vld [vmem:[%s0 + $0x20] sm:$0xf]
  %v7397 = vld [vmem:[%s0 + $0x24] sm:$0xf]
  %v7398 = vld [vmem:[%s0 + $0x28] sm:$0xf]
  %v7399 = vld [vmem:[%s0 + $0x2c] sm:$0xf]
  %v7400 = vld [vmem:[%s0 + $0x30] sm:$0xf]
  %v7401 = vld [vmem:[%s0 + $0x34] sm:$0xf]
  %v7402 = vld [vmem:[%s0 + $0x38] sm:$0xf]
  %v7403 = vld [vmem:[%s0 + $0x3c] sm:$0xf]
  %v7404 = vld [vmem:[%s0 + $0x40] sm:$0xf]
  %v7405 = vld [vmem:[%s0 + $0x44] sm:$0xf]
  %v7422 = vunpack.c.l.b16 %v7276
  %v7423 = vunpack.c.h.b16 %v7276
  %v7424 = vunpack.c.l.b16 %v7277
  %v7425 = vunpack.c.h.b16 %v7277
  %v7426 = vunpack.c.l.b16 %v7278
  %v7427 = vunpack.c.h.b16 %v7278
  %v7428 = vunpack.c.l.b16 %v7279
  %v7429 = vunpack.c.h.b16 %v7279
  %v7430 = vunpack.c.l.b16 %v7280
  %v7431 = vunpack.c.h.b16 %v7280
  %v7432 = vunpack.c.l.b16 %v7281
  %v7433 = vunpack.c.h.b16 %v7281
  %v7434 = vunpack.c.l.b16 %v7282
  %v7435 = vunpack.c.h.b16 %v7282
  %v7436 = vunpack.c.l.b16 %v7283
  %v7437 = vunpack.c.h.b16 %v7283
  %v7438 = vunpack.c.l.b16 %v7284
  %v7439 = vunpack.c.h.b16 %v7284
  %v7440 = vunpack.c.l.b16 %v7285
  %v7441 = vunpack.c.h.b16 %v7285
  %v7442 = vunpack.c.l.b16 %v7286
  %v7443 = vunpack.c.h.b16 %v7286
  %v7444 = vunpack.c.l.b16 %v7287
  %v7445 = vunpack.c.h.b16 %v7287
  %v7446 = vunpack.c.l.b16 %v7288
  %v7447 = vunpack.c.h.b16 %v7288
  %v7448 = vunpack.c.l.b16 %v7289
  %v7449 = vunpack.c.h.b16 %v7289
  %v7450 = vunpack.c.l.b16 %v7290
  %v7451 = vunpack.c.h.b16 %v7290
  %v7452 = vunpack.c.l.b16 %v7291
  %v7453 = vunpack.c.h.b16 %v7291
  %v7454 = vpack.c.b16 %v7424, %v7422
  %v7455 = vpack.c.b16 %v7425, %v7423
  %v7456 = vpack.c.b16 %v7428, %v7426
  %v7457 = vpack.c.b16 %v7429, %v7427
  %v7458 = vpack.c.b16 %v7432, %v7430
  %v7459 = vpack.c.b16 %v7433, %v7431
  %v7460 = vpack.c.b16 %v7436, %v7434
  %v7461 = vpack.c.b16 %v7437, %v7435
  %v7462 = vpack.c.b16 %v7440, %v7438
  %v7463 = vpack.c.b16 %v7441, %v7439
  %v7464 = vpack.c.b16 %v7444, %v7442
  %v7465 = vpack.c.b16 %v7445, %v7443
  %v7466 = vpack.c.b16 %v7448, %v7446
  %v7467 = vpack.c.b16 %v7449, %v7447
  %v7468 = vpack.c.b16 %v7452, %v7450
  %v7469 = vpack.c.b16 %v7453, %v7451
  %v7496 = vunpack.c.l.b16 %v7388
  %v7497 = vunpack.c.l.b16 %v7389
  %v7498 = vunpack.c.l.b16 %v7390
  %v7499 = vunpack.c.l.b16 %v7391
  %v7500 = vunpack.c.l.b16 %v7392
  %v7501 = vunpack.c.l.b16 %v7393
  %v7502 = vunpack.c.l.b16 %v7394
  %v7503 = vunpack.c.l.b16 %v7395
  %v7504 = vunpack.c.l.b16 %v7396
  %v7505 = vunpack.c.l.b16 %v7397
  %v7506 = vunpack.c.l.b16 %v7398
  %v7507 = vunpack.c.l.b16 %v7399
  %v7508 = vunpack.c.l.b16 %v7400
  %v7509 = vunpack.c.l.b16 %v7401
  %v7510 = vunpack.c.l.b16 %v7402
  %v7511 = vunpack.c.l.b16 %v7403
  %v7512 = vunpack.c.l.b16 %v7404
  %v7513 = vunpack.c.l.b16 %v7405
  %v7514 = vpack.c.b16 %v7497, %v7496
  %v7515 = vpack.c.b16 %v7499, %v7498
  %v7516 = vpack.c.b16 %v7501, %v7500
  %v7517 = vpack.c.b16 %v7503, %v7502
  %v7518 = vpack.c.b16 %v7505, %v7504
  %v7519 = vpack.c.b16 %v7507, %v7506
  %v7520 = vpack.c.b16 %v7509, %v7508
  %v7521 = vpack.c.b16 %v7511, %v7510
  %v7522 = vpack.c.b16 %v7513, %v7512
  %v7533 = vsel %vm5190, %v7455, 0
  %v7536 = vsel %vm5190, %v7457, 0
  %v7539 = vsel %vm5190, %v7459, 0
  %v7542 = vsel %vm5190, %v7461, 0
  %v7545 = vsel %vm5190, %v7463, 0
  %v7548 = vsel %vm5190, %v7465, 0
  %v7551 = vsel %vm5190, %v7467, 0
  %v7554 = vsel %vm5190, %v7469, 0
  %7556 = vmatpush.bf16.msra.mxu0 %v7521
  %7557 = vmatpush.bf16.msra.mxu0 %v7520
  %7558 = vmatpush.bf16.msra.mxu0 %v7519
  %7559 = vmatpush.bf16.msra.mxu0 %v7518
  %7560 = vmatpush.bf16.msra.mxu0 %v7517
  %7561 = vmatpush.bf16.msra.mxu0 %v7516
  %7562 = vmatpush.bf16.msra.mxu0 %v7515
  %7563 = vmatpush.bf16.msra.mxu0 %v7514
  %7564 = vmatmul.bf16.gmra.mxu0 %v7454
  %v7565 = vpop.f32.mrf.mxu0
  %v7566 = vadd.f32 %v7311, %v7565
  %v7567 = vpop.f32.mrf.mxu0
  %v7568 = vadd.f32 %v7316, %v7567
  %7569 = vmatmul.bf16.gmra.mxu0 %v7456
  %v7570 = vpop.f32.mrf.mxu0
  %v7571 = vadd.f32 %v7321, %v7570
  %v7572 = vpop.f32.mrf.mxu0
  %v7573 = vadd.f32 %v7326, %v7572
  %7574 = vmatmul.bf16.gmra.mxu0 %v7458
  %v7575 = vpop.f32.mrf.mxu0
  %v7576 = vadd.f32 %v7331, %v7575
  %v7577 = vpop.f32.mrf.mxu0
  %v7578 = vadd.f32 %v7336, %v7577
  %7579 = vmatmul.bf16.gmra.mxu0 %v7460
  %v7580 = vpop.f32.mrf.mxu0
  %v7581 = vadd.f32 %v7341, %v7580
  %v7582 = vpop.f32.mrf.mxu0
  %v7583 = vadd.f32 %v7346, %v7582
  %7584 = vmatmul.bf16.gmra.mxu0 %v7462
  %v7585 = vpop.f32.mrf.mxu0
  %v7586 = vadd.f32 %v7351, %v7585
  %v7587 = vpop.f32.mrf.mxu0
  %v7588 = vadd.f32 %v7356, %v7587
  %7589 = vmatmul.bf16.gmra.mxu0 %v7464
  %v7590 = vpop.f32.mrf.mxu0
  %v7591 = vadd.f32 %v7361, %v7590
  %v7592 = vpop.f32.mrf.mxu0
  %v7593 = vadd.f32 %v7366, %v7592
  %7594 = vmatmul.bf16.gmra.mxu0 %v7466
  %v7595 = vpop.f32.mrf.mxu0
  %v7596 = vadd.f32 %v7371, %v7595
  %v7597 = vpop.f32.mrf.mxu0
  %v7598 = vadd.f32 %v7376, %v7597
  %7599 = vmatmul.bf16.gmra.mxu0 %v7468
  %v7600 = vpop.f32.mrf.mxu0
  %v7601 = vadd.f32 %v7381, %v7600
  %v7602 = vpop.f32.mrf.mxu0
  %v7603 = vadd.f32 %v7386, %v7602
  %7604 = vdwg.mxu0
  %7605 = vmatpush.bf16.msra.mxu0 0
  %7606 = vmatpush.bf16.msra.mxu0 0
  %7607 = vmatpush.bf16.msra.mxu0 0
  %7608 = vmatpush.bf16.msra.mxu0 0
  %7609 = vmatpush.bf16.msra.mxu0 %v838
  %7610 = vmatpush.bf16.msra.mxu0 %v837
  %7611 = vmatpush.bf16.msra.mxu0 %v836
  %7612 = vmatpush.bf16.msra.mxu0 %v7522
  %7613 = vmatmul.bf16.gmra.mxu0 %v7533
  %v7614 = vpop.f32.mrf.mxu0
  %v7615 = vadd.f32 %v7566, %v7614
  %v7616 = vpop.f32.mrf.mxu0
  %v7617 = vadd.f32 %v7568, %v7616
  %7618 = vmatmul.bf16.gmra.mxu0 %v7536
  %v7619 = vpop.f32.mrf.mxu0
  %v7620 = vadd.f32 %v7571, %v7619
  %v7621 = vpop.f32.mrf.mxu0
  %v7622 = vadd.f32 %v7573, %v7621
  %7623 = vmatmul.bf16.gmra.mxu0 %v7539
  %v7624 = vpop.f32.mrf.mxu0
  %v7625 = vadd.f32 %v7576, %v7624
  %v7626 = vpop.f32.mrf.mxu0
  %v7627 = vadd.f32 %v7578, %v7626
  %7628 = vmatmul.bf16.gmra.mxu0 %v7542
  %v7629 = vpop.f32.mrf.mxu0
  %v7630 = vadd.f32 %v7581, %v7629
  %v7631 = vpop.f32.mrf.mxu0
  %v7632 = vadd.f32 %v7583, %v7631
  %7633 = vmatmul.bf16.gmra.mxu0 %v7545
  %v7634 = vpop.f32.mrf.mxu0
  %v7635 = vadd.f32 %v7586, %v7634
  %v7636 = vpop.f32.mrf.mxu0
  %v7637 = vadd.f32 %v7588, %v7636
  %7638 = vmatmul.bf16.gmra.mxu0 %v7548
  %v7639 = vpop.f32.mrf.mxu0
  %v7640 = vadd.f32 %v7591, %v7639
  %v7641 = vpop.f32.mrf.mxu0
  %v7642 = vadd.f32 %v7593, %v7641
  %7643 = vmatmul.bf16.gmra.mxu0 %v7551
  %v7644 = vpop.f32.mrf.mxu0
  %v7645 = vadd.f32 %v7596, %v7644
  %v7646 = vpop.f32.mrf.mxu0
  %v7647 = vadd.f32 %v7598, %v7646
  %7648 = vmatmul.bf16.gmra.mxu0 %v7554
  %v7649 = vpop.f32.mrf.mxu0
  %v7650 = vadd.f32 %v7601, %v7649
  %v7651 = vpop.f32.mrf.mxu0
  %v7652 = vadd.f32 %v7603, %v7651
  %7653 = vdwg.mxu0
  %v7654 = vmax.f32 %v7615, 0.0
  %v7655 = vmax.f32 %v7617, 0.0
  %v7656 = vmax.f32 %v7620, 0.0
  %v7657 = vmax.f32 %v7622, 0.0
  %v7658 = vmax.f32 %v7625, 0.0
  %v7659 = vmax.f32 %v7627, 0.0
  %v7660 = vmax.f32 %v7630, 0.0
  %v7661 = vmax.f32 %v7632, 0.0
  %v7662 = vmax.f32 %v7635, 0.0
  %v7663 = vmax.f32 %v7637, 0.0
  %v7664 = vmax.f32 %v7640, 0.0
  %v7665 = vmax.f32 %v7642, 0.0
  %v7666 = vmax.f32 %v7645, 0.0
  %v7667 = vmax.f32 %v7647, 0.0
  %v7668 = vmax.f32 %v7650, 0.0
  %v7669 = vmax.f32 %v7652, 0.0
  %v7670 = vld [vmem:[%s0 + $0x30] sm:$0xf]
  %v7671 = vld [vmem:[%s0 + $0x34] sm:$0xf]
  %v7672 = vld [vmem:[%s0 + $0x38] sm:$0xf]
  %v7673 = vld [vmem:[%s0 + $0x3c] sm:$0xf]
  %v7674 = vld [vmem:[%s0 + $0x40] sm:$0xf]
  %v7675 = vld [vmem:[%s0 + $0x44] sm:$0xf]
  %v7676 = vld [vmem:[%s0 + $0x48] sm:$0xf]
  %v7677 = vld [vmem:[%s0 + $0x4c] sm:$0xf]
  %v7678 = vld [vmem:[%s0 + $0x50] sm:$0xf]
  %v7679 = vld [vmem:[%s0 + $0x54] sm:$0xf]
  %v7680 = vld [vmem:[%s0 + $0x58] sm:$0xf]
  %v7681 = vld [vmem:[%s0 + $0x5c] sm:$0xf]
  %v7682 = vld [vmem:[%s0 + $0x60] sm:$0xf]
  %v7683 = vld [vmem:[%s0 + $0x64] sm:$0xf]
  %v7684 = vld [vmem:[%s0 + $0x68] sm:$0xf]
  %v7685 = vld [vmem:[%s0 + $0x6c] sm:$0xf]
  %v7686 = vld [vmem:[%s0 + $0x70] sm:$0xf]
  %v7687 = vld [vmem:[%s0 + $0x74] sm:$0xf]
  %v7706 = vunpack.c.l.b16 %v7670
  %v7707 = vunpack.c.l.b16 %v7671
  %v7708 = vunpack.c.l.b16 %v7672
  %v7709 = vunpack.c.l.b16 %v7673
  %v7710 = vunpack.c.l.b16 %v7674
  %v7711 = vunpack.c.l.b16 %v7675
  %v7712 = vunpack.c.l.b16 %v7676
  %v7713 = vunpack.c.l.b16 %v7677
  %v7714 = vunpack.c.l.b16 %v7678
  %v7715 = vunpack.c.l.b16 %v7679
  %v7716 = vunpack.c.l.b16 %v7680
  %v7717 = vunpack.c.l.b16 %v7681
  %v7718 = vunpack.c.l.b16 %v7682
  %v7719 = vunpack.c.l.b16 %v7683
  %v7720 = vunpack.c.l.b16 %v7684
  %v7721 = vunpack.c.l.b16 %v7685
  %v7722 = vunpack.c.l.b16 %v7686
  %v7723 = vunpack.c.l.b16 %v7687
  %v7724 = vpack.c.b16 %v7707, %v7706
  %v7725 = vpack.c.b16 %v7709, %v7708
  %v7726 = vpack.c.b16 %v7711, %v7710
  %v7727 = vpack.c.b16 %v7713, %v7712
  %v7728 = vpack.c.b16 %v7715, %v7714
  %v7729 = vpack.c.b16 %v7717, %v7716
  %v7730 = vpack.c.b16 %v7719, %v7718
  %v7731 = vpack.c.b16 %v7721, %v7720
  %v7732 = vpack.c.b16 %v7723, %v7722
  %7742 = vmatpush.bf16.msra.mxu0 %v7731
  %7743 = vmatpush.bf16.msra.mxu0 %v7730
  %7744 = vmatpush.bf16.msra.mxu0 %v7729
  %7745 = vmatpush.bf16.msra.mxu0 %v7728
  %7746 = vmatpush.bf16.msra.mxu0 %v7727
  %7747 = vmatpush.bf16.msra.mxu0 %v7726
  %7748 = vmatpush.bf16.msra.mxu0 %v7725
  %7749 = vmatpush.bf16.msra.mxu0 %v7724
  %7750 = vmatmul.bf16.gmra.mxu0 %v7454
  %v7751 = vpop.f32.mrf.mxu0
  %v7752 = vadd.f32 %v7311, %v7751
  %v7753 = vpop.f32.mrf.mxu0
  %v7754 = vadd.f32 %v7316, %v7753
  %7755 = vmatmul.bf16.gmra.mxu0 %v7456
  %v7756 = vpop.f32.mrf.mxu0
  %v7757 = vadd.f32 %v7321, %v7756
  %v7758 = vpop.f32.mrf.mxu0
  %v7759 = vadd.f32 %v7326, %v7758
  %7760 = vmatmul.bf16.gmra.mxu0 %v7458
  %v7761 = vpop.f32.mrf.mxu0
  %v7762 = vadd.f32 %v7331, %v7761
  %v7763 = vpop.f32.mrf.mxu0
  %v7764 = vadd.f32 %v7336, %v7763
  %7765 = vmatmul.bf16.gmra.mxu0 %v7460
  %v7766 = vpop.f32.mrf.mxu0
  %v7767 = vadd.f32 %v7341, %v7766
  %v7768 = vpop.f32.mrf.mxu0
  %v7769 = vadd.f32 %v7346, %v7768
  %7770 = vmatmul.bf16.gmra.mxu0 %v7462
  %v7771 = vpop.f32.mrf.mxu0
  %v7772 = vadd.f32 %v7351, %v7771
  %v7773 = vpop.f32.mrf.mxu0
  %v7774 = vadd.f32 %v7356, %v7773
  %7775 = vmatmul.bf16.gmra.mxu0 %v7464
  %v7776 = vpop.f32.mrf.mxu0
  %v7777 = vadd.f32 %v7361, %v7776
  %v7778 = vpop.f32.mrf.mxu0
  %v7779 = vadd.f32 %v7366, %v7778
  %7780 = vmatmul.bf16.gmra.mxu0 %v7466
  %v7781 = vpop.f32.mrf.mxu0
  %v7782 = vadd.f32 %v7371, %v7781
  %v7783 = vpop.f32.mrf.mxu0
  %v7784 = vadd.f32 %v7376, %v7783
  %7785 = vmatmul.bf16.gmra.mxu0 %v7468
  %v7786 = vpop.f32.mrf.mxu0
  %v7787 = vadd.f32 %v7381, %v7786
  %v7788 = vpop.f32.mrf.mxu0
  %v7789 = vadd.f32 %v7386, %v7788
  %7790 = vdwg.mxu0
  %7791 = vmatpush.bf16.msra.mxu0 0
  %7792 = vmatpush.bf16.msra.mxu0 0
  %7793 = vmatpush.bf16.msra.mxu0 0
  %7794 = vmatpush.bf16.msra.mxu0 0
  %7795 = vmatpush.bf16.msra.mxu0 %v1452
  %7796 = vmatpush.bf16.msra.mxu0 %v1451
  %7797 = vmatpush.bf16.msra.mxu0 %v1450
  %7798 = vmatpush.bf16.msra.mxu0 %v7732
  %7799 = vmatmul.bf16.gmra.mxu0 %v7533
  %v7800 = vpop.f32.mrf.mxu0
  %v7801 = vadd.f32 %v7752, %v7800
  %v7802 = vpop.f32.mrf.mxu0
  %v7803 = vadd.f32 %v7754, %v7802
  %7804 = vmatmul.bf16.gmra.mxu0 %v7536
  %v7805 = vpop.f32.mrf.mxu0
  %v7806 = vadd.f32 %v7757, %v7805
  %v7807 = vpop.f32.mrf.mxu0
  %v7808 = vadd.f32 %v7759, %v7807
  %7809 = vmatmul.bf16.gmra.mxu0 %v7539
  %v7810 = vpop.f32.mrf.mxu0
  %v7811 = vadd.f32 %v7762, %v7810
  %v7812 = vpop.f32.mrf.mxu0
  %v7813 = vadd.f32 %v7764, %v7812
  %7814 = vmatmul.bf16.gmra.mxu0 %v7542
  %v7815 = vpop.f32.mrf.mxu0
  %v7816 = vadd.f32 %v7767, %v7815
  %v7817 = vpop.f32.mrf.mxu0
  %v7818 = vadd.f32 %v7769, %v7817
  %7819 = vmatmul.bf16.gmra.mxu0 %v7545
  %v7820 = vpop.f32.mrf.mxu0
  %v7821 = vadd.f32 %v7772, %v7820
  %v7822 = vpop.f32.mrf.mxu0
  %v7823 = vadd.f32 %v7774, %v7822
  %7824 = vmatmul.bf16.gmra.mxu0 %v7548
  %v7825 = vpop.f32.mrf.mxu0
  %v7826 = vadd.f32 %v7777, %v7825
  %v7827 = vpop.f32.mrf.mxu0
  %v7828 = vadd.f32 %v7779, %v7827
  %7829 = vmatmul.bf16.gmra.mxu0 %v7551
  %v7830 = vpop.f32.mrf.mxu0
  %v7831 = vadd.f32 %v7782, %v7830
  %v7832 = vpop.f32.mrf.mxu0
  %v7833 = vadd.f32 %v7784, %v7832
  %7834 = vmatmul.bf16.gmra.mxu0 %v7554
  %v7835 = vpop.f32.mrf.mxu0
  %v7836 = vadd.f32 %v7787, %v7835
  %v7837 = vpop.f32.mrf.mxu0
  %v7838 = vadd.f32 %v7789, %v7837
  %7839 = vdwg.mxu0
  %v7840 = vmax.f32 %v7801, 0.0
  %v7841 = vmax.f32 %v7803, 0.0
  %v7842 = vmax.f32 %v7806, 0.0
  %v7843 = vmax.f32 %v7808, 0.0
  %v7844 = vmax.f32 %v7811, 0.0
  %v7845 = vmax.f32 %v7813, 0.0
  %v7846 = vmax.f32 %v7816, 0.0
  %v7847 = vmax.f32 %v7818, 0.0
  %v7848 = vmax.f32 %v7821, 0.0
  %v7849 = vmax.f32 %v7823, 0.0
  %v7850 = vmax.f32 %v7826, 0.0
  %v7851 = vmax.f32 %v7828, 0.0
  %v7852 = vmax.f32 %v7831, 0.0
  %v7853 = vmax.f32 %v7833, 0.0
  %v7854 = vmax.f32 %v7836, 0.0
  %v7855 = vmax.f32 %v7838, 0.0
  %v7856 = vld [vmem:[%s0 + $0x60] sm:$0xf]
  %v7857 = vld [vmem:[%s0 + $0x64] sm:$0xf]
  %v7858 = vld [vmem:[%s0 + $0x68] sm:$0xf]
  %v7859 = vld [vmem:[%s0 + $0x6c] sm:$0xf]
  %v7860 = vld [vmem:[%s0 + $0x70] sm:$0xf]
  %v7861 = vld [vmem:[%s0 + $0x74] sm:$0xf]
  %v7862 = vld [vmem:[%s0 + $0x78] sm:$0xf]
  %v7863 = vld [vmem:[%s0 + $0x7c] sm:$0xf]
  %v7864 = vld [vmem:[%s0 + $0x80] sm:$0xf]
  %v7865 = vld [vmem:[%s0 + $0x84] sm:$0xf]
  %v7866 = vld [vmem:[%s0 + $0x88] sm:$0xf]
  %v7867 = vld [vmem:[%s0 + $0x8c] sm:$0xf]
  %v7868 = vld [vmem:[%s0 + $0x90] sm:$0xf]
  %v7869 = vld [vmem:[%s0 + $0x94] sm:$0xf]
  %v7870 = vld [vmem:[%s0 + $0x98] sm:$0xf]
  %v7871 = vld [vmem:[%s0 + $0x9c] sm:$0xf]
  %v7872 = vld [vmem:[%s0 + $0xa0] sm:$0xf]
  %v7873 = vld [vmem:[%s0 + $0xa4] sm:$0xf]
  %v7892 = vunpack.c.l.b16 %v7856
  %v7893 = vunpack.c.l.b16 %v7857
  %v7894 = vunpack.c.l.b16 %v7858
  %v7895 = vunpack.c.l.b16 %v7859
  %v7896 = vunpack.c.l.b16 %v7860
  %v7897 = vunpack.c.l.b16 %v7861
  %v7898 = vunpack.c.l.b16 %v7862
  %v7899 = vunpack.c.l.b16 %v7863
  %v7900 = vunpack.c.l.b16 %v7864
  %v7901 = vunpack.c.l.b16 %v7865
  %v7902 = vunpack.c.l.b16 %v7866
  %v7903 = vunpack.c.l.b16 %v7867
  %v7904 = vunpack.c.l.b16 %v7868
  %v7905 = vunpack.c.l.b16 %v7869
  %v7906 = vunpack.c.l.b16 %v7870
  %v7907 = vunpack.c.l.b16 %v7871
  %v7908 = vunpack.c.l.b16 %v7872
  %v7909 = vunpack.c.l.b16 %v7873
  %v7910 = vpack.c.b16 %v7893, %v7892
  %v7911 = vpack.c.b16 %v7895, %v7894
  %v7912 = vpack.c.b16 %v7897, %v7896
  %v7913 = vpack.c.b16 %v7899, %v7898
  %v7914 = vpack.c.b16 %v7901, %v7900
  %v7915 = vpack.c.b16 %v7903, %v7902
  %v7916 = vpack.c.b16 %v7905, %v7904
  %v7917 = vpack.c.b16 %v7907, %v7906
  %v7918 = vpack.c.b16 %v7909, %v7908
  %7928 = vmatpush.bf16.msra.mxu0 %v7917
  %7929 = vmatpush.bf16.msra.mxu0 %v7916
  %7930 = vmatpush.bf16.msra.mxu0 %v7915
  %7931 = vmatpush.bf16.msra.mxu0 %v7914
  %7932 = vmatpush.bf16.msra.mxu0 %v7913
  %7933 = vmatpush.bf16.msra.mxu0 %v7912
  %7934 = vmatpush.bf16.msra.mxu0 %v7911
  %7935 = vmatpush.bf16.msra.mxu0 %v7910
  %7936 = vmatmul.bf16.gmra.mxu0 %v7454
  %v7937 = vpop.f32.mrf.mxu0
  %v7938 = vadd.f32 %v7311, %v7937
  %v7939 = vpop.f32.mrf.mxu0
  %v7940 = vadd.f32 %v7316, %v7939
  %7941 = vmatmul.bf16.gmra.mxu0 %v7456
  %v7942 = vpop.f32.mrf.mxu0
  %v7943 = vadd.f32 %v7321, %v7942
  %v7944 = vpop.f32.mrf.mxu0
  %v7945 = vadd.f32 %v7326, %v7944
  %7946 = vmatmul.bf16.gmra.mxu0 %v7458
  %v7947 = vpop.f32.mrf.mxu0
  %v7948 = vadd.f32 %v7331, %v7947
  %v7949 = vpop.f32.mrf.mxu0
  %v7950 = vadd.f32 %v7336, %v7949
  %7951 = vmatmul.bf16.gmra.mxu0 %v7460
  %v7952 = vpop.f32.mrf.mxu0
  %v7953 = vadd.f32 %v7341, %v7952
  %v7954 = vpop.f32.mrf.mxu0
  %v7955 = vadd.f32 %v7346, %v7954
  %7956 = vmatmul.bf16.gmra.mxu0 %v7462
  %v7957 = vpop.f32.mrf.mxu0
  %v7958 = vadd.f32 %v7351, %v7957
  %v7959 = vpop.f32.mrf.mxu0
  %v7960 = vadd.f32 %v7356, %v7959
  %7961 = vmatmul.bf16.gmra.mxu0 %v7464
  %v7962 = vpop.f32.mrf.mxu0
  %v7963 = vadd.f32 %v7361, %v7962
  %v7964 = vpop.f32.mrf.mxu0
  %v7965 = vadd.f32 %v7366, %v7964
  %7966 = vmatmul.bf16.gmra.mxu0 %v7466
  %v7967 = vpop.f32.mrf.mxu0
  %v7968 = vadd.f32 %v7371, %v7967
  %v7969 = vpop.f32.mrf.mxu0
  %v7970 = vadd.f32 %v7376, %v7969
  %7971 = vmatmul.bf16.gmra.mxu0 %v7468
  %v7972 = vpop.f32.mrf.mxu0
  %v7973 = vadd.f32 %v7381, %v7972
  %v7974 = vpop.f32.mrf.mxu0
  %v7975 = vadd.f32 %v7386, %v7974
  %7976 = vdwg.mxu0
  %7977 = vmatpush.bf16.msra.mxu0 0
  %7978 = vmatpush.bf16.msra.mxu0 0
  %7979 = vmatpush.bf16.msra.mxu0 0
  %7980 = vmatpush.bf16.msra.mxu0 0
  %7981 = vmatpush.bf16.msra.mxu0 %v2066
  %7982 = vmatpush.bf16.msra.mxu0 %v2065
  %7983 = vmatpush.bf16.msra.mxu0 %v2064
  %7984 = vmatpush.bf16.msra.mxu0 %v7918
  %7985 = vmatmul.bf16.gmra.mxu0 %v7533
  %v7986 = vpop.f32.mrf.mxu0
  %v7987 = vadd.f32 %v7938, %v7986
  %v7988 = vpop.f32.mrf.mxu0
  %v7989 = vadd.f32 %v7940, %v7988
  %7990 = vmatmul.bf16.gmra.mxu0 %v7536
  %v7991 = vpop.f32.mrf.mxu0
  %v7992 = vadd.f32 %v7943, %v7991
  %v7993 = vpop.f32.mrf.mxu0
  %v7994 = vadd.f32 %v7945, %v7993
  %7995 = vmatmul.bf16.gmra.mxu0 %v7539
  %v7996 = vpop.f32.mrf.mxu0
  %v7997 = vadd.f32 %v7948, %v7996
  %v7998 = vpop.f32.mrf.mxu0
  %v7999 = vadd.f32 %v7950, %v7998
  %8000 = vmatmul.bf16.gmra.mxu0 %v7542
  %v8001 = vpop.f32.mrf.mxu0
  %v8002 = vadd.f32 %v7953, %v8001
  %v8003 = vpop.f32.mrf.mxu0
  %v8004 = vadd.f32 %v7955, %v8003
  %8005 = vmatmul.bf16.gmra.mxu0 %v7545
  %v8006 = vpop.f32.mrf.mxu0
  %v8007 = vadd.f32 %v7958, %v8006
  %v8008 = vpop.f32.mrf.mxu0
  %v8009 = vadd.f32 %v7960, %v8008
  %8010 = vmatmul.bf16.gmra.mxu0 %v7548
  %v8011 = vpop.f32.mrf.mxu0
  %v8012 = vadd.f32 %v7963, %v8011
  %v8013 = vpop.f32.mrf.mxu0
  %v8014 = vadd.f32 %v7965, %v8013
  %8015 = vmatmul.bf16.gmra.mxu0 %v7551
  %v8016 = vpop.f32.mrf.mxu0
  %v8017 = vadd.f32 %v7968, %v8016
  %v8018 = vpop.f32.mrf.mxu0
  %v8019 = vadd.f32 %v7970, %v8018
  %8020 = vmatmul.bf16.gmra.mxu0 %v7554
  %v8021 = vpop.f32.mrf.mxu0
  %v8022 = vadd.f32 %v7973, %v8021
  %v8023 = vpop.f32.mrf.mxu0
  %v8024 = vadd.f32 %v7975, %v8023
  %8025 = vdwg.mxu0
  %v8026 = vmax.f32 %v7987, 0.0
  %v8027 = vmax.f32 %v7989, 0.0
  %v8028 = vmax.f32 %v7992, 0.0
  %v8029 = vmax.f32 %v7994, 0.0
  %v8030 = vmax.f32 %v7997, 0.0
  %v8031 = vmax.f32 %v7999, 0.0
  %v8032 = vmax.f32 %v8002, 0.0
  %v8033 = vmax.f32 %v8004, 0.0
  %v8034 = vmax.f32 %v8007, 0.0
  %v8035 = vmax.f32 %v8009, 0.0
  %v8036 = vmax.f32 %v8012, 0.0
  %v8037 = vmax.f32 %v8014, 0.0
  %v8038 = vmax.f32 %v8017, 0.0
  %v8039 = vmax.f32 %v8019, 0.0
  %v8040 = vmax.f32 %v8022, 0.0
  %v8041 = vmax.f32 %v8024, 0.0
  %v8042 = vld [vmem:[%s0 + $0x90] sm:$0xf]
  %v8043 = vld [vmem:[%s0 + $0x94] sm:$0xf]
  %v8044 = vld [vmem:[%s0 + $0x98] sm:$0xf]
  %v8045 = vld [vmem:[%s0 + $0x9c] sm:$0xf]
  %v8046 = vld [vmem:[%s0 + $0xa0] sm:$0xf]
  %v8047 = vld [vmem:[%s0 + $0xa4] sm:$0xf]
  %v8048 = vld [vmem:[%s0 + $0xa8] sm:$0xf]
  %v8049 = vld [vmem:[%s0 + $0xac] sm:$0xf]
  %v8050 = vld [vmem:[%s0 + $0xb0] sm:$0xf]
  %v8051 = vld [vmem:[%s0 + $0xb4] sm:$0xf]
  %v8052 = vld [vmem:[%s0 + $0xb8] sm:$0xf]
  %v8053 = vld [vmem:[%s0 + $0xbc] sm:$0xf]
  %v8054 = vld [vmem:[%s0 + $0xc0] sm:$0xf]
  %v8055 = vld [vmem:[%s0 + $0xc4] sm:$0xf]
  %v8056 = vld [vmem:[%s0 + $0xc8] sm:$0xf]
  %v8057 = vld [vmem:[%s0 + $0xcc] sm:$0xf]
  %v8058 = vld [vmem:[%s0 + $0xd0] sm:$0xf]
  %v8059 = vld [vmem:[%s0 + $0xd4] sm:$0xf]
  %v8078 = vunpack.c.l.b16 %v8042
  %v8079 = vunpack.c.l.b16 %v8043
  %v8080 = vunpack.c.l.b16 %v8044
  %v8081 = vunpack.c.l.b16 %v8045
  %v8082 = vunpack.c.l.b16 %v8046
  %v8083 = vunpack.c.l.b16 %v8047
  %v8084 = vunpack.c.l.b16 %v8048
  %v8085 = vunpack.c.l.b16 %v8049
  %v8086 = vunpack.c.l.b16 %v8050
  %v8087 = vunpack.c.l.b16 %v8051
  %v8088 = vunpack.c.l.b16 %v8052
  %v8089 = vunpack.c.l.b16 %v8053
  %v8090 = vunpack.c.l.b16 %v8054
  %v8091 = vunpack.c.l.b16 %v8055
  %v8092 = vunpack.c.l.b16 %v8056
  %v8093 = vunpack.c.l.b16 %v8057
  %v8094 = vunpack.c.l.b16 %v8058
  %v8095 = vunpack.c.l.b16 %v8059
  %v8096 = vpack.c.b16 %v8079, %v8078
  %v8097 = vpack.c.b16 %v8081, %v8080
  %v8098 = vpack.c.b16 %v8083, %v8082
  %v8099 = vpack.c.b16 %v8085, %v8084
  %v8100 = vpack.c.b16 %v8087, %v8086
  %v8101 = vpack.c.b16 %v8089, %v8088
  %v8102 = vpack.c.b16 %v8091, %v8090
  %v8103 = vpack.c.b16 %v8093, %v8092
  %v8104 = vpack.c.b16 %v8095, %v8094
  %8114 = vmatpush.bf16.msra.mxu0 %v8103
  %8115 = vmatpush.bf16.msra.mxu0 %v8102
  %8116 = vmatpush.bf16.msra.mxu0 %v8101
  %8117 = vmatpush.bf16.msra.mxu0 %v8100
  %8118 = vmatpush.bf16.msra.mxu0 %v8099
  %8119 = vmatpush.bf16.msra.mxu0 %v8098
  %8120 = vmatpush.bf16.msra.mxu0 %v8097
  %8121 = vmatpush.bf16.msra.mxu0 %v8096
  %8122 = vmatmul.bf16.gmra.mxu0 %v7454
  %v8123 = vpop.f32.mrf.mxu0
  %v8124 = vadd.f32 %v7311, %v8123
  %v8125 = vpop.f32.mrf.mxu0
  %v8126 = vadd.f32 %v7316, %v8125
  %8127 = vmatmul.bf16.gmra.mxu0 %v7456
  %v8128 = vpop.f32.mrf.mxu0
  %v8129 = vadd.f32 %v7321, %v8128
  %v8130 = vpop.f32.mrf.mxu0
  %v8131 = vadd.f32 %v7326, %v8130
  %8132 = vmatmul.bf16.gmra.mxu0 %v7458
  %v8133 = vpop.f32.mrf.mxu0
  %v8134 = vadd.f32 %v7331, %v8133
  %v8135 = vpop.f32.mrf.mxu0
  %v8136 = vadd.f32 %v7336, %v8135
  %8137 = vmatmul.bf16.gmra.mxu0 %v7460
  %v8138 = vpop.f32.mrf.mxu0
  %v8139 = vadd.f32 %v7341, %v8138
  %v8140 = vpop.f32.mrf.mxu0
  %v8141 = vadd.f32 %v7346, %v8140
  %8142 = vmatmul.bf16.gmra.mxu0 %v7462
  %v8143 = vpop.f32.mrf.mxu0
  %v8144 = vadd.f32 %v7351, %v8143
  %v8145 = vpop.f32.mrf.mxu0
  %v8146 = vadd.f32 %v7356, %v8145
  %8147 = vmatmul.bf16.gmra.mxu0 %v7464
  %v8148 = vpop.f32.mrf.mxu0
  %v8149 = vadd.f32 %v7361, %v8148
  %v8150 = vpop.f32.mrf.mxu0
  %v8151 = vadd.f32 %v7366, %v8150
  %8152 = vmatmul.bf16.gmra.mxu0 %v7466
  %v8153 = vpop.f32.mrf.mxu0
  %v8154 = vadd.f32 %v7371, %v8153
  %v8155 = vpop.f32.mrf.mxu0
  %v8156 = vadd.f32 %v7376, %v8155
  %8157 = vmatmul.bf16.gmra.mxu0 %v7468
  %v8158 = vpop.f32.mrf.mxu0
  %v8159 = vadd.f32 %v7381, %v8158
  %v8160 = vpop.f32.mrf.mxu0
  %v8161 = vadd.f32 %v7386, %v8160
  %8162 = vdwg.mxu0
  %8163 = vmatpush.bf16.msra.mxu0 0
  %8164 = vmatpush.bf16.msra.mxu0 0
  %8165 = vmatpush.bf16.msra.mxu0 0
  %8166 = vmatpush.bf16.msra.mxu0 0
  %8167 = vmatpush.bf16.msra.mxu0 %v2680
  %8168 = vmatpush.bf16.msra.mxu0 %v2679
  %8169 = vmatpush.bf16.msra.mxu0 %v2678
  %8170 = vmatpush.bf16.msra.mxu0 %v8104
  %8171 = vmatmul.bf16.gmra.mxu0 %v7533
  %v8172 = vpop.f32.mrf.mxu0
  %v8173 = vadd.f32 %v8124, %v8172
  %v8174 = vpop.f32.mrf.mxu0
  %v8175 = vadd.f32 %v8126, %v8174
  %8176 = vmatmul.bf16.gmra.mxu0 %v7536
  %v8177 = vpop.f32.mrf.mxu0
  %v8178 = vadd.f32 %v8129, %v8177
  %v8179 = vpop.f32.mrf.mxu0
  %v8180 = vadd.f32 %v8131, %v8179
  %8181 = vmatmul.bf16.gmra.mxu0 %v7539
  %v8182 = vpop.f32.mrf.mxu0
  %v8183 = vadd.f32 %v8134, %v8182
  %v8184 = vpop.f32.mrf.mxu0
  %v8185 = vadd.f32 %v8136, %v8184
  %8186 = vmatmul.bf16.gmra.mxu0 %v7542
  %v8187 = vpop.f32.mrf.mxu0
  %v8188 = vadd.f32 %v8139, %v8187
  %v8189 = vpop.f32.mrf.mxu0
  %v8190 = vadd.f32 %v8141, %v8189
  %8191 = vmatmul.bf16.gmra.mxu0 %v7545
  %v8192 = vpop.f32.mrf.mxu0
  %v8193 = vadd.f32 %v8144, %v8192
  %v8194 = vpop.f32.mrf.mxu0
  %v8195 = vadd.f32 %v8146, %v8194
  %8196 = vmatmul.bf16.gmra.mxu0 %v7548
  %v8197 = vpop.f32.mrf.mxu0
  %v8198 = vadd.f32 %v8149, %v8197
  %v8199 = vpop.f32.mrf.mxu0
  %v8200 = vadd.f32 %v8151, %v8199
  %8201 = vmatmul.bf16.gmra.mxu0 %v7551
  %v8202 = vpop.f32.mrf.mxu0
  %v8203 = vadd.f32 %v8154, %v8202
  %v8204 = vpop.f32.mrf.mxu0
  %v8205 = vadd.f32 %v8156, %v8204
  %8206 = vmatmul.bf16.gmra.mxu0 %v7554
  %v8207 = vpop.f32.mrf.mxu0
  %v8208 = vadd.f32 %v8159, %v8207
  %v8209 = vpop.f32.mrf.mxu0
  %v8210 = vadd.f32 %v8161, %v8209
  %8211 = vdwg.mxu0
  %v8212 = vmax.f32 %v8173, 0.0
  %v8213 = vmax.f32 %v8175, 0.0
  %v8214 = vmax.f32 %v8178, 0.0
  %v8215 = vmax.f32 %v8180, 0.0
  %v8216 = vmax.f32 %v8183, 0.0
  %v8217 = vmax.f32 %v8185, 0.0
  %v8218 = vmax.f32 %v8188, 0.0
  %v8219 = vmax.f32 %v8190, 0.0
  %v8220 = vmax.f32 %v8193, 0.0
  %v8221 = vmax.f32 %v8195, 0.0
  %v8222 = vmax.f32 %v8198, 0.0
  %v8223 = vmax.f32 %v8200, 0.0
  %v8224 = vmax.f32 %v8203, 0.0
  %v8225 = vmax.f32 %v8205, 0.0
  %v8226 = vmax.f32 %v8208, 0.0
  %v8227 = vmax.f32 %v8210, 0.0
  %v8228 = vld [vmem:[%s0 + $0xc0] sm:$0xf]
  %v8229 = vld [vmem:[%s0 + $0xc4] sm:$0xf]
  %v8230 = vld [vmem:[%s0 + $0xc8] sm:$0xf]
  %v8231 = vld [vmem:[%s0 + $0xcc] sm:$0xf]
  %v8232 = vld [vmem:[%s0 + $0xd0] sm:$0xf]
  %v8233 = vld [vmem:[%s0 + $0xd4] sm:$0xf]
  %v8234 = vld [vmem:[%s0 + $0xd8] sm:$0xf]
  %v8235 = vld [vmem:[%s0 + $0xdc] sm:$0xf]
  %v8236 = vld [vmem:[%s0 + $0xe0] sm:$0xf]
  %v8237 = vld [vmem:[%s0 + $0xe4] sm:$0xf]
  %v8238 = vld [vmem:[%s0 + $0xe8] sm:$0xf]
  %v8239 = vld [vmem:[%s0 + $0xec] sm:$0xf]
  %v8240 = vld [vmem:[%s0 + $0xf0] sm:$0xf]
  %v8241 = vld [vmem:[%s0 + $0xf4] sm:$0xf]
  %v8242 = vld [vmem:[%s0 + $0xf8] sm:$0xf]
  %v8243 = vld [vmem:[%s0 + $0xfc] sm:$0xf]
  %v8244 = vld [vmem:[%s0 + $0x100] sm:$0xf]
  %v8245 = vld [vmem:[%s0 + $0x104] sm:$0xf]
  %v8264 = vunpack.c.l.b16 %v8228
  %v8265 = vunpack.c.l.b16 %v8229
  %v8266 = vunpack.c.l.b16 %v8230
  %v8267 = vunpack.c.l.b16 %v8231
  %v8268 = vunpack.c.l.b16 %v8232
  %v8269 = vunpack.c.l.b16 %v8233
  %v8270 = vunpack.c.l.b16 %v8234
  %v8271 = vunpack.c.l.b16 %v8235
  %v8272 = vunpack.c.l.b16 %v8236
  %v8273 = vunpack.c.l.b16 %v8237
  %v8274 = vunpack.c.l.b16 %v8238
  %v8275 = vunpack.c.l.b16 %v8239
  %v8276 = vunpack.c.l.b16 %v8240
  %v8277 = vunpack.c.l.b16 %v8241
  %v8278 = vunpack.c.l.b16 %v8242
  %v8279 = vunpack.c.l.b16 %v8243
  %v8280 = vunpack.c.l.b16 %v8244
  %v8281 = vunpack.c.l.b16 %v8245
  %v8282 = vpack.c.b16 %v8265, %v8264
  %v8283 = vpack.c.b16 %v8267, %v8266
  %v8284 = vpack.c.b16 %v8269, %v8268
  %v8285 = vpack.c.b16 %v8271, %v8270
  %v8286 = vpack.c.b16 %v8273, %v8272
  %v8287 = vpack.c.b16 %v8275, %v8274
  %v8288 = vpack.c.b16 %v8277, %v8276
  %v8289 = vpack.c.b16 %v8279, %v8278
  %v8290 = vpack.c.b16 %v8281, %v8280
  %8300 = vmatpush.bf16.msra.mxu0 %v8289
  %8301 = vmatpush.bf16.msra.mxu0 %v8288
  %8302 = vmatpush.bf16.msra.mxu0 %v8287
  %8303 = vmatpush.bf16.msra.mxu0 %v8286
  %8304 = vmatpush.bf16.msra.mxu0 %v8285
  %8305 = vmatpush.bf16.msra.mxu0 %v8284
  %8306 = vmatpush.bf16.msra.mxu0 %v8283
  %8307 = vmatpush.bf16.msra.mxu0 %v8282
  %8308 = vmatmul.bf16.gmra.mxu0 %v7454
  %v8309 = vpop.f32.mrf.mxu0
  %v8310 = vadd.f32 %v7311, %v8309
  %v8311 = vpop.f32.mrf.mxu0
  %v8312 = vadd.f32 %v7316, %v8311
  %8313 = vmatmul.bf16.gmra.mxu0 %v7456
  %v8314 = vpop.f32.mrf.mxu0
  %v8315 = vadd.f32 %v7321, %v8314
  %v8316 = vpop.f32.mrf.mxu0
  %v8317 = vadd.f32 %v7326, %v8316
  %8318 = vmatmul.bf16.gmra.mxu0 %v7458
  %v8319 = vpop.f32.mrf.mxu0
  %v8320 = vadd.f32 %v7331, %v8319
  %v8321 = vpop.f32.mrf.mxu0
  %v8322 = vadd.f32 %v7336, %v8321
  %8323 = vmatmul.bf16.gmra.mxu0 %v7460
  %v8324 = vpop.f32.mrf.mxu0
  %v8325 = vadd.f32 %v7341, %v8324
  %v8326 = vpop.f32.mrf.mxu0
  %v8327 = vadd.f32 %v7346, %v8326
  %8328 = vmatmul.bf16.gmra.mxu0 %v7462
  %v8329 = vpop.f32.mrf.mxu0
  %v8330 = vadd.f32 %v7351, %v8329
  %v8331 = vpop.f32.mrf.mxu0
  %v8332 = vadd.f32 %v7356, %v8331
  %8333 = vmatmul.bf16.gmra.mxu0 %v7464
  %v8334 = vpop.f32.mrf.mxu0
  %v8335 = vadd.f32 %v7361, %v8334
  %v8336 = vpop.f32.mrf.mxu0
  %v8337 = vadd.f32 %v7366, %v8336
  %8338 = vmatmul.bf16.gmra.mxu0 %v7466
  %v8339 = vpop.f32.mrf.mxu0
  %v8340 = vadd.f32 %v7371, %v8339
  %v8341 = vpop.f32.mrf.mxu0
  %v8342 = vadd.f32 %v7376, %v8341
  %8343 = vmatmul.bf16.gmra.mxu0 %v7468
  %v8344 = vpop.f32.mrf.mxu0
  %v8345 = vadd.f32 %v7381, %v8344
  %v8346 = vpop.f32.mrf.mxu0
  %v8347 = vadd.f32 %v7386, %v8346
  %8348 = vdwg.mxu0
  %8349 = vmatpush.bf16.msra.mxu0 0
  %8350 = vmatpush.bf16.msra.mxu0 0
  %8351 = vmatpush.bf16.msra.mxu0 0
  %8352 = vmatpush.bf16.msra.mxu0 0
  %8353 = vmatpush.bf16.msra.mxu0 %v3294
  %8354 = vmatpush.bf16.msra.mxu0 %v3293
  %8355 = vmatpush.bf16.msra.mxu0 %v3292
  %8356 = vmatpush.bf16.msra.mxu0 %v8290
  %8357 = vmatmul.bf16.gmra.mxu0 %v7533
  %v8358 = vpop.f32.mrf.mxu0
  %v8359 = vadd.f32 %v8310, %v8358
  %v8360 = vpop.f32.mrf.mxu0
  %v8361 = vadd.f32 %v8312, %v8360
  %8362 = vmatmul.bf16.gmra.mxu0 %v7536
  %v8363 = vpop.f32.mrf.mxu0
  %v8364 = vadd.f32 %v8315, %v8363
  %v8365 = vpop.f32.mrf.mxu0
  %v8366 = vadd.f32 %v8317, %v8365
  %8367 = vmatmul.bf16.gmra.mxu0 %v7539
  %v8368 = vpop.f32.mrf.mxu0
  %v8369 = vadd.f32 %v8320, %v8368
  %v8370 = vpop.f32.mrf.mxu0
  %v8371 = vadd.f32 %v8322, %v8370
  %8372 = vmatmul.bf16.gmra.mxu0 %v7542
  %v8373 = vpop.f32.mrf.mxu0
  %v8374 = vadd.f32 %v8325, %v8373
  %v8375 = vpop.f32.mrf.mxu0
  %v8376 = vadd.f32 %v8327, %v8375
  %8377 = vmatmul.bf16.gmra.mxu0 %v7545
  %v8378 = vpop.f32.mrf.mxu0
  %v8379 = vadd.f32 %v8330, %v8378
  %v8380 = vpop.f32.mrf.mxu0
  %v8381 = vadd.f32 %v8332, %v8380
  %8382 = vmatmul.bf16.gmra.mxu0 %v7548
  %v8383 = vpop.f32.mrf.mxu0
  %v8384 = vadd.f32 %v8335, %v8383
  %v8385 = vpop.f32.mrf.mxu0
  %v8386 = vadd.f32 %v8337, %v8385
  %8387 = vmatmul.bf16.gmra.mxu0 %v7551
  %v8388 = vpop.f32.mrf.mxu0
  %v8389 = vadd.f32 %v8340, %v8388
  %v8390 = vpop.f32.mrf.mxu0
  %v8391 = vadd.f32 %v8342, %v8390
  %8392 = vmatmul.bf16.gmra.mxu0 %v7554
  %v8393 = vpop.f32.mrf.mxu0
  %v8394 = vadd.f32 %v8345, %v8393
  %v8395 = vpop.f32.mrf.mxu0
  %v8396 = vadd.f32 %v8347, %v8395
  %8397 = vdwg.mxu0
  %v8398 = vmax.f32 %v8359, 0.0
  %v8399 = vmax.f32 %v8361, 0.0
  %v8400 = vmax.f32 %v8364, 0.0
  %v8401 = vmax.f32 %v8366, 0.0
  %v8402 = vmax.f32 %v8369, 0.0
  %v8403 = vmax.f32 %v8371, 0.0
  %v8404 = vmax.f32 %v8374, 0.0
  %v8405 = vmax.f32 %v8376, 0.0
  %v8406 = vmax.f32 %v8379, 0.0
  %v8407 = vmax.f32 %v8381, 0.0
  %v8408 = vmax.f32 %v8384, 0.0
  %v8409 = vmax.f32 %v8386, 0.0
  %v8410 = vmax.f32 %v8389, 0.0
  %v8411 = vmax.f32 %v8391, 0.0
  %v8412 = vmax.f32 %v8394, 0.0
  %v8413 = vmax.f32 %v8396, 0.0
  %v8414 = vld [vmem:[%s0 + $0xf0] sm:$0xf]
  %v8415 = vld [vmem:[%s0 + $0xf4] sm:$0xf]
  %v8416 = vld [vmem:[%s0 + $0xf8] sm:$0xf]
  %v8417 = vld [vmem:[%s0 + $0xfc] sm:$0xf]
  %v8418 = vld [vmem:[%s0 + $0x100] sm:$0xf]
  %v8419 = vld [vmem:[%s0 + $0x104] sm:$0xf]
  %v8420 = vld [vmem:[%s0 + $0x108] sm:$0xf]
  %v8421 = vld [vmem:[%s0 + $0x10c] sm:$0xf]
  %v8422 = vld [vmem:[%s0 + $0x110] sm:$0xf]
  %v8423 = vld [vmem:[%s0 + $0x114] sm:$0xf]
  %v8424 = vld [vmem:[%s0 + $0x118] sm:$0xf]
  %v8425 = vld [vmem:[%s0 + $0x11c] sm:$0xf]
  %v8426 = vld [vmem:[%s0 + $0x120] sm:$0xf]
  %v8427 = vld [vmem:[%s0 + $0x124] sm:$0xf]
  %v8428 = vld [vmem:[%s0 + $0x128] sm:$0xf]
  %v8429 = vld [vmem:[%s0 + $0x12c] sm:$0xf]
  %v8430 = vld [vmem:[%s0 + $0x130] sm:$0xf]
  %v8431 = vld [vmem:[%s0 + $0x134] sm:$0xf]
  %v8450 = vunpack.c.l.b16 %v8414
  %v8451 = vunpack.c.l.b16 %v8415
  %v8452 = vunpack.c.l.b16 %v8416
  %v8453 = vunpack.c.l.b16 %v8417
  %v8454 = vunpack.c.l.b16 %v8418
  %v8455 = vunpack.c.l.b16 %v8419
  %v8456 = vunpack.c.l.b16 %v8420
  %v8457 = vunpack.c.l.b16 %v8421
  %v8458 = vunpack.c.l.b16 %v8422
  %v8459 = vunpack.c.l.b16 %v8423
  %v8460 = vunpack.c.l.b16 %v8424
  %v8461 = vunpack.c.l.b16 %v8425
  %v8462 = vunpack.c.l.b16 %v8426
  %v8463 = vunpack.c.l.b16 %v8427
  %v8464 = vunpack.c.l.b16 %v8428
  %v8465 = vunpack.c.l.b16 %v8429
  %v8466 = vunpack.c.l.b16 %v8430
  %v8467 = vunpack.c.l.b16 %v8431
  %v8468 = vpack.c.b16 %v8451, %v8450
  %v8469 = vpack.c.b16 %v8453, %v8452
  %v8470 = vpack.c.b16 %v8455, %v8454
  %v8471 = vpack.c.b16 %v8457, %v8456
  %v8472 = vpack.c.b16 %v8459, %v8458
  %v8473 = vpack.c.b16 %v8461, %v8460
  %v8474 = vpack.c.b16 %v8463, %v8462
  %v8475 = vpack.c.b16 %v8465, %v8464
  %v8476 = vpack.c.b16 %v8467, %v8466
  %8486 = vmatpush.bf16.msra.mxu0 %v8475
  %8487 = vmatpush.bf16.msra.mxu0 %v8474
  %8488 = vmatpush.bf16.msra.mxu0 %v8473
  %8489 = vmatpush.bf16.msra.mxu0 %v8472
  %8490 = vmatpush.bf16.msra.mxu0 %v8471
  %8491 = vmatpush.bf16.msra.mxu0 %v8470
  %8492 = vmatpush.bf16.msra.mxu0 %v8469
  %8493 = vmatpush.bf16.msra.mxu0 %v8468
  %8494 = vmatmul.bf16.gmra.mxu0 %v7454
  %v8495 = vpop.f32.mrf.mxu0
  %v8496 = vadd.f32 %v7311, %v8495
  %v8497 = vpop.f32.mrf.mxu0
  %v8498 = vadd.f32 %v7316, %v8497
  %8499 = vmatmul.bf16.gmra.mxu0 %v7456
  %v8500 = vpop.f32.mrf.mxu0
  %v8501 = vadd.f32 %v7321, %v8500
  %v8502 = vpop.f32.mrf.mxu0
  %v8503 = vadd.f32 %v7326, %v8502
  %8504 = vmatmul.bf16.gmra.mxu0 %v7458
  %v8505 = vpop.f32.mrf.mxu0
  %v8506 = vadd.f32 %v7331, %v8505
  %v8507 = vpop.f32.mrf.mxu0
  %v8508 = vadd.f32 %v7336, %v8507
  %8509 = vmatmul.bf16.gmra.mxu0 %v7460
  %v8510 = vpop.f32.mrf.mxu0
  %v8511 = vadd.f32 %v7341, %v8510
  %v8512 = vpop.f32.mrf.mxu0
  %v8513 = vadd.f32 %v7346, %v8512
  %8514 = vmatmul.bf16.gmra.mxu0 %v7462
  %v8515 = vpop.f32.mrf.mxu0
  %v8516 = vadd.f32 %v7351, %v8515
  %v8517 = vpop.f32.mrf.mxu0
  %v8518 = vadd.f32 %v7356, %v8517
  %8519 = vmatmul.bf16.gmra.mxu0 %v7464
  %v8520 = vpop.f32.mrf.mxu0
  %v8521 = vadd.f32 %v7361, %v8520
  %v8522 = vpop.f32.mrf.mxu0
  %v8523 = vadd.f32 %v7366, %v8522
  %8524 = vmatmul.bf16.gmra.mxu0 %v7466
  %v8525 = vpop.f32.mrf.mxu0
  %v8526 = vadd.f32 %v7371, %v8525
  %v8527 = vpop.f32.mrf.mxu0
  %v8528 = vadd.f32 %v7376, %v8527
  %8529 = vmatmul.bf16.gmra.mxu0 %v7468
  %v8530 = vpop.f32.mrf.mxu0
  %v8531 = vadd.f32 %v7381, %v8530
  %v8532 = vpop.f32.mrf.mxu0
  %v8533 = vadd.f32 %v7386, %v8532
  %8534 = vdwg.mxu0
  %8535 = vmatpush.bf16.msra.mxu0 0
  %8536 = vmatpush.bf16.msra.mxu0 0
  %8537 = vmatpush.bf16.msra.mxu0 0
  %8538 = vmatpush.bf16.msra.mxu0 0
  %8539 = vmatpush.bf16.msra.mxu0 %v3908
  %8540 = vmatpush.bf16.msra.mxu0 %v3907
  %8541 = vmatpush.bf16.msra.mxu0 %v3906
  %8542 = vmatpush.bf16.msra.mxu0 %v8476
  %8543 = vmatmul.bf16.gmra.mxu0 %v7533
  %v8544 = vpop.f32.mrf.mxu0
  %v8545 = vadd.f32 %v8496, %v8544
  %v8546 = vpop.f32.mrf.mxu0
  %v8547 = vadd.f32 %v8498, %v8546
  %8548 = vmatmul.bf16.gmra.mxu0 %v7536
  %v8549 = vpop.f32.mrf.mxu0
  %v8550 = vadd.f32 %v8501, %v8549
  %v8551 = vpop.f32.mrf.mxu0
  %v8552 = vadd.f32 %v8503, %v8551
  %8553 = vmatmul.bf16.gmra.mxu0 %v7539
  %v8554 = vpop.f32.mrf.mxu0
  %v8555 = vadd.f32 %v8506, %v8554
  %v8556 = vpop.f32.mrf.mxu0
  %v8557 = vadd.f32 %v8508, %v8556
  %8558 = vmatmul.bf16.gmra.mxu0 %v7542
  %v8559 = vpop.f32.mrf.mxu0
  %v8560 = vadd.f32 %v8511, %v8559
  %v8561 = vpop.f32.mrf.mxu0
  %v8562 = vadd.f32 %v8513, %v8561
  %8563 = vmatmul.bf16.gmra.mxu0 %v7545
  %v8564 = vpop.f32.mrf.mxu0
  %v8565 = vadd.f32 %v8516, %v8564
  %v8566 = vpop.f32.mrf.mxu0
  %v8567 = vadd.f32 %v8518, %v8566
  %8568 = vmatmul.bf16.gmra.mxu0 %v7548
  %v8569 = vpop.f32.mrf.mxu0
  %v8570 = vadd.f32 %v8521, %v8569
  %v8571 = vpop.f32.mrf.mxu0
  %v8572 = vadd.f32 %v8523, %v8571
  %8573 = vmatmul.bf16.gmra.mxu0 %v7551
  %v8574 = vpop.f32.mrf.mxu0
  %v8575 = vadd.f32 %v8526, %v8574
  %v8576 = vpop.f32.mrf.mxu0
  %v8577 = vadd.f32 %v8528, %v8576
  %8578 = vmatmul.bf16.gmra.mxu0 %v7554
  %v8579 = vpop.f32.mrf.mxu0
  %v8580 = vadd.f32 %v8531, %v8579
  %v8581 = vpop.f32.mrf.mxu0
  %v8582 = vadd.f32 %v8533, %v8581
  %8583 = vdwg.mxu0
  %v8584 = vmax.f32 %v8545, 0.0
  %v8585 = vmax.f32 %v8547, 0.0
  %v8586 = vmax.f32 %v8550, 0.0
  %v8587 = vmax.f32 %v8552, 0.0
  %v8588 = vmax.f32 %v8555, 0.0
  %v8589 = vmax.f32 %v8557, 0.0
  %v8590 = vmax.f32 %v8560, 0.0
  %v8591 = vmax.f32 %v8562, 0.0
  %v8592 = vmax.f32 %v8565, 0.0
  %v8593 = vmax.f32 %v8567, 0.0
  %v8594 = vmax.f32 %v8570, 0.0
  %v8595 = vmax.f32 %v8572, 0.0
  %v8596 = vmax.f32 %v8575, 0.0
  %v8597 = vmax.f32 %v8577, 0.0
  %v8598 = vmax.f32 %v8580, 0.0
  %v8599 = vmax.f32 %v8582, 0.0
  %v8600 = vld [vmem:[%s0 + $0x120] sm:$0xf]
  %v8601 = vld [vmem:[%s0 + $0x124] sm:$0xf]
  %v8602 = vld [vmem:[%s0 + $0x128] sm:$0xf]
  %v8603 = vld [vmem:[%s0 + $0x12c] sm:$0xf]
  %v8604 = vld [vmem:[%s0 + $0x130] sm:$0xf]
  %v8605 = vld [vmem:[%s0 + $0x134] sm:$0xf]
  %v8606 = vld [vmem:[%s0 + $0x138] sm:$0xf]
  %v8607 = vld [vmem:[%s0 + $0x13c] sm:$0xf]
  %v8608 = vld [vmem:[%s0 + $0x140] sm:$0xf]
  %v8609 = vld [vmem:[%s0 + $0x144] sm:$0xf]
  %v8610 = vld [vmem:[%s0 + $0x148] sm:$0xf]
  %v8611 = vld [vmem:[%s0 + $0x14c] sm:$0xf]
  %v8612 = vld [vmem:[%s0 + $0x150] sm:$0xf]
  %v8613 = vld [vmem:[%s0 + $0x154] sm:$0xf]
  %v8614 = vld [vmem:[%s0 + $0x158] sm:$0xf]
  %v8615 = vld [vmem:[%s0 + $0x15c] sm:$0xf]
  %v8616 = vld [vmem:[%s0 + $0x160] sm:$0xf]
  %v8617 = vld [vmem:[%s0 + $0x164] sm:$0xf]
  %v8636 = vunpack.c.l.b16 %v8600
  %v8637 = vunpack.c.l.b16 %v8601
  %v8638 = vunpack.c.l.b16 %v8602
  %v8639 = vunpack.c.l.b16 %v8603
  %v8640 = vunpack.c.l.b16 %v8604
  %v8641 = vunpack.c.l.b16 %v8605
  %v8642 = vunpack.c.l.b16 %v8606
  %v8643 = vunpack.c.l.b16 %v8607
  %v8644 = vunpack.c.l.b16 %v8608
  %v8645 = vunpack.c.l.b16 %v8609
  %v8646 = vunpack.c.l.b16 %v8610
  %v8647 = vunpack.c.l.b16 %v8611
  %v8648 = vunpack.c.l.b16 %v8612
  %v8649 = vunpack.c.l.b16 %v8613
  %v8650 = vunpack.c.l.b16 %v8614
  %v8651 = vunpack.c.l.b16 %v8615
  %v8652 = vunpack.c.l.b16 %v8616
  %v8653 = vunpack.c.l.b16 %v8617
  %v8654 = vpack.c.b16 %v8637, %v8636
  %v8655 = vpack.c.b16 %v8639, %v8638
  %v8656 = vpack.c.b16 %v8641, %v8640
  %v8657 = vpack.c.b16 %v8643, %v8642
  %v8658 = vpack.c.b16 %v8645, %v8644
  %v8659 = vpack.c.b16 %v8647, %v8646
  %v8660 = vpack.c.b16 %v8649, %v8648
  %v8661 = vpack.c.b16 %v8651, %v8650
  %v8662 = vpack.c.b16 %v8653, %v8652
  %8672 = vmatpush.bf16.msra.mxu0 %v8661
  %8673 = vmatpush.bf16.msra.mxu0 %v8660
  %8674 = vmatpush.bf16.msra.mxu0 %v8659
  %8675 = vmatpush.bf16.msra.mxu0 %v8658
  %8676 = vmatpush.bf16.msra.mxu0 %v8657
  %8677 = vmatpush.bf16.msra.mxu0 %v8656
  %8678 = vmatpush.bf16.msra.mxu0 %v8655
  %8679 = vmatpush.bf16.msra.mxu0 %v8654
  %8680 = vmatmul.bf16.gmra.mxu0 %v7454
  %v8681 = vpop.f32.mrf.mxu0
  %v8682 = vadd.f32 %v7311, %v8681
  %v8683 = vpop.f32.mrf.mxu0
  %v8684 = vadd.f32 %v7316, %v8683
  %8685 = vmatmul.bf16.gmra.mxu0 %v7456
  %v8686 = vpop.f32.mrf.mxu0
  %v8687 = vadd.f32 %v7321, %v8686
  %v8688 = vpop.f32.mrf.mxu0
  %v8689 = vadd.f32 %v7326, %v8688
  %8690 = vmatmul.bf16.gmra.mxu0 %v7458
  %v8691 = vpop.f32.mrf.mxu0
  %v8692 = vadd.f32 %v7331, %v8691
  %v8693 = vpop.f32.mrf.mxu0
  %v8694 = vadd.f32 %v7336, %v8693
  %8695 = vmatmul.bf16.gmra.mxu0 %v7460
  %v8696 = vpop.f32.mrf.mxu0
  %v8697 = vadd.f32 %v7341, %v8696
  %v8698 = vpop.f32.mrf.mxu0
  %v8699 = vadd.f32 %v7346, %v8698
  %8700 = vmatmul.bf16.gmra.mxu0 %v7462
  %v8701 = vpop.f32.mrf.mxu0
  %v8702 = vadd.f32 %v7351, %v8701
  %v8703 = vpop.f32.mrf.mxu0
  %v8704 = vadd.f32 %v7356, %v8703
  %8705 = vmatmul.bf16.gmra.mxu0 %v7464
  %v8706 = vpop.f32.mrf.mxu0
  %v8707 = vadd.f32 %v7361, %v8706
  %v8708 = vpop.f32.mrf.mxu0
  %v8709 = vadd.f32 %v7366, %v8708
  %8710 = vmatmul.bf16.gmra.mxu0 %v7466
  %v8711 = vpop.f32.mrf.mxu0
  %v8712 = vadd.f32 %v7371, %v8711
  %v8713 = vpop.f32.mrf.mxu0
  %v8714 = vadd.f32 %v7376, %v8713
  %8715 = vmatmul.bf16.gmra.mxu0 %v7468
  %v8716 = vpop.f32.mrf.mxu0
  %v8717 = vadd.f32 %v7381, %v8716
  %v8718 = vpop.f32.mrf.mxu0
  %v8719 = vadd.f32 %v7386, %v8718
  %8720 = vdwg.mxu0
  %8721 = vmatpush.bf16.msra.mxu0 0
  %8722 = vmatpush.bf16.msra.mxu0 0
  %8723 = vmatpush.bf16.msra.mxu0 0
  %8724 = vmatpush.bf16.msra.mxu0 0
  %8725 = vmatpush.bf16.msra.mxu0 %v4522
  %8726 = vmatpush.bf16.msra.mxu0 %v4521
  %8727 = vmatpush.bf16.msra.mxu0 %v4520
  %8728 = vmatpush.bf16.msra.mxu0 %v8662
  %8729 = vmatmul.bf16.gmra.mxu0 %v7533
  %v8730 = vpop.f32.mrf.mxu0
  %v8731 = vadd.f32 %v8682, %v8730
  %v8732 = vpop.f32.mrf.mxu0
  %v8733 = vadd.f32 %v8684, %v8732
  %8734 = vmatmul.bf16.gmra.mxu0 %v7536
  %v8735 = vpop.f32.mrf.mxu0
  %v8736 = vadd.f32 %v8687, %v8735
  %v8737 = vpop.f32.mrf.mxu0
  %v8738 = vadd.f32 %v8689, %v8737
  %8739 = vmatmul.bf16.gmra.mxu0 %v7539
  %v8740 = vpop.f32.mrf.mxu0
  %v8741 = vadd.f32 %v8692, %v8740
  %v8742 = vpop.f32.mrf.mxu0
  %v8743 = vadd.f32 %v8694, %v8742
  %8744 = vmatmul.bf16.gmra.mxu0 %v7542
  %v8745 = vpop.f32.mrf.mxu0
  %v8746 = vadd.f32 %v8697, %v8745
  %v8747 = vpop.f32.mrf.mxu0
  %v8748 = vadd.f32 %v8699, %v8747
  %8749 = vmatmul.bf16.gmra.mxu0 %v7545
  %v8750 = vpop.f32.mrf.mxu0
  %v8751 = vadd.f32 %v8702, %v8750
  %v8752 = vpop.f32.mrf.mxu0
  %v8753 = vadd.f32 %v8704, %v8752
  %8754 = vmatmul.bf16.gmra.mxu0 %v7548
  %v8755 = vpop.f32.mrf.mxu0
  %v8756 = vadd.f32 %v8707, %v8755
  %v8757 = vpop.f32.mrf.mxu0
  %v8758 = vadd.f32 %v8709, %v8757
  %8759 = vmatmul.bf16.gmra.mxu0 %v7551
  %v8760 = vpop.f32.mrf.mxu0
  %v8761 = vadd.f32 %v8712, %v8760
  %v8762 = vpop.f32.mrf.mxu0
  %v8763 = vadd.f32 %v8714, %v8762
  %8764 = vmatmul.bf16.gmra.mxu0 %v7554
  %v8765 = vpop.f32.mrf.mxu0
  %v8766 = vadd.f32 %v8717, %v8765
  %v8767 = vpop.f32.mrf.mxu0
  %v8768 = vadd.f32 %v8719, %v8767
  %8769 = vdwg.mxu0
  %v8770 = vmax.f32 %v8731, 0.0
  %v8771 = vmax.f32 %v8733, 0.0
  %v8772 = vmax.f32 %v8736, 0.0
  %v8773 = vmax.f32 %v8738, 0.0
  %v8774 = vmax.f32 %v8741, 0.0
  %v8775 = vmax.f32 %v8743, 0.0
  %v8776 = vmax.f32 %v8746, 0.0
  %v8777 = vmax.f32 %v8748, 0.0
  %v8778 = vmax.f32 %v8751, 0.0
  %v8779 = vmax.f32 %v8753, 0.0
  %v8780 = vmax.f32 %v8756, 0.0
  %v8781 = vmax.f32 %v8758, 0.0
  %v8782 = vmax.f32 %v8761, 0.0
  %v8783 = vmax.f32 %v8763, 0.0
  %v8784 = vmax.f32 %v8766, 0.0
  %v8785 = vmax.f32 %v8768, 0.0
  %v8786 = vld [vmem:[%s0 + $0x150] sm:$0xf]
  %v8787 = vld [vmem:[%s0 + $0x154] sm:$0xf]
  %v8788 = vld [vmem:[%s0 + $0x158] sm:$0xf]
  %v8789 = vld [vmem:[%s0 + $0x15c] sm:$0xf]
  %v8790 = vld [vmem:[%s0 + $0x160] sm:$0xf]
  %v8791 = vld [vmem:[%s0 + $0x164] sm:$0xf]
  %v8792 = vld [vmem:[%s0 + $0x168] sm:$0xf]
  %v8793 = vld [vmem:[%s0 + $0x16c] sm:$0xf]
  %v8794 = vld [vmem:[%s0 + $0x170] sm:$0xf]
  %v8795 = vld [vmem:[%s0 + $0x174] sm:$0xf]
  %v8796 = vld [vmem:[%s0 + $0x178] sm:$0xf]
  %v8797 = vld [vmem:[%s0 + $0x17c] sm:$0xf]
  %v8798 = vld [vmem:[%s0 + $0x180] sm:$0xf]
  %v8799 = vld [vmem:[%s0 + $0x184] sm:$0xf]
  %v8800 = vld [vmem:[%s0 + $0x188] sm:$0xf]
  %v8801 = vld [vmem:[%s0 + $0x18c] sm:$0xf]
  %v8802 = vld [vmem:[%s0 + $0x190] sm:$0xf]
  %v8803 = vld [vmem:[%s0 + $0x194] sm:$0xf]
  %v8804 = vld [vmem:[%s0 + $0x198] sm:$0xf]
  %v8805 = vld [vmem:[%s0 + $0x19c] sm:$0xf]
  %v8806 = vld [vmem:[%s0 + $0x1a0] sm:$0xf]
  %v8807 = vld [vmem:[%s0 + $0x1a4] sm:$0xf]
  %v8808 = vld [vmem:[%s0 + $0x1a8] sm:$0xf]
  %v8809 = vld [vmem:[%s0 + $0x1ac] sm:$0xf]
  %v8834 = vunpack.c.l.b16 %v8786
  %v8835 = vunpack.c.l.b16 %v8787
  %v8836 = vunpack.c.l.b16 %v8788
  %v8837 = vunpack.c.l.b16 %v8789
  %v8838 = vunpack.c.l.b16 %v8790
  %v8839 = vunpack.c.l.b16 %v8791
  %v8840 = vunpack.c.l.b16 %v8792
  %v8841 = vunpack.c.l.b16 %v8793
  %v8842 = vunpack.c.l.b16 %v8794
  %v8843 = vunpack.c.l.b16 %v8795
  %v8844 = vunpack.c.l.b16 %v8796
  %v8845 = vunpack.c.l.b16 %v8797
  %v8846 = vunpack.c.l.b16 %v8798
  %v8847 = vunpack.c.l.b16 %v8799
  %v8848 = vunpack.c.l.b16 %v8800
  %v8849 = vunpack.c.l.b16 %v8801
  %v8850 = vunpack.c.l.b16 %v8802
  %v8851 = vunpack.c.l.b16 %v8803
  %v8852 = vunpack.c.l.b16 %v8804
  %v8853 = vunpack.c.l.b16 %v8805
  %v8854 = vunpack.c.l.b16 %v8806
  %v8855 = vunpack.c.l.b16 %v8807
  %v8856 = vunpack.c.l.b16 %v8808
  %v8857 = vunpack.c.l.b16 %v8809
  %v8858 = vpack.c.b16 %v8835, %v8834
  %v8859 = vpack.c.b16 %v8837, %v8836
  %v8860 = vpack.c.b16 %v8839, %v8838
  %v8861 = vpack.c.b16 %v8841, %v8840
  %v8862 = vpack.c.b16 %v8843, %v8842
  %v8863 = vpack.c.b16 %v8845, %v8844
  %v8864 = vpack.c.b16 %v8847, %v8846
  %v8865 = vpack.c.b16 %v8849, %v8848
  %v8866 = vpack.c.b16 %v8851, %v8850
  %v8867 = vpack.c.b16 %v8853, %v8852
  %v8868 = vpack.c.b16 %v8855, %v8854
  %v8869 = vpack.c.b16 %v8857, %v8856
  %8882 = vmatpush.bf16.msra.mxu0 %v8865
  %8883 = vmatpush.bf16.msra.mxu0 %v8864
  %8884 = vmatpush.bf16.msra.mxu0 %v8863
  %8885 = vmatpush.bf16.msra.mxu0 %v8862
  %8886 = vmatpush.bf16.msra.mxu0 %v8861
  %8887 = vmatpush.bf16.msra.mxu0 %v8860
  %8888 = vmatpush.bf16.msra.mxu0 %v8859
  %8889 = vmatpush.bf16.msra.mxu0 %v8858
  %8890 = vmatmul.bf16.gmra.mxu0 %v7454
  %v8891 = vpop.f32.mrf.mxu0
  %v8892 = vadd.f32 %v7311, %v8891
  %v8893 = vpop.f32.mrf.mxu0
  %v8894 = vadd.f32 %v7316, %v8893
  %8895 = vmatmul.bf16.gmra.mxu0 %v7456
  %v8896 = vpop.f32.mrf.mxu0
  %v8897 = vadd.f32 %v7321, %v8896
  %v8898 = vpop.f32.mrf.mxu0
  %v8899 = vadd.f32 %v7326, %v8898
  %8900 = vmatmul.bf16.gmra.mxu0 %v7458
  %v8901 = vpop.f32.mrf.mxu0
  %v8902 = vadd.f32 %v7331, %v8901
  %v8903 = vpop.f32.mrf.mxu0
  %v8904 = vadd.f32 %v7336, %v8903
  %8905 = vmatmul.bf16.gmra.mxu0 %v7460
  %v8906 = vpop.f32.mrf.mxu0
  %v8907 = vadd.f32 %v7341, %v8906
  %v8908 = vpop.f32.mrf.mxu0
  %v8909 = vadd.f32 %v7346, %v8908
  %8910 = vmatmul.bf16.gmra.mxu0 %v7462
  %v8911 = vpop.f32.mrf.mxu0
  %v8912 = vadd.f32 %v7351, %v8911
  %v8913 = vpop.f32.mrf.mxu0
  %v8914 = vadd.f32 %v7356, %v8913
  %8915 = vmatmul.bf16.gmra.mxu0 %v7464
  %v8916 = vpop.f32.mrf.mxu0
  %v8917 = vadd.f32 %v7361, %v8916
  %v8918 = vpop.f32.mrf.mxu0
  %v8919 = vadd.f32 %v7366, %v8918
  %8920 = vmatmul.bf16.gmra.mxu0 %v7466
  %v8921 = vpop.f32.mrf.mxu0
  %v8922 = vadd.f32 %v7371, %v8921
  %v8923 = vpop.f32.mrf.mxu0
  %v8924 = vadd.f32 %v7376, %v8923
  %8925 = vmatmul.bf16.gmra.mxu0 %v7468
  %v8926 = vpop.f32.mrf.mxu0
  %v8927 = vadd.f32 %v7381, %v8926
  %v8928 = vpop.f32.mrf.mxu0
  %v8929 = vadd.f32 %v7386, %v8928
  %8930 = vdwg.mxu0
  %8931 = vmatpush.bf16.msra.mxu0 0
  %8932 = vmatpush.bf16.msra.mxu0 0
  %8933 = vmatpush.bf16.msra.mxu0 0
  %8934 = vmatpush.bf16.msra.mxu0 0
  %8935 = vmatpush.bf16.msra.mxu0 %v8869
  %8936 = vmatpush.bf16.msra.mxu0 %v8868
  %8937 = vmatpush.bf16.msra.mxu0 %v8867
  %8938 = vmatpush.bf16.msra.mxu0 %v8866
  %8939 = vmatmul.bf16.gmra.mxu0 %v7533
  %v8940 = vpop.f32.mrf.mxu0
  %v8941 = vadd.f32 %v8892, %v8940
  %v8942 = vpop.f32.mrf.mxu0
  %v8943 = vadd.f32 %v8894, %v8942
  %8944 = vmatmul.bf16.gmra.mxu0 %v7536
  %v8945 = vpop.f32.mrf.mxu0
  %v8946 = vadd.f32 %v8897, %v8945
  %v8947 = vpop.f32.mrf.mxu0
  %v8948 = vadd.f32 %v8899, %v8947
  %8949 = vmatmul.bf16.gmra.mxu0 %v7539
  %v8950 = vpop.f32.mrf.mxu0
  %v8951 = vadd.f32 %v8902, %v8950
  %v8952 = vpop.f32.mrf.mxu0
  %v8953 = vadd.f32 %v8904, %v8952
  %8954 = vmatmul.bf16.gmra.mxu0 %v7542
  %v8955 = vpop.f32.mrf.mxu0
  %v8956 = vadd.f32 %v8907, %v8955
  %v8957 = vpop.f32.mrf.mxu0
  %v8958 = vadd.f32 %v8909, %v8957
  %8959 = vmatmul.bf16.gmra.mxu0 %v7545
  %v8960 = vpop.f32.mrf.mxu0
  %v8961 = vadd.f32 %v8912, %v8960
  %v8962 = vpop.f32.mrf.mxu0
  %v8963 = vadd.f32 %v8914, %v8962
  %8964 = vmatmul.bf16.gmra.mxu0 %v7548
  %v8965 = vpop.f32.mrf.mxu0
  %v8966 = vadd.f32 %v8917, %v8965
  %v8967 = vpop.f32.mrf.mxu0
  %v8968 = vadd.f32 %v8919, %v8967
  %8969 = vmatmul.bf16.gmra.mxu0 %v7551
  %v8970 = vpop.f32.mrf.mxu0
  %v8971 = vadd.f32 %v8922, %v8970
  %v8972 = vpop.f32.mrf.mxu0
  %v8973 = vadd.f32 %v8924, %v8972
  %8974 = vmatmul.bf16.gmra.mxu0 %v7554
  %v8975 = vpop.f32.mrf.mxu0
  %v8976 = vadd.f32 %v8927, %v8975
  %v8977 = vpop.f32.mrf.mxu0
  %v8978 = vadd.f32 %v8929, %v8977
  %8979 = vdwg.mxu0
  %v8980 = vmax.f32 %v8941, 0.0
  %v8981 = vmax.f32 %v8943, 0.0
  %v8982 = vmax.f32 %v8946, 0.0
  %v8983 = vmax.f32 %v8948, 0.0
  %v8984 = vmax.f32 %v8951, 0.0
  %v8985 = vmax.f32 %v8953, 0.0
  %v8986 = vmax.f32 %v8956, 0.0
  %v8987 = vmax.f32 %v8958, 0.0
  %v8988 = vmax.f32 %v8961, 0.0
  %v8989 = vmax.f32 %v8963, 0.0
  %v8990 = vmax.f32 %v8966, 0.0
  %v8991 = vmax.f32 %v8968, 0.0
  %v8992 = vmax.f32 %v8971, 0.0
  %v8993 = vmax.f32 %v8973, 0.0
  %v8994 = vmax.f32 %v8976, 0.0
  %v8995 = vmax.f32 %v8978, 0.0
  %v8996 = vadd.f32 %v7654, %v7840
  %v8997 = vadd.f32 %v7655, %v7841
  %v8998 = vadd.f32 %v7656, %v7842
  %v8999 = vadd.f32 %v7657, %v7843
  %v9000 = vadd.f32 %v7658, %v7844
  %v9001 = vadd.f32 %v7659, %v7845
  %v9002 = vadd.f32 %v7660, %v7846
  %v9003 = vadd.f32 %v7661, %v7847
  %v9004 = vadd.f32 %v7662, %v7848
  %v9005 = vadd.f32 %v7663, %v7849
  %v9006 = vadd.f32 %v7664, %v7850
  %v9007 = vadd.f32 %v7665, %v7851
  %v9008 = vadd.f32 %v7666, %v7852
  %v9009 = vadd.f32 %v7667, %v7853
  %v9010 = vadd.f32 %v7668, %v7854
  %v9011 = vadd.f32 %v7669, %v7855
  %v9012 = vadd.f32 %v8996, %v9004
  %v9013 = vadd.f32 %v8997, %v9005
  %v9014 = vadd.f32 %v8998, %v9006
  %v9015 = vadd.f32 %v8999, %v9007
  %v9016 = vadd.f32 %v9000, %v9008
  %v9017 = vadd.f32 %v9001, %v9009
  %v9018 = vadd.f32 %v9002, %v9010
  %v9019 = vadd.f32 %v9003, %v9011
  %v9020 = vmul.f32 %v9012, 0.25
  %v9021 = vmul.f32 %v9013, 0.25
  %v9022 = vmul.f32 %v9014, 0.25
  %v9023 = vmul.f32 %v9015, 0.25
  %v9024 = vmul.f32 %v9016, 0.25
  %v9025 = vmul.f32 %v9017, 0.25
  %v9026 = vmul.f32 %v9018, 0.25
  %v9027 = vmul.f32 %v9019, 0.25
  %v9028 = vpack.c.bf16 %v9021, %v9020
  %v9029 = vpack.c.bf16 %v9023, %v9022
  %v9030 = vpack.c.bf16 %v9025, %v9024
  %v9031 = vpack.c.bf16 %v9027, %v9026
  %v9032 = vld [vmem:[%s5 + $0x20] sm:$0xf]
  %v9034 = vsel %vm5190, %v9032, 0
  %9036 = vmatpush.bf16.msra.mxu0 0
  %9037 = vmatpush.bf16.msra.mxu0 0
  %9038 = vmatpush.bf16.msra.mxu0 0
  %9039 = vmatpush.bf16.msra.mxu0 0
  %9040 = vmatpush.bf16.msra.mxu0 %v9031
  %9041 = vmatpush.bf16.msra.mxu0 %v9030
  %9042 = vmatpush.bf16.msra.mxu0 %v9029
  %9043 = vmatpush.bf16.msra.mxu0 %v9028
  %9044 = vmatmul.bf16.gmra.mxu0 %v9034
  %v9045 = vpop.f32.mrf.mxu0
  %v9046 = vadd.f32 0.0, %v9045
  %v9047 = vpop.f32.mrf.mxu0
  %9048 = vdwg.mxu0
  %v9049 = vadd.f32 %v7275, %v9046
  %v9050 = vadd.f32 %v8026, %v8212
  %v9051 = vadd.f32 %v8027, %v8213
  %v9052 = vadd.f32 %v8028, %v8214
  %v9053 = vadd.f32 %v8029, %v8215
  %v9054 = vadd.f32 %v8030, %v8216
  %v9055 = vadd.f32 %v8031, %v8217
  %v9056 = vadd.f32 %v8032, %v8218
  %v9057 = vadd.f32 %v8033, %v8219
  %v9058 = vadd.f32 %v8034, %v8220
  %v9059 = vadd.f32 %v8035, %v8221
  %v9060 = vadd.f32 %v8036, %v8222
  %v9061 = vadd.f32 %v8037, %v8223
  %v9062 = vadd.f32 %v8038, %v8224
  %v9063 = vadd.f32 %v8039, %v8225
  %v9064 = vadd.f32 %v8040, %v8226
  %v9065 = vadd.f32 %v8041, %v8227
  %v9066 = vadd.f32 %v9050, %v9058
  %v9067 = vadd.f32 %v9051, %v9059
  %v9068 = vadd.f32 %v9052, %v9060
  %v9069 = vadd.f32 %v9053, %v9061
  %v9070 = vadd.f32 %v9054, %v9062
  %v9071 = vadd.f32 %v9055, %v9063
  %v9072 = vadd.f32 %v9056, %v9064
  %v9073 = vadd.f32 %v9057, %v9065
  %v9074 = vmul.f32 %v9066, 0.25
  %v9075 = vmul.f32 %v9067, 0.25
  %v9076 = vmul.f32 %v9068, 0.25
  %v9077 = vmul.f32 %v9069, 0.25
  %v9078 = vmul.f32 %v9070, 0.25
  %v9079 = vmul.f32 %v9071, 0.25
  %v9080 = vmul.f32 %v9072, 0.25
  %v9081 = vmul.f32 %v9073, 0.25
  %v9082 = vpack.c.bf16 %v9075, %v9074
  %v9083 = vpack.c.bf16 %v9077, %v9076
  %v9084 = vpack.c.bf16 %v9079, %v9078
  %v9085 = vpack.c.bf16 %v9081, %v9080
  %v9086 = vld [vmem:[%s5 + $0x24] sm:$0xf]
  %v9088 = vsel %vm5190, %v9086, 0
  %9090 = vmatpush.bf16.msra.mxu0 0
  %9091 = vmatpush.bf16.msra.mxu0 0
  %9092 = vmatpush.bf16.msra.mxu0 0
  %9093 = vmatpush.bf16.msra.mxu0 0
  %9094 = vmatpush.bf16.msra.mxu0 %v9085
  %9095 = vmatpush.bf16.msra.mxu0 %v9084
  %9096 = vmatpush.bf16.msra.mxu0 %v9083
  %9097 = vmatpush.bf16.msra.mxu0 %v9082
  %9098 = vmatmul.bf16.gmra.mxu0 %v9088
  %v9099 = vpop.f32.mrf.mxu0
  %v9100 = vadd.f32 0.0, %v9099
  %v9101 = vpop.f32.mrf.mxu0
  %9102 = vdwg.mxu0
  %v9103 = vadd.f32 %v9049, %v9100
  %v9104 = vadd.f32 %v8398, %v8584
  %v9105 = vadd.f32 %v8399, %v8585
  %v9106 = vadd.f32 %v8400, %v8586
  %v9107 = vadd.f32 %v8401, %v8587
  %v9108 = vadd.f32 %v8402, %v8588
  %v9109 = vadd.f32 %v8403, %v8589
  %v9110 = vadd.f32 %v8404, %v8590
  %v9111 = vadd.f32 %v8405, %v8591
  %v9112 = vadd.f32 %v8406, %v8592
  %v9113 = vadd.f32 %v8407, %v8593
  %v9114 = vadd.f32 %v8408, %v8594
  %v9115 = vadd.f32 %v8409, %v8595
  %v9116 = vadd.f32 %v8410, %v8596
  %v9117 = vadd.f32 %v8411, %v8597
  %v9118 = vadd.f32 %v8412, %v8598
  %v9119 = vadd.f32 %v8413, %v8599
  %v9120 = vadd.f32 %v9104, %v9112
  %v9121 = vadd.f32 %v9105, %v9113
  %v9122 = vadd.f32 %v9106, %v9114
  %v9123 = vadd.f32 %v9107, %v9115
  %v9124 = vadd.f32 %v9108, %v9116
  %v9125 = vadd.f32 %v9109, %v9117
  %v9126 = vadd.f32 %v9110, %v9118
  %v9127 = vadd.f32 %v9111, %v9119
  %v9128 = vmul.f32 %v9120, 0.25
  %v9129 = vmul.f32 %v9121, 0.25
  %v9130 = vmul.f32 %v9122, 0.25
  %v9131 = vmul.f32 %v9123, 0.25
  %v9132 = vmul.f32 %v9124, 0.25
  %v9133 = vmul.f32 %v9125, 0.25
  %v9134 = vmul.f32 %v9126, 0.25
  %v9135 = vmul.f32 %v9127, 0.25
  %v9136 = vpack.c.bf16 %v9129, %v9128
  %v9137 = vpack.c.bf16 %v9131, %v9130
  %v9138 = vpack.c.bf16 %v9133, %v9132
  %v9139 = vpack.c.bf16 %v9135, %v9134
  %v9140 = vld [vmem:[%s5 + $0x28] sm:$0xf]
  %v9142 = vsel %vm5190, %v9140, 0
  %9144 = vmatpush.bf16.msra.mxu0 0
  %9145 = vmatpush.bf16.msra.mxu0 0
  %9146 = vmatpush.bf16.msra.mxu0 0
  %9147 = vmatpush.bf16.msra.mxu0 0
  %9148 = vmatpush.bf16.msra.mxu0 %v9139
  %9149 = vmatpush.bf16.msra.mxu0 %v9138
  %9150 = vmatpush.bf16.msra.mxu0 %v9137
  %9151 = vmatpush.bf16.msra.mxu0 %v9136
  %9152 = vmatmul.bf16.gmra.mxu0 %v9142
  %v9153 = vpop.f32.mrf.mxu0
  %v9154 = vadd.f32 0.0, %v9153
  %v9155 = vpop.f32.mrf.mxu0
  %9156 = vdwg.mxu0
  %v9157 = vadd.f32 %v9103, %v9154
  %v9158 = vadd.f32 %v8770, %v8980
  %v9159 = vadd.f32 %v8771, %v8981
  %v9160 = vadd.f32 %v8772, %v8982
  %v9161 = vadd.f32 %v8773, %v8983
  %v9162 = vadd.f32 %v8774, %v8984
  %v9163 = vadd.f32 %v8775, %v8985
  %v9164 = vadd.f32 %v8776, %v8986
  %v9165 = vadd.f32 %v8777, %v8987
  %v9166 = vadd.f32 %v8778, %v8988
  %v9167 = vadd.f32 %v8779, %v8989
  %v9168 = vadd.f32 %v8780, %v8990
  %v9169 = vadd.f32 %v8781, %v8991
  %v9170 = vadd.f32 %v8782, %v8992
  %v9171 = vadd.f32 %v8783, %v8993
  %v9172 = vadd.f32 %v8784, %v8994
  %v9173 = vadd.f32 %v8785, %v8995
  %v9174 = vadd.f32 %v9158, %v9166
  %v9175 = vadd.f32 %v9159, %v9167
  %v9176 = vadd.f32 %v9160, %v9168
  %v9177 = vadd.f32 %v9161, %v9169
  %v9178 = vadd.f32 %v9162, %v9170
  %v9179 = vadd.f32 %v9163, %v9171
  %v9180 = vadd.f32 %v9164, %v9172
  %v9181 = vadd.f32 %v9165, %v9173
  %v9182 = vmul.f32 %v9174, 0.25
  %v9183 = vmul.f32 %v9175, 0.25
  %v9184 = vmul.f32 %v9176, 0.25
  %v9185 = vmul.f32 %v9177, 0.25
  %v9186 = vmul.f32 %v9178, 0.25
  %v9187 = vmul.f32 %v9179, 0.25
  %v9188 = vmul.f32 %v9180, 0.25
  %v9189 = vmul.f32 %v9181, 0.25
  %v9190 = vpack.c.bf16 %v9183, %v9182
  %v9191 = vpack.c.bf16 %v9185, %v9184
  %v9192 = vpack.c.bf16 %v9187, %v9186
  %v9193 = vpack.c.bf16 %v9189, %v9188
  %v9194 = vld [vmem:[%s5 + $0x2c] sm:$0xf]
  %v9196 = vsel %vm5190, %v9194, 0
  %9198 = vmatpush.bf16.msra.mxu0 0
  %9199 = vmatpush.bf16.msra.mxu0 0
  %9200 = vmatpush.bf16.msra.mxu0 0
  %9201 = vmatpush.bf16.msra.mxu0 0
  %9202 = vmatpush.bf16.msra.mxu0 %v9193
  %9203 = vmatpush.bf16.msra.mxu0 %v9192
  %9204 = vmatpush.bf16.msra.mxu0 %v9191
  %9205 = vmatpush.bf16.msra.mxu0 %v9190
  %9206 = vmatmul.bf16.gmra.mxu0 %v9196
  %v9207 = vpop.f32.mrf.mxu0
  %v9208 = vadd.f32 0.0, %v9207
  %v9209 = vpop.f32.mrf.mxu0
  %9210 = vdwg.mxu0
  %v9211 = vadd.f32 %v9157, %v9208
  %v9212 = vld [vmem:[%s6] sm:$0xff]
  %9214 = vset.pattern.permute.xlu0 0
  %9215 = vperm.xlu0 %9214, %v9212
  %v9216 = vpop.permute.xlu0 %9215
  %v9218 = vadd.f32 %v9211, %v9216
  %9219 = vst [vmem:[%s7] sm:$0xff] %v9218
  // Predicated region
  $region30: #{blanknet_forward.1} parent=0 // pred_check
    _
  $region31: #{blanknet_forward.1} parent=0 // pred_check_branch
    %9221 = sbr.rel (0) target = $region33
  $region32: #{blanknet_forward.1} parent=0 // pred_region
    _
  $region33: #{blanknet_forward.1} parent=0 // pred_fallthru
    _
  // Predicated region
  $region34: #{blanknet_forward.1} parent=0 // pred_check
    _
  $region35: #{blanknet_forward.1} parent=0 // pred_check_branch
    %9223 = sbr.rel (0) target = $region37
  $region36: #{blanknet_forward.1} parent=0 // pred_region
    _
  $region37: #{blanknet_forward.1} parent=0 // pred_fallthru
    _

</llo_original>
